<compile_context>
chip_gen: v6e
topology: v6e:2x2x1
jax: 0.10.0
libtpu: 0.0.40
codegen_flags: <defaults>
</compile_context>

<pallas_src>
import functools

import numpy as np
import jax
import jax.numpy as jnp
from jax.experimental import pallas as pl
from jax.experimental.pallas import tpu as pltpu

BRANCHES = ("qual", "quat", "width", "depth")
LOGITS_OUT = {"qual": 1, "quat": 4, "width": 1, "depth": 1}
NUM_LOGITS = sum(LOGITS_OUT.values())      # 7
LOGITS_PAD = 128                           # lane-dense logits store, sliced outside
MAX_IMGS_PER_STEP = 8                      # batch-block cap per grid step


# ------------------------------- Pallas kernel ------------------------------ #

def _grasp_head_kernel(x_ref, mask_ref, *rest, num_convs, per_branch, co,
                       wpad, margin, l_ext, l_rows, b_blk):
    """Fused GraspHead for one block of b_blk images (one grid step).

    x_ref   : (L_blk, Cin) bf16 -- b_blk margin-extended padded rasters, image k
              at rows [k*l_ext + margin, k*l_ext + margin + l_rows); zeros else.
    mask_ref: (L_cmp, 1) f32 -- 1.0 at interior (real-pixel) compute rows.
    rest    : w_0, b_0, ..., w_{nc-1}, b_{nc-1}, w_log, b_log, out_ref,
              act_ref, acc_ref
      w_0     : (9, Cin, Ccat)  bf16      tap-major, branch-concat layer 0
      w_l>0   : (9, Ccat, Ccat) bf16 block-diag  OR  (9, 4, Co, Co) per-branch
      b_l     : (1, Ccat)       f32
      w_log   : (Ccat, 128)     bf16 ; b_log : (1, 128) f32
      out_ref : (b_blk*l_rows, 128) bf16
      act_ref : (L_blk, Ccat)   bf16 VMEM scratch (margin-extended activations)
      acc_ref : (L_cmp, Ccat)   f32  VMEM scratch (tap accumulator)
    """
    *conv_wb, wlog_ref, blog_ref, out_ref, act_ref, acc_ref = rest
    l_cmp, ccat = acc_ref.shape
    interior = mask_ref[...] > 0.0                                # (L_cmp, 1)

    # Halo rows of act_ref are read by shifted tap windows of layers > 0; zero
    # them every step so no uninitialized VMEM is ever consumed.
    zeros_halo = jnp.zeros((margin, ccat), act_ref.dtype)
    act_ref[pl.ds(0, margin), :] = zeros_halo
    act_ref[pl.ds(margin + l_cmp, margin), :] = zeros_halo

    # Row offset of tap (kh, kw) on the flattened padded raster.
    offsets = [(kh - 1) * wpad + (kw - 1) for kh in range(3) for kw in range(3)]

    def conv3x3_relu(src_ref, w_ref, b_ref, branch_blocks):
        # 9 shifted (rows, Cin) @ (Cin, Cout) MXU matmuls, accumulated in the
        # f32 VMEM scratch (bounded vreg pressure).
        for tap, off in enumerate(offsets):
            win = src_ref[pl.ds(margin + off, l_cmp), :]          # bf16
            if branch_blocks:
                # Compact per-branch weights: 4 lane-aligned Co-wide matmuls.
                for bi in range(4):
                    sl = slice(bi * co, (bi + 1) * co)
                    part = jnp.dot(win[:, sl], w_ref[tap, bi],
                                   preferred_element_type=jnp.float32)
                    if tap == 0:
                        acc_ref[:, sl] = part
                    else:
                        acc_ref[:, sl] += part
            else:
                part = jnp.dot(win, w_ref[tap],
                               preferred_element_type=jnp.float32)
                if tap == 0:
                    acc_ref[...] = part
                else:
                    acc_ref[...] += part
        # f32 bias + ReLU epilogue; the interior mask re-zeroes the padding
        # ring (and margin rows) so the next layer sees correct zero padding.
        h = jnp.maximum(acc_ref[...] + b_ref[...], 0.0)
        act_ref[pl.ds(margin, l_cmp), :] = jnp.where(
            interior, h, 0.0).astype(act_ref.dtype)

    conv3x3_relu(x_ref, conv_wb[0], conv_wb[1], branch_blocks=False)
    for layer in range(1, num_convs):
        conv3x3_relu(act_ref, conv_wb[2 * layer], conv_wb[2 * layer + 1],
                     branch_blocks=per_branch)

    # Fused 1x1 logits for all 4 branches, padded to 128 lanes, one image at a
    # time (skips the inter-image margin rows in both MXU work and writeback).
    for k in range(b_blk):
        hk = act_ref[pl.ds(k * l_ext + margin, l_rows), :]        # bf16
        logits = jnp.dot(hk, wlog_ref[...], preferred_element_type=jnp.float32)
        out_ref[pl.ds(k * l_rows, l_rows), :] = (
            logits + blog_ref[...]).astype(out_ref.dtype)


# ------------------------------ parameters ---------------------------------- #

def init_grasp_head_params(key, num_convs, in_channels, conv_out_channels):
    """Per-branch f32 parameters, mirroring the PyTorch module layout."""
    params = {}
    bkeys = jax.random.split(key, len(BRANCHES))
    for bkey, branch in zip(bkeys, BRANCHES):
        ks = jax.random.split(bkey, 2 * num_convs + 2)
        convs = []
        for i in range(num_convs):
            cin = in_channels if i == 0 else conv_out_channels
            w = jax.random.normal(ks[2 * i], (3, 3, cin, conv_out_channels),
                                  jnp.float32) * 0.05
            b = jax.random.normal(ks[2 * i + 1], (conv_out_channels,),
                                  jnp.float32) * 0.05
            convs.append((w, b))
        wl = jax.random.normal(ks[-2], (conv_out_channels, LOGITS_OUT[branch]),
                               jnp.float32) * 0.05
        bl = jax.random.normal(ks[-1], (LOGITS_OUT[branch],), jnp.float32) * 0.05
        params[branch] = {"convs": convs, "logits": (wl, bl)}
    return params


def pack_grasp_head_params(params):
    """One-time packing (call OUTSIDE jit; reuse the result every forward).

    Layer 0: branches share the input -> concat along Cout -> (9, Cin, Ccat).
    Layers>0: per-branch (9, 4, Co, Co) if Co % 128 == 0 (4x fewer FLOPs/bytes
    than block-diagonal), otherwise block-diagonal (9, Ccat, Ccat) to keep
    lane-dense matmuls for small Co.
    Logits: 4 heads packed into one (Ccat, 128) matrix (7 real columns).
    """
    num_convs = len(params[BRANCHES[0]]["convs"])
    assert num_convs >= 1
    co = params[BRANCHES[0]]["convs"][-1][0].shape[-1]
    cin = params[BRANCHES[0]]["convs"][0][0].shape[2]
    ccat = 4 * co
    per_branch = (num_convs > 1) and (co % 128 == 0)

    conv_wb = []
    w0 = jnp.concatenate([params[b]["convs"][0][0] for b in BRANCHES], axis=-1)
    b0 = jnp.concatenate([params[b]["convs"][0][1] for b in BRANCHES])
    conv_wb.append((w0.reshape(9, cin, ccat).astype(jnp.bfloat16),
                    b0.reshape(1, ccat).astype(jnp.float32)))
    for l in range(1, num_convs):
        bias = jnp.concatenate([params[b]["convs"][l][1] for b in BRANCHES])
        if per_branch:
            w = jnp.stack([params[b]["convs"][l][0].reshape(9, co, co)
                           for b in BRANCHES], axis=1)            # (9,4,Co,Co)
        else:
            w = jnp.zeros((3, 3, ccat, ccat), jnp.float32)
            for bi, b in enumerate(BRANCHES):
                wb = params[b]["convs"][l][0]                     # (3,3,Co,Co)
                w = w.at[:, :, bi * co:(bi + 1) * co,
                         bi * co:(bi + 1) * co].set(wb)
            w = w.reshape(9, ccat, ccat)
        conv_wb.append((w.astype(jnp.bfloat16),
                        bias.reshape(1, ccat).astype(jnp.float32)))

    wlog = jnp.zeros((ccat, LOGITS_PAD), jnp.float32)
    blog = jnp.zeros((1, LOGITS_PAD), jnp.float32)
    col = 0
    for bi, b in enumerate(BRANCHES):
        wl, bl = params[b]["logits"]                              # (Co, nb), (nb,)
        nb = wl.shape[-1]
        wlog = wlog.at[bi * co:(bi + 1) * co, col:col + nb].set(wl)
        blog = blog.at[0, col:col + nb].set(bl)
        col += nb
    return {"conv": tuple(conv_wb),
            "wlog": wlog.astype(jnp.bfloat16),
            "blog": blog}


# ------------------------------- forward ------------------------------------ #

def grasp_head_forward(x_nchw, packed):
    """Returns (qual, quat, width, depth) in NCHW f32, matching the PyTorch head."""
    n, cin, h, w = x_nchw.shape
    conv_wb = packed["conv"]
    wlog, blog = packed["wlog"], packed["blog"]
    num_convs = len(conv_wb)
    ccat = wlog.shape[0]
    co = ccat // 4
    per_branch = (num_convs > 1) and (conv_wb[1][0].ndim == 4)
    assert conv_wb[0][0].shape[1] == cin

    # Padded-raster geometry: width padded to a multiple of 8 (lane/sublane
    # friendly), margin = 2 full raster rows (>= wpad + 1 and 8-aligned).
    hp = h + 2
    wpad = ((w + 2 + 7) // 8) * 8
    l_rows = hp * wpad                         # one padded image raster
    margin = 2 * wpad
    l_ext = l_rows + 2 * margin                # per-image extended raster
    m_rows = margin // wpad                    # = 2 extra raster rows each side

    # Batch blocking: amortize per-step overhead, but keep >= 2 grid steps when
    # the batch allows so both v7x TensorCores get work.
    b_blk = max(1, min(MAX_IMGS_PER_STEP, -(-n // 2)))
    n_pad = -(-n // b_blk) * b_blk
    num_steps = n_pad // b_blk
    l_blk = b_blk * l_ext
    l_cmp = l_blk - 2 * margin                 # conv compute rows per step

    # Single pad builds batch padding, the conv zero-ring, the width padding
    # and the row margins in one go; cast to bf16 before padding (half DMA).
    x_nhwc = jnp.transpose(x_nchw, (0, 2, 3, 1)).astype(jnp.bfloat16)
    x_ext = jnp.pad(x_nhwc, ((0, n_pad - n), (m_rows + 1, m_rows + 1),
                             (1, wpad - w - 1), (0, 0)))
    x_ext = x_ext.reshape(n_pad * l_ext, cin)

    # Interior-pixel mask over the compute rows of ONE grid step (identical for
    # every step; constant index_map -> DMA'd once).
    r = np.arange(l_cmp)
    local = (r + margin) % l_ext
    rr = local - margin
    yy = rr // wpad
    xx = rr % wpad
    interior = ((rr >= 0) & (rr < l_rows) &
                (yy >= 1) & (yy <= h) & (xx >= 1) & (xx <= w))
    mask = jnp.asarray(interior.astype(np.float32).reshape(l_cmp, 1))

    # ---- specs / operands -------------------------------------------------- #
    in_specs = [
        pl.BlockSpec((l_blk, cin), lambda i: (i, 0)),
        pl.BlockSpec((l_cmp, 1), lambda i: (0, 0)),
    ]
    args = [x_ext, mask]
    for w_l, b_l in conv_wb:
        in_specs.append(pl.BlockSpec(w_l.shape,
                                     lambda i, nd=w_l.ndim: (0,) * nd))
        in_specs.append(pl.BlockSpec(b_l.shape, lambda i: (0, 0)))
        args.extend([w_l, b_l])
    in_specs.append(pl.BlockSpec(wlog.shape, lambda i: (0, 0)))
    in_specs.append(pl.BlockSpec(blog.shape, lambda i: (0, 0)))
    args.extend([wlog, blog])

    # ---- VMEM budget & cost hint ------------------------------------------ #
    nbytes = lambda a: int(a.size) * a.dtype.itemsize
    w_bytes = sum(nbytes(w_l) + nbytes(b_l) for w_l, b_l in conv_wb)
    w_bytes += nbytes(wlog) + nbytes(blog)
    x_blk_bytes = l_blk * cin * 2
    out_blk_bytes = b_blk * l_rows * LOGITS_PAD * 2
    scratch_bytes = l_blk * ccat * 2 + l_cmp * ccat * 4
    vmem_limit = int(min(max(2 * (x_blk_bytes + out_blk_bytes) + 2 * w_bytes +
                             scratch_bytes + (4 << 20), 32 << 20), 128 << 20))

    k_eff = co if per_branch else ccat
    flops_step = 2 * l_cmp * 9 * cin * ccat
    flops_step += (num_convs - 1) * 2 * l_cmp * 9 * k_eff * ccat
    flops_step += b_blk * 2 * l_rows * ccat * LOGITS_PAD
    bytes_step = x_blk_bytes + out_blk_bytes + l_cmp * 4
    cost = pl.CostEstimate(flops=num_steps * flops_step, transcendentals=0,
                           bytes_accessed=num_steps * bytes_step + w_bytes)

    out = pl.pallas_call(
        functools.partial(_grasp_head_kernel, num_convs=num_convs,
                          per_branch=per_branch, co=co, wpad=wpad,
                          margin=margin, l_ext=l_ext, l_rows=l_rows,
                          b_blk=b_blk),
        out_shape=jax.ShapeDtypeStruct((n_pad * l_rows, LOGITS_PAD),
                                       jnp.bfloat16),
        grid=(num_steps,),
        in_specs=in_specs,
        out_specs=pl.BlockSpec((b_blk * l_rows, LOGITS_PAD), lambda i: (i, 0)),
        scratch_shapes=[pltpu.VMEM((l_blk, ccat), jnp.bfloat16),
                        pltpu.VMEM((l_cmp, ccat), jnp.float32)],
        compiler_params=pltpu.CompilerParams(
            dimension_semantics=("parallel",),
            vmem_limit_bytes=vmem_limit),
        cost_estimate=cost,
    )(*args)

    out = out.reshape(n_pad, hp, wpad, LOGITS_PAD)[:n, 1:h + 1, 1:w + 1,
                                                   :NUM_LOGITS]
    out = out.astype(jnp.float32)
    qual = jnp.transpose(out[..., 0:1], (0, 3, 1, 2))
    quat = jnp.transpose(out[..., 1:5], (0, 3, 1, 2))
    width = jnp.transpose(out[..., 5:6], (0, 3, 1, 2))
    depth = jnp.transpose(out[..., 6:7], (0, 3, 1, 2))
    return qual, quat, width, depth


# --------------------------- pure-JAX reference ------------------------------ #

def _as_bf16(x):
    # Emulate the kernel's bf16 MXU inputs (with f32 accumulation).
    return x.astype(jnp.bfloat16).astype(jnp.float32)


def grasp_head_reference(x_nchw, params):
    x = jnp.transpose(x_nchw, (0, 2, 3, 1))
    outs = []
    for branch in BRANCHES:
        hcur = x
        for w, b in params[branch]["convs"]:
            hcur = jax.lax.conv_general_dilated(
                _as_bf16(hcur), _as_bf16(w), window_strides=(1, 1),
                padding="SAME",
                dimension_numbers=("NHWC", "HWIO", "NHWC")) + b
            hcur = jnp.maximum(hcur, 0.0)
        wl, bl = params[branch]["logits"]
        hcur = jnp.einsum("nhwc,cd->nhwd", _as_bf16(hcur), _as_bf16(wl)) + bl
        # kernel stores its logits in bf16
        hcur = hcur.astype(jnp.bfloat16).astype(jnp.float32)
        outs.append(jnp.transpose(hcur, (0, 3, 1, 2)))
    return tuple(outs)


# --------------------------------- main -------------------------------------- #

if __name__ == "__main__":
    key = jax.random.PRNGKey(0)
    fwd = jax.jit(grasp_head_forward)

    configs = [
        # small demo (block-diagonal small-Co path)
        dict(batch=2, in_channels=32, conv_out_channels=32, num_convs=2, roi=14),
        # Co % 128 == 0 exercises the compact per-branch weight path + batch pad
        dict(batch=3, in_channels=128, conv_out_channels=128, num_convs=2,
             roi=14),
    ]

    for ci, cfg in enumerate(configs):
        kx, kp, key = jax.random.split(key, 3)
        x = jax.random.normal(
            kx, (cfg["batch"], cfg["in_channels"], cfg["roi"], cfg["roi"]),
            jnp.float32)
        params = init_grasp_head_params(kp, cfg["num_convs"],
                                        cfg["in_channels"],
                                        cfg["conv_out_channels"])
        packed = pack_grasp_head_params(params)   # one-time packing, outside jit

        qual, quat, width, depth = jax.block_until_ready(fwd(x, packed))

        b, roi = cfg["batch"], cfg["roi"]
        assert qual.shape == (b, 1, roi, roi)
        assert quat.shape == (b, 4, roi, roi)
        assert width.shape == (b, 1, roi, roi)
        assert depth.shape == (b, 1, roi, roi)

        # numerical check against a bf16-matmul XLA reference (tolerance loose
        # because both sides intentionally use bf16 MXU inputs + bf16 logits).
        ref = grasp_head_reference(x, params)
        for got, want in zip((qual, quat, width, depth), ref):
            err = float(jnp.max(jnp.abs(got - want)))
            assert jnp.allclose(got, want, atol=3e-2, rtol=3e-2), (
                f"config {ci}: mismatch vs reference (max abs err {err})")

    print("KERNEL_OK")
</pallas_src>

<mosaic_0001>
module attributes {stable_mosaic.version = 11 : i64} {
  func.func @_grasp_head_kernel(%arg0: i32, %arg1: memref<320x32xbf16, #tpu.memory_space<vmem>>, %arg2: memref<256x1xf32, #tpu.memory_space<vmem>>, %arg3: memref<9x32x128xbf16, #tpu.memory_space<vmem>>, %arg4: memref<1x128xf32, #tpu.memory_space<vmem>>, %arg5: memref<9x128x128xbf16, #tpu.memory_space<vmem>>, %arg6: memref<1x128xf32, #tpu.memory_space<vmem>>, %arg7: memref<128x128xbf16, #tpu.memory_space<vmem>>, %arg8: memref<1x128xf32, #tpu.memory_space<vmem>>, %arg9: memref<256x128xbf16, #tpu.memory_space<vmem>>, %arg10: memref<320x128xbf16, #tpu.memory_space<vmem>>, %arg11: memref<256x128xf32, #tpu.memory_space<vmem>>) attributes {dimension_semantics = [#tpu.dimension_semantics<parallel>], iteration_bounds = array<i64: 2>, scalar_prefetch = 0 : i64, scratch_operands = 2 : i64, tpu.core_type = #tpu.core_type<tc>, window_params = [{transform_indices = @transform_0, window_bounds = array<i64: 320, 32>}, {pipeline_mode = #tpu.pipeline_mode<synchronous>, transform_indices = @transform_1, window_bounds = array<i64: 256, 1>}, {pipeline_mode = #tpu.pipeline_mode<synchronous>, transform_indices = @transform_2, window_bounds = array<i64: 9, 32, 128>}, {pipeline_mode = #tpu.pipeline_mode<synchronous>, transform_indices = @transform_3, window_bounds = array<i64: 1, 128>}, {pipeline_mode = #tpu.pipeline_mode<synchronous>, transform_indices = @transform_4, window_bounds = array<i64: 9, 128, 128>}, {pipeline_mode = #tpu.pipeline_mode<synchronous>, transform_indices = @transform_5, window_bounds = array<i64: 1, 128>}, {pipeline_mode = #tpu.pipeline_mode<synchronous>, transform_indices = @transform_6, window_bounds = array<i64: 128, 128>}, {pipeline_mode = #tpu.pipeline_mode<synchronous>, transform_indices = @transform_7, window_bounds = array<i64: 1, 128>}, {transform_indices = @transform_8, window_bounds = array<i64: 256, 128>}]} {
    %c0 = arith.constant 0 : index
    %c0_0 = arith.constant 0 : index
    %0 = vector.load %arg2[%c0, %c0_0] : memref<256x1xf32, #tpu.memory_space<vmem>>, vector<256x1xf32>
    %cst = arith.constant 0.000000e+00 : f32
    %1 = vector.broadcast %cst : f32 to vector<256x1xf32>
    %2 = arith.cmpf ogt, %0, %1 : vector<256x1xf32>
    %cst_1 = arith.constant 0.000000e+00 : bf16
    %3 = vector.broadcast %cst_1 : bf16 to vector<32x128xbf16>
    %c0_2 = arith.constant 0 : index
    %c0_3 = arith.constant 0 : index
    %4 = vector.load %arg10[%c0_2, %c0_3] : memref<320x128xbf16, #tpu.memory_space<vmem>>, vector<32x128xbf16>
    tpu.vector_store %arg10[%c0_2, %c0_3], %3 {strides = array<i32>} : memref<320x128xbf16, #tpu.memory_space<vmem>>, vector<32x128xbf16>,
    %c288 = arith.constant 288 : index
    %c0_4 = arith.constant 0 : index
    %5 = vector.load %arg10[%c288, %c0_4] : memref<320x128xbf16, #tpu.memory_space<vmem>>, vector<32x128xbf16>
    tpu.vector_store %arg10[%c288, %c0_4], %3 {strides = array<i32>} : memref<320x128xbf16, #tpu.memory_space<vmem>>, vector<32x128xbf16>,
    %c15 = arith.constant 15 : index
    %c0_5 = arith.constant 0 : index
    %6 = vector.load %arg1[%c15, %c0_5] : memref<320x32xbf16, #tpu.memory_space<vmem>>, vector<256x32xbf16>
    %c0_6 = arith.constant 0 : index
    %c0_7 = arith.constant 0 : index
    %c0_8 = arith.constant 0 : index
    %7 = vector.load %arg3[%c0_6, %c0_7, %c0_8] : memref<9x32x128xbf16, #tpu.memory_space<vmem>>, vector<1x32x128xbf16>
    %8 = vector.shape_cast %7 : vector<1x32x128xbf16> to vector<32x128xbf16>
    %cst_9 = arith.constant dense<0.000000e+00> : vector<256x128xf32>
    %9 = tpu.matmul %6, %8, %cst_9 {dimension_numbers = #tpu.dot_dimension_numbers<[1], [0], [0], [1], [0, 0, 1, 1], [], []>} : vector<256x32xbf16>, vector<32x128xbf16>, vector<256x128xf32> -> vector<256x128xf32>
    %c0_10 = arith.constant 0 : index
    %c0_11 = arith.constant 0 : index
    %10 = vector.load %arg11[%c0_10, %c0_11] : memref<256x128xf32, #tpu.memory_space<vmem>>, vector<256x128xf32>
    tpu.vector_store %arg11[%c0_10, %c0_11], %9 {strides = array<i32>} : memref<256x128xf32, #tpu.memory_space<vmem>>, vector<256x128xf32>,
    %c16 = arith.constant 16 : index
    %c0_12 = arith.constant 0 : index
    %11 = vector.load %arg1[%c16, %c0_12] : memref<320x32xbf16, #tpu.memory_space<vmem>>, vector<256x32xbf16>
    %c1 = arith.constant 1 : index
    %c0_13 = arith.constant 0 : index
    %c0_14 = arith.constant 0 : index
    %12 = vector.load %arg3[%c1, %c0_13, %c0_14] : memref<9x32x128xbf16, #tpu.memory_space<vmem>>, vector<1x32x128xbf16>
    %13 = vector.shape_cast %12 : vector<1x32x128xbf16> to vector<32x128xbf16>
    %cst_15 = arith.constant dense<0.000000e+00> : vector<256x128xf32>
    %14 = tpu.matmul %11, %13, %cst_15 {dimension_numbers = #tpu.dot_dimension_numbers<[1], [0], [0], [1], [0, 0, 1, 1], [], []>} : vector<256x32xbf16>, vector<32x128xbf16>, vector<256x128xf32> -> vector<256x128xf32>
    %c0_16 = arith.constant 0 : index
    %c0_17 = arith.constant 0 : index
    %15 = vector.load %arg11[%c0_16, %c0_17] : memref<256x128xf32, #tpu.memory_space<vmem>>, vector<256x128xf32>
    %16 = arith.addf %15, %14 : vector<256x128xf32>
    %c0_18 = arith.constant 0 : index
    %c0_19 = arith.constant 0 : index
    %17 = vector.load %arg11[%c0_18, %c0_19] : memref<256x128xf32, #tpu.memory_space<vmem>>, vector<256x128xf32>
    tpu.vector_store %arg11[%c0_18, %c0_19], %16 {strides = array<i32>} : memref<256x128xf32, #tpu.memory_space<vmem>>, vector<256x128xf32>,
    %c17 = arith.constant 17 : index
    %c0_20 = arith.constant 0 : index
    %18 = vector.load %arg1[%c17, %c0_20] : memref<320x32xbf16, #tpu.memory_space<vmem>>, vector<256x32xbf16>
    %c2 = arith.constant 2 : index
    %c0_21 = arith.constant 0 : index
    %c0_22 = arith.constant 0 : index
    %19 = vector.load %arg3[%c2, %c0_21, %c0_22] : memref<9x32x128xbf16, #tpu.memory_space<vmem>>, vector<1x32x128xbf16>
    %20 = vector.shape_cast %19 : vector<1x32x128xbf16> to vector<32x128xbf16>
    %cst_23 = arith.constant dense<0.000000e+00> : vector<256x128xf32>
    %21 = tpu.matmul %18, %20, %cst_23 {dimension_numbers = #tpu.dot_dimension_numbers<[1], [0], [0], [1], [0, 0, 1, 1], [], []>} : vector<256x32xbf16>, vector<32x128xbf16>, vector<256x128xf32> -> vector<256x128xf32>
    %c0_24 = arith.constant 0 : index
    %c0_25 = arith.constant 0 : index
    %22 = vector.load %arg11[%c0_24, %c0_25] : memref<256x128xf32, #tpu.memory_space<vmem>>, vector<256x128xf32>
    %23 = arith.addf %22, %21 : vector<256x128xf32>
    %c0_26 = arith.constant 0 : index
    %c0_27 = arith.constant 0 : index
    %24 = vector.load %arg11[%c0_26, %c0_27] : memref<256x128xf32, #tpu.memory_space<vmem>>, vector<256x128xf32>
    tpu.vector_store %arg11[%c0_26, %c0_27], %23 {strides = array<i32>} : memref<256x128xf32, #tpu.memory_space<vmem>>, vector<256x128xf32>,
    %c31 = arith.constant 31 : index
    %c0_28 = arith.constant 0 : index
    %25 = vector.load %arg1[%c31, %c0_28] : memref<320x32xbf16, #tpu.memory_space<vmem>>, vector<256x32xbf16>
    %c3 = arith.constant 3 : index
    %c0_29 = arith.constant 0 : index
    %c0_30 = arith.constant 0 : index
    %26 = vector.load %arg3[%c3, %c0_29, %c0_30] : memref<9x32x128xbf16, #tpu.memory_space<vmem>>, vector<1x32x128xbf16>
    %27 = vector.shape_cast %26 : vector<1x32x128xbf16> to vector<32x128xbf16>
    %cst_31 = arith.constant dense<0.000000e+00> : vector<256x128xf32>
    %28 = tpu.matmul %25, %27, %cst_31 {dimension_numbers = #tpu.dot_dimension_numbers<[1], [0], [0], [1], [0, 0, 1, 1], [], []>} : vector<256x32xbf16>, vector<32x128xbf16>, vector<256x128xf32> -> vector<256x128xf32>
    %c0_32 = arith.constant 0 : index
    %c0_33 = arith.constant 0 : index
    %29 = vector.load %arg11[%c0_32, %c0_33] : memref<256x128xf32, #tpu.memory_space<vmem>>, vector<256x128xf32>
    %30 = arith.addf %29, %28 : vector<256x128xf32>
    %c0_34 = arith.constant 0 : index
    %c0_35 = arith.constant 0 : index
    %31 = vector.load %arg11[%c0_34, %c0_35] : memref<256x128xf32, #tpu.memory_space<vmem>>, vector<256x128xf32>
    tpu.vector_store %arg11[%c0_34, %c0_35], %30 {strides = array<i32>} : memref<256x128xf32, #tpu.memory_space<vmem>>, vector<256x128xf32>,
    %c32 = arith.constant 32 : index
    %c0_36 = arith.constant 0 : index
    %32 = vector.load %arg1[%c32, %c0_36] : memref<320x32xbf16, #tpu.memory_space<vmem>>, vector<256x32xbf16>
    %c4 = arith.constant 4 : index
    %c0_37 = arith.constant 0 : index
    %c0_38 = arith.constant 0 : index
    %33 = vector.load %arg3[%c4, %c0_37, %c0_38] : memref<9x32x128xbf16, #tpu.memory_space<vmem>>, vector<1x32x128xbf16>
    %34 = vector.shape_cast %33 : vector<1x32x128xbf16> to vector<32x128xbf16>
    %cst_39 = arith.constant dense<0.000000e+00> : vector<256x128xf32>
    %35 = tpu.matmul %32, %34, %cst_39 {dimension_numbers = #tpu.dot_dimension_numbers<[1], [0], [0], [1], [0, 0, 1, 1], [], []>} : vector<256x32xbf16>, vector<32x128xbf16>, vector<256x128xf32> -> vector<256x128xf32>
    %c0_40 = arith.constant 0 : index
    %c0_41 = arith.constant 0 : index
    %36 = vector.load %arg11[%c0_40, %c0_41] : memref<256x128xf32, #tpu.memory_space<vmem>>, vector<256x128xf32>
    %37 = arith.addf %36, %35 : vector<256x128xf32>
    %c0_42 = arith.constant 0 : index
    %c0_43 = arith.constant 0 : index
    %38 = vector.load %arg11[%c0_42, %c0_43] : memref<256x128xf32, #tpu.memory_space<vmem>>, vector<256x128xf32>
    tpu.vector_store %arg11[%c0_42, %c0_43], %37 {strides = array<i32>} : memref<256x128xf32, #tpu.memory_space<vmem>>, vector<256x128xf32>,
    %c33 = arith.constant 33 : index
    %c0_44 = arith.constant 0 : index
    %39 = vector.load %arg1[%c33, %c0_44] : memref<320x32xbf16, #tpu.memory_space<vmem>>, vector<256x32xbf16>
    %c5 = arith.constant 5 : index
    %c0_45 = arith.constant 0 : index
    %c0_46 = arith.constant 0 : index
    %40 = vector.load %arg3[%c5, %c0_45, %c0_46] : memref<9x32x128xbf16, #tpu.memory_space<vmem>>, vector<1x32x128xbf16>
    %41 = vector.shape_cast %40 : vector<1x32x128xbf16> to vector<32x128xbf16>
    %cst_47 = arith.constant dense<0.000000e+00> : vector<256x128xf32>
    %42 = tpu.matmul %39, %41, %cst_47 {dimension_numbers = #tpu.dot_dimension_numbers<[1], [0], [0], [1], [0, 0, 1, 1], [], []>} : vector<256x32xbf16>, vector<32x128xbf16>, vector<256x128xf32> -> vector<256x128xf32>
    %c0_48 = arith.constant 0 : index
    %c0_49 = arith.constant 0 : index
    %43 = vector.load %arg11[%c0_48, %c0_49] : memref<256x128xf32, #tpu.memory_space<vmem>>, vector<256x128xf32>
    %44 = arith.addf %43, %42 : vector<256x128xf32>
    %c0_50 = arith.constant 0 : index
    %c0_51 = arith.constant 0 : index
    %45 = vector.load %arg11[%c0_50, %c0_51] : memref<256x128xf32, #tpu.memory_space<vmem>>, vector<256x128xf32>
    tpu.vector_store %arg11[%c0_50, %c0_51], %44 {strides = array<i32>} : memref<256x128xf32, #tpu.memory_space<vmem>>, vector<256x128xf32>,
    %c47 = arith.constant 47 : index
    %c0_52 = arith.constant 0 : index
    %46 = vector.load %arg1[%c47, %c0_52] : memref<320x32xbf16, #tpu.memory_space<vmem>>, vector<256x32xbf16>
    %c6 = arith.constant 6 : index
    %c0_53 = arith.constant 0 : index
    %c0_54 = arith.constant 0 : index
    %47 = vector.load %arg3[%c6, %c0_53, %c0_54] : memref<9x32x128xbf16, #tpu.memory_space<vmem>>, vector<1x32x128xbf16>
    %48 = vector.shape_cast %47 : vector<1x32x128xbf16> to vector<32x128xbf16>
    %cst_55 = arith.constant dense<0.000000e+00> : vector<256x128xf32>
    %49 = tpu.matmul %46, %48, %cst_55 {dimension_numbers = #tpu.dot_dimension_numbers<[1], [0], [0], [1], [0, 0, 1, 1], [], []>} : vector<256x32xbf16>, vector<32x128xbf16>, vector<256x128xf32> -> vector<256x128xf32>
    %c0_56 = arith.constant 0 : index
    %c0_57 = arith.constant 0 : index
    %50 = vector.load %arg11[%c0_56, %c0_57] : memref<256x128xf32, #tpu.memory_space<vmem>>, vector<256x128xf32>
    %51 = arith.addf %50, %49 : vector<256x128xf32>
    %c0_58 = arith.constant 0 : index
    %c0_59 = arith.constant 0 : index
    %52 = vector.load %arg11[%c0_58, %c0_59] : memref<256x128xf32, #tpu.memory_space<vmem>>, vector<256x128xf32>
    tpu.vector_store %arg11[%c0_58, %c0_59], %51 {strides = array<i32>} : memref<256x128xf32, #tpu.memory_space<vmem>>, vector<256x128xf32>,
    %c48 = arith.constant 48 : index
    %c0_60 = arith.constant 0 : index
    %53 = vector.load %arg1[%c48, %c0_60] : memref<320x32xbf16, #tpu.memory_space<vmem>>, vector<256x32xbf16>
    %c7 = arith.constant 7 : index
    %c0_61 = arith.constant 0 : index
    %c0_62 = arith.constant 0 : index
    %54 = vector.load %arg3[%c7, %c0_61, %c0_62] : memref<9x32x128xbf16, #tpu.memory_space<vmem>>, vector<1x32x128xbf16>
    %55 = vector.shape_cast %54 : vector<1x32x128xbf16> to vector<32x128xbf16>
    %cst_63 = arith.constant dense<0.000000e+00> : vector<256x128xf32>
    %56 = tpu.matmul %53, %55, %cst_63 {dimension_numbers = #tpu.dot_dimension_numbers<[1], [0], [0], [1], [0, 0, 1, 1], [], []>} : vector<256x32xbf16>, vector<32x128xbf16>, vector<256x128xf32> -> vector<256x128xf32>
    %c0_64 = arith.constant 0 : index
    %c0_65 = arith.constant 0 : index
    %57 = vector.load %arg11[%c0_64, %c0_65] : memref<256x128xf32, #tpu.memory_space<vmem>>, vector<256x128xf32>
    %58 = arith.addf %57, %56 : vector<256x128xf32>
    %c0_66 = arith.constant 0 : index
    %c0_67 = arith.constant 0 : index
    %59 = vector.load %arg11[%c0_66, %c0_67] : memref<256x128xf32, #tpu.memory_space<vmem>>, vector<256x128xf32>
    tpu.vector_store %arg11[%c0_66, %c0_67], %58 {strides = array<i32>} : memref<256x128xf32, #tpu.memory_space<vmem>>, vector<256x128xf32>,
    %c49 = arith.constant 49 : index
    %c0_68 = arith.constant 0 : index
    %60 = vector.load %arg1[%c49, %c0_68] : memref<320x32xbf16, #tpu.memory_space<vmem>>, vector<256x32xbf16>
    %c8 = arith.constant 8 : index
    %c0_69 = arith.constant 0 : index
    %c0_70 = arith.constant 0 : index
    %61 = vector.load %arg3[%c8, %c0_69, %c0_70] : memref<9x32x128xbf16, #tpu.memory_space<vmem>>, vector<1x32x128xbf16>
    %62 = vector.shape_cast %61 : vector<1x32x128xbf16> to vector<32x128xbf16>
    %cst_71 = arith.constant dense<0.000000e+00> : vector<256x128xf32>
    %63 = tpu.matmul %60, %62, %cst_71 {dimension_numbers = #tpu.dot_dimension_numbers<[1], [0], [0], [1], [0, 0, 1, 1], [], []>} : vector<256x32xbf16>, vector<32x128xbf16>, vector<256x128xf32> -> vector<256x128xf32>
    %c0_72 = arith.constant 0 : index
    %c0_73 = arith.constant 0 : index
    %64 = vector.load %arg11[%c0_72, %c0_73] : memref<256x128xf32, #tpu.memory_space<vmem>>, vector<256x128xf32>
    %65 = arith.addf %64, %63 : vector<256x128xf32>
    %c0_74 = arith.constant 0 : index
    %c0_75 = arith.constant 0 : index
    %66 = vector.load %arg11[%c0_74, %c0_75] : memref<256x128xf32, #tpu.memory_space<vmem>>, vector<256x128xf32>
    tpu.vector_store %arg11[%c0_74, %c0_75], %65 {strides = array<i32>} : memref<256x128xf32, #tpu.memory_space<vmem>>, vector<256x128xf32>,
    %c0_76 = arith.constant 0 : index
    %c0_77 = arith.constant 0 : index
    %67 = vector.load %arg11[%c0_76, %c0_77] : memref<256x128xf32, #tpu.memory_space<vmem>>, vector<256x128xf32>
    %c0_78 = arith.constant 0 : index
    %c0_79 = arith.constant 0 : index
    %68 = vector.load %arg4[%c0_78, %c0_79] : memref<1x128xf32, #tpu.memory_space<vmem>>, vector<1x128xf32>
    %69 = vector.broadcast %68 : vector<1x128xf32> to vector<256x128xf32>
    %70 = arith.addf %67, %69 : vector<256x128xf32>
    %cst_80 = arith.constant 0.000000e+00 : f32
    %71 = vector.broadcast %cst_80 : f32 to vector<256x128xf32>
    %72 = arith.maximumf %70, %71 : vector<256x128xf32>
    %cst_81 = arith.constant 0.000000e+00 : f32
    %73 = vector.shape_cast %2 : vector<256x1xi1> to vector<256x1xi1>
    %74 = vector.broadcast %73 : vector<256x1xi1> to vector<256x128xi1>
    %75 = vector.broadcast %cst_81 : f32 to vector<256x128xf32>
    %76 = arith.select %74, %72, %75 : vector<256x128xi1>, vector<256x128xf32>
    %77 = arith.truncf %76 : vector<256x128xf32> to vector<256x128xbf16>
    %c32_82 = arith.constant 32 : index
    %c0_83 = arith.constant 0 : index
    %78 = vector.load %arg10[%c32_82, %c0_83] : memref<320x128xbf16, #tpu.memory_space<vmem>>, vector<256x128xbf16>
    tpu.vector_store %arg10[%c32_82, %c0_83], %77 {strides = array<i32>} : memref<320x128xbf16, #tpu.memory_space<vmem>>, vector<256x128xbf16>,
    %c15_84 = arith.constant 15 : index
    %c0_85 = arith.constant 0 : index
    %79 = vector.load %arg10[%c15_84, %c0_85] : memref<320x128xbf16, #tpu.memory_space<vmem>>, vector<256x128xbf16>
    %c0_86 = arith.constant 0 : index
    %c0_87 = arith.constant 0 : index
    %c0_88 = arith.constant 0 : index
    %80 = vector.load %arg5[%c0_86, %c0_87, %c0_88] : memref<9x128x128xbf16, #tpu.memory_space<vmem>>, vector<1x128x128xbf16>
    %81 = vector.shape_cast %80 : vector<1x128x128xbf16> to vector<128x128xbf16>
    %cst_89 = arith.constant dense<0.000000e+00> : vector<256x128xf32>
    %82 = tpu.matmul %79, %81, %cst_89 {dimension_numbers = #tpu.dot_dimension_numbers<[1], [0], [0], [1], [0, 0, 1, 1], [], []>} : vector<256x128xbf16>, vector<128x128xbf16>, vector<256x128xf32> -> vector<256x128xf32>
    %c0_90 = arith.constant 0 : index
    %c0_91 = arith.constant 0 : index
    %83 = vector.load %arg11[%c0_90, %c0_91] : memref<256x128xf32, #tpu.memory_space<vmem>>, vector<256x128xf32>
    tpu.vector_store %arg11[%c0_90, %c0_91], %82 {strides = array<i32>} : memref<256x128xf32, #tpu.memory_space<vmem>>, vector<256x128xf32>,
    %c16_92 = arith.constant 16 : index
    %c0_93 = arith.constant 0 : index
    %84 = vector.load %arg10[%c16_92, %c0_93] : memref<320x128xbf16, #tpu.memory_space<vmem>>, vector<256x128xbf16>
    %c1_94 = arith.constant 1 : index
    %c0_95 = arith.constant 0 : index
    %c0_96 = arith.constant 0 : index
    %85 = vector.load %arg5[%c1_94, %c0_95, %c0_96] : memref<9x128x128xbf16, #tpu.memory_space<vmem>>, vector<1x128x128xbf16>
    %86 = vector.shape_cast %85 : vector<1x128x128xbf16> to vector<128x128xbf16>
    %cst_97 = arith.constant dense<0.000000e+00> : vector<256x128xf32>
    %87 = tpu.matmul %84, %86, %cst_97 {dimension_numbers = #tpu.dot_dimension_numbers<[1], [0], [0], [1], [0, 0, 1, 1], [], []>} : vector<256x128xbf16>, vector<128x128xbf16>, vector<256x128xf32> -> vector<256x128xf32>
    %c0_98 = arith.constant 0 : index
    %c0_99 = arith.constant 0 : index
    %88 = vector.load %arg11[%c0_98, %c0_99] : memref<256x128xf32, #tpu.memory_space<vmem>>, vector<256x128xf32>
    %89 = arith.addf %88, %87 : vector<256x128xf32>
    %c0_100 = arith.constant 0 : index
    %c0_101 = arith.constant 0 : index
    %90 = vector.load %arg11[%c0_100, %c0_101] : memref<256x128xf32, #tpu.memory_space<vmem>>, vector<256x128xf32>
    tpu.vector_store %arg11[%c0_100, %c0_101], %89 {strides = array<i32>} : memref<256x128xf32, #tpu.memory_space<vmem>>, vector<256x128xf32>,
    %c17_102 = arith.constant 17 : index
    %c0_103 = arith.constant 0 : index
    %91 = vector.load %arg10[%c17_102, %c0_103] : memref<320x128xbf16, #tpu.memory_space<vmem>>, vector<256x128xbf16>
    %c2_104 = arith.constant 2 : index
    %c0_105 = arith.constant 0 : index
    %c0_106 = arith.constant 0 : index
    %92 = vector.load %arg5[%c2_104, %c0_105, %c0_106] : memref<9x128x128xbf16, #tpu.memory_space<vmem>>, vector<1x128x128xbf16>
    %93 = vector.shape_cast %92 : vector<1x128x128xbf16> to vector<128x128xbf16>
    %cst_107 = arith.constant dense<0.000000e+00> : vector<256x128xf32>
    %94 = tpu.matmul %91, %93, %cst_107 {dimension_numbers = #tpu.dot_dimension_numbers<[1], [0], [0], [1], [0, 0, 1, 1], [], []>} : vector<256x128xbf16>, vector<128x128xbf16>, vector<256x128xf32> -> vector<256x128xf32>
    %c0_108 = arith.constant 0 : index
    %c0_109 = arith.constant 0 : index
    %95 = vector.load %arg11[%c0_108, %c0_109] : memref<256x128xf32, #tpu.memory_space<vmem>>, vector<256x128xf32>
    %96 = arith.addf %95, %94 : vector<256x128xf32>
    %c0_110 = arith.constant 0 : index
    %c0_111 = arith.constant 0 : index
    %97 = vector.load %arg11[%c0_110, %c0_111] : memref<256x128xf32, #tpu.memory_space<vmem>>, vector<256x128xf32>
    tpu.vector_store %arg11[%c0_110, %c0_111], %96 {strides = array<i32>} : memref<256x128xf32, #tpu.memory_space<vmem>>, vector<256x128xf32>,
    %c31_112 = arith.constant 31 : index
    %c0_113 = arith.constant 0 : index
    %98 = vector.load %arg10[%c31_112, %c0_113] : memref<320x128xbf16, #tpu.memory_space<vmem>>, vector<256x128xbf16>
    %c3_114 = arith.constant 3 : index
    %c0_115 = arith.constant 0 : index
    %c0_116 = arith.constant 0 : index
    %99 = vector.load %arg5[%c3_114, %c0_115, %c0_116] : memref<9x128x128xbf16, #tpu.memory_space<vmem>>, vector<1x128x128xbf16>
    %100 = vector.shape_cast %99 : vector<1x128x128xbf16> to vector<128x128xbf16>
    %cst_117 = arith.constant dense<0.000000e+00> : vector<256x128xf32>
    %101 = tpu.matmul %98, %100, %cst_117 {dimension_numbers = #tpu.dot_dimension_numbers<[1], [0], [0], [1], [0, 0, 1, 1], [], []>} : vector<256x128xbf16>, vector<128x128xbf16>, vector<256x128xf32> -> vector<256x128xf32>
    %c0_118 = arith.constant 0 : index
    %c0_119 = arith.constant 0 : index
    %102 = vector.load %arg11[%c0_118, %c0_119] : memref<256x128xf32, #tpu.memory_space<vmem>>, vector<256x128xf32>
    %103 = arith.addf %102, %101 : vector<256x128xf32>
    %c0_120 = arith.constant 0 : index
    %c0_121 = arith.constant 0 : index
    %104 = vector.load %arg11[%c0_120, %c0_121] : memref<256x128xf32, #tpu.memory_space<vmem>>, vector<256x128xf32>
    tpu.vector_store %arg11[%c0_120, %c0_121], %103 {strides = array<i32>} : memref<256x128xf32, #tpu.memory_space<vmem>>, vector<256x128xf32>,
    %c32_122 = arith.constant 32 : index
    %c0_123 = arith.constant 0 : index
    %105 = vector.load %arg10[%c32_122, %c0_123] : memref<320x128xbf16, #tpu.memory_space<vmem>>, vector<256x128xbf16>
    %c4_124 = arith.constant 4 : index
    %c0_125 = arith.constant 0 : index
    %c0_126 = arith.constant 0 : index
    %106 = vector.load %arg5[%c4_124, %c0_125, %c0_126] : memref<9x128x128xbf16, #tpu.memory_space<vmem>>, vector<1x128x128xbf16>
    %107 = vector.shape_cast %106 : vector<1x128x128xbf16> to vector<128x128xbf16>
    %cst_127 = arith.constant dense<0.000000e+00> : vector<256x128xf32>
    %108 = tpu.matmul %105, %107, %cst_127 {dimension_numbers = #tpu.dot_dimension_numbers<[1], [0], [0], [1], [0, 0, 1, 1], [], []>} : vector<256x128xbf16>, vector<128x128xbf16>, vector<256x128xf32> -> vector<256x128xf32>
    %c0_128 = arith.constant 0 : index
    %c0_129 = arith.constant 0 : index
    %109 = vector.load %arg11[%c0_128, %c0_129] : memref<256x128xf32, #tpu.memory_space<vmem>>, vector<256x128xf32>
    %110 = arith.addf %109, %108 : vector<256x128xf32>
    %c0_130 = arith.constant 0 : index
    %c0_131 = arith.constant 0 : index
    %111 = vector.load %arg11[%c0_130, %c0_131] : memref<256x128xf32, #tpu.memory_space<vmem>>, vector<256x128xf32>
    tpu.vector_store %arg11[%c0_130, %c0_131], %110 {strides = array<i32>} : memref<256x128xf32, #tpu.memory_space<vmem>>, vector<256x128xf32>,
    %c33_132 = arith.constant 33 : index
    %c0_133 = arith.constant 0 : index
    %112 = vector.load %arg10[%c33_132, %c0_133] : memref<320x128xbf16, #tpu.memory_space<vmem>>, vector<256x128xbf16>
    %c5_134 = arith.constant 5 : index
    %c0_135 = arith.constant 0 : index
    %c0_136 = arith.constant 0 : index
    %113 = vector.load %arg5[%c5_134, %c0_135, %c0_136] : memref<9x128x128xbf16, #tpu.memory_space<vmem>>, vector<1x128x128xbf16>
    %114 = vector.shape_cast %113 : vector<1x128x128xbf16> to vector<128x128xbf16>
    %cst_137 = arith.constant dense<0.000000e+00> : vector<256x128xf32>
    %115 = tpu.matmul %112, %114, %cst_137 {dimension_numbers = #tpu.dot_dimension_numbers<[1], [0], [0], [1], [0, 0, 1, 1], [], []>} : vector<256x128xbf16>, vector<128x128xbf16>, vector<256x128xf32> -> vector<256x128xf32>
    %c0_138 = arith.constant 0 : index
    %c0_139 = arith.constant 0 : index
    %116 = vector.load %arg11[%c0_138, %c0_139] : memref<256x128xf32, #tpu.memory_space<vmem>>, vector<256x128xf32>
    %117 = arith.addf %116, %115 : vector<256x128xf32>
    %c0_140 = arith.constant 0 : index
    %c0_141 = arith.constant 0 : index
    %118 = vector.load %arg11[%c0_140, %c0_141] : memref<256x128xf32, #tpu.memory_space<vmem>>, vector<256x128xf32>
    tpu.vector_store %arg11[%c0_140, %c0_141], %117 {strides = array<i32>} : memref<256x128xf32, #tpu.memory_space<vmem>>, vector<256x128xf32>,
    %c47_142 = arith.constant 47 : index
    %c0_143 = arith.constant 0 : index
    %119 = vector.load %arg10[%c47_142, %c0_143] : memref<320x128xbf16, #tpu.memory_space<vmem>>, vector<256x128xbf16>
    %c6_144 = arith.constant 6 : index
    %c0_145 = arith.constant 0 : index
    %c0_146 = arith.constant 0 : index
    %120 = vector.load %arg5[%c6_144, %c0_145, %c0_146] : memref<9x128x128xbf16, #tpu.memory_space<vmem>>, vector<1x128x128xbf16>
    %121 = vector.shape_cast %120 : vector<1x128x128xbf16> to vector<128x128xbf16>
    %cst_147 = arith.constant dense<0.000000e+00> : vector<256x128xf32>
    %122 = tpu.matmul %119, %121, %cst_147 {dimension_numbers = #tpu.dot_dimension_numbers<[1], [0], [0], [1], [0, 0, 1, 1], [], []>} : vector<256x128xbf16>, vector<128x128xbf16>, vector<256x128xf32> -> vector<256x128xf32>
    %c0_148 = arith.constant 0 : index
    %c0_149 = arith.constant 0 : index
    %123 = vector.load %arg11[%c0_148, %c0_149] : memref<256x128xf32, #tpu.memory_space<vmem>>, vector<256x128xf32>
    %124 = arith.addf %123, %122 : vector<256x128xf32>
    %c0_150 = arith.constant 0 : index
    %c0_151 = arith.constant 0 : index
    %125 = vector.load %arg11[%c0_150, %c0_151] : memref<256x128xf32, #tpu.memory_space<vmem>>, vector<256x128xf32>
    tpu.vector_store %arg11[%c0_150, %c0_151], %124 {strides = array<i32>} : memref<256x128xf32, #tpu.memory_space<vmem>>, vector<256x128xf32>,
    %c48_152 = arith.constant 48 : index
    %c0_153 = arith.constant 0 : index
    %126 = vector.load %arg10[%c48_152, %c0_153] : memref<320x128xbf16, #tpu.memory_space<vmem>>, vector<256x128xbf16>
    %c7_154 = arith.constant 7 : index
    %c0_155 = arith.constant 0 : index
    %c0_156 = arith.constant 0 : index
    %127 = vector.load %arg5[%c7_154, %c0_155, %c0_156] : memref<9x128x128xbf16, #tpu.memory_space<vmem>>, vector<1x128x128xbf16>
    %128 = vector.shape_cast %127 : vector<1x128x128xbf16> to vector<128x128xbf16>
    %cst_157 = arith.constant dense<0.000000e+00> : vector<256x128xf32>
    %129 = tpu.matmul %126, %128, %cst_157 {dimension_numbers = #tpu.dot_dimension_numbers<[1], [0], [0], [1], [0, 0, 1, 1], [], []>} : vector<256x128xbf16>, vector<128x128xbf16>, vector<256x128xf32> -> vector<256x128xf32>
    %c0_158 = arith.constant 0 : index
    %c0_159 = arith.constant 0 : index
    %130 = vector.load %arg11[%c0_158, %c0_159] : memref<256x128xf32, #tpu.memory_space<vmem>>, vector<256x128xf32>
    %131 = arith.addf %130, %129 : vector<256x128xf32>
    %c0_160 = arith.constant 0 : index
    %c0_161 = arith.constant 0 : index
    %132 = vector.load %arg11[%c0_160, %c0_161] : memref<256x128xf32, #tpu.memory_space<vmem>>, vector<256x128xf32>
    tpu.vector_store %arg11[%c0_160, %c0_161], %131 {strides = array<i32>} : memref<256x128xf32, #tpu.memory_space<vmem>>, vector<256x128xf32>,
    %c49_162 = arith.constant 49 : index
    %c0_163 = arith.constant 0 : index
    %133 = vector.load %arg10[%c49_162, %c0_163] : memref<320x128xbf16, #tpu.memory_space<vmem>>, vector<256x128xbf16>
    %c8_164 = arith.constant 8 : index
    %c0_165 = arith.constant 0 : index
    %c0_166 = arith.constant 0 : index
    %134 = vector.load %arg5[%c8_164, %c0_165, %c0_166] : memref<9x128x128xbf16, #tpu.memory_space<vmem>>, vector<1x128x128xbf16>
    %135 = vector.shape_cast %134 : vector<1x128x128xbf16> to vector<128x128xbf16>
    %cst_167 = arith.constant dense<0.000000e+00> : vector<256x128xf32>
    %136 = tpu.matmul %133, %135, %cst_167 {dimension_numbers = #tpu.dot_dimension_numbers<[1], [0], [0], [1], [0, 0, 1, 1], [], []>} : vector<256x128xbf16>, vector<128x128xbf16>, vector<256x128xf32> -> vector<256x128xf32>
    %c0_168 = arith.constant 0 : index
    %c0_169 = arith.constant 0 : index
    %137 = vector.load %arg11[%c0_168, %c0_169] : memref<256x128xf32, #tpu.memory_space<vmem>>, vector<256x128xf32>
    %138 = arith.addf %137, %136 : vector<256x128xf32>
    %c0_170 = arith.constant 0 : index
    %c0_171 = arith.constant 0 : index
    %139 = vector.load %arg11[%c0_170, %c0_171] : memref<256x128xf32, #tpu.memory_space<vmem>>, vector<256x128xf32>
    tpu.vector_store %arg11[%c0_170, %c0_171], %138 {strides = array<i32>} : memref<256x128xf32, #tpu.memory_space<vmem>>, vector<256x128xf32>,
    %c0_172 = arith.constant 0 : index
    %c0_173 = arith.constant 0 : index
    %140 = vector.load %arg11[%c0_172, %c0_173] : memref<256x128xf32, #tpu.memory_space<vmem>>, vector<256x128xf32>
    %c0_174 = arith.constant 0 : index
    %c0_175 = arith.constant 0 : index
    %141 = vector.load %arg6[%c0_174, %c0_175] : memref<1x128xf32, #tpu.memory_space<vmem>>, vector<1x128xf32>
    %142 = vector.broadcast %141 : vector<1x128xf32> to vector<256x128xf32>
    %143 = arith.addf %140, %142 : vector<256x128xf32>
    %cst_176 = arith.constant 0.000000e+00 : f32
    %144 = vector.broadcast %cst_176 : f32 to vector<256x128xf32>
    %145 = arith.maximumf %143, %144 : vector<256x128xf32>
    %cst_177 = arith.constant 0.000000e+00 : f32
    %146 = vector.shape_cast %2 : vector<256x1xi1> to vector<256x1xi1>
    %147 = vector.broadcast %146 : vector<256x1xi1> to vector<256x128xi1>
    %148 = vector.broadcast %cst_177 : f32 to vector<256x128xf32>
    %149 = arith.select %147, %145, %148 : vector<256x128xi1>, vector<256x128xf32>
    %150 = arith.truncf %149 : vector<256x128xf32> to vector<256x128xbf16>
    %c32_178 = arith.constant 32 : index
    %c0_179 = arith.constant 0 : index
    %151 = vector.load %arg10[%c32_178, %c0_179] : memref<320x128xbf16, #tpu.memory_space<vmem>>, vector<256x128xbf16>
    tpu.vector_store %arg10[%c32_178, %c0_179], %150 {strides = array<i32>} : memref<320x128xbf16, #tpu.memory_space<vmem>>, vector<256x128xbf16>,
    %c32_180 = arith.constant 32 : index
    %c0_181 = arith.constant 0 : index
    %152 = vector.load %arg10[%c32_180, %c0_181] : memref<320x128xbf16, #tpu.memory_space<vmem>>, vector<256x128xbf16>
    %c0_182 = arith.constant 0 : index
    %c0_183 = arith.constant 0 : index
    %153 = vector.load %arg7[%c0_182, %c0_183] : memref<128x128xbf16, #tpu.memory_space<vmem>>, vector<128x128xbf16>
    %cst_184 = arith.constant dense<0.000000e+00> : vector<256x128xf32>
    %154 = tpu.matmul %152, %153, %cst_184 {dimension_numbers = #tpu.dot_dimension_numbers<[1], [0], [0], [1], [0, 0, 1, 1], [], []>} : vector<256x128xbf16>, vector<128x128xbf16>, vector<256x128xf32> -> vector<256x128xf32>
    %c0_185 = arith.constant 0 : index
    %c0_186 = arith.constant 0 : index
    %155 = vector.load %arg8[%c0_185, %c0_186] : memref<1x128xf32, #tpu.memory_space<vmem>>, vector<1x128xf32>
    %156 = vector.broadcast %155 : vector<1x128xf32> to vector<256x128xf32>
    %157 = arith.addf %154, %156 : vector<256x128xf32>
    %158 = arith.truncf %157 : vector<256x128xf32> to vector<256x128xbf16>
    %c0_187 = arith.constant 0 : index
    %c0_188 = arith.constant 0 : index
    %159 = vector.load %arg9[%c0_187, %c0_188] : memref<256x128xbf16, #tpu.memory_space<vmem>>, vector<256x128xbf16>
    tpu.vector_store %arg9[%c0_187, %c0_188], %158 {strides = array<i32>} : memref<256x128xbf16, #tpu.memory_space<vmem>>, vector<256x128xbf16>,
    return
  }
  func.func @transform_0(%arg0: i32) -> (i32, i32) {
    %c0_i32 = arith.constant 0 : i32
    %c0_i32_0 = arith.constant 0 : i32
    return %arg0, %c0_i32 : i32, i32
  }
  func.func @transform_1(%arg0: i32) -> (i32, i32) {
    %c0_i32 = arith.constant 0 : i32
    %c0_i32_0 = arith.constant 0 : i32
    %c0_i32_1 = arith.constant 0 : i32
    return %c0_i32, %c0_i32_0 : i32, i32
  }
  func.func @transform_2(%arg0: i32) -> (i32, i32, i32) {
    %c0_i32 = arith.constant 0 : i32
    %c0_i32_0 = arith.constant 0 : i32
    %c0_i32_1 = arith.constant 0 : i32
    %c0_i32_2 = arith.constant 0 : i32
    return %c0_i32, %c0_i32_0, %c0_i32_1 : i32, i32, i32
  }
  func.func @transform_3(%arg0: i32) -> (i32, i32) {
    %c0_i32 = arith.constant 0 : i32
    %c0_i32_0 = arith.constant 0 : i32
    %c0_i32_1 = arith.constant 0 : i32
    return %c0_i32, %c0_i32_0 : i32, i32
  }
  func.func @transform_4(%arg0: i32) -> (i32, i32, i32) {
    %c0_i32 = arith.constant 0 : i32
    %c0_i32_0 = arith.constant 0 : i32
    %c0_i32_1 = arith.constant 0 : i32
    %c0_i32_2 = arith.constant 0 : i32
    return %c0_i32, %c0_i32_0, %c0_i32_1 : i32, i32, i32
  }
  func.func @transform_5(%arg0: i32) -> (i32, i32) {
    %c0_i32 = arith.constant 0 : i32
    %c0_i32_0 = arith.constant 0 : i32
    %c0_i32_1 = arith.constant 0 : i32
    return %c0_i32, %c0_i32_0 : i32, i32
  }
  func.func @transform_6(%arg0: i32) -> (i32, i32) {
    %c0_i32 = arith.constant 0 : i32
    %c0_i32_0 = arith.constant 0 : i32
    %c0_i32_1 = arith.constant 0 : i32
    return %c0_i32, %c0_i32_0 : i32, i32
  }
  func.func @transform_7(%arg0: i32) -> (i32, i32) {
    %c0_i32 = arith.constant 0 : i32
    %c0_i32_0 = arith.constant 0 : i32
    %c0_i32_1 = arith.constant 0 : i32
    return %c0_i32, %c0_i32_0 : i32, i32
  }
  func.func @transform_8(%arg0: i32) -> (i32, i32) {
    %c0_i32 = arith.constant 0 : i32
    %c0_i32_0 = arith.constant 0 : i32
    return %arg0, %c0_i32 : i32, i32
  }
}

</mosaic_0001>

<llo_original>
// kernel: grasp_head_forward.1
$region0: #{grasp_head_forward.1}
  #allocation0 [shape = 'u32[]', space=smem, size = 0x4, offset = 0x4, fixed_abs, tag = 'smem constant byte address 0x4 - core index']
  #allocation1 [shape = 'u32[144,128]{1,0:T(1,128)}', space=vmem, size = 0x12000, scoped, tag = 'internal scratch']
  #allocation2 [shape = 'bf16[320,128]{1,0:T(8,128)(2,1)}', space=vmem, size = 0x14000, scoped, tag = 'scratch operand']
  #allocation3 [shape = 'f32[256,128]{1,0:T(8,128)}', space=vmem, size = 0x20000, scoped, tag = 'scratch operand']
  %s0 = inlined_call_operand.vmem [shape: bf16[640,32], index: 0, kind: input, shape index: {}]
  %s1 = inlined_call_operand.vmem [shape: f32[256,1], index: 1, kind: input, shape index: {}]
  %s2 = inlined_call_operand.vmem [shape: bf16[9,32,128], index: 2, kind: input, shape index: {}]
  %s3 = inlined_call_operand.vmem [shape: f32[1,128], index: 3, kind: input, shape index: {}]
  %s4 = inlined_call_operand.vmem [shape: bf16[9,128,128], index: 4, kind: input, shape index: {}]
  %s5 = inlined_call_operand.vmem [shape: f32[1,128], index: 5, kind: input, shape index: {}]
  %s6 = inlined_call_operand.vmem [shape: bf16[128,128], index: 6, kind: input, shape index: {}]
  %s7 = inlined_call_operand.vmem [shape: f32[1,128], index: 7, kind: input, shape index: {}]
  %s8 = inlined_call_operand.vmem [shape: bf16[512,128], index: 8, kind: output, shape index: {}]
  %s9 = sld [smem:[#allocation0]]
  $region65: #{grasp_head_forward.1} parent=0
    _
  %s11 = ssub.s32 1, %s9
  %s12 = scalar_select 0, %s11, %s9
  loop: start=0, step=1, limit=4
  $region2: #{grasp_head_forward.1} parent=0 // loop_pre_header
    _
  $region3: #{grasp_head_forward.1} parent=0 // loop_header
    %s14 = sphi 0, %s18
    %p15 = scmp.ge.s32.totalorder %s14, 4
    %s24 = sphi 0, %s26
    %s27 = sphi 0, %s24
    %s28 = sphi 0, %s27
    %s44 = sphi 0, %s28
    %s48 = sphi 0, %s48
    %s50 = sphi 0, %s48
    %s51 = sphi 0, %s50
    %s65 = sphi 0, %s51
    %s69 = sphi 0, %s69
    %s71 = sphi 0, %s69
    %s72 = sphi 0, %s71
    %s86 = sphi 0, %s72
    %s90 = sphi 0, %s90
    %s92 = sphi 0, %s90
    %s93 = sphi 0, %s92
    %s107 = sphi 0, %s93
    %s111 = sphi 0, %s111
    %s113 = sphi 0, %s111
    %s114 = sphi 0, %s113
    %s128 = sphi 0, %s114
    %s132 = sphi 0, %s132
    %s134 = sphi 0, %s132
    %s135 = sphi 0, %s134
    %s149 = sphi 0, %s135
    %s153 = sphi 0, %s153
    %s155 = sphi 0, %s153
    %s156 = sphi 0, %s155
    %s170 = sphi 0, %s156
    %s174 = sphi 0, %s174
    %s176 = sphi 0, %s174
    %s177 = sphi 0, %s176
    %s191 = sphi 0, %s177
    %s197 = sphi 0, %s199
    %s200 = sphi 0, %s197
    %s201 = sphi 0, %s200
    %s217 = sphi 0, %s201
  $region4: #{grasp_head_forward.1} parent=0 // loop_header_branch
    %17 = sbr.rel (%p15) target = $region8
  $region5: #{grasp_head_forward.1} parent=0 // loop_body
    %s19 = ssub.s32 %s14, 1
    %s20 = ssub.s32 %s14, 2
    %s21 = sadd.s32 %s14, 1
    %s22 = ssub.s32 %s14, %s21
    %p23 = scmp.eq.s32.totalorder %s22, 0
    %s25 = sadd.s32 %s24, 1
    %s26 = scalar_select %p23, %s24, %s25
    %p29 = pneg %p23
    %p30 = scmp.eq.s32.totalorder %s14, 1
    %p31 = por %p29, %p30
    %p32 = scmp.ne.s32.totalorder %s24, %s27
    %p33 = scmp.eq.s32.totalorder %s14, 0
    %p34 = por %p32, %p33
    %p35 = scmp.ne.s32.totalorder %s24, %s27
    %p36 = scmp.eq.s32.totalorder %s19, 1
    %p37 = por %p35, %p36
    %p38 = scmp.ne.s32.totalorder %s27, %s28
    %p39 = scmp.eq.s32.totalorder %s19, 0
    %p40 = por %p38, %p39
    %p41 = scmp.ne.s32.totalorder %s27, %s28
    %p42 = scmp.eq.s32.totalorder %s20, 1
    %p43 = por %p41, %p42
    %p45 = scmp.ne.s32.totalorder %s28, %s44
    %p46 = scmp.eq.s32.totalorder %s20, 0
    %p47 = por %p45, %p46
    %s49 = sadd.s32 %s48, 1
    %p52 = scmp.eq.s32.totalorder %s14, 1
    %p53 = scmp.ne.s32.totalorder %s48, %s50
    %p54 = scmp.eq.s32.totalorder %s14, 0
    %p55 = por %p53, %p54
    %p56 = scmp.ne.s32.totalorder %s48, %s50
    %p57 = scmp.eq.s32.totalorder %s19, 1
    %p58 = por %p56, %p57
    %p59 = scmp.ne.s32.totalorder %s50, %s51
    %p60 = scmp.eq.s32.totalorder %s19, 0
    %p61 = por %p59, %p60
    %p62 = scmp.ne.s32.totalorder %s50, %s51
    %p63 = scmp.eq.s32.totalorder %s20, 1
    %p64 = por %p62, %p63
    %p66 = scmp.ne.s32.totalorder %s51, %s65
    %p67 = scmp.eq.s32.totalorder %s20, 0
    %p68 = por %p66, %p67
    %s70 = sadd.s32 %s69, 1
    %p73 = scmp.eq.s32.totalorder %s14, 1
    %p74 = scmp.ne.s32.totalorder %s69, %s71
    %p75 = scmp.eq.s32.totalorder %s14, 0
    %p76 = por %p74, %p75
    %p77 = scmp.ne.s32.totalorder %s69, %s71
    %p78 = scmp.eq.s32.totalorder %s19, 1
    %p79 = por %p77, %p78
    %p80 = scmp.ne.s32.totalorder %s71, %s72
    %p81 = scmp.eq.s32.totalorder %s19, 0
    %p82 = por %p80, %p81
    %p83 = scmp.ne.s32.totalorder %s71, %s72
    %p84 = scmp.eq.s32.totalorder %s20, 1
    %p85 = por %p83, %p84
    %p87 = scmp.ne.s32.totalorder %s72, %s86
    %p88 = scmp.eq.s32.totalorder %s20, 0
    %p89 = por %p87, %p88
    %s91 = sadd.s32 %s90, 1
    %p94 = scmp.eq.s32.totalorder %s14, 1
    %p95 = scmp.ne.s32.totalorder %s90, %s92
    %p96 = scmp.eq.s32.totalorder %s14, 0
    %p97 = por %p95, %p96
    %p98 = scmp.ne.s32.totalorder %s90, %s92
    %p99 = scmp.eq.s32.totalorder %s19, 1
    %p100 = por %p98, %p99
    %p101 = scmp.ne.s32.totalorder %s92, %s93
    %p102 = scmp.eq.s32.totalorder %s19, 0
    %p103 = por %p101, %p102
    %p104 = scmp.ne.s32.totalorder %s92, %s93
    %p105 = scmp.eq.s32.totalorder %s20, 1
    %p106 = por %p104, %p105
    %p108 = scmp.ne.s32.totalorder %s93, %s107
    %p109 = scmp.eq.s32.totalorder %s20, 0
    %p110 = por %p108, %p109
    %s112 = sadd.s32 %s111, 1
    %p115 = scmp.eq.s32.totalorder %s14, 1
    %p116 = scmp.ne.s32.totalorder %s111, %s113
    %p117 = scmp.eq.s32.totalorder %s14, 0
    %p118 = por %p116, %p117
    %p119 = scmp.ne.s32.totalorder %s111, %s113
    %p120 = scmp.eq.s32.totalorder %s19, 1
    %p121 = por %p119, %p120
    %p122 = scmp.ne.s32.totalorder %s113, %s114
    %p123 = scmp.eq.s32.totalorder %s19, 0
    %p124 = por %p122, %p123
    %p125 = scmp.ne.s32.totalorder %s113, %s114
    %p126 = scmp.eq.s32.totalorder %s20, 1
    %p127 = por %p125, %p126
    %p129 = scmp.ne.s32.totalorder %s114, %s128
    %p130 = scmp.eq.s32.totalorder %s20, 0
    %p131 = por %p129, %p130
    %s133 = sadd.s32 %s132, 1
    %p136 = scmp.eq.s32.totalorder %s14, 1
    %p137 = scmp.ne.s32.totalorder %s132, %s134
    %p138 = scmp.eq.s32.totalorder %s14, 0
    %p139 = por %p137, %p138
    %p140 = scmp.ne.s32.totalorder %s132, %s134
    %p141 = scmp.eq.s32.totalorder %s19, 1
    %p142 = por %p140, %p141
    %p143 = scmp.ne.s32.totalorder %s134, %s135
    %p144 = scmp.eq.s32.totalorder %s19, 0
    %p145 = por %p143, %p144
    %p146 = scmp.ne.s32.totalorder %s134, %s135
    %p147 = scmp.eq.s32.totalorder %s20, 1
    %p148 = por %p146, %p147
    %p150 = scmp.ne.s32.totalorder %s135, %s149
    %p151 = scmp.eq.s32.totalorder %s20, 0
    %p152 = por %p150, %p151
    %s154 = sadd.s32 %s153, 1
    %p157 = scmp.eq.s32.totalorder %s14, 1
    %p158 = scmp.ne.s32.totalorder %s153, %s155
    %p159 = scmp.eq.s32.totalorder %s14, 0
    %p160 = por %p158, %p159
    %p161 = scmp.ne.s32.totalorder %s153, %s155
    %p162 = scmp.eq.s32.totalorder %s19, 1
    %p163 = por %p161, %p162
    %p164 = scmp.ne.s32.totalorder %s155, %s156
    %p165 = scmp.eq.s32.totalorder %s19, 0
    %p166 = por %p164, %p165
    %p167 = scmp.ne.s32.totalorder %s155, %s156
    %p168 = scmp.eq.s32.totalorder %s20, 1
    %p169 = por %p167, %p168
    %p171 = scmp.ne.s32.totalorder %s156, %s170
    %p172 = scmp.eq.s32.totalorder %s20, 0
    %p173 = por %p171, %p172
    %s175 = sadd.s32 %s174, 1
    %p178 = scmp.eq.s32.totalorder %s14, 1
    %p179 = scmp.ne.s32.totalorder %s174, %s176
    %p180 = scmp.eq.s32.totalorder %s14, 0
    %p181 = por %p179, %p180
    %p182 = scmp.ne.s32.totalorder %s174, %s176
    %p183 = scmp.eq.s32.totalorder %s19, 1
    %p184 = por %p182, %p183
    %p185 = scmp.ne.s32.totalorder %s176, %s177
    %p186 = scmp.eq.s32.totalorder %s19, 0
    %p187 = por %p185, %p186
    %p188 = scmp.ne.s32.totalorder %s176, %s177
    %p189 = scmp.eq.s32.totalorder %s20, 1
    %p190 = por %p188, %p189
    %p192 = scmp.ne.s32.totalorder %s177, %s191
    %p193 = scmp.eq.s32.totalorder %s20, 0
    %p194 = por %p192, %p193
    %s195 = ssub.s32 %s14, %s21
    %p196 = scmp.eq.s32.totalorder %s195, 0
    %s198 = sadd.s32 %s197, 1
    %s199 = scalar_select %p196, %s197, %s198
    %p202 = pneg %p196
    %p203 = scmp.eq.s32.totalorder %s14, 1
    %p204 = por %p202, %p203
    %p205 = scmp.ne.s32.totalorder %s197, %s200
    %p206 = scmp.eq.s32.totalorder %s14, 0
    %p207 = por %p205, %p206
    %p208 = scmp.ne.s32.totalorder %s197, %s200
    %p209 = scmp.eq.s32.totalorder %s19, 1
    %p210 = por %p208, %p209
    %p211 = scmp.ne.s32.totalorder %s200, %s201
    %p212 = scmp.eq.s32.totalorder %s19, 0
    %p213 = por %p211, %p212
    %p214 = scmp.ne.s32.totalorder %s200, %s201
    %p215 = scmp.eq.s32.totalorder %s20, 1
    %p216 = por %p214, %p215
    %p218 = scmp.ne.s32.totalorder %s201, %s217
    %p219 = scmp.eq.s32.totalorder %s20, 0
    %p220 = por %p218, %p219
    %p221 = scmp.le.s32.totalorder 1, %s14
    %p222 = scmp.lt.s32.totalorder %s14, 3
    %p223 = pnand %p221, %p222
    %p224 = pneg %p223
    // Predicated region
    $region9: #{grasp_head_forward.1} parent=5 // pred_check
      _
    $region10: #{grasp_head_forward.1} parent=5 // pred_check_branch
      %226 = sbr.rel (%p223) target = $region12
    $region11: #{grasp_head_forward.1} parent=5 // pred_region
      %s227 = ssub.s32 %s14, 1
      // Predicated region
      $region13: #{grasp_head_forward.1} parent=11 // pred_check
        %p228 = pneg %p61
      $region14: #{grasp_head_forward.1} parent=11 // pred_check_branch
        %230 = sbr.rel (%p228) target = $region16
      $region15: #{grasp_head_forward.1} parent=11 // pred_region
        _
      $region16: #{grasp_head_forward.1} parent=11 // pred_fallthru
        _
      // Predicated region
      $region17: #{grasp_head_forward.1} parent=11 // pred_check
        %p231 = pneg %p82
      $region18: #{grasp_head_forward.1} parent=11 // pred_check_branch
        %233 = sbr.rel (%p231) target = $region20
      $region19: #{grasp_head_forward.1} parent=11 // pred_region
        _
      $region20: #{grasp_head_forward.1} parent=11 // pred_fallthru
        _
      // Predicated region
      $region21: #{grasp_head_forward.1} parent=11 // pred_check
        %p234 = pneg %p103
      $region22: #{grasp_head_forward.1} parent=11 // pred_check_branch
        %236 = sbr.rel (%p234) target = $region24
      $region23: #{grasp_head_forward.1} parent=11 // pred_region
        _
      $region24: #{grasp_head_forward.1} parent=11 // pred_fallthru
        _
      // Predicated region
      $region25: #{grasp_head_forward.1} parent=11 // pred_check
        %p237 = pneg %p124
      $region26: #{grasp_head_forward.1} parent=11 // pred_check_branch
        %239 = sbr.rel (%p237) target = $region28
      $region27: #{grasp_head_forward.1} parent=11 // pred_region
        _
      $region28: #{grasp_head_forward.1} parent=11 // pred_fallthru
        _
      // Predicated region
      $region29: #{grasp_head_forward.1} parent=11 // pred_check
        %p240 = pneg %p145
      $region30: #{grasp_head_forward.1} parent=11 // pred_check_branch
        %242 = sbr.rel (%p240) target = $region32
      $region31: #{grasp_head_forward.1} parent=11 // pred_region
        _
      $region32: #{grasp_head_forward.1} parent=11 // pred_fallthru
        _
      // Predicated region
      $region33: #{grasp_head_forward.1} parent=11 // pred_check
        %p243 = pneg %p166
      $region34: #{grasp_head_forward.1} parent=11 // pred_check_branch
        %245 = sbr.rel (%p243) target = $region36
      $region35: #{grasp_head_forward.1} parent=11 // pred_region
        _
      $region36: #{grasp_head_forward.1} parent=11 // pred_fallthru
        _
      // Predicated region
      $region37: #{grasp_head_forward.1} parent=11 // pred_check
        %p246 = pneg %p187
      $region38: #{grasp_head_forward.1} parent=11 // pred_check_branch
        %248 = sbr.rel (%p246) target = $region40
      $region39: #{grasp_head_forward.1} parent=11 // pred_region
        _
      $region40: #{grasp_head_forward.1} parent=11 // pred_fallthru
        _
    $region12: #{grasp_head_forward.1} parent=5 // pred_fallthru
      _
    %p249 = scmp.lt.s32.totalorder %s14, 2
    // Predicated region
    $region41: #{grasp_head_forward.1} parent=5 // pred_check
      %p250 = pneg %p249
    $region42: #{grasp_head_forward.1} parent=5 // pred_check_branch
      %252 = sbr.rel (%p250) target = $region44
    $region43: #{grasp_head_forward.1} parent=5 // pred_region
      // Predicated region
      $region45: #{grasp_head_forward.1} parent=43 // pred_check
        %p253 = pneg %p34
      $region46: #{grasp_head_forward.1} parent=43 // pred_check_branch
        %255 = sbr.rel (%p253) target = $region48
      $region47: #{grasp_head_forward.1} parent=43 // pred_region
        %s256 = smul.u32 40, %s14
        %p257 = scmp.lt.s32.totalorder %s256, 79
        %s258 = scalar_select %p257, %s256, 79
        %s259 = smul.addr %s258, 4
        %s260 = scalar_lea.vmem %s0, %s259
        %s261 = smul.u32 40, %s14
      $region48: #{grasp_head_forward.1} parent=43 // pred_fallthru
        _
    $region44: #{grasp_head_forward.1} parent=5 // pred_fallthru
      _
    %p262 = scmp.le.s32.totalorder 1, %s14
    %p263 = scmp.lt.s32.totalorder %s14, 3
    %p264 = pnand %p262, %p263
    %p265 = pneg %p264
    // Predicated region
    $region49: #{grasp_head_forward.1} parent=5 // pred_check
      _
    $region50: #{grasp_head_forward.1} parent=5 // pred_check_branch
      %267 = sbr.rel (%p264) target = $region52
    $region51: #{grasp_head_forward.1} parent=5 // pred_region
      %s268 = ssub.s32 %s14, 1
      %s269 = smul.u32 40, %s19
      %p270 = scmp.lt.s32.totalorder %s269, 79
      %s271 = scalar_select %p270, %s269, 79
      %s272 = smul.addr %s271, 4
      %s273 = scalar_lea.vmem %s0, %s272
      %p274 = pneg %p40
      %p275 = pneg %p37
      %p276 = pneg %p61
      %p277 = pneg %p58
      %p278 = pneg %p82
      %p279 = pneg %p79
      %p280 = pneg %p103
      %p281 = pneg %p100
      %p282 = pneg %p124
      %p283 = pneg %p121
      %p284 = pneg %p145
      %p285 = pneg %p142
      %p286 = pneg %p166
      %p287 = pneg %p163
      %p288 = pneg %p187
      %p289 = pneg %p184
      %p290 = pneg %p213
      %p291 = pneg %p210
      %s292 = smul.u32 32, %s19
      %p293 = scmp.lt.s32.totalorder %s292, 63
      %s294 = scalar_select %p293, %s292, 63
      %s295 = smul.addr %s294, 4
      %s296 = scalar_lea.vmem %s8, %s295
      %s297 = smul.u32 40, %s19
      %p298 = scmp.lt.s32.totalorder %s297, 79
      %s299 = scalar_select %p298, %s297, 79
      %s300 = smul.addr %s299, 4
      %s301 = scalar_lea.vmem %s0, %s300
      %s302 = smul.u32 40, %s19
      %s303 = smul.u32 32, %s19
      %p304 = scmp.lt.s32.totalorder %s303, 63
      %s305 = scalar_select %p304, %s303, 63
      %s306 = smul.addr %s305, 4
      %s307 = scalar_lea.vmem %s8, %s306
      %s308 = smul.u32 32, %s19
      %v310 = vld [vmem:[%s1] sm:$0xff]
      %v311 = vld [vmem:[%s1 + $0x8] sm:$0xff]
      %v312 = vld [vmem:[%s1 + $0x10] sm:$0xff]
      %v313 = vld [vmem:[%s1 + $0x18] sm:$0xff]
      %v314 = vld [vmem:[%s1 + $0x20] sm:$0xff]
      %v315 = vld [vmem:[%s1 + $0x28] sm:$0xff]
      %v316 = vld [vmem:[%s1 + $0x30] sm:$0xff]
      %v317 = vld [vmem:[%s1 + $0x38] sm:$0xff]
      %v318 = vld [vmem:[%s1 + $0x40] sm:$0xff]
      %v319 = vld [vmem:[%s1 + $0x48] sm:$0xff]
      %v320 = vld [vmem:[%s1 + $0x50] sm:$0xff]
      %v321 = vld [vmem:[%s1 + $0x58] sm:$0xff]
      %v322 = vld [vmem:[%s1 + $0x60] sm:$0xff]
      %v323 = vld [vmem:[%s1 + $0x68] sm:$0xff]
      %v324 = vld [vmem:[%s1 + $0x70] sm:$0xff]
      %v325 = vld [vmem:[%s1 + $0x78] sm:$0xff]
      %v326 = vld [vmem:[%s1 + $0x80] sm:$0xff]
      %v327 = vld [vmem:[%s1 + $0x88] sm:$0xff]
      %v328 = vld [vmem:[%s1 + $0x90] sm:$0xff]
      %v329 = vld [vmem:[%s1 + $0x98] sm:$0xff]
      %v330 = vld [vmem:[%s1 + $0xa0] sm:$0xff]
      %v331 = vld [vmem:[%s1 + $0xa8] sm:$0xff]
      %v332 = vld [vmem:[%s1 + $0xb0] sm:$0xff]
      %v333 = vld [vmem:[%s1 + $0xb8] sm:$0xff]
      %v334 = vld [vmem:[%s1 + $0xc0] sm:$0xff]
      %v335 = vld [vmem:[%s1 + $0xc8] sm:$0xff]
      %v336 = vld [vmem:[%s1 + $0xd0] sm:$0xff]
      %v337 = vld [vmem:[%s1 + $0xd8] sm:$0xff]
      %v338 = vld [vmem:[%s1 + $0xe0] sm:$0xff]
      %v339 = vld [vmem:[%s1 + $0xe8] sm:$0xff]
      %v340 = vld [vmem:[%s1 + $0xf0] sm:$0xff]
      %v341 = vld [vmem:[%s1 + $0xf8] sm:$0xff]
      %vm342 = vcmp.gt.f32.partialorder %v310, 0.0
      %vm343 = vcmp.gt.f32.partialorder %v311, 0.0
      %vm344 = vcmp.gt.f32.partialorder %v312, 0.0
      %vm345 = vcmp.gt.f32.partialorder %v313, 0.0
      %vm346 = vcmp.gt.f32.partialorder %v314, 0.0
      %vm347 = vcmp.gt.f32.partialorder %v315, 0.0
      %vm348 = vcmp.gt.f32.partialorder %v316, 0.0
      %vm349 = vcmp.gt.f32.partialorder %v317, 0.0
      %vm350 = vcmp.gt.f32.partialorder %v318, 0.0
      %vm351 = vcmp.gt.f32.partialorder %v319, 0.0
      %vm352 = vcmp.gt.f32.partialorder %v320, 0.0
      %vm353 = vcmp.gt.f32.partialorder %v321, 0.0
      %vm354 = vcmp.gt.f32.partialorder %v322, 0.0
      %vm355 = vcmp.gt.f32.partialorder %v323, 0.0
      %vm356 = vcmp.gt.f32.partialorder %v324, 0.0
      %vm357 = vcmp.gt.f32.partialorder %v325, 0.0
      %vm358 = vcmp.gt.f32.partialorder %v326, 0.0
      %vm359 = vcmp.gt.f32.partialorder %v327, 0.0
      %vm360 = vcmp.gt.f32.partialorder %v328, 0.0
      %vm361 = vcmp.gt.f32.partialorder %v329, 0.0
      %vm362 = vcmp.gt.f32.partialorder %v330, 0.0
      %vm363 = vcmp.gt.f32.partialorder %v331, 0.0
      %vm364 = vcmp.gt.f32.partialorder %v332, 0.0
      %vm365 = vcmp.gt.f32.partialorder %v333, 0.0
      %vm366 = vcmp.gt.f32.partialorder %v334, 0.0
      %vm367 = vcmp.gt.f32.partialorder %v335, 0.0
      %vm368 = vcmp.gt.f32.partialorder %v336, 0.0
      %vm369 = vcmp.gt.f32.partialorder %v337, 0.0
      %vm370 = vcmp.gt.f32.partialorder %v338, 0.0
      %vm371 = vcmp.gt.f32.partialorder %v339, 0.0
      %vm372 = vcmp.gt.f32.partialorder %v340, 0.0
      %vm373 = vcmp.gt.f32.partialorder %v341, 0.0
      %374 = vst [vmem:[#allocation2] sm:$0xf] 0
      %375 = vst [vmem:[#allocation2 + $0x4] sm:$0xf] 0
      %376 = vst [vmem:[#allocation2 + $0x8] sm:$0xf] 0
      %377 = vst [vmem:[#allocation2 + $0xc] sm:$0xf] 0
      %378 = vst [vmem:[#allocation2 + $0x90] sm:$0xf] 0
      %379 = vst [vmem:[#allocation2 + $0x94] sm:$0xf] 0
      %380 = vst [vmem:[#allocation2 + $0x98] sm:$0xf] 0
      %381 = vst [vmem:[#allocation2 + $0x9c] sm:$0xf] 0
      %v382 = vld [vmem:[%s301 + $0x4] sm:$0x8]
      %v383 = vld [vmem:[%s301 + $0x8] sm:$0xf]
      %v384 = vld [vmem:[%s301 + $0xc] sm:$0xf]
      %v385 = vld [vmem:[%s301 + $0x10] sm:$0xf]
      %v386 = vld [vmem:[%s301 + $0x14] sm:$0xf]
      %v387 = vld [vmem:[%s301 + $0x18] sm:$0xf]
      %v388 = vld [vmem:[%s301 + $0x1c] sm:$0xf]
      %v389 = vld [vmem:[%s301 + $0x20] sm:$0xf]
      %v390 = vld [vmem:[%s301 + $0x24] sm:$0xf]
      %v391 = vld [vmem:[%s301 + $0x28] sm:$0xf]
      %v392 = vld [vmem:[%s301 + $0x2c] sm:$0xf]
      %v393 = vld [vmem:[%s301 + $0x30] sm:$0xf]
      %v394 = vld [vmem:[%s301 + $0x34] sm:$0xf]
      %v395 = vld [vmem:[%s301 + $0x38] sm:$0xf]
      %v396 = vld [vmem:[%s301 + $0x3c] sm:$0xf]
      %v397 = vld [vmem:[%s301 + $0x40] sm:$0xf]
      %v398 = vld [vmem:[%s301 + $0x44] sm:$0xf]
      %v399 = vld [vmem:[%s301 + $0x48] sm:$0xf]
      %v400 = vld [vmem:[%s301 + $0x4c] sm:$0xf]
      %v401 = vld [vmem:[%s301 + $0x50] sm:$0xf]
      %v402 = vld [vmem:[%s301 + $0x54] sm:$0xf]
      %v403 = vld [vmem:[%s301 + $0x58] sm:$0xf]
      %v404 = vld [vmem:[%s301 + $0x5c] sm:$0xf]
      %v405 = vld [vmem:[%s301 + $0x60] sm:$0xf]
      %v406 = vld [vmem:[%s301 + $0x64] sm:$0xf]
      %v407 = vld [vmem:[%s301 + $0x68] sm:$0xf]
      %v408 = vld [vmem:[%s301 + $0x6c] sm:$0xf]
      %v409 = vld [vmem:[%s301 + $0x70] sm:$0xf]
      %v410 = vld [vmem:[%s301 + $0x74] sm:$0xf]
      %v411 = vld [vmem:[%s301 + $0x78] sm:$0xf]
      %v412 = vld [vmem:[%s301 + $0x7c] sm:$0xf]
      %v413 = vld [vmem:[%s301 + $0x80] sm:$0xf]
      %v414 = vld [vmem:[%s301 + $0x84] sm:$0xf]
      %v415 = vld [vmem:[%s2] sm:$0xf]
      %v416 = vld [vmem:[%s2 + $0x4] sm:$0xf]
      %v417 = vld [vmem:[%s2 + $0x8] sm:$0xf]
      %v418 = vld [vmem:[%s2 + $0xc] sm:$0xf]
      %v452 = vunpack.c.l.b16 %v382
      %v453 = vunpack.c.l.b16 %v383
      %v454 = vunpack.c.l.b16 %v384
      %v455 = vunpack.c.l.b16 %v385
      %v456 = vunpack.c.l.b16 %v386
      %v457 = vunpack.c.l.b16 %v387
      %v458 = vunpack.c.l.b16 %v388
      %v459 = vunpack.c.l.b16 %v389
      %v460 = vunpack.c.l.b16 %v390
      %v461 = vunpack.c.l.b16 %v391
      %v462 = vunpack.c.l.b16 %v392
      %v463 = vunpack.c.l.b16 %v393
      %v464 = vunpack.c.l.b16 %v394
      %v465 = vunpack.c.l.b16 %v395
      %v466 = vunpack.c.l.b16 %v396
      %v467 = vunpack.c.l.b16 %v397
      %v468 = vunpack.c.l.b16 %v398
      %v469 = vunpack.c.l.b16 %v399
      %v470 = vunpack.c.l.b16 %v400
      %v471 = vunpack.c.l.b16 %v401
      %v472 = vunpack.c.l.b16 %v402
      %v473 = vunpack.c.l.b16 %v403
      %v474 = vunpack.c.l.b16 %v404
      %v475 = vunpack.c.l.b16 %v405
      %v476 = vunpack.c.l.b16 %v406
      %v477 = vunpack.c.l.b16 %v407
      %v478 = vunpack.c.l.b16 %v408
      %v479 = vunpack.c.l.b16 %v409
      %v480 = vunpack.c.l.b16 %v410
      %v481 = vunpack.c.l.b16 %v411
      %v482 = vunpack.c.l.b16 %v412
      %v483 = vunpack.c.l.b16 %v413
      %v484 = vunpack.c.l.b16 %v414
      %v485 = vpack.c.b16 %v453, %v452
      %v486 = vpack.c.b16 %v455, %v454
      %v487 = vpack.c.b16 %v457, %v456
      %v488 = vpack.c.b16 %v459, %v458
      %v489 = vpack.c.b16 %v461, %v460
      %v490 = vpack.c.b16 %v463, %v462
      %v491 = vpack.c.b16 %v465, %v464
      %v492 = vpack.c.b16 %v467, %v466
      %v493 = vpack.c.b16 %v469, %v468
      %v494 = vpack.c.b16 %v471, %v470
      %v495 = vpack.c.b16 %v473, %v472
      %v496 = vpack.c.b16 %v475, %v474
      %v497 = vpack.c.b16 %v477, %v476
      %v498 = vpack.c.b16 %v479, %v478
      %v499 = vpack.c.b16 %v481, %v480
      %v500 = vpack.c.b16 %v483, %v482
      %v501 = vpack.c.b16 %v484, %v484
      %vm502 = vsmask.f32 4352
      %v504 = vshrl.u32 %v485, 16
      %v506 = vrot.slane %v504, 3
      %v507 = vshll.u32 %v485, 16
      %v509 = vrot.slane %v507, 4
      %v510 = vor.u32 %v506, %v509
      %v512 = vshrl.u32 %v486, 16
      %v514 = vrot.slane %v512, 3
      %v515 = vshll.u32 %v486, 16
      %v517 = vrot.slane %v515, 4
      %v518 = vor.u32 %v514, %v517
      %v519 = vsel %vm502, %v510, %v518
      %v521 = vshrl.u32 %v487, 16
      %v523 = vrot.slane %v521, 3
      %v524 = vshll.u32 %v487, 16
      %v526 = vrot.slane %v524, 4
      %v527 = vor.u32 %v523, %v526
      %v528 = vsel %vm502, %v518, %v527
      %v530 = vshrl.u32 %v488, 16
      %v532 = vrot.slane %v530, 3
      %v533 = vshll.u32 %v488, 16
      %v535 = vrot.slane %v533, 4
      %v536 = vor.u32 %v532, %v535
      %v537 = vsel %vm502, %v527, %v536
      %v539 = vshrl.u32 %v489, 16
      %v541 = vrot.slane %v539, 3
      %v542 = vshll.u32 %v489, 16
      %v544 = vrot.slane %v542, 4
      %v545 = vor.u32 %v541, %v544
      %v546 = vsel %vm502, %v536, %v545
      %v548 = vshrl.u32 %v490, 16
      %v550 = vrot.slane %v548, 3
      %v551 = vshll.u32 %v490, 16
      %v553 = vrot.slane %v551, 4
      %v554 = vor.u32 %v550, %v553
      %v555 = vsel %vm502, %v545, %v554
      %v557 = vshrl.u32 %v491, 16
      %v559 = vrot.slane %v557, 3
      %v560 = vshll.u32 %v491, 16
      %v562 = vrot.slane %v560, 4
      %v563 = vor.u32 %v559, %v562
      %v564 = vsel %vm502, %v554, %v563
      %v566 = vshrl.u32 %v492, 16
      %v568 = vrot.slane %v566, 3
      %v569 = vshll.u32 %v492, 16
      %v571 = vrot.slane %v569, 4
      %v572 = vor.u32 %v568, %v571
      %v573 = vsel %vm502, %v563, %v572
      %v575 = vshrl.u32 %v493, 16
      %v577 = vrot.slane %v575, 3
      %v578 = vshll.u32 %v493, 16
      %v580 = vrot.slane %v578, 4
      %v581 = vor.u32 %v577, %v580
      %v582 = vsel %vm502, %v572, %v581
      %v584 = vshrl.u32 %v494, 16
      %v586 = vrot.slane %v584, 3
      %v587 = vshll.u32 %v494, 16
      %v589 = vrot.slane %v587, 4
      %v590 = vor.u32 %v586, %v589
      %v591 = vsel %vm502, %v581, %v590
      %v593 = vshrl.u32 %v495, 16
      %v595 = vrot.slane %v593, 3
      %v596 = vshll.u32 %v495, 16
      %v598 = vrot.slane %v596, 4
      %v599 = vor.u32 %v595, %v598
      %v600 = vsel %vm502, %v590, %v599
      %v602 = vshrl.u32 %v496, 16
      %v604 = vrot.slane %v602, 3
      %v605 = vshll.u32 %v496, 16
      %v607 = vrot.slane %v605, 4
      %v608 = vor.u32 %v604, %v607
      %v609 = vsel %vm502, %v599, %v608
      %v611 = vshrl.u32 %v497, 16
      %v613 = vrot.slane %v611, 3
      %v614 = vshll.u32 %v497, 16
      %v616 = vrot.slane %v614, 4
      %v617 = vor.u32 %v613, %v616
      %v618 = vsel %vm502, %v608, %v617
      %v620 = vshrl.u32 %v498, 16
      %v622 = vrot.slane %v620, 3
      %v623 = vshll.u32 %v498, 16
      %v625 = vrot.slane %v623, 4
      %v626 = vor.u32 %v622, %v625
      %v627 = vsel %vm502, %v617, %v626
      %v629 = vshrl.u32 %v499, 16
      %v631 = vrot.slane %v629, 3
      %v632 = vshll.u32 %v499, 16
      %v634 = vrot.slane %v632, 4
      %v635 = vor.u32 %v631, %v634
      %v636 = vsel %vm502, %v626, %v635
      %v638 = vshrl.u32 %v500, 16
      %v640 = vrot.slane %v638, 3
      %v641 = vshll.u32 %v500, 16
      %v643 = vrot.slane %v641, 4
      %v644 = vor.u32 %v640, %v643
      %v645 = vsel %vm502, %v635, %v644
      %v647 = vshrl.u32 %v501, 16
      %v649 = vrot.slane %v647, 3
      %v650 = vshll.u32 %v501, 16
      %v652 = vrot.slane %v650, 4
      %v653 = vor.u32 %v649, %v652
      %v654 = vsel %vm502, %v644, %v653
      %v659 = vunpack.c.l.b16 %v415
      %v660 = vunpack.c.l.b16 %v416
      %v661 = vunpack.c.l.b16 %v417
      %v662 = vunpack.c.l.b16 %v418
      %v663 = vpack.c.b16 %v660, %v659
      %v664 = vpack.c.b16 %v662, %v661
      %vm667 = vcmask 261120
      %v669 = vsel %vm667, %v519, 0
      %v672 = vsel %vm667, %v528, 0
      %v675 = vsel %vm667, %v537, 0
      %v678 = vsel %vm667, %v546, 0
      %v681 = vsel %vm667, %v555, 0
      %v684 = vsel %vm667, %v564, 0
      %v687 = vsel %vm667, %v573, 0
      %v690 = vsel %vm667, %v582, 0
      %v693 = vsel %vm667, %v591, 0
      %v696 = vsel %vm667, %v600, 0
      %v699 = vsel %vm667, %v609, 0
      %v702 = vsel %vm667, %v618, 0
      %v705 = vsel %vm667, %v627, 0
      %v708 = vsel %vm667, %v636, 0
      %v711 = vsel %vm667, %v645, 0
      %v714 = vsel %vm667, %v654, 0
      %716 = vmatprep.subr.bf16.mxu0 0
      %717 = vmatpush1.bf16.msra.mxu0 0
      %718 = vmatprep.subr.bf16.mxu0 0
      %719 = vmatpush1.bf16.msra.mxu0 0
      %720 = vmatprep.subr.bf16.mxu0 0
      %721 = vmatpush1.bf16.msra.mxu0 0
      %722 = vmatprep.subr.bf16.mxu0 0
      %723 = vmatpush1.bf16.msra.mxu0 0
      %724 = vmatprep.subr.bf16.mxu0 0
      %725 = vmatpush1.bf16.msra.mxu0 0
      %726 = vmatprep.subr.bf16.mxu0 0
      %727 = vmatpush1.bf16.msra.mxu0 0
      %728 = vmatprep.subr.bf16.mxu0 0
      %729 = vmatpush1.bf16.msra.mxu0 %v664
      %730 = vmatprep.subr.bf16.mxu0 0
      %731 = vmatpush1.bf16.msra.mxu0 %v663
      %732 = vmatprep.subr.bf16.mxu0 0
      %733 = vmatpush2.bf16.msra.mxu0 0
      %734 = vmatprep.subr.bf16.mxu0 0
      %735 = vmatpush2.bf16.msra.mxu0 0
      %736 = vmatprep.subr.bf16.mxu0 0
      %737 = vmatpush2.bf16.msra.mxu0 0
      %738 = vmatprep.subr.bf16.mxu0 0
      %739 = vmatpush2.bf16.msra.mxu0 0
      %740 = vmatprep.subr.bf16.mxu0 0
      %741 = vmatpush2.bf16.msra.mxu0 0
      %742 = vmatprep.subr.bf16.mxu0 0
      %743 = vmatpush2.bf16.msra.mxu0 0
      %744 = vmatprep.subr.bf16.mxu0 0
      %745 = vmatpush2.bf16.msra.mxu0 0
      %746 = vmatprep.subr.bf16.mxu0 0
      %747 = vmatpush2.bf16.msra.mxu0 0
      %748 = vmatprep.mubr.bf16.mxu0 0
      %749 = vmatmul.mubr.bf16.gmra.mxu0 %v669
      %v750 = vpop.f32.mrf.mxu0
      %v751 = vadd.f32 0.0, %v750
      %v752 = vpop.f32.mrf.mxu0
      %v753 = vpop.f32.mrf.mxu0
      %v754 = vadd.f32 0.0, %v753
      %v755 = vpop.f32.mrf.mxu0
      %756 = vmatprep.mubr.bf16.mxu0 0
      %757 = vmatmul.mubr.bf16.gmra.mxu0 %v672
      %v758 = vpop.f32.mrf.mxu0
      %v759 = vadd.f32 0.0, %v758
      %v760 = vpop.f32.mrf.mxu0
      %v761 = vpop.f32.mrf.mxu0
      %v762 = vadd.f32 0.0, %v761
      %v763 = vpop.f32.mrf.mxu0
      %764 = vmatprep.mubr.bf16.mxu0 0
      %765 = vmatmul.mubr.bf16.gmra.mxu0 %v675
      %v766 = vpop.f32.mrf.mxu0
      %v767 = vadd.f32 0.0, %v766
      %v768 = vpop.f32.mrf.mxu0
      %v769 = vpop.f32.mrf.mxu0
      %v770 = vadd.f32 0.0, %v769
      %v771 = vpop.f32.mrf.mxu0
      %772 = vmatprep.mubr.bf16.mxu0 0
      %773 = vmatmul.mubr.bf16.gmra.mxu0 %v678
      %v774 = vpop.f32.mrf.mxu0
      %v775 = vadd.f32 0.0, %v774
      %v776 = vpop.f32.mrf.mxu0
      %v777 = vpop.f32.mrf.mxu0
      %v778 = vadd.f32 0.0, %v777
      %v779 = vpop.f32.mrf.mxu0
      %780 = vmatprep.mubr.bf16.mxu0 0
      %781 = vmatmul.mubr.bf16.gmra.mxu0 %v681
      %v782 = vpop.f32.mrf.mxu0
      %v783 = vadd.f32 0.0, %v782
      %v784 = vpop.f32.mrf.mxu0
      %v785 = vpop.f32.mrf.mxu0
      %v786 = vadd.f32 0.0, %v785
      %v787 = vpop.f32.mrf.mxu0
      %788 = vmatprep.mubr.bf16.mxu0 0
      %789 = vmatmul.mubr.bf16.gmra.mxu0 %v684
      %v790 = vpop.f32.mrf.mxu0
      %v791 = vadd.f32 0.0, %v790
      %v792 = vpop.f32.mrf.mxu0
      %v793 = vpop.f32.mrf.mxu0
      %v794 = vadd.f32 0.0, %v793
      %v795 = vpop.f32.mrf.mxu0
      %796 = vmatprep.mubr.bf16.mxu0 0
      %797 = vmatmul.mubr.bf16.gmra.mxu0 %v687
      %v798 = vpop.f32.mrf.mxu0
      %v799 = vadd.f32 0.0, %v798
      %v800 = vpop.f32.mrf.mxu0
      %v801 = vpop.f32.mrf.mxu0
      %v802 = vadd.f32 0.0, %v801
      %v803 = vpop.f32.mrf.mxu0
      %804 = vmatprep.mubr.bf16.mxu0 0
      %805 = vmatmul.mubr.bf16.gmra.mxu0 %v690
      %v806 = vpop.f32.mrf.mxu0
      %v807 = vadd.f32 0.0, %v806
      %v808 = vpop.f32.mrf.mxu0
      %v809 = vpop.f32.mrf.mxu0
      %v810 = vadd.f32 0.0, %v809
      %v811 = vpop.f32.mrf.mxu0
      %812 = vmatprep.mubr.bf16.mxu0 0
      %813 = vmatmul.mubr.bf16.gmra.mxu0 %v693
      %v814 = vpop.f32.mrf.mxu0
      %v815 = vadd.f32 0.0, %v814
      %v816 = vpop.f32.mrf.mxu0
      %v817 = vpop.f32.mrf.mxu0
      %v818 = vadd.f32 0.0, %v817
      %v819 = vpop.f32.mrf.mxu0
      %820 = vmatprep.mubr.bf16.mxu0 0
      %821 = vmatmul.mubr.bf16.gmra.mxu0 %v696
      %v822 = vpop.f32.mrf.mxu0
      %v823 = vadd.f32 0.0, %v822
      %v824 = vpop.f32.mrf.mxu0
      %v825 = vpop.f32.mrf.mxu0
      %v826 = vadd.f32 0.0, %v825
      %v827 = vpop.f32.mrf.mxu0
      %828 = vmatprep.mubr.bf16.mxu0 0
      %829 = vmatmul.mubr.bf16.gmra.mxu0 %v699
      %v830 = vpop.f32.mrf.mxu0
      %v831 = vadd.f32 0.0, %v830
      %v832 = vpop.f32.mrf.mxu0
      %v833 = vpop.f32.mrf.mxu0
      %v834 = vadd.f32 0.0, %v833
      %v835 = vpop.f32.mrf.mxu0
      %836 = vmatprep.mubr.bf16.mxu0 0
      %837 = vmatmul.mubr.bf16.gmra.mxu0 %v702
      %v838 = vpop.f32.mrf.mxu0
      %v839 = vadd.f32 0.0, %v838
      %v840 = vpop.f32.mrf.mxu0
      %v841 = vpop.f32.mrf.mxu0
      %v842 = vadd.f32 0.0, %v841
      %v843 = vpop.f32.mrf.mxu0
      %844 = vmatprep.mubr.bf16.mxu0 0
      %845 = vmatmul.mubr.bf16.gmra.mxu0 %v705
      %v846 = vpop.f32.mrf.mxu0
      %v847 = vadd.f32 0.0, %v846
      %v848 = vpop.f32.mrf.mxu0
      %v849 = vpop.f32.mrf.mxu0
      %v850 = vadd.f32 0.0, %v849
      %v851 = vpop.f32.mrf.mxu0
      %852 = vmatprep.mubr.bf16.mxu0 0
      %853 = vmatmul.mubr.bf16.gmra.mxu0 %v708
      %v854 = vpop.f32.mrf.mxu0
      %v855 = vadd.f32 0.0, %v854
      %v856 = vpop.f32.mrf.mxu0
      %v857 = vpop.f32.mrf.mxu0
      %v858 = vadd.f32 0.0, %v857
      %v859 = vpop.f32.mrf.mxu0
      %860 = vmatprep.mubr.bf16.mxu0 0
      %861 = vmatmul.mubr.bf16.gmra.mxu0 %v711
      %v862 = vpop.f32.mrf.mxu0
      %v863 = vadd.f32 0.0, %v862
      %v864 = vpop.f32.mrf.mxu0
      %v865 = vpop.f32.mrf.mxu0
      %v866 = vadd.f32 0.0, %v865
      %v867 = vpop.f32.mrf.mxu0
      %868 = vmatprep.mubr.bf16.mxu0 0
      %869 = vmatmul.mubr.bf16.gmra.mxu0 %v714
      %v870 = vpop.f32.mrf.mxu0
      %v871 = vadd.f32 0.0, %v870
      %v872 = vpop.f32.mrf.mxu0
      %v873 = vpop.f32.mrf.mxu0
      %v874 = vadd.f32 0.0, %v873
      %v875 = vpop.f32.mrf.mxu0
      %876 = vdwg.mxu0
      %877 = vst [vmem:[#allocation3] sm:$0xff] %v751
      %878 = vst [vmem:[#allocation3 + $0x8] sm:$0xff] %v754
      %879 = vst [vmem:[#allocation3 + $0x10] sm:$0xff] %v759
      %880 = vst [vmem:[#allocation3 + $0x18] sm:$0xff] %v762
      %881 = vst [vmem:[#allocation3 + $0x20] sm:$0xff] %v767
      %882 = vst [vmem:[#allocation3 + $0x28] sm:$0xff] %v770
      %883 = vst [vmem:[#allocation3 + $0x30] sm:$0xff] %v775
      %884 = vst [vmem:[#allocation3 + $0x38] sm:$0xff] %v778
      %885 = vst [vmem:[#allocation3 + $0x40] sm:$0xff] %v783
      %886 = vst [vmem:[#allocation3 + $0x48] sm:$0xff] %v786
      %887 = vst [vmem:[#allocation3 + $0x50] sm:$0xff] %v791
      %888 = vst [vmem:[#allocation3 + $0x58] sm:$0xff] %v794
      %889 = vst [vmem:[#allocation3 + $0x60] sm:$0xff] %v799
      %890 = vst [vmem:[#allocation3 + $0x68] sm:$0xff] %v802
      %891 = vst [vmem:[#allocation3 + $0x70] sm:$0xff] %v807
      %892 = vst [vmem:[#allocation3 + $0x78] sm:$0xff] %v810
      %893 = vst [vmem:[#allocation3 + $0x80] sm:$0xff] %v815
      %894 = vst [vmem:[#allocation3 + $0x88] sm:$0xff] %v818
      %895 = vst [vmem:[#allocation3 + $0x90] sm:$0xff] %v823
      %896 = vst [vmem:[#allocation3 + $0x98] sm:$0xff] %v826
      %897 = vst [vmem:[#allocation3 + $0xa0] sm:$0xff] %v831
      %898 = vst [vmem:[#allocation3 + $0xa8] sm:$0xff] %v834
      %899 = vst [vmem:[#allocation3 + $0xb0] sm:$0xff] %v839
      %900 = vst [vmem:[#allocation3 + $0xb8] sm:$0xff] %v842
      %901 = vst [vmem:[#allocation3 + $0xc0] sm:$0xff] %v847
      %902 = vst [vmem:[#allocation3 + $0xc8] sm:$0xff] %v850
      %903 = vst [vmem:[#allocation3 + $0xd0] sm:$0xff] %v855
      %904 = vst [vmem:[#allocation3 + $0xd8] sm:$0xff] %v858
      %905 = vst [vmem:[#allocation3 + $0xe0] sm:$0xff] %v863
      %906 = vst [vmem:[#allocation3 + $0xe8] sm:$0xff] %v866
      %907 = vst [vmem:[#allocation3 + $0xf0] sm:$0xff] %v871
      %908 = vst [vmem:[#allocation3 + $0xf8] sm:$0xff] %v874
      %v909 = vld [vmem:[%s301 + $0x8] sm:$0xf]
      %v910 = vld [vmem:[%s301 + $0xc] sm:$0xf]
      %v911 = vld [vmem:[%s301 + $0x10] sm:$0xf]
      %v912 = vld [vmem:[%s301 + $0x14] sm:$0xf]
      %v913 = vld [vmem:[%s301 + $0x18] sm:$0xf]
      %v914 = vld [vmem:[%s301 + $0x1c] sm:$0xf]
      %v915 = vld [vmem:[%s301 + $0x20] sm:$0xf]
      %v916 = vld [vmem:[%s301 + $0x24] sm:$0xf]
      %v917 = vld [vmem:[%s301 + $0x28] sm:$0xf]
      %v918 = vld [vmem:[%s301 + $0x2c] sm:$0xf]
      %v919 = vld [vmem:[%s301 + $0x30] sm:$0xf]
      %v920 = vld [vmem:[%s301 + $0x34] sm:$0xf]
      %v921 = vld [vmem:[%s301 + $0x38] sm:$0xf]
      %v922 = vld [vmem:[%s301 + $0x3c] sm:$0xf]
      %v923 = vld [vmem:[%s301 + $0x40] sm:$0xf]
      %v924 = vld [vmem:[%s301 + $0x44] sm:$0xf]
      %v925 = vld [vmem:[%s301 + $0x48] sm:$0xf]
      %v926 = vld [vmem:[%s301 + $0x4c] sm:$0xf]
      %v927 = vld [vmem:[%s301 + $0x50] sm:$0xf]
      %v928 = vld [vmem:[%s301 + $0x54] sm:$0xf]
      %v929 = vld [vmem:[%s301 + $0x58] sm:$0xf]
      %v930 = vld [vmem:[%s301 + $0x5c] sm:$0xf]
      %v931 = vld [vmem:[%s301 + $0x60] sm:$0xf]
      %v932 = vld [vmem:[%s301 + $0x64] sm:$0xf]
      %v933 = vld [vmem:[%s301 + $0x68] sm:$0xf]
      %v934 = vld [vmem:[%s301 + $0x6c] sm:$0xf]
      %v935 = vld [vmem:[%s301 + $0x70] sm:$0xf]
      %v936 = vld [vmem:[%s301 + $0x74] sm:$0xf]
      %v937 = vld [vmem:[%s301 + $0x78] sm:$0xf]
      %v938 = vld [vmem:[%s301 + $0x7c] sm:$0xf]
      %v939 = vld [vmem:[%s301 + $0x80] sm:$0xf]
      %v940 = vld [vmem:[%s301 + $0x84] sm:$0xf]
      %s941 = scalar_lea.vmem %s2, 16
      %v942 = vld [vmem:[%s941] sm:$0xf]
      %v943 = vld [vmem:[%s941 + $0x4] sm:$0xf]
      %v944 = vld [vmem:[%s941 + $0x8] sm:$0xf]
      %v945 = vld [vmem:[%s941 + $0xc] sm:$0xf]
      %v978 = vunpack.c.l.b16 %v909
      %v979 = vunpack.c.l.b16 %v910
      %v980 = vunpack.c.l.b16 %v911
      %v981 = vunpack.c.l.b16 %v912
      %v982 = vunpack.c.l.b16 %v913
      %v983 = vunpack.c.l.b16 %v914
      %v984 = vunpack.c.l.b16 %v915
      %v985 = vunpack.c.l.b16 %v916
      %v986 = vunpack.c.l.b16 %v917
      %v987 = vunpack.c.l.b16 %v918
      %v988 = vunpack.c.l.b16 %v919
      %v989 = vunpack.c.l.b16 %v920
      %v990 = vunpack.c.l.b16 %v921
      %v991 = vunpack.c.l.b16 %v922
      %v992 = vunpack.c.l.b16 %v923
      %v993 = vunpack.c.l.b16 %v924
      %v994 = vunpack.c.l.b16 %v925
      %v995 = vunpack.c.l.b16 %v926
      %v996 = vunpack.c.l.b16 %v927
      %v997 = vunpack.c.l.b16 %v928
      %v998 = vunpack.c.l.b16 %v929
      %v999 = vunpack.c.l.b16 %v930
      %v1000 = vunpack.c.l.b16 %v931
      %v1001 = vunpack.c.l.b16 %v932
      %v1002 = vunpack.c.l.b16 %v933
      %v1003 = vunpack.c.l.b16 %v934
      %v1004 = vunpack.c.l.b16 %v935
      %v1005 = vunpack.c.l.b16 %v936
      %v1006 = vunpack.c.l.b16 %v937
      %v1007 = vunpack.c.l.b16 %v938
      %v1008 = vunpack.c.l.b16 %v939
      %v1009 = vunpack.c.l.b16 %v940
      %v1010 = vpack.c.b16 %v979, %v978
      %v1011 = vpack.c.b16 %v981, %v980
      %v1012 = vpack.c.b16 %v983, %v982
      %v1013 = vpack.c.b16 %v985, %v984
      %v1014 = vpack.c.b16 %v987, %v986
      %v1015 = vpack.c.b16 %v989, %v988
      %v1016 = vpack.c.b16 %v991, %v990
      %v1017 = vpack.c.b16 %v993, %v992
      %v1018 = vpack.c.b16 %v995, %v994
      %v1019 = vpack.c.b16 %v997, %v996
      %v1020 = vpack.c.b16 %v999, %v998
      %v1021 = vpack.c.b16 %v1001, %v1000
      %v1022 = vpack.c.b16 %v1003, %v1002
      %v1023 = vpack.c.b16 %v1005, %v1004
      %v1024 = vpack.c.b16 %v1007, %v1006
      %v1025 = vpack.c.b16 %v1009, %v1008
      %v1030 = vunpack.c.l.b16 %v942
      %v1031 = vunpack.c.l.b16 %v943
      %v1032 = vunpack.c.l.b16 %v944
      %v1033 = vunpack.c.l.b16 %v945
      %v1034 = vpack.c.b16 %v1031, %v1030
      %v1035 = vpack.c.b16 %v1033, %v1032
      %v1039 = vsel %vm667, %v1010, 0
      %v1042 = vsel %vm667, %v1011, 0
      %v1045 = vsel %vm667, %v1012, 0
      %v1048 = vsel %vm667, %v1013, 0
      %v1051 = vsel %vm667, %v1014, 0
      %v1054 = vsel %vm667, %v1015, 0
      %v1057 = vsel %vm667, %v1016, 0
      %v1060 = vsel %vm667, %v1017, 0
      %v1063 = vsel %vm667, %v1018, 0
      %v1066 = vsel %vm667, %v1019, 0
      %v1069 = vsel %vm667, %v1020, 0
      %v1072 = vsel %vm667, %v1021, 0
      %v1075 = vsel %vm667, %v1022, 0
      %v1078 = vsel %vm667, %v1023, 0
      %v1081 = vsel %vm667, %v1024, 0
      %v1084 = vsel %vm667, %v1025, 0
      %1086 = vmatprep.subr.bf16.mxu0 0
      %1087 = vmatpush1.bf16.msra.mxu0 0
      %1088 = vmatprep.subr.bf16.mxu0 0
      %1089 = vmatpush1.bf16.msra.mxu0 0
      %1090 = vmatprep.subr.bf16.mxu0 0
      %1091 = vmatpush1.bf16.msra.mxu0 0
      %1092 = vmatprep.subr.bf16.mxu0 0
      %1093 = vmatpush1.bf16.msra.mxu0 0
      %1094 = vmatprep.subr.bf16.mxu0 0
      %1095 = vmatpush1.bf16.msra.mxu0 0
      %1096 = vmatprep.subr.bf16.mxu0 0
      %1097 = vmatpush1.bf16.msra.mxu0 0
      %1098 = vmatprep.subr.bf16.mxu0 0
      %1099 = vmatpush1.bf16.msra.mxu0 %v1035
      %1100 = vmatprep.subr.bf16.mxu0 0
      %1101 = vmatpush1.bf16.msra.mxu0 %v1034
      %1102 = vmatprep.subr.bf16.mxu0 0
      %1103 = vmatpush2.bf16.msra.mxu0 0
      %1104 = vmatprep.subr.bf16.mxu0 0
      %1105 = vmatpush2.bf16.msra.mxu0 0
      %1106 = vmatprep.subr.bf16.mxu0 0
      %1107 = vmatpush2.bf16.msra.mxu0 0
      %1108 = vmatprep.subr.bf16.mxu0 0
      %1109 = vmatpush2.bf16.msra.mxu0 0
      %1110 = vmatprep.subr.bf16.mxu0 0
      %1111 = vmatpush2.bf16.msra.mxu0 0
      %1112 = vmatprep.subr.bf16.mxu0 0
      %1113 = vmatpush2.bf16.msra.mxu0 0
      %1114 = vmatprep.subr.bf16.mxu0 0
      %1115 = vmatpush2.bf16.msra.mxu0 0
      %1116 = vmatprep.subr.bf16.mxu0 0
      %1117 = vmatpush2.bf16.msra.mxu0 0
      %1118 = vmatprep.mubr.bf16.mxu0 0
      %1119 = vmatmul.mubr.bf16.gmra.mxu0 %v1039
      %v1120 = vpop.f32.mrf.mxu0
      %v1121 = vadd.f32 0.0, %v1120
      %v1122 = vpop.f32.mrf.mxu0
      %v1123 = vpop.f32.mrf.mxu0
      %v1124 = vadd.f32 0.0, %v1123
      %v1125 = vpop.f32.mrf.mxu0
      %1126 = vmatprep.mubr.bf16.mxu0 0
      %1127 = vmatmul.mubr.bf16.gmra.mxu0 %v1042
      %v1128 = vpop.f32.mrf.mxu0
      %v1129 = vadd.f32 0.0, %v1128
      %v1130 = vpop.f32.mrf.mxu0
      %v1131 = vpop.f32.mrf.mxu0
      %v1132 = vadd.f32 0.0, %v1131
      %v1133 = vpop.f32.mrf.mxu0
      %1134 = vmatprep.mubr.bf16.mxu0 0
      %1135 = vmatmul.mubr.bf16.gmra.mxu0 %v1045
      %v1136 = vpop.f32.mrf.mxu0
      %v1137 = vadd.f32 0.0, %v1136
      %v1138 = vpop.f32.mrf.mxu0
      %v1139 = vpop.f32.mrf.mxu0
      %v1140 = vadd.f32 0.0, %v1139
      %v1141 = vpop.f32.mrf.mxu0
      %1142 = vmatprep.mubr.bf16.mxu0 0
      %1143 = vmatmul.mubr.bf16.gmra.mxu0 %v1048
      %v1144 = vpop.f32.mrf.mxu0
      %v1145 = vadd.f32 0.0, %v1144
      %v1146 = vpop.f32.mrf.mxu0
      %v1147 = vpop.f32.mrf.mxu0
      %v1148 = vadd.f32 0.0, %v1147
      %v1149 = vpop.f32.mrf.mxu0
      %1150 = vmatprep.mubr.bf16.mxu0 0
      %1151 = vmatmul.mubr.bf16.gmra.mxu0 %v1051
      %v1152 = vpop.f32.mrf.mxu0
      %v1153 = vadd.f32 0.0, %v1152
      %v1154 = vpop.f32.mrf.mxu0
      %v1155 = vpop.f32.mrf.mxu0
      %v1156 = vadd.f32 0.0, %v1155
      %v1157 = vpop.f32.mrf.mxu0
      %1158 = vmatprep.mubr.bf16.mxu0 0
      %1159 = vmatmul.mubr.bf16.gmra.mxu0 %v1054
      %v1160 = vpop.f32.mrf.mxu0
      %v1161 = vadd.f32 0.0, %v1160
      %v1162 = vpop.f32.mrf.mxu0
      %v1163 = vpop.f32.mrf.mxu0
      %v1164 = vadd.f32 0.0, %v1163
      %v1165 = vpop.f32.mrf.mxu0
      %1166 = vmatprep.mubr.bf16.mxu0 0
      %1167 = vmatmul.mubr.bf16.gmra.mxu0 %v1057
      %v1168 = vpop.f32.mrf.mxu0
      %v1169 = vadd.f32 0.0, %v1168
      %v1170 = vpop.f32.mrf.mxu0
      %v1171 = vpop.f32.mrf.mxu0
      %v1172 = vadd.f32 0.0, %v1171
      %v1173 = vpop.f32.mrf.mxu0
      %1174 = vmatprep.mubr.bf16.mxu0 0
      %1175 = vmatmul.mubr.bf16.gmra.mxu0 %v1060
      %v1176 = vpop.f32.mrf.mxu0
      %v1177 = vadd.f32 0.0, %v1176
      %v1178 = vpop.f32.mrf.mxu0
      %v1179 = vpop.f32.mrf.mxu0
      %v1180 = vadd.f32 0.0, %v1179
      %v1181 = vpop.f32.mrf.mxu0
      %1182 = vmatprep.mubr.bf16.mxu0 0
      %1183 = vmatmul.mubr.bf16.gmra.mxu0 %v1063
      %v1184 = vpop.f32.mrf.mxu0
      %v1185 = vadd.f32 0.0, %v1184
      %v1186 = vpop.f32.mrf.mxu0
      %v1187 = vpop.f32.mrf.mxu0
      %v1188 = vadd.f32 0.0, %v1187
      %v1189 = vpop.f32.mrf.mxu0
      %1190 = vmatprep.mubr.bf16.mxu0 0
      %1191 = vmatmul.mubr.bf16.gmra.mxu0 %v1066
      %v1192 = vpop.f32.mrf.mxu0
      %v1193 = vadd.f32 0.0, %v1192
      %v1194 = vpop.f32.mrf.mxu0
      %v1195 = vpop.f32.mrf.mxu0
      %v1196 = vadd.f32 0.0, %v1195
      %v1197 = vpop.f32.mrf.mxu0
      %1198 = vmatprep.mubr.bf16.mxu0 0
      %1199 = vmatmul.mubr.bf16.gmra.mxu0 %v1069
      %v1200 = vpop.f32.mrf.mxu0
      %v1201 = vadd.f32 0.0, %v1200
      %v1202 = vpop.f32.mrf.mxu0
      %v1203 = vpop.f32.mrf.mxu0
      %v1204 = vadd.f32 0.0, %v1203
      %v1205 = vpop.f32.mrf.mxu0
      %1206 = vmatprep.mubr.bf16.mxu0 0
      %1207 = vmatmul.mubr.bf16.gmra.mxu0 %v1072
      %v1208 = vpop.f32.mrf.mxu0
      %v1209 = vadd.f32 0.0, %v1208
      %v1210 = vpop.f32.mrf.mxu0
      %v1211 = vpop.f32.mrf.mxu0
      %v1212 = vadd.f32 0.0, %v1211
      %v1213 = vpop.f32.mrf.mxu0
      %1214 = vmatprep.mubr.bf16.mxu0 0
      %1215 = vmatmul.mubr.bf16.gmra.mxu0 %v1075
      %v1216 = vpop.f32.mrf.mxu0
      %v1217 = vadd.f32 0.0, %v1216
      %v1218 = vpop.f32.mrf.mxu0
      %v1219 = vpop.f32.mrf.mxu0
      %v1220 = vadd.f32 0.0, %v1219
      %v1221 = vpop.f32.mrf.mxu0
      %1222 = vmatprep.mubr.bf16.mxu0 0
      %1223 = vmatmul.mubr.bf16.gmra.mxu0 %v1078
      %v1224 = vpop.f32.mrf.mxu0
      %v1225 = vadd.f32 0.0, %v1224
      %v1226 = vpop.f32.mrf.mxu0
      %v1227 = vpop.f32.mrf.mxu0
      %v1228 = vadd.f32 0.0, %v1227
      %v1229 = vpop.f32.mrf.mxu0
      %1230 = vmatprep.mubr.bf16.mxu0 0
      %1231 = vmatmul.mubr.bf16.gmra.mxu0 %v1081
      %v1232 = vpop.f32.mrf.mxu0
      %v1233 = vadd.f32 0.0, %v1232
      %v1234 = vpop.f32.mrf.mxu0
      %v1235 = vpop.f32.mrf.mxu0
      %v1236 = vadd.f32 0.0, %v1235
      %v1237 = vpop.f32.mrf.mxu0
      %1238 = vmatprep.mubr.bf16.mxu0 0
      %1239 = vmatmul.mubr.bf16.gmra.mxu0 %v1084
      %v1240 = vpop.f32.mrf.mxu0
      %v1241 = vadd.f32 0.0, %v1240
      %v1242 = vpop.f32.mrf.mxu0
      %v1243 = vpop.f32.mrf.mxu0
      %v1244 = vadd.f32 0.0, %v1243
      %v1245 = vpop.f32.mrf.mxu0
      %1246 = vdwg.mxu0
      %v1247 = vld [vmem:[#allocation3] sm:$0xff]
      %v1248 = vld [vmem:[#allocation3 + $0x8] sm:$0xff]
      %v1249 = vld [vmem:[#allocation3 + $0x10] sm:$0xff]
      %v1250 = vld [vmem:[#allocation3 + $0x18] sm:$0xff]
      %v1251 = vld [vmem:[#allocation3 + $0x20] sm:$0xff]
      %v1252 = vld [vmem:[#allocation3 + $0x28] sm:$0xff]
      %v1253 = vld [vmem:[#allocation3 + $0x30] sm:$0xff]
      %v1254 = vld [vmem:[#allocation3 + $0x38] sm:$0xff]
      %v1255 = vld [vmem:[#allocation3 + $0x40] sm:$0xff]
      %v1256 = vld [vmem:[#allocation3 + $0x48] sm:$0xff]
      %v1257 = vld [vmem:[#allocation3 + $0x50] sm:$0xff]
      %v1258 = vld [vmem:[#allocation3 + $0x58] sm:$0xff]
      %v1259 = vld [vmem:[#allocation3 + $0x60] sm:$0xff]
      %v1260 = vld [vmem:[#allocation3 + $0x68] sm:$0xff]
      %v1261 = vld [vmem:[#allocation3 + $0x70] sm:$0xff]
      %v1262 = vld [vmem:[#allocation3 + $0x78] sm:$0xff]
      %v1263 = vld [vmem:[#allocation3 + $0x80] sm:$0xff]
      %v1264 = vld [vmem:[#allocation3 + $0x88] sm:$0xff]
      %v1265 = vld [vmem:[#allocation3 + $0x90] sm:$0xff]
      %v1266 = vld [vmem:[#allocation3 + $0x98] sm:$0xff]
      %v1267 = vld [vmem:[#allocation3 + $0xa0] sm:$0xff]
      %v1268 = vld [vmem:[#allocation3 + $0xa8] sm:$0xff]
      %v1269 = vld [vmem:[#allocation3 + $0xb0] sm:$0xff]
      %v1270 = vld [vmem:[#allocation3 + $0xb8] sm:$0xff]
      %v1271 = vld [vmem:[#allocation3 + $0xc0] sm:$0xff]
      %v1272 = vld [vmem:[#allocation3 + $0xc8] sm:$0xff]
      %v1273 = vld [vmem:[#allocation3 + $0xd0] sm:$0xff]
      %v1274 = vld [vmem:[#allocation3 + $0xd8] sm:$0xff]
      %v1275 = vld [vmem:[#allocation3 + $0xe0] sm:$0xff]
      %v1276 = vld [vmem:[#allocation3 + $0xe8] sm:$0xff]
      %v1277 = vld [vmem:[#allocation3 + $0xf0] sm:$0xff]
      %v1278 = vld [vmem:[#allocation3 + $0xf8] sm:$0xff]
      %v1279 = vadd.f32 %v1247, %v1121
      %v1280 = vadd.f32 %v1248, %v1124
      %v1281 = vadd.f32 %v1249, %v1129
      %v1282 = vadd.f32 %v1250, %v1132
      %v1283 = vadd.f32 %v1251, %v1137
      %v1284 = vadd.f32 %v1252, %v1140
      %v1285 = vadd.f32 %v1253, %v1145
      %v1286 = vadd.f32 %v1254, %v1148
      %v1287 = vadd.f32 %v1255, %v1153
      %v1288 = vadd.f32 %v1256, %v1156
      %v1289 = vadd.f32 %v1257, %v1161
      %v1290 = vadd.f32 %v1258, %v1164
      %v1291 = vadd.f32 %v1259, %v1169
      %v1292 = vadd.f32 %v1260, %v1172
      %v1293 = vadd.f32 %v1261, %v1177
      %v1294 = vadd.f32 %v1262, %v1180
      %v1295 = vadd.f32 %v1263, %v1185
      %v1296 = vadd.f32 %v1264, %v1188
      %v1297 = vadd.f32 %v1265, %v1193
      %v1298 = vadd.f32 %v1266, %v1196
      %v1299 = vadd.f32 %v1267, %v1201
      %v1300 = vadd.f32 %v1268, %v1204
      %v1301 = vadd.f32 %v1269, %v1209
      %v1302 = vadd.f32 %v1270, %v1212
      %v1303 = vadd.f32 %v1271, %v1217
      %v1304 = vadd.f32 %v1272, %v1220
      %v1305 = vadd.f32 %v1273, %v1225
      %v1306 = vadd.f32 %v1274, %v1228
      %v1307 = vadd.f32 %v1275, %v1233
      %v1308 = vadd.f32 %v1276, %v1236
      %v1309 = vadd.f32 %v1277, %v1241
      %v1310 = vadd.f32 %v1278, %v1244
      %1311 = vst [vmem:[#allocation3] sm:$0xff] %v1279
      %1312 = vst [vmem:[#allocation3 + $0x8] sm:$0xff] %v1280
      %1313 = vst [vmem:[#allocation3 + $0x10] sm:$0xff] %v1281
      %1314 = vst [vmem:[#allocation3 + $0x18] sm:$0xff] %v1282
      %1315 = vst [vmem:[#allocation3 + $0x20] sm:$0xff] %v1283
      %1316 = vst [vmem:[#allocation3 + $0x28] sm:$0xff] %v1284
      %1317 = vst [vmem:[#allocation3 + $0x30] sm:$0xff] %v1285
      %1318 = vst [vmem:[#allocation3 + $0x38] sm:$0xff] %v1286
      %1319 = vst [vmem:[#allocation3 + $0x40] sm:$0xff] %v1287
      %1320 = vst [vmem:[#allocation3 + $0x48] sm:$0xff] %v1288
      %1321 = vst [vmem:[#allocation3 + $0x50] sm:$0xff] %v1289
      %1322 = vst [vmem:[#allocation3 + $0x58] sm:$0xff] %v1290
      %1323 = vst [vmem:[#allocation3 + $0x60] sm:$0xff] %v1291
      %1324 = vst [vmem:[#allocation3 + $0x68] sm:$0xff] %v1292
      %1325 = vst [vmem:[#allocation3 + $0x70] sm:$0xff] %v1293
      %1326 = vst [vmem:[#allocation3 + $0x78] sm:$0xff] %v1294
      %1327 = vst [vmem:[#allocation3 + $0x80] sm:$0xff] %v1295
      %1328 = vst [vmem:[#allocation3 + $0x88] sm:$0xff] %v1296
      %1329 = vst [vmem:[#allocation3 + $0x90] sm:$0xff] %v1297
      %1330 = vst [vmem:[#allocation3 + $0x98] sm:$0xff] %v1298
      %1331 = vst [vmem:[#allocation3 + $0xa0] sm:$0xff] %v1299
      %1332 = vst [vmem:[#allocation3 + $0xa8] sm:$0xff] %v1300
      %1333 = vst [vmem:[#allocation3 + $0xb0] sm:$0xff] %v1301
      %1334 = vst [vmem:[#allocation3 + $0xb8] sm:$0xff] %v1302
      %1335 = vst [vmem:[#allocation3 + $0xc0] sm:$0xff] %v1303
      %1336 = vst [vmem:[#allocation3 + $0xc8] sm:$0xff] %v1304
      %1337 = vst [vmem:[#allocation3 + $0xd0] sm:$0xff] %v1305
      %1338 = vst [vmem:[#allocation3 + $0xd8] sm:$0xff] %v1306
      %1339 = vst [vmem:[#allocation3 + $0xe0] sm:$0xff] %v1307
      %1340 = vst [vmem:[#allocation3 + $0xe8] sm:$0xff] %v1308
      %1341 = vst [vmem:[#allocation3 + $0xf0] sm:$0xff] %v1309
      %1342 = vst [vmem:[#allocation3 + $0xf8] sm:$0xff] %v1310
      %v1343 = vld [vmem:[%s301 + $0x8] sm:$0xf]
      %v1344 = vld [vmem:[%s301 + $0xc] sm:$0xf]
      %v1345 = vld [vmem:[%s301 + $0x10] sm:$0xf]
      %v1346 = vld [vmem:[%s301 + $0x14] sm:$0xf]
      %v1347 = vld [vmem:[%s301 + $0x18] sm:$0xf]
      %v1348 = vld [vmem:[%s301 + $0x1c] sm:$0xf]
      %v1349 = vld [vmem:[%s301 + $0x20] sm:$0xf]
      %v1350 = vld [vmem:[%s301 + $0x24] sm:$0xf]
      %v1351 = vld [vmem:[%s301 + $0x28] sm:$0xf]
      %v1352 = vld [vmem:[%s301 + $0x2c] sm:$0xf]
      %v1353 = vld [vmem:[%s301 + $0x30] sm:$0xf]
      %v1354 = vld [vmem:[%s301 + $0x34] sm:$0xf]
      %v1355 = vld [vmem:[%s301 + $0x38] sm:$0xf]
      %v1356 = vld [vmem:[%s301 + $0x3c] sm:$0xf]
      %v1357 = vld [vmem:[%s301 + $0x40] sm:$0xf]
      %v1358 = vld [vmem:[%s301 + $0x44] sm:$0xf]
      %v1359 = vld [vmem:[%s301 + $0x48] sm:$0xf]
      %v1360 = vld [vmem:[%s301 + $0x4c] sm:$0xf]
      %v1361 = vld [vmem:[%s301 + $0x50] sm:$0xf]
      %v1362 = vld [vmem:[%s301 + $0x54] sm:$0xf]
      %v1363 = vld [vmem:[%s301 + $0x58] sm:$0xf]
      %v1364 = vld [vmem:[%s301 + $0x5c] sm:$0xf]
      %v1365 = vld [vmem:[%s301 + $0x60] sm:$0xf]
      %v1366 = vld [vmem:[%s301 + $0x64] sm:$0xf]
      %v1367 = vld [vmem:[%s301 + $0x68] sm:$0xf]
      %v1368 = vld [vmem:[%s301 + $0x6c] sm:$0xf]
      %v1369 = vld [vmem:[%s301 + $0x70] sm:$0xf]
      %v1370 = vld [vmem:[%s301 + $0x74] sm:$0xf]
      %v1371 = vld [vmem:[%s301 + $0x78] sm:$0xf]
      %v1372 = vld [vmem:[%s301 + $0x7c] sm:$0xf]
      %v1373 = vld [vmem:[%s301 + $0x80] sm:$0xf]
      %v1374 = vld [vmem:[%s301 + $0x84] sm:$0xf]
      %v1375 = vld [vmem:[%s301 + $0x88] sm:$0x1]
      %s1376 = scalar_lea.vmem %s2, 32
      %v1377 = vld [vmem:[%s1376] sm:$0xf]
      %v1378 = vld [vmem:[%s1376 + $0x4] sm:$0xf]
      %v1379 = vld [vmem:[%s1376 + $0x8] sm:$0xf]
      %v1380 = vld [vmem:[%s1376 + $0xc] sm:$0xf]
      %v1414 = vunpack.c.l.b16 %v1343
      %v1415 = vunpack.c.l.b16 %v1344
      %v1416 = vunpack.c.l.b16 %v1345
      %v1417 = vunpack.c.l.b16 %v1346
      %v1418 = vunpack.c.l.b16 %v1347
      %v1419 = vunpack.c.l.b16 %v1348
      %v1420 = vunpack.c.l.b16 %v1349
      %v1421 = vunpack.c.l.b16 %v1350
      %v1422 = vunpack.c.l.b16 %v1351
      %v1423 = vunpack.c.l.b16 %v1352
      %v1424 = vunpack.c.l.b16 %v1353
      %v1425 = vunpack.c.l.b16 %v1354
      %v1426 = vunpack.c.l.b16 %v1355
      %v1427 = vunpack.c.l.b16 %v1356
      %v1428 = vunpack.c.l.b16 %v1357
      %v1429 = vunpack.c.l.b16 %v1358
      %v1430 = vunpack.c.l.b16 %v1359
      %v1431 = vunpack.c.l.b16 %v1360
      %v1432 = vunpack.c.l.b16 %v1361
      %v1433 = vunpack.c.l.b16 %v1362
      %v1434 = vunpack.c.l.b16 %v1363
      %v1435 = vunpack.c.l.b16 %v1364
      %v1436 = vunpack.c.l.b16 %v1365
      %v1437 = vunpack.c.l.b16 %v1366
      %v1438 = vunpack.c.l.b16 %v1367
      %v1439 = vunpack.c.l.b16 %v1368
      %v1440 = vunpack.c.l.b16 %v1369
      %v1441 = vunpack.c.l.b16 %v1370
      %v1442 = vunpack.c.l.b16 %v1371
      %v1443 = vunpack.c.l.b16 %v1372
      %v1444 = vunpack.c.l.b16 %v1373
      %v1445 = vunpack.c.l.b16 %v1374
      %v1446 = vunpack.c.l.b16 %v1375
      %v1447 = vpack.c.b16 %v1415, %v1414
      %v1448 = vpack.c.b16 %v1417, %v1416
      %v1449 = vpack.c.b16 %v1419, %v1418
      %v1450 = vpack.c.b16 %v1421, %v1420
      %v1451 = vpack.c.b16 %v1423, %v1422
      %v1452 = vpack.c.b16 %v1425, %v1424
      %v1453 = vpack.c.b16 %v1427, %v1426
      %v1454 = vpack.c.b16 %v1429, %v1428
      %v1455 = vpack.c.b16 %v1431, %v1430
      %v1456 = vpack.c.b16 %v1433, %v1432
      %v1457 = vpack.c.b16 %v1435, %v1434
      %v1458 = vpack.c.b16 %v1437, %v1436
      %v1459 = vpack.c.b16 %v1439, %v1438
      %v1460 = vpack.c.b16 %v1441, %v1440
      %v1461 = vpack.c.b16 %v1443, %v1442
      %v1462 = vpack.c.b16 %v1445, %v1444
      %v1463 = vpack.c.b16 %v1446, %v1446
      %vm1464 = vsmask.f32 7424
      %v1466 = vshrl.u32 %v1447, 16
      %v1468 = vshll.u32 %v1447, 16
      %v1470 = vrot.slane %v1468, 1
      %v1471 = vor.u32 %v1466, %v1470
      %v1473 = vshll.u32 %v1448, 16
      %v1475 = vrot.slane %v1473, 1
      %v1476 = vsel %vm1464, %v1471, %v1475
      %v1477 = vshrl.u32 %v1448, 16
      %v1479 = vor.u32 %v1477, %v1475
      %v1481 = vshll.u32 %v1449, 16
      %v1483 = vrot.slane %v1481, 1
      %v1484 = vsel %vm1464, %v1479, %v1483
      %v1485 = vshrl.u32 %v1449, 16
      %v1487 = vor.u32 %v1485, %v1483
      %v1489 = vshll.u32 %v1450, 16
      %v1491 = vrot.slane %v1489, 1
      %v1492 = vsel %vm1464, %v1487, %v1491
      %v1493 = vshrl.u32 %v1450, 16
      %v1495 = vor.u32 %v1493, %v1491
      %v1497 = vshll.u32 %v1451, 16
      %v1499 = vrot.slane %v1497, 1
      %v1500 = vsel %vm1464, %v1495, %v1499
      %v1501 = vshrl.u32 %v1451, 16
      %v1503 = vor.u32 %v1501, %v1499
      %v1505 = vshll.u32 %v1452, 16
      %v1507 = vrot.slane %v1505, 1
      %v1508 = vsel %vm1464, %v1503, %v1507
      %v1509 = vshrl.u32 %v1452, 16
      %v1511 = vor.u32 %v1509, %v1507
      %v1513 = vshll.u32 %v1453, 16
      %v1515 = vrot.slane %v1513, 1
      %v1516 = vsel %vm1464, %v1511, %v1515
      %v1517 = vshrl.u32 %v1453, 16
      %v1519 = vor.u32 %v1517, %v1515
      %v1521 = vshll.u32 %v1454, 16
      %v1523 = vrot.slane %v1521, 1
      %v1524 = vsel %vm1464, %v1519, %v1523
      %v1525 = vshrl.u32 %v1454, 16
      %v1527 = vor.u32 %v1525, %v1523
      %v1529 = vshll.u32 %v1455, 16
      %v1531 = vrot.slane %v1529, 1
      %v1532 = vsel %vm1464, %v1527, %v1531
      %v1533 = vshrl.u32 %v1455, 16
      %v1535 = vor.u32 %v1533, %v1531
      %v1537 = vshll.u32 %v1456, 16
      %v1539 = vrot.slane %v1537, 1
      %v1540 = vsel %vm1464, %v1535, %v1539
      %v1541 = vshrl.u32 %v1456, 16
      %v1543 = vor.u32 %v1541, %v1539
      %v1545 = vshll.u32 %v1457, 16
      %v1547 = vrot.slane %v1545, 1
      %v1548 = vsel %vm1464, %v1543, %v1547
      %v1549 = vshrl.u32 %v1457, 16
      %v1551 = vor.u32 %v1549, %v1547
      %v1553 = vshll.u32 %v1458, 16
      %v1555 = vrot.slane %v1553, 1
      %v1556 = vsel %vm1464, %v1551, %v1555
      %v1557 = vshrl.u32 %v1458, 16
      %v1559 = vor.u32 %v1557, %v1555
      %v1561 = vshll.u32 %v1459, 16
      %v1563 = vrot.slane %v1561, 1
      %v1564 = vsel %vm1464, %v1559, %v1563
      %v1565 = vshrl.u32 %v1459, 16
      %v1567 = vor.u32 %v1565, %v1563
      %v1569 = vshll.u32 %v1460, 16
      %v1571 = vrot.slane %v1569, 1
      %v1572 = vsel %vm1464, %v1567, %v1571
      %v1573 = vshrl.u32 %v1460, 16
      %v1575 = vor.u32 %v1573, %v1571
      %v1577 = vshll.u32 %v1461, 16
      %v1579 = vrot.slane %v1577, 1
      %v1580 = vsel %vm1464, %v1575, %v1579
      %v1581 = vshrl.u32 %v1461, 16
      %v1583 = vor.u32 %v1581, %v1579
      %v1585 = vshll.u32 %v1462, 16
      %v1587 = vrot.slane %v1585, 1
      %v1588 = vsel %vm1464, %v1583, %v1587
      %v1589 = vshrl.u32 %v1462, 16
      %v1591 = vor.u32 %v1589, %v1587
      %v1593 = vshll.u32 %v1463, 16
      %v1595 = vrot.slane %v1593, 1
      %v1596 = vsel %vm1464, %v1591, %v1595
      %v1601 = vunpack.c.l.b16 %v1377
      %v1602 = vunpack.c.l.b16 %v1378
      %v1603 = vunpack.c.l.b16 %v1379
      %v1604 = vunpack.c.l.b16 %v1380
      %v1605 = vpack.c.b16 %v1602, %v1601
      %v1606 = vpack.c.b16 %v1604, %v1603
      %v1610 = vsel %vm667, %v1476, 0
      %v1613 = vsel %vm667, %v1484, 0
      %v1616 = vsel %vm667, %v1492, 0
      %v1619 = vsel %vm667, %v1500, 0
      %v1622 = vsel %vm667, %v1508, 0
      %v1625 = vsel %vm667, %v1516, 0
      %v1628 = vsel %vm667, %v1524, 0
      %v1631 = vsel %vm667, %v1532, 0
      %v1634 = vsel %vm667, %v1540, 0
      %v1637 = vsel %vm667, %v1548, 0
      %v1640 = vsel %vm667, %v1556, 0
      %v1643 = vsel %vm667, %v1564, 0
      %v1646 = vsel %vm667, %v1572, 0
      %v1649 = vsel %vm667, %v1580, 0
      %v1652 = vsel %vm667, %v1588, 0
      %v1655 = vsel %vm667, %v1596, 0
      %1657 = vmatprep.subr.bf16.mxu0 0
      %1658 = vmatpush1.bf16.msra.mxu0 0
      %1659 = vmatprep.subr.bf16.mxu0 0
      %1660 = vmatpush1.bf16.msra.mxu0 0
      %1661 = vmatprep.subr.bf16.mxu0 0
      %1662 = vmatpush1.bf16.msra.mxu0 0
      %1663 = vmatprep.subr.bf16.mxu0 0
      %1664 = vmatpush1.bf16.msra.mxu0 0
      %1665 = vmatprep.subr.bf16.mxu0 0
      %1666 = vmatpush1.bf16.msra.mxu0 0
      %1667 = vmatprep.subr.bf16.mxu0 0
      %1668 = vmatpush1.bf16.msra.mxu0 0
      %1669 = vmatprep.subr.bf16.mxu0 0
      %1670 = vmatpush1.bf16.msra.mxu0 %v1606
      %1671 = vmatprep.subr.bf16.mxu0 0
      %1672 = vmatpush1.bf16.msra.mxu0 %v1605
      %1673 = vmatprep.subr.bf16.mxu0 0
      %1674 = vmatpush2.bf16.msra.mxu0 0
      %1675 = vmatprep.subr.bf16.mxu0 0
      %1676 = vmatpush2.bf16.msra.mxu0 0
      %1677 = vmatprep.subr.bf16.mxu0 0
      %1678 = vmatpush2.bf16.msra.mxu0 0
      %1679 = vmatprep.subr.bf16.mxu0 0
      %1680 = vmatpush2.bf16.msra.mxu0 0
      %1681 = vmatprep.subr.bf16.mxu0 0
      %1682 = vmatpush2.bf16.msra.mxu0 0
      %1683 = vmatprep.subr.bf16.mxu0 0
      %1684 = vmatpush2.bf16.msra.mxu0 0
      %1685 = vmatprep.subr.bf16.mxu0 0
      %1686 = vmatpush2.bf16.msra.mxu0 0
      %1687 = vmatprep.subr.bf16.mxu0 0
      %1688 = vmatpush2.bf16.msra.mxu0 0
      %1689 = vmatprep.mubr.bf16.mxu0 0
      %1690 = vmatmul.mubr.bf16.gmra.mxu0 %v1610
      %v1691 = vpop.f32.mrf.mxu0
      %v1692 = vadd.f32 0.0, %v1691
      %v1693 = vpop.f32.mrf.mxu0
      %v1694 = vpop.f32.mrf.mxu0
      %v1695 = vadd.f32 0.0, %v1694
      %v1696 = vpop.f32.mrf.mxu0
      %1697 = vmatprep.mubr.bf16.mxu0 0
      %1698 = vmatmul.mubr.bf16.gmra.mxu0 %v1613
      %v1699 = vpop.f32.mrf.mxu0
      %v1700 = vadd.f32 0.0, %v1699
      %v1701 = vpop.f32.mrf.mxu0
      %v1702 = vpop.f32.mrf.mxu0
      %v1703 = vadd.f32 0.0, %v1702
      %v1704 = vpop.f32.mrf.mxu0
      %1705 = vmatprep.mubr.bf16.mxu0 0
      %1706 = vmatmul.mubr.bf16.gmra.mxu0 %v1616
      %v1707 = vpop.f32.mrf.mxu0
      %v1708 = vadd.f32 0.0, %v1707
      %v1709 = vpop.f32.mrf.mxu0
      %v1710 = vpop.f32.mrf.mxu0
      %v1711 = vadd.f32 0.0, %v1710
      %v1712 = vpop.f32.mrf.mxu0
      %1713 = vmatprep.mubr.bf16.mxu0 0
      %1714 = vmatmul.mubr.bf16.gmra.mxu0 %v1619
      %v1715 = vpop.f32.mrf.mxu0
      %v1716 = vadd.f32 0.0, %v1715
      %v1717 = vpop.f32.mrf.mxu0
      %v1718 = vpop.f32.mrf.mxu0
      %v1719 = vadd.f32 0.0, %v1718
      %v1720 = vpop.f32.mrf.mxu0
      %1721 = vmatprep.mubr.bf16.mxu0 0
      %1722 = vmatmul.mubr.bf16.gmra.mxu0 %v1622
      %v1723 = vpop.f32.mrf.mxu0
      %v1724 = vadd.f32 0.0, %v1723
      %v1725 = vpop.f32.mrf.mxu0
      %v1726 = vpop.f32.mrf.mxu0
      %v1727 = vadd.f32 0.0, %v1726
      %v1728 = vpop.f32.mrf.mxu0
      %1729 = vmatprep.mubr.bf16.mxu0 0
      %1730 = vmatmul.mubr.bf16.gmra.mxu0 %v1625
      %v1731 = vpop.f32.mrf.mxu0
      %v1732 = vadd.f32 0.0, %v1731
      %v1733 = vpop.f32.mrf.mxu0
      %v1734 = vpop.f32.mrf.mxu0
      %v1735 = vadd.f32 0.0, %v1734
      %v1736 = vpop.f32.mrf.mxu0
      %1737 = vmatprep.mubr.bf16.mxu0 0
      %1738 = vmatmul.mubr.bf16.gmra.mxu0 %v1628
      %v1739 = vpop.f32.mrf.mxu0
      %v1740 = vadd.f32 0.0, %v1739
      %v1741 = vpop.f32.mrf.mxu0
      %v1742 = vpop.f32.mrf.mxu0
      %v1743 = vadd.f32 0.0, %v1742
      %v1744 = vpop.f32.mrf.mxu0
      %1745 = vmatprep.mubr.bf16.mxu0 0
      %1746 = vmatmul.mubr.bf16.gmra.mxu0 %v1631
      %v1747 = vpop.f32.mrf.mxu0
      %v1748 = vadd.f32 0.0, %v1747
      %v1749 = vpop.f32.mrf.mxu0
      %v1750 = vpop.f32.mrf.mxu0
      %v1751 = vadd.f32 0.0, %v1750
      %v1752 = vpop.f32.mrf.mxu0
      %1753 = vmatprep.mubr.bf16.mxu0 0
      %1754 = vmatmul.mubr.bf16.gmra.mxu0 %v1634
      %v1755 = vpop.f32.mrf.mxu0
      %v1756 = vadd.f32 0.0, %v1755
      %v1757 = vpop.f32.mrf.mxu0
      %v1758 = vpop.f32.mrf.mxu0
      %v1759 = vadd.f32 0.0, %v1758
      %v1760 = vpop.f32.mrf.mxu0
      %1761 = vmatprep.mubr.bf16.mxu0 0
      %1762 = vmatmul.mubr.bf16.gmra.mxu0 %v1637
      %v1763 = vpop.f32.mrf.mxu0
      %v1764 = vadd.f32 0.0, %v1763
      %v1765 = vpop.f32.mrf.mxu0
      %v1766 = vpop.f32.mrf.mxu0
      %v1767 = vadd.f32 0.0, %v1766
      %v1768 = vpop.f32.mrf.mxu0
      %1769 = vmatprep.mubr.bf16.mxu0 0
      %1770 = vmatmul.mubr.bf16.gmra.mxu0 %v1640
      %v1771 = vpop.f32.mrf.mxu0
      %v1772 = vadd.f32 0.0, %v1771
      %v1773 = vpop.f32.mrf.mxu0
      %v1774 = vpop.f32.mrf.mxu0
      %v1775 = vadd.f32 0.0, %v1774
      %v1776 = vpop.f32.mrf.mxu0
      %1777 = vmatprep.mubr.bf16.mxu0 0
      %1778 = vmatmul.mubr.bf16.gmra.mxu0 %v1643
      %v1779 = vpop.f32.mrf.mxu0
      %v1780 = vadd.f32 0.0, %v1779
      %v1781 = vpop.f32.mrf.mxu0
      %v1782 = vpop.f32.mrf.mxu0
      %v1783 = vadd.f32 0.0, %v1782
      %v1784 = vpop.f32.mrf.mxu0
      %1785 = vmatprep.mubr.bf16.mxu0 0
      %1786 = vmatmul.mubr.bf16.gmra.mxu0 %v1646
      %v1787 = vpop.f32.mrf.mxu0
      %v1788 = vadd.f32 0.0, %v1787
      %v1789 = vpop.f32.mrf.mxu0
      %v1790 = vpop.f32.mrf.mxu0
      %v1791 = vadd.f32 0.0, %v1790
      %v1792 = vpop.f32.mrf.mxu0
      %1793 = vmatprep.mubr.bf16.mxu0 0
      %1794 = vmatmul.mubr.bf16.gmra.mxu0 %v1649
      %v1795 = vpop.f32.mrf.mxu0
      %v1796 = vadd.f32 0.0, %v1795
      %v1797 = vpop.f32.mrf.mxu0
      %v1798 = vpop.f32.mrf.mxu0
      %v1799 = vadd.f32 0.0, %v1798
      %v1800 = vpop.f32.mrf.mxu0
      %1801 = vmatprep.mubr.bf16.mxu0 0
      %1802 = vmatmul.mubr.bf16.gmra.mxu0 %v1652
      %v1803 = vpop.f32.mrf.mxu0
      %v1804 = vadd.f32 0.0, %v1803
      %v1805 = vpop.f32.mrf.mxu0
      %v1806 = vpop.f32.mrf.mxu0
      %v1807 = vadd.f32 0.0, %v1806
      %v1808 = vpop.f32.mrf.mxu0
      %1809 = vmatprep.mubr.bf16.mxu0 0
      %1810 = vmatmul.mubr.bf16.gmra.mxu0 %v1655
      %v1811 = vpop.f32.mrf.mxu0
      %v1812 = vadd.f32 0.0, %v1811
      %v1813 = vpop.f32.mrf.mxu0
      %v1814 = vpop.f32.mrf.mxu0
      %v1815 = vadd.f32 0.0, %v1814
      %v1816 = vpop.f32.mrf.mxu0
      %1817 = vdwg.mxu0
      %v1818 = vld [vmem:[#allocation3] sm:$0xff]
      %v1819 = vld [vmem:[#allocation3 + $0x8] sm:$0xff]
      %v1820 = vld [vmem:[#allocation3 + $0x10] sm:$0xff]
      %v1821 = vld [vmem:[#allocation3 + $0x18] sm:$0xff]
      %v1822 = vld [vmem:[#allocation3 + $0x20] sm:$0xff]
      %v1823 = vld [vmem:[#allocation3 + $0x28] sm:$0xff]
      %v1824 = vld [vmem:[#allocation3 + $0x30] sm:$0xff]
      %v1825 = vld [vmem:[#allocation3 + $0x38] sm:$0xff]
      %v1826 = vld [vmem:[#allocation3 + $0x40] sm:$0xff]
      %v1827 = vld [vmem:[#allocation3 + $0x48] sm:$0xff]
      %v1828 = vld [vmem:[#allocation3 + $0x50] sm:$0xff]
      %v1829 = vld [vmem:[#allocation3 + $0x58] sm:$0xff]
      %v1830 = vld [vmem:[#allocation3 + $0x60] sm:$0xff]
      %v1831 = vld [vmem:[#allocation3 + $0x68] sm:$0xff]
      %v1832 = vld [vmem:[#allocation3 + $0x70] sm:$0xff]
      %v1833 = vld [vmem:[#allocation3 + $0x78] sm:$0xff]
      %v1834 = vld [vmem:[#allocation3 + $0x80] sm:$0xff]
      %v1835 = vld [vmem:[#allocation3 + $0x88] sm:$0xff]
      %v1836 = vld [vmem:[#allocation3 + $0x90] sm:$0xff]
      %v1837 = vld [vmem:[#allocation3 + $0x98] sm:$0xff]
      %v1838 = vld [vmem:[#allocation3 + $0xa0] sm:$0xff]
      %v1839 = vld [vmem:[#allocation3 + $0xa8] sm:$0xff]
      %v1840 = vld [vmem:[#allocation3 + $0xb0] sm:$0xff]
      %v1841 = vld [vmem:[#allocation3 + $0xb8] sm:$0xff]
      %v1842 = vld [vmem:[#allocation3 + $0xc0] sm:$0xff]
      %v1843 = vld [vmem:[#allocation3 + $0xc8] sm:$0xff]
      %v1844 = vld [vmem:[#allocation3 + $0xd0] sm:$0xff]
      %v1845 = vld [vmem:[#allocation3 + $0xd8] sm:$0xff]
      %v1846 = vld [vmem:[#allocation3 + $0xe0] sm:$0xff]
      %v1847 = vld [vmem:[#allocation3 + $0xe8] sm:$0xff]
      %v1848 = vld [vmem:[#allocation3 + $0xf0] sm:$0xff]
      %v1849 = vld [vmem:[#allocation3 + $0xf8] sm:$0xff]
      %v1850 = vadd.f32 %v1818, %v1692
      %v1851 = vadd.f32 %v1819, %v1695
      %v1852 = vadd.f32 %v1820, %v1700
      %v1853 = vadd.f32 %v1821, %v1703
      %v1854 = vadd.f32 %v1822, %v1708
      %v1855 = vadd.f32 %v1823, %v1711
      %v1856 = vadd.f32 %v1824, %v1716
      %v1857 = vadd.f32 %v1825, %v1719
      %v1858 = vadd.f32 %v1826, %v1724
      %v1859 = vadd.f32 %v1827, %v1727
      %v1860 = vadd.f32 %v1828, %v1732
      %v1861 = vadd.f32 %v1829, %v1735
      %v1862 = vadd.f32 %v1830, %v1740
      %v1863 = vadd.f32 %v1831, %v1743
      %v1864 = vadd.f32 %v1832, %v1748
      %v1865 = vadd.f32 %v1833, %v1751
      %v1866 = vadd.f32 %v1834, %v1756
      %v1867 = vadd.f32 %v1835, %v1759
      %v1868 = vadd.f32 %v1836, %v1764
      %v1869 = vadd.f32 %v1837, %v1767
      %v1870 = vadd.f32 %v1838, %v1772
      %v1871 = vadd.f32 %v1839, %v1775
      %v1872 = vadd.f32 %v1840, %v1780
      %v1873 = vadd.f32 %v1841, %v1783
      %v1874 = vadd.f32 %v1842, %v1788
      %v1875 = vadd.f32 %v1843, %v1791
      %v1876 = vadd.f32 %v1844, %v1796
      %v1877 = vadd.f32 %v1845, %v1799
      %v1878 = vadd.f32 %v1846, %v1804
      %v1879 = vadd.f32 %v1847, %v1807
      %v1880 = vadd.f32 %v1848, %v1812
      %v1881 = vadd.f32 %v1849, %v1815
      %1882 = vst [vmem:[#allocation3] sm:$0xff] %v1850
      %1883 = vst [vmem:[#allocation3 + $0x8] sm:$0xff] %v1851
      %1884 = vst [vmem:[#allocation3 + $0x10] sm:$0xff] %v1852
      %1885 = vst [vmem:[#allocation3 + $0x18] sm:$0xff] %v1853
      %1886 = vst [vmem:[#allocation3 + $0x20] sm:$0xff] %v1854
      %1887 = vst [vmem:[#allocation3 + $0x28] sm:$0xff] %v1855
      %1888 = vst [vmem:[#allocation3 + $0x30] sm:$0xff] %v1856
      %1889 = vst [vmem:[#allocation3 + $0x38] sm:$0xff] %v1857
      %1890 = vst [vmem:[#allocation3 + $0x40] sm:$0xff] %v1858
      %1891 = vst [vmem:[#allocation3 + $0x48] sm:$0xff] %v1859
      %1892 = vst [vmem:[#allocation3 + $0x50] sm:$0xff] %v1860
      %1893 = vst [vmem:[#allocation3 + $0x58] sm:$0xff] %v1861
      %1894 = vst [vmem:[#allocation3 + $0x60] sm:$0xff] %v1862
      %1895 = vst [vmem:[#allocation3 + $0x68] sm:$0xff] %v1863
      %1896 = vst [vmem:[#allocation3 + $0x70] sm:$0xff] %v1864
      %1897 = vst [vmem:[#allocation3 + $0x78] sm:$0xff] %v1865
      %1898 = vst [vmem:[#allocation3 + $0x80] sm:$0xff] %v1866
      %1899 = vst [vmem:[#allocation3 + $0x88] sm:$0xff] %v1867
      %1900 = vst [vmem:[#allocation3 + $0x90] sm:$0xff] %v1868
      %1901 = vst [vmem:[#allocation3 + $0x98] sm:$0xff] %v1869
      %1902 = vst [vmem:[#allocation3 + $0xa0] sm:$0xff] %v1870
      %1903 = vst [vmem:[#allocation3 + $0xa8] sm:$0xff] %v1871
      %1904 = vst [vmem:[#allocation3 + $0xb0] sm:$0xff] %v1872
      %1905 = vst [vmem:[#allocation3 + $0xb8] sm:$0xff] %v1873
      %1906 = vst [vmem:[#allocation3 + $0xc0] sm:$0xff] %v1874
      %1907 = vst [vmem:[#allocation3 + $0xc8] sm:$0xff] %v1875
      %1908 = vst [vmem:[#allocation3 + $0xd0] sm:$0xff] %v1876
      %1909 = vst [vmem:[#allocation3 + $0xd8] sm:$0xff] %v1877
      %1910 = vst [vmem:[#allocation3 + $0xe0] sm:$0xff] %v1878
      %1911 = vst [vmem:[#allocation3 + $0xe8] sm:$0xff] %v1879
      %1912 = vst [vmem:[#allocation3 + $0xf0] sm:$0xff] %v1880
      %1913 = vst [vmem:[#allocation3 + $0xf8] sm:$0xff] %v1881
      %v1914 = vld [vmem:[%s301 + $0xc] sm:$0x8]
      %v1915 = vld [vmem:[%s301 + $0x10] sm:$0xf]
      %v1916 = vld [vmem:[%s301 + $0x14] sm:$0xf]
      %v1917 = vld [vmem:[%s301 + $0x18] sm:$0xf]
      %v1918 = vld [vmem:[%s301 + $0x1c] sm:$0xf]
      %v1919 = vld [vmem:[%s301 + $0x20] sm:$0xf]
      %v1920 = vld [vmem:[%s301 + $0x24] sm:$0xf]
      %v1921 = vld [vmem:[%s301 + $0x28] sm:$0xf]
      %v1922 = vld [vmem:[%s301 + $0x2c] sm:$0xf]
      %v1923 = vld [vmem:[%s301 + $0x30] sm:$0xf]
      %v1924 = vld [vmem:[%s301 + $0x34] sm:$0xf]
      %v1925 = vld [vmem:[%s301 + $0x38] sm:$0xf]
      %v1926 = vld [vmem:[%s301 + $0x3c] sm:$0xf]
      %v1927 = vld [vmem:[%s301 + $0x40] sm:$0xf]
      %v1928 = vld [vmem:[%s301 + $0x44] sm:$0xf]
      %v1929 = vld [vmem:[%s301 + $0x48] sm:$0xf]
      %v1930 = vld [vmem:[%s301 + $0x4c] sm:$0xf]
      %v1931 = vld [vmem:[%s301 + $0x50] sm:$0xf]
      %v1932 = vld [vmem:[%s301 + $0x54] sm:$0xf]
      %v1933 = vld [vmem:[%s301 + $0x58] sm:$0xf]
      %v1934 = vld [vmem:[%s301 + $0x5c] sm:$0xf]
      %v1935 = vld [vmem:[%s301 + $0x60] sm:$0xf]
      %v1936 = vld [vmem:[%s301 + $0x64] sm:$0xf]
      %v1937 = vld [vmem:[%s301 + $0x68] sm:$0xf]
      %v1938 = vld [vmem:[%s301 + $0x6c] sm:$0xf]
      %v1939 = vld [vmem:[%s301 + $0x70] sm:$0xf]
      %v1940 = vld [vmem:[%s301 + $0x74] sm:$0xf]
      %v1941 = vld [vmem:[%s301 + $0x78] sm:$0xf]
      %v1942 = vld [vmem:[%s301 + $0x7c] sm:$0xf]
      %v1943 = vld [vmem:[%s301 + $0x80] sm:$0xf]
      %v1944 = vld [vmem:[%s301 + $0x84] sm:$0xf]
      %v1945 = vld [vmem:[%s301 + $0x88] sm:$0xf]
      %v1946 = vld [vmem:[%s301 + $0x8c] sm:$0xf]
      %s1947 = scalar_lea.vmem %s2, 48
      %v1948 = vld [vmem:[%s1947] sm:$0xf]
      %v1949 = vld [vmem:[%s1947 + $0x4] sm:$0xf]
      %v1950 = vld [vmem:[%s1947 + $0x8] sm:$0xf]
      %v1951 = vld [vmem:[%s1947 + $0xc] sm:$0xf]
      %v1985 = vunpack.c.l.b16 %v1914
      %v1986 = vunpack.c.l.b16 %v1915
      %v1987 = vunpack.c.l.b16 %v1916
      %v1988 = vunpack.c.l.b16 %v1917
      %v1989 = vunpack.c.l.b16 %v1918
      %v1990 = vunpack.c.l.b16 %v1919
      %v1991 = vunpack.c.l.b16 %v1920
      %v1992 = vunpack.c.l.b16 %v1921
      %v1993 = vunpack.c.l.b16 %v1922
      %v1994 = vunpack.c.l.b16 %v1923
      %v1995 = vunpack.c.l.b16 %v1924
      %v1996 = vunpack.c.l.b16 %v1925
      %v1997 = vunpack.c.l.b16 %v1926
      %v1998 = vunpack.c.l.b16 %v1927
      %v1999 = vunpack.c.l.b16 %v1928
      %v2000 = vunpack.c.l.b16 %v1929
      %v2001 = vunpack.c.l.b16 %v1930
      %v2002 = vunpack.c.l.b16 %v1931
      %v2003 = vunpack.c.l.b16 %v1932
      %v2004 = vunpack.c.l.b16 %v1933
      %v2005 = vunpack.c.l.b16 %v1934
      %v2006 = vunpack.c.l.b16 %v1935
      %v2007 = vunpack.c.l.b16 %v1936
      %v2008 = vunpack.c.l.b16 %v1937
      %v2009 = vunpack.c.l.b16 %v1938
      %v2010 = vunpack.c.l.b16 %v1939
      %v2011 = vunpack.c.l.b16 %v1940
      %v2012 = vunpack.c.l.b16 %v1941
      %v2013 = vunpack.c.l.b16 %v1942
      %v2014 = vunpack.c.l.b16 %v1943
      %v2015 = vunpack.c.l.b16 %v1944
      %v2016 = vunpack.c.l.b16 %v1945
      %v2017 = vunpack.c.l.b16 %v1946
      %v2018 = vpack.c.b16 %v1986, %v1985
      %v2019 = vpack.c.b16 %v1988, %v1987
      %v2020 = vpack.c.b16 %v1990, %v1989
      %v2021 = vpack.c.b16 %v1992, %v1991
      %v2022 = vpack.c.b16 %v1994, %v1993
      %v2023 = vpack.c.b16 %v1996, %v1995
      %v2024 = vpack.c.b16 %v1998, %v1997
      %v2025 = vpack.c.b16 %v2000, %v1999
      %v2026 = vpack.c.b16 %v2002, %v2001
      %v2027 = vpack.c.b16 %v2004, %v2003
      %v2028 = vpack.c.b16 %v2006, %v2005
      %v2029 = vpack.c.b16 %v2008, %v2007
      %v2030 = vpack.c.b16 %v2010, %v2009
      %v2031 = vpack.c.b16 %v2012, %v2011
      %v2032 = vpack.c.b16 %v2014, %v2013
      %v2033 = vpack.c.b16 %v2016, %v2015
      %v2034 = vpack.c.b16 %v2017, %v2017
      %v2036 = vshrl.u32 %v2018, 16
      %v2038 = vrot.slane %v2036, 3
      %v2039 = vshll.u32 %v2018, 16
      %v2041 = vrot.slane %v2039, 4
      %v2042 = vor.u32 %v2038, %v2041
      %v2044 = vshrl.u32 %v2019, 16
      %v2046 = vrot.slane %v2044, 3
      %v2047 = vshll.u32 %v2019, 16
      %v2049 = vrot.slane %v2047, 4
      %v2050 = vor.u32 %v2046, %v2049
      %v2051 = vsel %vm502, %v2042, %v2050
      %v2053 = vshrl.u32 %v2020, 16
      %v2055 = vrot.slane %v2053, 3
      %v2056 = vshll.u32 %v2020, 16
      %v2058 = vrot.slane %v2056, 4
      %v2059 = vor.u32 %v2055, %v2058
      %v2060 = vsel %vm502, %v2050, %v2059
      %v2062 = vshrl.u32 %v2021, 16
      %v2064 = vrot.slane %v2062, 3
      %v2065 = vshll.u32 %v2021, 16
      %v2067 = vrot.slane %v2065, 4
      %v2068 = vor.u32 %v2064, %v2067
      %v2069 = vsel %vm502, %v2059, %v2068
      %v2071 = vshrl.u32 %v2022, 16
      %v2073 = vrot.slane %v2071, 3
      %v2074 = vshll.u32 %v2022, 16
      %v2076 = vrot.slane %v2074, 4
      %v2077 = vor.u32 %v2073, %v2076
      %v2078 = vsel %vm502, %v2068, %v2077
      %v2080 = vshrl.u32 %v2023, 16
      %v2082 = vrot.slane %v2080, 3
      %v2083 = vshll.u32 %v2023, 16
      %v2085 = vrot.slane %v2083, 4
      %v2086 = vor.u32 %v2082, %v2085
      %v2087 = vsel %vm502, %v2077, %v2086
      %v2089 = vshrl.u32 %v2024, 16
      %v2091 = vrot.slane %v2089, 3
      %v2092 = vshll.u32 %v2024, 16
      %v2094 = vrot.slane %v2092, 4
      %v2095 = vor.u32 %v2091, %v2094
      %v2096 = vsel %vm502, %v2086, %v2095
      %v2098 = vshrl.u32 %v2025, 16
      %v2100 = vrot.slane %v2098, 3
      %v2101 = vshll.u32 %v2025, 16
      %v2103 = vrot.slane %v2101, 4
      %v2104 = vor.u32 %v2100, %v2103
      %v2105 = vsel %vm502, %v2095, %v2104
      %v2107 = vshrl.u32 %v2026, 16
      %v2109 = vrot.slane %v2107, 3
      %v2110 = vshll.u32 %v2026, 16
      %v2112 = vrot.slane %v2110, 4
      %v2113 = vor.u32 %v2109, %v2112
      %v2114 = vsel %vm502, %v2104, %v2113
      %v2116 = vshrl.u32 %v2027, 16
      %v2118 = vrot.slane %v2116, 3
      %v2119 = vshll.u32 %v2027, 16
      %v2121 = vrot.slane %v2119, 4
      %v2122 = vor.u32 %v2118, %v2121
      %v2123 = vsel %vm502, %v2113, %v2122
      %v2125 = vshrl.u32 %v2028, 16
      %v2127 = vrot.slane %v2125, 3
      %v2128 = vshll.u32 %v2028, 16
      %v2130 = vrot.slane %v2128, 4
      %v2131 = vor.u32 %v2127, %v2130
      %v2132 = vsel %vm502, %v2122, %v2131
      %v2134 = vshrl.u32 %v2029, 16
      %v2136 = vrot.slane %v2134, 3
      %v2137 = vshll.u32 %v2029, 16
      %v2139 = vrot.slane %v2137, 4
      %v2140 = vor.u32 %v2136, %v2139
      %v2141 = vsel %vm502, %v2131, %v2140
      %v2143 = vshrl.u32 %v2030, 16
      %v2145 = vrot.slane %v2143, 3
      %v2146 = vshll.u32 %v2030, 16
      %v2148 = vrot.slane %v2146, 4
      %v2149 = vor.u32 %v2145, %v2148
      %v2150 = vsel %vm502, %v2140, %v2149
      %v2152 = vshrl.u32 %v2031, 16
      %v2154 = vrot.slane %v2152, 3
      %v2155 = vshll.u32 %v2031, 16
      %v2157 = vrot.slane %v2155, 4
      %v2158 = vor.u32 %v2154, %v2157
      %v2159 = vsel %vm502, %v2149, %v2158
      %v2161 = vshrl.u32 %v2032, 16
      %v2163 = vrot.slane %v2161, 3
      %v2164 = vshll.u32 %v2032, 16
      %v2166 = vrot.slane %v2164, 4
      %v2167 = vor.u32 %v2163, %v2166
      %v2168 = vsel %vm502, %v2158, %v2167
      %v2170 = vshrl.u32 %v2033, 16
      %v2172 = vrot.slane %v2170, 3
      %v2173 = vshll.u32 %v2033, 16
      %v2175 = vrot.slane %v2173, 4
      %v2176 = vor.u32 %v2172, %v2175
      %v2177 = vsel %vm502, %v2167, %v2176
      %v2179 = vshrl.u32 %v2034, 16
      %v2181 = vrot.slane %v2179, 3
      %v2182 = vshll.u32 %v2034, 16
      %v2184 = vrot.slane %v2182, 4
      %v2185 = vor.u32 %v2181, %v2184
      %v2186 = vsel %vm502, %v2176, %v2185
      %v2191 = vunpack.c.l.b16 %v1948
      %v2192 = vunpack.c.l.b16 %v1949
      %v2193 = vunpack.c.l.b16 %v1950
      %v2194 = vunpack.c.l.b16 %v1951
      %v2195 = vpack.c.b16 %v2192, %v2191
      %v2196 = vpack.c.b16 %v2194, %v2193
      %v2200 = vsel %vm667, %v2051, 0
      %v2203 = vsel %vm667, %v2060, 0
      %v2206 = vsel %vm667, %v2069, 0
      %v2209 = vsel %vm667, %v2078, 0
      %v2212 = vsel %vm667, %v2087, 0
      %v2215 = vsel %vm667, %v2096, 0
      %v2218 = vsel %vm667, %v2105, 0
      %v2221 = vsel %vm667, %v2114, 0
      %v2224 = vsel %vm667, %v2123, 0
      %v2227 = vsel %vm667, %v2132, 0
      %v2230 = vsel %vm667, %v2141, 0
      %v2233 = vsel %vm667, %v2150, 0
      %v2236 = vsel %vm667, %v2159, 0
      %v2239 = vsel %vm667, %v2168, 0
      %v2242 = vsel %vm667, %v2177, 0
      %v2245 = vsel %vm667, %v2186, 0
      %2247 = vmatprep.subr.bf16.mxu0 0
      %2248 = vmatpush1.bf16.msra.mxu0 0
      %2249 = vmatprep.subr.bf16.mxu0 0
      %2250 = vmatpush1.bf16.msra.mxu0 0
      %2251 = vmatprep.subr.bf16.mxu0 0
      %2252 = vmatpush1.bf16.msra.mxu0 0
      %2253 = vmatprep.subr.bf16.mxu0 0
      %2254 = vmatpush1.bf16.msra.mxu0 0
      %2255 = vmatprep.subr.bf16.mxu0 0
      %2256 = vmatpush1.bf16.msra.mxu0 0
      %2257 = vmatprep.subr.bf16.mxu0 0
      %2258 = vmatpush1.bf16.msra.mxu0 0
      %2259 = vmatprep.subr.bf16.mxu0 0
      %2260 = vmatpush1.bf16.msra.mxu0 %v2196
      %2261 = vmatprep.subr.bf16.mxu0 0
      %2262 = vmatpush1.bf16.msra.mxu0 %v2195
      %2263 = vmatprep.subr.bf16.mxu0 0
      %2264 = vmatpush2.bf16.msra.mxu0 0
      %2265 = vmatprep.subr.bf16.mxu0 0
      %2266 = vmatpush2.bf16.msra.mxu0 0
      %2267 = vmatprep.subr.bf16.mxu0 0
      %2268 = vmatpush2.bf16.msra.mxu0 0
      %2269 = vmatprep.subr.bf16.mxu0 0
      %2270 = vmatpush2.bf16.msra.mxu0 0
      %2271 = vmatprep.subr.bf16.mxu0 0
      %2272 = vmatpush2.bf16.msra.mxu0 0
      %2273 = vmatprep.subr.bf16.mxu0 0
      %2274 = vmatpush2.bf16.msra.mxu0 0
      %2275 = vmatprep.subr.bf16.mxu0 0
      %2276 = vmatpush2.bf16.msra.mxu0 0
      %2277 = vmatprep.subr.bf16.mxu0 0
      %2278 = vmatpush2.bf16.msra.mxu0 0
      %2279 = vmatprep.mubr.bf16.mxu0 0
      %2280 = vmatmul.mubr.bf16.gmra.mxu0 %v2200
      %v2281 = vpop.f32.mrf.mxu0
      %v2282 = vadd.f32 0.0, %v2281
      %v2283 = vpop.f32.mrf.mxu0
      %v2284 = vpop.f32.mrf.mxu0
      %v2285 = vadd.f32 0.0, %v2284
      %v2286 = vpop.f32.mrf.mxu0
      %2287 = vmatprep.mubr.bf16.mxu0 0
      %2288 = vmatmul.mubr.bf16.gmra.mxu0 %v2203
      %v2289 = vpop.f32.mrf.mxu0
      %v2290 = vadd.f32 0.0, %v2289
      %v2291 = vpop.f32.mrf.mxu0
      %v2292 = vpop.f32.mrf.mxu0
      %v2293 = vadd.f32 0.0, %v2292
      %v2294 = vpop.f32.mrf.mxu0
      %2295 = vmatprep.mubr.bf16.mxu0 0
      %2296 = vmatmul.mubr.bf16.gmra.mxu0 %v2206
      %v2297 = vpop.f32.mrf.mxu0
      %v2298 = vadd.f32 0.0, %v2297
      %v2299 = vpop.f32.mrf.mxu0
      %v2300 = vpop.f32.mrf.mxu0
      %v2301 = vadd.f32 0.0, %v2300
      %v2302 = vpop.f32.mrf.mxu0
      %2303 = vmatprep.mubr.bf16.mxu0 0
      %2304 = vmatmul.mubr.bf16.gmra.mxu0 %v2209
      %v2305 = vpop.f32.mrf.mxu0
      %v2306 = vadd.f32 0.0, %v2305
      %v2307 = vpop.f32.mrf.mxu0
      %v2308 = vpop.f32.mrf.mxu0
      %v2309 = vadd.f32 0.0, %v2308
      %v2310 = vpop.f32.mrf.mxu0
      %2311 = vmatprep.mubr.bf16.mxu0 0
      %2312 = vmatmul.mubr.bf16.gmra.mxu0 %v2212
      %v2313 = vpop.f32.mrf.mxu0
      %v2314 = vadd.f32 0.0, %v2313
      %v2315 = vpop.f32.mrf.mxu0
      %v2316 = vpop.f32.mrf.mxu0
      %v2317 = vadd.f32 0.0, %v2316
      %v2318 = vpop.f32.mrf.mxu0
      %2319 = vmatprep.mubr.bf16.mxu0 0
      %2320 = vmatmul.mubr.bf16.gmra.mxu0 %v2215
      %v2321 = vpop.f32.mrf.mxu0
      %v2322 = vadd.f32 0.0, %v2321
      %v2323 = vpop.f32.mrf.mxu0
      %v2324 = vpop.f32.mrf.mxu0
      %v2325 = vadd.f32 0.0, %v2324
      %v2326 = vpop.f32.mrf.mxu0
      %2327 = vmatprep.mubr.bf16.mxu0 0
      %2328 = vmatmul.mubr.bf16.gmra.mxu0 %v2218
      %v2329 = vpop.f32.mrf.mxu0
      %v2330 = vadd.f32 0.0, %v2329
      %v2331 = vpop.f32.mrf.mxu0
      %v2332 = vpop.f32.mrf.mxu0
      %v2333 = vadd.f32 0.0, %v2332
      %v2334 = vpop.f32.mrf.mxu0
      %2335 = vmatprep.mubr.bf16.mxu0 0
      %2336 = vmatmul.mubr.bf16.gmra.mxu0 %v2221
      %v2337 = vpop.f32.mrf.mxu0
      %v2338 = vadd.f32 0.0, %v2337
      %v2339 = vpop.f32.mrf.mxu0
      %v2340 = vpop.f32.mrf.mxu0
      %v2341 = vadd.f32 0.0, %v2340
      %v2342 = vpop.f32.mrf.mxu0
      %2343 = vmatprep.mubr.bf16.mxu0 0
      %2344 = vmatmul.mubr.bf16.gmra.mxu0 %v2224
      %v2345 = vpop.f32.mrf.mxu0
      %v2346 = vadd.f32 0.0, %v2345
      %v2347 = vpop.f32.mrf.mxu0
      %v2348 = vpop.f32.mrf.mxu0
      %v2349 = vadd.f32 0.0, %v2348
      %v2350 = vpop.f32.mrf.mxu0
      %2351 = vmatprep.mubr.bf16.mxu0 0
      %2352 = vmatmul.mubr.bf16.gmra.mxu0 %v2227
      %v2353 = vpop.f32.mrf.mxu0
      %v2354 = vadd.f32 0.0, %v2353
      %v2355 = vpop.f32.mrf.mxu0
      %v2356 = vpop.f32.mrf.mxu0
      %v2357 = vadd.f32 0.0, %v2356
      %v2358 = vpop.f32.mrf.mxu0
      %2359 = vmatprep.mubr.bf16.mxu0 0
      %2360 = vmatmul.mubr.bf16.gmra.mxu0 %v2230
      %v2361 = vpop.f32.mrf.mxu0
      %v2362 = vadd.f32 0.0, %v2361
      %v2363 = vpop.f32.mrf.mxu0
      %v2364 = vpop.f32.mrf.mxu0
      %v2365 = vadd.f32 0.0, %v2364
      %v2366 = vpop.f32.mrf.mxu0
      %2367 = vmatprep.mubr.bf16.mxu0 0
      %2368 = vmatmul.mubr.bf16.gmra.mxu0 %v2233
      %v2369 = vpop.f32.mrf.mxu0
      %v2370 = vadd.f32 0.0, %v2369
      %v2371 = vpop.f32.mrf.mxu0
      %v2372 = vpop.f32.mrf.mxu0
      %v2373 = vadd.f32 0.0, %v2372
      %v2374 = vpop.f32.mrf.mxu0
      %2375 = vmatprep.mubr.bf16.mxu0 0
      %2376 = vmatmul.mubr.bf16.gmra.mxu0 %v2236
      %v2377 = vpop.f32.mrf.mxu0
      %v2378 = vadd.f32 0.0, %v2377
      %v2379 = vpop.f32.mrf.mxu0
      %v2380 = vpop.f32.mrf.mxu0
      %v2381 = vadd.f32 0.0, %v2380
      %v2382 = vpop.f32.mrf.mxu0
      %2383 = vmatprep.mubr.bf16.mxu0 0
      %2384 = vmatmul.mubr.bf16.gmra.mxu0 %v2239
      %v2385 = vpop.f32.mrf.mxu0
      %v2386 = vadd.f32 0.0, %v2385
      %v2387 = vpop.f32.mrf.mxu0
      %v2388 = vpop.f32.mrf.mxu0
      %v2389 = vadd.f32 0.0, %v2388
      %v2390 = vpop.f32.mrf.mxu0
      %2391 = vmatprep.mubr.bf16.mxu0 0
      %2392 = vmatmul.mubr.bf16.gmra.mxu0 %v2242
      %v2393 = vpop.f32.mrf.mxu0
      %v2394 = vadd.f32 0.0, %v2393
      %v2395 = vpop.f32.mrf.mxu0
      %v2396 = vpop.f32.mrf.mxu0
      %v2397 = vadd.f32 0.0, %v2396
      %v2398 = vpop.f32.mrf.mxu0
      %2399 = vmatprep.mubr.bf16.mxu0 0
      %2400 = vmatmul.mubr.bf16.gmra.mxu0 %v2245
      %v2401 = vpop.f32.mrf.mxu0
      %v2402 = vadd.f32 0.0, %v2401
      %v2403 = vpop.f32.mrf.mxu0
      %v2404 = vpop.f32.mrf.mxu0
      %v2405 = vadd.f32 0.0, %v2404
      %v2406 = vpop.f32.mrf.mxu0
      %2407 = vdwg.mxu0
      %v2408 = vld [vmem:[#allocation3] sm:$0xff]
      %v2409 = vld [vmem:[#allocation3 + $0x8] sm:$0xff]
      %v2410 = vld [vmem:[#allocation3 + $0x10] sm:$0xff]
      %v2411 = vld [vmem:[#allocation3 + $0x18] sm:$0xff]
      %v2412 = vld [vmem:[#allocation3 + $0x20] sm:$0xff]
      %v2413 = vld [vmem:[#allocation3 + $0x28] sm:$0xff]
      %v2414 = vld [vmem:[#allocation3 + $0x30] sm:$0xff]
      %v2415 = vld [vmem:[#allocation3 + $0x38] sm:$0xff]
      %v2416 = vld [vmem:[#allocation3 + $0x40] sm:$0xff]
      %v2417 = vld [vmem:[#allocation3 + $0x48] sm:$0xff]
      %v2418 = vld [vmem:[#allocation3 + $0x50] sm:$0xff]
      %v2419 = vld [vmem:[#allocation3 + $0x58] sm:$0xff]
      %v2420 = vld [vmem:[#allocation3 + $0x60] sm:$0xff]
      %v2421 = vld [vmem:[#allocation3 + $0x68] sm:$0xff]
      %v2422 = vld [vmem:[#allocation3 + $0x70] sm:$0xff]
      %v2423 = vld [vmem:[#allocation3 + $0x78] sm:$0xff]
      %v2424 = vld [vmem:[#allocation3 + $0x80] sm:$0xff]
      %v2425 = vld [vmem:[#allocation3 + $0x88] sm:$0xff]
      %v2426 = vld [vmem:[#allocation3 + $0x90] sm:$0xff]
      %v2427 = vld [vmem:[#allocation3 + $0x98] sm:$0xff]
      %v2428 = vld [vmem:[#allocation3 + $0xa0] sm:$0xff]
      %v2429 = vld [vmem:[#allocation3 + $0xa8] sm:$0xff]
      %v2430 = vld [vmem:[#allocation3 + $0xb0] sm:$0xff]
      %v2431 = vld [vmem:[#allocation3 + $0xb8] sm:$0xff]
      %v2432 = vld [vmem:[#allocation3 + $0xc0] sm:$0xff]
      %v2433 = vld [vmem:[#allocation3 + $0xc8] sm:$0xff]
      %v2434 = vld [vmem:[#allocation3 + $0xd0] sm:$0xff]
      %v2435 = vld [vmem:[#allocation3 + $0xd8] sm:$0xff]
      %v2436 = vld [vmem:[#allocation3 + $0xe0] sm:$0xff]
      %v2437 = vld [vmem:[#allocation3 + $0xe8] sm:$0xff]
      %v2438 = vld [vmem:[#allocation3 + $0xf0] sm:$0xff]
      %v2439 = vld [vmem:[#allocation3 + $0xf8] sm:$0xff]
      %v2440 = vadd.f32 %v2408, %v2282
      %v2441 = vadd.f32 %v2409, %v2285
      %v2442 = vadd.f32 %v2410, %v2290
      %v2443 = vadd.f32 %v2411, %v2293
      %v2444 = vadd.f32 %v2412, %v2298
      %v2445 = vadd.f32 %v2413, %v2301
      %v2446 = vadd.f32 %v2414, %v2306
      %v2447 = vadd.f32 %v2415, %v2309
      %v2448 = vadd.f32 %v2416, %v2314
      %v2449 = vadd.f32 %v2417, %v2317
      %v2450 = vadd.f32 %v2418, %v2322
      %v2451 = vadd.f32 %v2419, %v2325
      %v2452 = vadd.f32 %v2420, %v2330
      %v2453 = vadd.f32 %v2421, %v2333
      %v2454 = vadd.f32 %v2422, %v2338
      %v2455 = vadd.f32 %v2423, %v2341
      %v2456 = vadd.f32 %v2424, %v2346
      %v2457 = vadd.f32 %v2425, %v2349
      %v2458 = vadd.f32 %v2426, %v2354
      %v2459 = vadd.f32 %v2427, %v2357
      %v2460 = vadd.f32 %v2428, %v2362
      %v2461 = vadd.f32 %v2429, %v2365
      %v2462 = vadd.f32 %v2430, %v2370
      %v2463 = vadd.f32 %v2431, %v2373
      %v2464 = vadd.f32 %v2432, %v2378
      %v2465 = vadd.f32 %v2433, %v2381
      %v2466 = vadd.f32 %v2434, %v2386
      %v2467 = vadd.f32 %v2435, %v2389
      %v2468 = vadd.f32 %v2436, %v2394
      %v2469 = vadd.f32 %v2437, %v2397
      %v2470 = vadd.f32 %v2438, %v2402
      %v2471 = vadd.f32 %v2439, %v2405
      %2472 = vst [vmem:[#allocation3] sm:$0xff] %v2440
      %2473 = vst [vmem:[#allocation3 + $0x8] sm:$0xff] %v2441
      %2474 = vst [vmem:[#allocation3 + $0x10] sm:$0xff] %v2442
      %2475 = vst [vmem:[#allocation3 + $0x18] sm:$0xff] %v2443
      %2476 = vst [vmem:[#allocation3 + $0x20] sm:$0xff] %v2444
      %2477 = vst [vmem:[#allocation3 + $0x28] sm:$0xff] %v2445
      %2478 = vst [vmem:[#allocation3 + $0x30] sm:$0xff] %v2446
      %2479 = vst [vmem:[#allocation3 + $0x38] sm:$0xff] %v2447
      %2480 = vst [vmem:[#allocation3 + $0x40] sm:$0xff] %v2448
      %2481 = vst [vmem:[#allocation3 + $0x48] sm:$0xff] %v2449
      %2482 = vst [vmem:[#allocation3 + $0x50] sm:$0xff] %v2450
      %2483 = vst [vmem:[#allocation3 + $0x58] sm:$0xff] %v2451
      %2484 = vst [vmem:[#allocation3 + $0x60] sm:$0xff] %v2452
      %2485 = vst [vmem:[#allocation3 + $0x68] sm:$0xff] %v2453
      %2486 = vst [vmem:[#allocation3 + $0x70] sm:$0xff] %v2454
      %2487 = vst [vmem:[#allocation3 + $0x78] sm:$0xff] %v2455
      %2488 = vst [vmem:[#allocation3 + $0x80] sm:$0xff] %v2456
      %2489 = vst [vmem:[#allocation3 + $0x88] sm:$0xff] %v2457
      %2490 = vst [vmem:[#allocation3 + $0x90] sm:$0xff] %v2458
      %2491 = vst [vmem:[#allocation3 + $0x98] sm:$0xff] %v2459
      %2492 = vst [vmem:[#allocation3 + $0xa0] sm:$0xff] %v2460
      %2493 = vst [vmem:[#allocation3 + $0xa8] sm:$0xff] %v2461
      %2494 = vst [vmem:[#allocation3 + $0xb0] sm:$0xff] %v2462
      %2495 = vst [vmem:[#allocation3 + $0xb8] sm:$0xff] %v2463
      %2496 = vst [vmem:[#allocation3 + $0xc0] sm:$0xff] %v2464
      %2497 = vst [vmem:[#allocation3 + $0xc8] sm:$0xff] %v2465
      %2498 = vst [vmem:[#allocation3 + $0xd0] sm:$0xff] %v2466
      %2499 = vst [vmem:[#allocation3 + $0xd8] sm:$0xff] %v2467
      %2500 = vst [vmem:[#allocation3 + $0xe0] sm:$0xff] %v2468
      %2501 = vst [vmem:[#allocation3 + $0xe8] sm:$0xff] %v2469
      %2502 = vst [vmem:[#allocation3 + $0xf0] sm:$0xff] %v2470
      %2503 = vst [vmem:[#allocation3 + $0xf8] sm:$0xff] %v2471
      %v2504 = vld [vmem:[%s301 + $0x10] sm:$0xf]
      %v2505 = vld [vmem:[%s301 + $0x14] sm:$0xf]
      %v2506 = vld [vmem:[%s301 + $0x18] sm:$0xf]
      %v2507 = vld [vmem:[%s301 + $0x1c] sm:$0xf]
      %v2508 = vld [vmem:[%s301 + $0x20] sm:$0xf]
      %v2509 = vld [vmem:[%s301 + $0x24] sm:$0xf]
      %v2510 = vld [vmem:[%s301 + $0x28] sm:$0xf]
      %v2511 = vld [vmem:[%s301 + $0x2c] sm:$0xf]
      %v2512 = vld [vmem:[%s301 + $0x30] sm:$0xf]
      %v2513 = vld [vmem:[%s301 + $0x34] sm:$0xf]
      %v2514 = vld [vmem:[%s301 + $0x38] sm:$0xf]
      %v2515 = vld [vmem:[%s301 + $0x3c] sm:$0xf]
      %v2516 = vld [vmem:[%s301 + $0x40] sm:$0xf]
      %v2517 = vld [vmem:[%s301 + $0x44] sm:$0xf]
      %v2518 = vld [vmem:[%s301 + $0x48] sm:$0xf]
      %v2519 = vld [vmem:[%s301 + $0x4c] sm:$0xf]
      %v2520 = vld [vmem:[%s301 + $0x50] sm:$0xf]
      %v2521 = vld [vmem:[%s301 + $0x54] sm:$0xf]
      %v2522 = vld [vmem:[%s301 + $0x58] sm:$0xf]
      %v2523 = vld [vmem:[%s301 + $0x5c] sm:$0xf]
      %v2524 = vld [vmem:[%s301 + $0x60] sm:$0xf]
      %v2525 = vld [vmem:[%s301 + $0x64] sm:$0xf]
      %v2526 = vld [vmem:[%s301 + $0x68] sm:$0xf]
      %v2527 = vld [vmem:[%s301 + $0x6c] sm:$0xf]
      %v2528 = vld [vmem:[%s301 + $0x70] sm:$0xf]
      %v2529 = vld [vmem:[%s301 + $0x74] sm:$0xf]
      %v2530 = vld [vmem:[%s301 + $0x78] sm:$0xf]
      %v2531 = vld [vmem:[%s301 + $0x7c] sm:$0xf]
      %v2532 = vld [vmem:[%s301 + $0x80] sm:$0xf]
      %v2533 = vld [vmem:[%s301 + $0x84] sm:$0xf]
      %v2534 = vld [vmem:[%s301 + $0x88] sm:$0xf]
      %v2535 = vld [vmem:[%s301 + $0x8c] sm:$0xf]
      %s2536 = scalar_lea.vmem %s2, 64
      %v2537 = vld [vmem:[%s2536] sm:$0xf]
      %v2538 = vld [vmem:[%s2536 + $0x4] sm:$0xf]
      %v2539 = vld [vmem:[%s2536 + $0x8] sm:$0xf]
      %v2540 = vld [vmem:[%s2536 + $0xc] sm:$0xf]
      %v2573 = vunpack.c.l.b16 %v2504
      %v2574 = vunpack.c.l.b16 %v2505
      %v2575 = vunpack.c.l.b16 %v2506
      %v2576 = vunpack.c.l.b16 %v2507
      %v2577 = vunpack.c.l.b16 %v2508
      %v2578 = vunpack.c.l.b16 %v2509
      %v2579 = vunpack.c.l.b16 %v2510
      %v2580 = vunpack.c.l.b16 %v2511
      %v2581 = vunpack.c.l.b16 %v2512
      %v2582 = vunpack.c.l.b16 %v2513
      %v2583 = vunpack.c.l.b16 %v2514
      %v2584 = vunpack.c.l.b16 %v2515
      %v2585 = vunpack.c.l.b16 %v2516
      %v2586 = vunpack.c.l.b16 %v2517
      %v2587 = vunpack.c.l.b16 %v2518
      %v2588 = vunpack.c.l.b16 %v2519
      %v2589 = vunpack.c.l.b16 %v2520
      %v2590 = vunpack.c.l.b16 %v2521
      %v2591 = vunpack.c.l.b16 %v2522
      %v2592 = vunpack.c.l.b16 %v2523
      %v2593 = vunpack.c.l.b16 %v2524
      %v2594 = vunpack.c.l.b16 %v2525
      %v2595 = vunpack.c.l.b16 %v2526
      %v2596 = vunpack.c.l.b16 %v2527
      %v2597 = vunpack.c.l.b16 %v2528
      %v2598 = vunpack.c.l.b16 %v2529
      %v2599 = vunpack.c.l.b16 %v2530
      %v2600 = vunpack.c.l.b16 %v2531
      %v2601 = vunpack.c.l.b16 %v2532
      %v2602 = vunpack.c.l.b16 %v2533
      %v2603 = vunpack.c.l.b16 %v2534
      %v2604 = vunpack.c.l.b16 %v2535
      %v2605 = vpack.c.b16 %v2574, %v2573
      %v2606 = vpack.c.b16 %v2576, %v2575
      %v2607 = vpack.c.b16 %v2578, %v2577
      %v2608 = vpack.c.b16 %v2580, %v2579
      %v2609 = vpack.c.b16 %v2582, %v2581
      %v2610 = vpack.c.b16 %v2584, %v2583
      %v2611 = vpack.c.b16 %v2586, %v2585
      %v2612 = vpack.c.b16 %v2588, %v2587
      %v2613 = vpack.c.b16 %v2590, %v2589
      %v2614 = vpack.c.b16 %v2592, %v2591
      %v2615 = vpack.c.b16 %v2594, %v2593
      %v2616 = vpack.c.b16 %v2596, %v2595
      %v2617 = vpack.c.b16 %v2598, %v2597
      %v2618 = vpack.c.b16 %v2600, %v2599
      %v2619 = vpack.c.b16 %v2602, %v2601
      %v2620 = vpack.c.b16 %v2604, %v2603
      %v2625 = vunpack.c.l.b16 %v2537
      %v2626 = vunpack.c.l.b16 %v2538
      %v2627 = vunpack.c.l.b16 %v2539
      %v2628 = vunpack.c.l.b16 %v2540
      %v2629 = vpack.c.b16 %v2626, %v2625
      %v2630 = vpack.c.b16 %v2628, %v2627
      %v2634 = vsel %vm667, %v2605, 0
      %v2637 = vsel %vm667, %v2606, 0
      %v2640 = vsel %vm667, %v2607, 0
      %v2643 = vsel %vm667, %v2608, 0
      %v2646 = vsel %vm667, %v2609, 0
      %v2649 = vsel %vm667, %v2610, 0
      %v2652 = vsel %vm667, %v2611, 0
      %v2655 = vsel %vm667, %v2612, 0
      %v2658 = vsel %vm667, %v2613, 0
      %v2661 = vsel %vm667, %v2614, 0
      %v2664 = vsel %vm667, %v2615, 0
      %v2667 = vsel %vm667, %v2616, 0
      %v2670 = vsel %vm667, %v2617, 0
      %v2673 = vsel %vm667, %v2618, 0
      %v2676 = vsel %vm667, %v2619, 0
      %v2679 = vsel %vm667, %v2620, 0
      %2681 = vmatprep.subr.bf16.mxu0 0
      %2682 = vmatpush1.bf16.msra.mxu0 0
      %2683 = vmatprep.subr.bf16.mxu0 0
      %2684 = vmatpush1.bf16.msra.mxu0 0
      %2685 = vmatprep.subr.bf16.mxu0 0
      %2686 = vmatpush1.bf16.msra.mxu0 0
      %2687 = vmatprep.subr.bf16.mxu0 0
      %2688 = vmatpush1.bf16.msra.mxu0 0
      %2689 = vmatprep.subr.bf16.mxu0 0
      %2690 = vmatpush1.bf16.msra.mxu0 0
      %2691 = vmatprep.subr.bf16.mxu0 0
      %2692 = vmatpush1.bf16.msra.mxu0 0
      %2693 = vmatprep.subr.bf16.mxu0 0
      %2694 = vmatpush1.bf16.msra.mxu0 %v2630
      %2695 = vmatprep.subr.bf16.mxu0 0
      %2696 = vmatpush1.bf16.msra.mxu0 %v2629
      %2697 = vmatprep.subr.bf16.mxu0 0
      %2698 = vmatpush2.bf16.msra.mxu0 0
      %2699 = vmatprep.subr.bf16.mxu0 0
      %2700 = vmatpush2.bf16.msra.mxu0 0
      %2701 = vmatprep.subr.bf16.mxu0 0
      %2702 = vmatpush2.bf16.msra.mxu0 0
      %2703 = vmatprep.subr.bf16.mxu0 0
      %2704 = vmatpush2.bf16.msra.mxu0 0
      %2705 = vmatprep.subr.bf16.mxu0 0
      %2706 = vmatpush2.bf16.msra.mxu0 0
      %2707 = vmatprep.subr.bf16.mxu0 0
      %2708 = vmatpush2.bf16.msra.mxu0 0
      %2709 = vmatprep.subr.bf16.mxu0 0
      %2710 = vmatpush2.bf16.msra.mxu0 0
      %2711 = vmatprep.subr.bf16.mxu0 0
      %2712 = vmatpush2.bf16.msra.mxu0 0
      %2713 = vmatprep.mubr.bf16.mxu0 0
      %2714 = vmatmul.mubr.bf16.gmra.mxu0 %v2634
      %v2715 = vpop.f32.mrf.mxu0
      %v2716 = vadd.f32 0.0, %v2715
      %v2717 = vpop.f32.mrf.mxu0
      %v2718 = vpop.f32.mrf.mxu0
      %v2719 = vadd.f32 0.0, %v2718
      %v2720 = vpop.f32.mrf.mxu0
      %2721 = vmatprep.mubr.bf16.mxu0 0
      %2722 = vmatmul.mubr.bf16.gmra.mxu0 %v2637
      %v2723 = vpop.f32.mrf.mxu0
      %v2724 = vadd.f32 0.0, %v2723
      %v2725 = vpop.f32.mrf.mxu0
      %v2726 = vpop.f32.mrf.mxu0
      %v2727 = vadd.f32 0.0, %v2726
      %v2728 = vpop.f32.mrf.mxu0
      %2729 = vmatprep.mubr.bf16.mxu0 0
      %2730 = vmatmul.mubr.bf16.gmra.mxu0 %v2640
      %v2731 = vpop.f32.mrf.mxu0
      %v2732 = vadd.f32 0.0, %v2731
      %v2733 = vpop.f32.mrf.mxu0
      %v2734 = vpop.f32.mrf.mxu0
      %v2735 = vadd.f32 0.0, %v2734
      %v2736 = vpop.f32.mrf.mxu0
      %2737 = vmatprep.mubr.bf16.mxu0 0
      %2738 = vmatmul.mubr.bf16.gmra.mxu0 %v2643
      %v2739 = vpop.f32.mrf.mxu0
      %v2740 = vadd.f32 0.0, %v2739
      %v2741 = vpop.f32.mrf.mxu0
      %v2742 = vpop.f32.mrf.mxu0
      %v2743 = vadd.f32 0.0, %v2742
      %v2744 = vpop.f32.mrf.mxu0
      %2745 = vmatprep.mubr.bf16.mxu0 0
      %2746 = vmatmul.mubr.bf16.gmra.mxu0 %v2646
      %v2747 = vpop.f32.mrf.mxu0
      %v2748 = vadd.f32 0.0, %v2747
      %v2749 = vpop.f32.mrf.mxu0
      %v2750 = vpop.f32.mrf.mxu0
      %v2751 = vadd.f32 0.0, %v2750
      %v2752 = vpop.f32.mrf.mxu0
      %2753 = vmatprep.mubr.bf16.mxu0 0
      %2754 = vmatmul.mubr.bf16.gmra.mxu0 %v2649
      %v2755 = vpop.f32.mrf.mxu0
      %v2756 = vadd.f32 0.0, %v2755
      %v2757 = vpop.f32.mrf.mxu0
      %v2758 = vpop.f32.mrf.mxu0
      %v2759 = vadd.f32 0.0, %v2758
      %v2760 = vpop.f32.mrf.mxu0
      %2761 = vmatprep.mubr.bf16.mxu0 0
      %2762 = vmatmul.mubr.bf16.gmra.mxu0 %v2652
      %v2763 = vpop.f32.mrf.mxu0
      %v2764 = vadd.f32 0.0, %v2763
      %v2765 = vpop.f32.mrf.mxu0
      %v2766 = vpop.f32.mrf.mxu0
      %v2767 = vadd.f32 0.0, %v2766
      %v2768 = vpop.f32.mrf.mxu0
      %2769 = vmatprep.mubr.bf16.mxu0 0
      %2770 = vmatmul.mubr.bf16.gmra.mxu0 %v2655
      %v2771 = vpop.f32.mrf.mxu0
      %v2772 = vadd.f32 0.0, %v2771
      %v2773 = vpop.f32.mrf.mxu0
      %v2774 = vpop.f32.mrf.mxu0
      %v2775 = vadd.f32 0.0, %v2774
      %v2776 = vpop.f32.mrf.mxu0
      %2777 = vmatprep.mubr.bf16.mxu0 0
      %2778 = vmatmul.mubr.bf16.gmra.mxu0 %v2658
      %v2779 = vpop.f32.mrf.mxu0
      %v2780 = vadd.f32 0.0, %v2779
      %v2781 = vpop.f32.mrf.mxu0
      %v2782 = vpop.f32.mrf.mxu0
      %v2783 = vadd.f32 0.0, %v2782
      %v2784 = vpop.f32.mrf.mxu0
      %2785 = vmatprep.mubr.bf16.mxu0 0
      %2786 = vmatmul.mubr.bf16.gmra.mxu0 %v2661
      %v2787 = vpop.f32.mrf.mxu0
      %v2788 = vadd.f32 0.0, %v2787
      %v2789 = vpop.f32.mrf.mxu0
      %v2790 = vpop.f32.mrf.mxu0
      %v2791 = vadd.f32 0.0, %v2790
      %v2792 = vpop.f32.mrf.mxu0
      %2793 = vmatprep.mubr.bf16.mxu0 0
      %2794 = vmatmul.mubr.bf16.gmra.mxu0 %v2664
      %v2795 = vpop.f32.mrf.mxu0
      %v2796 = vadd.f32 0.0, %v2795
      %v2797 = vpop.f32.mrf.mxu0
      %v2798 = vpop.f32.mrf.mxu0
      %v2799 = vadd.f32 0.0, %v2798
      %v2800 = vpop.f32.mrf.mxu0
      %2801 = vmatprep.mubr.bf16.mxu0 0
      %2802 = vmatmul.mubr.bf16.gmra.mxu0 %v2667
      %v2803 = vpop.f32.mrf.mxu0
      %v2804 = vadd.f32 0.0, %v2803
      %v2805 = vpop.f32.mrf.mxu0
      %v2806 = vpop.f32.mrf.mxu0
      %v2807 = vadd.f32 0.0, %v2806
      %v2808 = vpop.f32.mrf.mxu0
      %2809 = vmatprep.mubr.bf16.mxu0 0
      %2810 = vmatmul.mubr.bf16.gmra.mxu0 %v2670
      %v2811 = vpop.f32.mrf.mxu0
      %v2812 = vadd.f32 0.0, %v2811
      %v2813 = vpop.f32.mrf.mxu0
      %v2814 = vpop.f32.mrf.mxu0
      %v2815 = vadd.f32 0.0, %v2814
      %v2816 = vpop.f32.mrf.mxu0
      %2817 = vmatprep.mubr.bf16.mxu0 0
      %2818 = vmatmul.mubr.bf16.gmra.mxu0 %v2673
      %v2819 = vpop.f32.mrf.mxu0
      %v2820 = vadd.f32 0.0, %v2819
      %v2821 = vpop.f32.mrf.mxu0
      %v2822 = vpop.f32.mrf.mxu0
      %v2823 = vadd.f32 0.0, %v2822
      %v2824 = vpop.f32.mrf.mxu0
      %2825 = vmatprep.mubr.bf16.mxu0 0
      %2826 = vmatmul.mubr.bf16.gmra.mxu0 %v2676
      %v2827 = vpop.f32.mrf.mxu0
      %v2828 = vadd.f32 0.0, %v2827
      %v2829 = vpop.f32.mrf.mxu0
      %v2830 = vpop.f32.mrf.mxu0
      %v2831 = vadd.f32 0.0, %v2830
      %v2832 = vpop.f32.mrf.mxu0
      %2833 = vmatprep.mubr.bf16.mxu0 0
      %2834 = vmatmul.mubr.bf16.gmra.mxu0 %v2679
      %v2835 = vpop.f32.mrf.mxu0
      %v2836 = vadd.f32 0.0, %v2835
      %v2837 = vpop.f32.mrf.mxu0
      %v2838 = vpop.f32.mrf.mxu0
      %v2839 = vadd.f32 0.0, %v2838
      %v2840 = vpop.f32.mrf.mxu0
      %2841 = vdwg.mxu0
      %v2842 = vld [vmem:[#allocation3] sm:$0xff]
      %v2843 = vld [vmem:[#allocation3 + $0x8] sm:$0xff]
      %v2844 = vld [vmem:[#allocation3 + $0x10] sm:$0xff]
      %v2845 = vld [vmem:[#allocation3 + $0x18] sm:$0xff]
      %v2846 = vld [vmem:[#allocation3 + $0x20] sm:$0xff]
      %v2847 = vld [vmem:[#allocation3 + $0x28] sm:$0xff]
      %v2848 = vld [vmem:[#allocation3 + $0x30] sm:$0xff]
      %v2849 = vld [vmem:[#allocation3 + $0x38] sm:$0xff]
      %v2850 = vld [vmem:[#allocation3 + $0x40] sm:$0xff]
      %v2851 = vld [vmem:[#allocation3 + $0x48] sm:$0xff]
      %v2852 = vld [vmem:[#allocation3 + $0x50] sm:$0xff]
      %v2853 = vld [vmem:[#allocation3 + $0x58] sm:$0xff]
      %v2854 = vld [vmem:[#allocation3 + $0x60] sm:$0xff]
      %v2855 = vld [vmem:[#allocation3 + $0x68] sm:$0xff]
      %v2856 = vld [vmem:[#allocation3 + $0x70] sm:$0xff]
      %v2857 = vld [vmem:[#allocation3 + $0x78] sm:$0xff]
      %v2858 = vld [vmem:[#allocation3 + $0x80] sm:$0xff]
      %v2859 = vld [vmem:[#allocation3 + $0x88] sm:$0xff]
      %v2860 = vld [vmem:[#allocation3 + $0x90] sm:$0xff]
      %v2861 = vld [vmem:[#allocation3 + $0x98] sm:$0xff]
      %v2862 = vld [vmem:[#allocation3 + $0xa0] sm:$0xff]
      %v2863 = vld [vmem:[#allocation3 + $0xa8] sm:$0xff]
      %v2864 = vld [vmem:[#allocation3 + $0xb0] sm:$0xff]
      %v2865 = vld [vmem:[#allocation3 + $0xb8] sm:$0xff]
      %v2866 = vld [vmem:[#allocation3 + $0xc0] sm:$0xff]
      %v2867 = vld [vmem:[#allocation3 + $0xc8] sm:$0xff]
      %v2868 = vld [vmem:[#allocation3 + $0xd0] sm:$0xff]
      %v2869 = vld [vmem:[#allocation3 + $0xd8] sm:$0xff]
      %v2870 = vld [vmem:[#allocation3 + $0xe0] sm:$0xff]
      %v2871 = vld [vmem:[#allocation3 + $0xe8] sm:$0xff]
      %v2872 = vld [vmem:[#allocation3 + $0xf0] sm:$0xff]
      %v2873 = vld [vmem:[#allocation3 + $0xf8] sm:$0xff]
      %v2874 = vadd.f32 %v2842, %v2716
      %v2875 = vadd.f32 %v2843, %v2719
      %v2876 = vadd.f32 %v2844, %v2724
      %v2877 = vadd.f32 %v2845, %v2727
      %v2878 = vadd.f32 %v2846, %v2732
      %v2879 = vadd.f32 %v2847, %v2735
      %v2880 = vadd.f32 %v2848, %v2740
      %v2881 = vadd.f32 %v2849, %v2743
      %v2882 = vadd.f32 %v2850, %v2748
      %v2883 = vadd.f32 %v2851, %v2751
      %v2884 = vadd.f32 %v2852, %v2756
      %v2885 = vadd.f32 %v2853, %v2759
      %v2886 = vadd.f32 %v2854, %v2764
      %v2887 = vadd.f32 %v2855, %v2767
      %v2888 = vadd.f32 %v2856, %v2772
      %v2889 = vadd.f32 %v2857, %v2775
      %v2890 = vadd.f32 %v2858, %v2780
      %v2891 = vadd.f32 %v2859, %v2783
      %v2892 = vadd.f32 %v2860, %v2788
      %v2893 = vadd.f32 %v2861, %v2791
      %v2894 = vadd.f32 %v2862, %v2796
      %v2895 = vadd.f32 %v2863, %v2799
      %v2896 = vadd.f32 %v2864, %v2804
      %v2897 = vadd.f32 %v2865, %v2807
      %v2898 = vadd.f32 %v2866, %v2812
      %v2899 = vadd.f32 %v2867, %v2815
      %v2900 = vadd.f32 %v2868, %v2820
      %v2901 = vadd.f32 %v2869, %v2823
      %v2902 = vadd.f32 %v2870, %v2828
      %v2903 = vadd.f32 %v2871, %v2831
      %v2904 = vadd.f32 %v2872, %v2836
      %v2905 = vadd.f32 %v2873, %v2839
      %2906 = vst [vmem:[#allocation3] sm:$0xff] %v2874
      %2907 = vst [vmem:[#allocation3 + $0x8] sm:$0xff] %v2875
      %2908 = vst [vmem:[#allocation3 + $0x10] sm:$0xff] %v2876
      %2909 = vst [vmem:[#allocation3 + $0x18] sm:$0xff] %v2877
      %2910 = vst [vmem:[#allocation3 + $0x20] sm:$0xff] %v2878
      %2911 = vst [vmem:[#allocation3 + $0x28] sm:$0xff] %v2879
      %2912 = vst [vmem:[#allocation3 + $0x30] sm:$0xff] %v2880
      %2913 = vst [vmem:[#allocation3 + $0x38] sm:$0xff] %v2881
      %2914 = vst [vmem:[#allocation3 + $0x40] sm:$0xff] %v2882
      %2915 = vst [vmem:[#allocation3 + $0x48] sm:$0xff] %v2883
      %2916 = vst [vmem:[#allocation3 + $0x50] sm:$0xff] %v2884
      %2917 = vst [vmem:[#allocation3 + $0x58] sm:$0xff] %v2885
      %2918 = vst [vmem:[#allocation3 + $0x60] sm:$0xff] %v2886
      %2919 = vst [vmem:[#allocation3 + $0x68] sm:$0xff] %v2887
      %2920 = vst [vmem:[#allocation3 + $0x70] sm:$0xff] %v2888
      %2921 = vst [vmem:[#allocation3 + $0x78] sm:$0xff] %v2889
      %2922 = vst [vmem:[#allocation3 + $0x80] sm:$0xff] %v2890
      %2923 = vst [vmem:[#allocation3 + $0x88] sm:$0xff] %v2891
      %2924 = vst [vmem:[#allocation3 + $0x90] sm:$0xff] %v2892
      %2925 = vst [vmem:[#allocation3 + $0x98] sm:$0xff] %v2893
      %2926 = vst [vmem:[#allocation3 + $0xa0] sm:$0xff] %v2894
      %2927 = vst [vmem:[#allocation3 + $0xa8] sm:$0xff] %v2895
      %2928 = vst [vmem:[#allocation3 + $0xb0] sm:$0xff] %v2896
      %2929 = vst [vmem:[#allocation3 + $0xb8] sm:$0xff] %v2897
      %2930 = vst [vmem:[#allocation3 + $0xc0] sm:$0xff] %v2898
      %2931 = vst [vmem:[#allocation3 + $0xc8] sm:$0xff] %v2899
      %2932 = vst [vmem:[#allocation3 + $0xd0] sm:$0xff] %v2900
      %2933 = vst [vmem:[#allocation3 + $0xd8] sm:$0xff] %v2901
      %2934 = vst [vmem:[#allocation3 + $0xe0] sm:$0xff] %v2902
      %2935 = vst [vmem:[#allocation3 + $0xe8] sm:$0xff] %v2903
      %2936 = vst [vmem:[#allocation3 + $0xf0] sm:$0xff] %v2904
      %2937 = vst [vmem:[#allocation3 + $0xf8] sm:$0xff] %v2905
      %v2938 = vld [vmem:[%s301 + $0x10] sm:$0xf]
      %v2939 = vld [vmem:[%s301 + $0x14] sm:$0xf]
      %v2940 = vld [vmem:[%s301 + $0x18] sm:$0xf]
      %v2941 = vld [vmem:[%s301 + $0x1c] sm:$0xf]
      %v2942 = vld [vmem:[%s301 + $0x20] sm:$0xf]
      %v2943 = vld [vmem:[%s301 + $0x24] sm:$0xf]
      %v2944 = vld [vmem:[%s301 + $0x28] sm:$0xf]
      %v2945 = vld [vmem:[%s301 + $0x2c] sm:$0xf]
      %v2946 = vld [vmem:[%s301 + $0x30] sm:$0xf]
      %v2947 = vld [vmem:[%s301 + $0x34] sm:$0xf]
      %v2948 = vld [vmem:[%s301 + $0x38] sm:$0xf]
      %v2949 = vld [vmem:[%s301 + $0x3c] sm:$0xf]
      %v2950 = vld [vmem:[%s301 + $0x40] sm:$0xf]
      %v2951 = vld [vmem:[%s301 + $0x44] sm:$0xf]
      %v2952 = vld [vmem:[%s301 + $0x48] sm:$0xf]
      %v2953 = vld [vmem:[%s301 + $0x4c] sm:$0xf]
      %v2954 = vld [vmem:[%s301 + $0x50] sm:$0xf]
      %v2955 = vld [vmem:[%s301 + $0x54] sm:$0xf]
      %v2956 = vld [vmem:[%s301 + $0x58] sm:$0xf]
      %v2957 = vld [vmem:[%s301 + $0x5c] sm:$0xf]
      %v2958 = vld [vmem:[%s301 + $0x60] sm:$0xf]
      %v2959 = vld [vmem:[%s301 + $0x64] sm:$0xf]
      %v2960 = vld [vmem:[%s301 + $0x68] sm:$0xf]
      %v2961 = vld [vmem:[%s301 + $0x6c] sm:$0xf]
      %v2962 = vld [vmem:[%s301 + $0x70] sm:$0xf]
      %v2963 = vld [vmem:[%s301 + $0x74] sm:$0xf]
      %v2964 = vld [vmem:[%s301 + $0x78] sm:$0xf]
      %v2965 = vld [vmem:[%s301 + $0x7c] sm:$0xf]
      %v2966 = vld [vmem:[%s301 + $0x80] sm:$0xf]
      %v2967 = vld [vmem:[%s301 + $0x84] sm:$0xf]
      %v2968 = vld [vmem:[%s301 + $0x88] sm:$0xf]
      %v2969 = vld [vmem:[%s301 + $0x8c] sm:$0xf]
      %v2970 = vld [vmem:[%s301 + $0x90] sm:$0x1]
      %s2971 = scalar_lea.vmem %s2, 80
      %v2972 = vld [vmem:[%s2971] sm:$0xf]
      %v2973 = vld [vmem:[%s2971 + $0x4] sm:$0xf]
      %v2974 = vld [vmem:[%s2971 + $0x8] sm:$0xf]
      %v2975 = vld [vmem:[%s2971 + $0xc] sm:$0xf]
      %v3009 = vunpack.c.l.b16 %v2938
      %v3010 = vunpack.c.l.b16 %v2939
      %v3011 = vunpack.c.l.b16 %v2940
      %v3012 = vunpack.c.l.b16 %v2941
      %v3013 = vunpack.c.l.b16 %v2942
      %v3014 = vunpack.c.l.b16 %v2943
      %v3015 = vunpack.c.l.b16 %v2944
      %v3016 = vunpack.c.l.b16 %v2945
      %v3017 = vunpack.c.l.b16 %v2946
      %v3018 = vunpack.c.l.b16 %v2947
      %v3019 = vunpack.c.l.b16 %v2948
      %v3020 = vunpack.c.l.b16 %v2949
      %v3021 = vunpack.c.l.b16 %v2950
      %v3022 = vunpack.c.l.b16 %v2951
      %v3023 = vunpack.c.l.b16 %v2952
      %v3024 = vunpack.c.l.b16 %v2953
      %v3025 = vunpack.c.l.b16 %v2954
      %v3026 = vunpack.c.l.b16 %v2955
      %v3027 = vunpack.c.l.b16 %v2956
      %v3028 = vunpack.c.l.b16 %v2957
      %v3029 = vunpack.c.l.b16 %v2958
      %v3030 = vunpack.c.l.b16 %v2959
      %v3031 = vunpack.c.l.b16 %v2960
      %v3032 = vunpack.c.l.b16 %v2961
      %v3033 = vunpack.c.l.b16 %v2962
      %v3034 = vunpack.c.l.b16 %v2963
      %v3035 = vunpack.c.l.b16 %v2964
      %v3036 = vunpack.c.l.b16 %v2965
      %v3037 = vunpack.c.l.b16 %v2966
      %v3038 = vunpack.c.l.b16 %v2967
      %v3039 = vunpack.c.l.b16 %v2968
      %v3040 = vunpack.c.l.b16 %v2969
      %v3041 = vunpack.c.l.b16 %v2970
      %v3042 = vpack.c.b16 %v3010, %v3009
      %v3043 = vpack.c.b16 %v3012, %v3011
      %v3044 = vpack.c.b16 %v3014, %v3013
      %v3045 = vpack.c.b16 %v3016, %v3015
      %v3046 = vpack.c.b16 %v3018, %v3017
      %v3047 = vpack.c.b16 %v3020, %v3019
      %v3048 = vpack.c.b16 %v3022, %v3021
      %v3049 = vpack.c.b16 %v3024, %v3023
      %v3050 = vpack.c.b16 %v3026, %v3025
      %v3051 = vpack.c.b16 %v3028, %v3027
      %v3052 = vpack.c.b16 %v3030, %v3029
      %v3053 = vpack.c.b16 %v3032, %v3031
      %v3054 = vpack.c.b16 %v3034, %v3033
      %v3055 = vpack.c.b16 %v3036, %v3035
      %v3056 = vpack.c.b16 %v3038, %v3037
      %v3057 = vpack.c.b16 %v3040, %v3039
      %v3058 = vpack.c.b16 %v3041, %v3041
      %v3060 = vshrl.u32 %v3042, 16
      %v3062 = vshll.u32 %v3042, 16
      %v3064 = vrot.slane %v3062, 1
      %v3065 = vor.u32 %v3060, %v3064
      %v3067 = vshll.u32 %v3043, 16
      %v3069 = vrot.slane %v3067, 1
      %v3070 = vsel %vm1464, %v3065, %v3069
      %v3071 = vshrl.u32 %v3043, 16
      %v3073 = vor.u32 %v3071, %v3069
      %v3075 = vshll.u32 %v3044, 16
      %v3077 = vrot.slane %v3075, 1
      %v3078 = vsel %vm1464, %v3073, %v3077
      %v3079 = vshrl.u32 %v3044, 16
      %v3081 = vor.u32 %v3079, %v3077
      %v3083 = vshll.u32 %v3045, 16
      %v3085 = vrot.slane %v3083, 1
      %v3086 = vsel %vm1464, %v3081, %v3085
      %v3087 = vshrl.u32 %v3045, 16
      %v3089 = vor.u32 %v3087, %v3085
      %v3091 = vshll.u32 %v3046, 16
      %v3093 = vrot.slane %v3091, 1
      %v3094 = vsel %vm1464, %v3089, %v3093
      %v3095 = vshrl.u32 %v3046, 16
      %v3097 = vor.u32 %v3095, %v3093
      %v3099 = vshll.u32 %v3047, 16
      %v3101 = vrot.slane %v3099, 1
      %v3102 = vsel %vm1464, %v3097, %v3101
      %v3103 = vshrl.u32 %v3047, 16
      %v3105 = vor.u32 %v3103, %v3101
      %v3107 = vshll.u32 %v3048, 16
      %v3109 = vrot.slane %v3107, 1
      %v3110 = vsel %vm1464, %v3105, %v3109
      %v3111 = vshrl.u32 %v3048, 16
      %v3113 = vor.u32 %v3111, %v3109
      %v3115 = vshll.u32 %v3049, 16
      %v3117 = vrot.slane %v3115, 1
      %v3118 = vsel %vm1464, %v3113, %v3117
      %v3119 = vshrl.u32 %v3049, 16
      %v3121 = vor.u32 %v3119, %v3117
      %v3123 = vshll.u32 %v3050, 16
      %v3125 = vrot.slane %v3123, 1
      %v3126 = vsel %vm1464, %v3121, %v3125
      %v3127 = vshrl.u32 %v3050, 16
      %v3129 = vor.u32 %v3127, %v3125
      %v3131 = vshll.u32 %v3051, 16
      %v3133 = vrot.slane %v3131, 1
      %v3134 = vsel %vm1464, %v3129, %v3133
      %v3135 = vshrl.u32 %v3051, 16
      %v3137 = vor.u32 %v3135, %v3133
      %v3139 = vshll.u32 %v3052, 16
      %v3141 = vrot.slane %v3139, 1
      %v3142 = vsel %vm1464, %v3137, %v3141
      %v3143 = vshrl.u32 %v3052, 16
      %v3145 = vor.u32 %v3143, %v3141
      %v3147 = vshll.u32 %v3053, 16
      %v3149 = vrot.slane %v3147, 1
      %v3150 = vsel %vm1464, %v3145, %v3149
      %v3151 = vshrl.u32 %v3053, 16
      %v3153 = vor.u32 %v3151, %v3149
      %v3155 = vshll.u32 %v3054, 16
      %v3157 = vrot.slane %v3155, 1
      %v3158 = vsel %vm1464, %v3153, %v3157
      %v3159 = vshrl.u32 %v3054, 16
      %v3161 = vor.u32 %v3159, %v3157
      %v3163 = vshll.u32 %v3055, 16
      %v3165 = vrot.slane %v3163, 1
      %v3166 = vsel %vm1464, %v3161, %v3165
      %v3167 = vshrl.u32 %v3055, 16
      %v3169 = vor.u32 %v3167, %v3165
      %v3171 = vshll.u32 %v3056, 16
      %v3173 = vrot.slane %v3171, 1
      %v3174 = vsel %vm1464, %v3169, %v3173
      %v3175 = vshrl.u32 %v3056, 16
      %v3177 = vor.u32 %v3175, %v3173
      %v3179 = vshll.u32 %v3057, 16
      %v3181 = vrot.slane %v3179, 1
      %v3182 = vsel %vm1464, %v3177, %v3181
      %v3183 = vshrl.u32 %v3057, 16
      %v3185 = vor.u32 %v3183, %v3181
      %v3187 = vshll.u32 %v3058, 16
      %v3189 = vrot.slane %v3187, 1
      %v3190 = vsel %vm1464, %v3185, %v3189
      %v3195 = vunpack.c.l.b16 %v2972
      %v3196 = vunpack.c.l.b16 %v2973
      %v3197 = vunpack.c.l.b16 %v2974
      %v3198 = vunpack.c.l.b16 %v2975
      %v3199 = vpack.c.b16 %v3196, %v3195
      %v3200 = vpack.c.b16 %v3198, %v3197
      %v3204 = vsel %vm667, %v3070, 0
      %v3207 = vsel %vm667, %v3078, 0
      %v3210 = vsel %vm667, %v3086, 0
      %v3213 = vsel %vm667, %v3094, 0
      %v3216 = vsel %vm667, %v3102, 0
      %v3219 = vsel %vm667, %v3110, 0
      %v3222 = vsel %vm667, %v3118, 0
      %v3225 = vsel %vm667, %v3126, 0
      %v3228 = vsel %vm667, %v3134, 0
      %v3231 = vsel %vm667, %v3142, 0
      %v3234 = vsel %vm667, %v3150, 0
      %v3237 = vsel %vm667, %v3158, 0
      %v3240 = vsel %vm667, %v3166, 0
      %v3243 = vsel %vm667, %v3174, 0
      %v3246 = vsel %vm667, %v3182, 0
      %v3249 = vsel %vm667, %v3190, 0
      %3251 = vmatprep.subr.bf16.mxu0 0
      %3252 = vmatpush1.bf16.msra.mxu0 0
      %3253 = vmatprep.subr.bf16.mxu0 0
      %3254 = vmatpush1.bf16.msra.mxu0 0
      %3255 = vmatprep.subr.bf16.mxu0 0
      %3256 = vmatpush1.bf16.msra.mxu0 0
      %3257 = vmatprep.subr.bf16.mxu0 0
      %3258 = vmatpush1.bf16.msra.mxu0 0
      %3259 = vmatprep.subr.bf16.mxu0 0
      %3260 = vmatpush1.bf16.msra.mxu0 0
      %3261 = vmatprep.subr.bf16.mxu0 0
      %3262 = vmatpush1.bf16.msra.mxu0 0
      %3263 = vmatprep.subr.bf16.mxu0 0
      %3264 = vmatpush1.bf16.msra.mxu0 %v3200
      %3265 = vmatprep.subr.bf16.mxu0 0
      %3266 = vmatpush1.bf16.msra.mxu0 %v3199
      %3267 = vmatprep.subr.bf16.mxu0 0
      %3268 = vmatpush2.bf16.msra.mxu0 0
      %3269 = vmatprep.subr.bf16.mxu0 0
      %3270 = vmatpush2.bf16.msra.mxu0 0
      %3271 = vmatprep.subr.bf16.mxu0 0
      %3272 = vmatpush2.bf16.msra.mxu0 0
      %3273 = vmatprep.subr.bf16.mxu0 0
      %3274 = vmatpush2.bf16.msra.mxu0 0
      %3275 = vmatprep.subr.bf16.mxu0 0
      %3276 = vmatpush2.bf16.msra.mxu0 0
      %3277 = vmatprep.subr.bf16.mxu0 0
      %3278 = vmatpush2.bf16.msra.mxu0 0
      %3279 = vmatprep.subr.bf16.mxu0 0
      %3280 = vmatpush2.bf16.msra.mxu0 0
      %3281 = vmatprep.subr.bf16.mxu0 0
      %3282 = vmatpush2.bf16.msra.mxu0 0
      %3283 = vmatprep.mubr.bf16.mxu0 0
      %3284 = vmatmul.mubr.bf16.gmra.mxu0 %v3204
      %v3285 = vpop.f32.mrf.mxu0
      %v3286 = vadd.f32 0.0, %v3285
      %v3287 = vpop.f32.mrf.mxu0
      %v3288 = vpop.f32.mrf.mxu0
      %v3289 = vadd.f32 0.0, %v3288
      %v3290 = vpop.f32.mrf.mxu0
      %3291 = vmatprep.mubr.bf16.mxu0 0
      %3292 = vmatmul.mubr.bf16.gmra.mxu0 %v3207
      %v3293 = vpop.f32.mrf.mxu0
      %v3294 = vadd.f32 0.0, %v3293
      %v3295 = vpop.f32.mrf.mxu0
      %v3296 = vpop.f32.mrf.mxu0
      %v3297 = vadd.f32 0.0, %v3296
      %v3298 = vpop.f32.mrf.mxu0
      %3299 = vmatprep.mubr.bf16.mxu0 0
      %3300 = vmatmul.mubr.bf16.gmra.mxu0 %v3210
      %v3301 = vpop.f32.mrf.mxu0
      %v3302 = vadd.f32 0.0, %v3301
      %v3303 = vpop.f32.mrf.mxu0
      %v3304 = vpop.f32.mrf.mxu0
      %v3305 = vadd.f32 0.0, %v3304
      %v3306 = vpop.f32.mrf.mxu0
      %3307 = vmatprep.mubr.bf16.mxu0 0
      %3308 = vmatmul.mubr.bf16.gmra.mxu0 %v3213
      %v3309 = vpop.f32.mrf.mxu0
      %v3310 = vadd.f32 0.0, %v3309
      %v3311 = vpop.f32.mrf.mxu0
      %v3312 = vpop.f32.mrf.mxu0
      %v3313 = vadd.f32 0.0, %v3312
      %v3314 = vpop.f32.mrf.mxu0
      %3315 = vmatprep.mubr.bf16.mxu0 0
      %3316 = vmatmul.mubr.bf16.gmra.mxu0 %v3216
      %v3317 = vpop.f32.mrf.mxu0
      %v3318 = vadd.f32 0.0, %v3317
      %v3319 = vpop.f32.mrf.mxu0
      %v3320 = vpop.f32.mrf.mxu0
      %v3321 = vadd.f32 0.0, %v3320
      %v3322 = vpop.f32.mrf.mxu0
      %3323 = vmatprep.mubr.bf16.mxu0 0
      %3324 = vmatmul.mubr.bf16.gmra.mxu0 %v3219
      %v3325 = vpop.f32.mrf.mxu0
      %v3326 = vadd.f32 0.0, %v3325
      %v3327 = vpop.f32.mrf.mxu0
      %v3328 = vpop.f32.mrf.mxu0
      %v3329 = vadd.f32 0.0, %v3328
      %v3330 = vpop.f32.mrf.mxu0
      %3331 = vmatprep.mubr.bf16.mxu0 0
      %3332 = vmatmul.mubr.bf16.gmra.mxu0 %v3222
      %v3333 = vpop.f32.mrf.mxu0
      %v3334 = vadd.f32 0.0, %v3333
      %v3335 = vpop.f32.mrf.mxu0
      %v3336 = vpop.f32.mrf.mxu0
      %v3337 = vadd.f32 0.0, %v3336
      %v3338 = vpop.f32.mrf.mxu0
      %3339 = vmatprep.mubr.bf16.mxu0 0
      %3340 = vmatmul.mubr.bf16.gmra.mxu0 %v3225
      %v3341 = vpop.f32.mrf.mxu0
      %v3342 = vadd.f32 0.0, %v3341
      %v3343 = vpop.f32.mrf.mxu0
      %v3344 = vpop.f32.mrf.mxu0
      %v3345 = vadd.f32 0.0, %v3344
      %v3346 = vpop.f32.mrf.mxu0
      %3347 = vmatprep.mubr.bf16.mxu0 0
      %3348 = vmatmul.mubr.bf16.gmra.mxu0 %v3228
      %v3349 = vpop.f32.mrf.mxu0
      %v3350 = vadd.f32 0.0, %v3349
      %v3351 = vpop.f32.mrf.mxu0
      %v3352 = vpop.f32.mrf.mxu0
      %v3353 = vadd.f32 0.0, %v3352
      %v3354 = vpop.f32.mrf.mxu0
      %3355 = vmatprep.mubr.bf16.mxu0 0
      %3356 = vmatmul.mubr.bf16.gmra.mxu0 %v3231
      %v3357 = vpop.f32.mrf.mxu0
      %v3358 = vadd.f32 0.0, %v3357
      %v3359 = vpop.f32.mrf.mxu0
      %v3360 = vpop.f32.mrf.mxu0
      %v3361 = vadd.f32 0.0, %v3360
      %v3362 = vpop.f32.mrf.mxu0
      %3363 = vmatprep.mubr.bf16.mxu0 0
      %3364 = vmatmul.mubr.bf16.gmra.mxu0 %v3234
      %v3365 = vpop.f32.mrf.mxu0
      %v3366 = vadd.f32 0.0, %v3365
      %v3367 = vpop.f32.mrf.mxu0
      %v3368 = vpop.f32.mrf.mxu0
      %v3369 = vadd.f32 0.0, %v3368
      %v3370 = vpop.f32.mrf.mxu0
      %3371 = vmatprep.mubr.bf16.mxu0 0
      %3372 = vmatmul.mubr.bf16.gmra.mxu0 %v3237
      %v3373 = vpop.f32.mrf.mxu0
      %v3374 = vadd.f32 0.0, %v3373
      %v3375 = vpop.f32.mrf.mxu0
      %v3376 = vpop.f32.mrf.mxu0
      %v3377 = vadd.f32 0.0, %v3376
      %v3378 = vpop.f32.mrf.mxu0
      %3379 = vmatprep.mubr.bf16.mxu0 0
      %3380 = vmatmul.mubr.bf16.gmra.mxu0 %v3240
      %v3381 = vpop.f32.mrf.mxu0
      %v3382 = vadd.f32 0.0, %v3381
      %v3383 = vpop.f32.mrf.mxu0
      %v3384 = vpop.f32.mrf.mxu0
      %v3385 = vadd.f32 0.0, %v3384
      %v3386 = vpop.f32.mrf.mxu0
      %3387 = vmatprep.mubr.bf16.mxu0 0
      %3388 = vmatmul.mubr.bf16.gmra.mxu0 %v3243
      %v3389 = vpop.f32.mrf.mxu0
      %v3390 = vadd.f32 0.0, %v3389
      %v3391 = vpop.f32.mrf.mxu0
      %v3392 = vpop.f32.mrf.mxu0
      %v3393 = vadd.f32 0.0, %v3392
      %v3394 = vpop.f32.mrf.mxu0
      %3395 = vmatprep.mubr.bf16.mxu0 0
      %3396 = vmatmul.mubr.bf16.gmra.mxu0 %v3246
      %v3397 = vpop.f32.mrf.mxu0
      %v3398 = vadd.f32 0.0, %v3397
      %v3399 = vpop.f32.mrf.mxu0
      %v3400 = vpop.f32.mrf.mxu0
      %v3401 = vadd.f32 0.0, %v3400
      %v3402 = vpop.f32.mrf.mxu0
      %3403 = vmatprep.mubr.bf16.mxu0 0
      %3404 = vmatmul.mubr.bf16.gmra.mxu0 %v3249
      %v3405 = vpop.f32.mrf.mxu0
      %v3406 = vadd.f32 0.0, %v3405
      %v3407 = vpop.f32.mrf.mxu0
      %v3408 = vpop.f32.mrf.mxu0
      %v3409 = vadd.f32 0.0, %v3408
      %v3410 = vpop.f32.mrf.mxu0
      %3411 = vdwg.mxu0
      %v3412 = vld [vmem:[#allocation3] sm:$0xff]
      %v3413 = vld [vmem:[#allocation3 + $0x8] sm:$0xff]
      %v3414 = vld [vmem:[#allocation3 + $0x10] sm:$0xff]
      %v3415 = vld [vmem:[#allocation3 + $0x18] sm:$0xff]
      %v3416 = vld [vmem:[#allocation3 + $0x20] sm:$0xff]
      %v3417 = vld [vmem:[#allocation3 + $0x28] sm:$0xff]
      %v3418 = vld [vmem:[#allocation3 + $0x30] sm:$0xff]
      %v3419 = vld [vmem:[#allocation3 + $0x38] sm:$0xff]
      %v3420 = vld [vmem:[#allocation3 + $0x40] sm:$0xff]
      %v3421 = vld [vmem:[#allocation3 + $0x48] sm:$0xff]
      %v3422 = vld [vmem:[#allocation3 + $0x50] sm:$0xff]
      %v3423 = vld [vmem:[#allocation3 + $0x58] sm:$0xff]
      %v3424 = vld [vmem:[#allocation3 + $0x60] sm:$0xff]
      %v3425 = vld [vmem:[#allocation3 + $0x68] sm:$0xff]
      %v3426 = vld [vmem:[#allocation3 + $0x70] sm:$0xff]
      %v3427 = vld [vmem:[#allocation3 + $0x78] sm:$0xff]
      %v3428 = vld [vmem:[#allocation3 + $0x80] sm:$0xff]
      %v3429 = vld [vmem:[#allocation3 + $0x88] sm:$0xff]
      %v3430 = vld [vmem:[#allocation3 + $0x90] sm:$0xff]
      %v3431 = vld [vmem:[#allocation3 + $0x98] sm:$0xff]
      %v3432 = vld [vmem:[#allocation3 + $0xa0] sm:$0xff]
      %v3433 = vld [vmem:[#allocation3 + $0xa8] sm:$0xff]
      %v3434 = vld [vmem:[#allocation3 + $0xb0] sm:$0xff]
      %v3435 = vld [vmem:[#allocation3 + $0xb8] sm:$0xff]
      %v3436 = vld [vmem:[#allocation3 + $0xc0] sm:$0xff]
      %v3437 = vld [vmem:[#allocation3 + $0xc8] sm:$0xff]
      %v3438 = vld [vmem:[#allocation3 + $0xd0] sm:$0xff]
      %v3439 = vld [vmem:[#allocation3 + $0xd8] sm:$0xff]
      %v3440 = vld [vmem:[#allocation3 + $0xe0] sm:$0xff]
      %v3441 = vld [vmem:[#allocation3 + $0xe8] sm:$0xff]
      %v3442 = vld [vmem:[#allocation3 + $0xf0] sm:$0xff]
      %v3443 = vld [vmem:[#allocation3 + $0xf8] sm:$0xff]
      %v3444 = vadd.f32 %v3412, %v3286
      %v3445 = vadd.f32 %v3413, %v3289
      %v3446 = vadd.f32 %v3414, %v3294
      %v3447 = vadd.f32 %v3415, %v3297
      %v3448 = vadd.f32 %v3416, %v3302
      %v3449 = vadd.f32 %v3417, %v3305
      %v3450 = vadd.f32 %v3418, %v3310
      %v3451 = vadd.f32 %v3419, %v3313
      %v3452 = vadd.f32 %v3420, %v3318
      %v3453 = vadd.f32 %v3421, %v3321
      %v3454 = vadd.f32 %v3422, %v3326
      %v3455 = vadd.f32 %v3423, %v3329
      %v3456 = vadd.f32 %v3424, %v3334
      %v3457 = vadd.f32 %v3425, %v3337
      %v3458 = vadd.f32 %v3426, %v3342
      %v3459 = vadd.f32 %v3427, %v3345
      %v3460 = vadd.f32 %v3428, %v3350
      %v3461 = vadd.f32 %v3429, %v3353
      %v3462 = vadd.f32 %v3430, %v3358
      %v3463 = vadd.f32 %v3431, %v3361
      %v3464 = vadd.f32 %v3432, %v3366
      %v3465 = vadd.f32 %v3433, %v3369
      %v3466 = vadd.f32 %v3434, %v3374
      %v3467 = vadd.f32 %v3435, %v3377
      %v3468 = vadd.f32 %v3436, %v3382
      %v3469 = vadd.f32 %v3437, %v3385
      %v3470 = vadd.f32 %v3438, %v3390
      %v3471 = vadd.f32 %v3439, %v3393
      %v3472 = vadd.f32 %v3440, %v3398
      %v3473 = vadd.f32 %v3441, %v3401
      %v3474 = vadd.f32 %v3442, %v3406
      %v3475 = vadd.f32 %v3443, %v3409
      %3476 = vst [vmem:[#allocation3] sm:$0xff] %v3444
      %3477 = vst [vmem:[#allocation3 + $0x8] sm:$0xff] %v3445
      %3478 = vst [vmem:[#allocation3 + $0x10] sm:$0xff] %v3446
      %3479 = vst [vmem:[#allocation3 + $0x18] sm:$0xff] %v3447
      %3480 = vst [vmem:[#allocation3 + $0x20] sm:$0xff] %v3448
      %3481 = vst [vmem:[#allocation3 + $0x28] sm:$0xff] %v3449
      %3482 = vst [vmem:[#allocation3 + $0x30] sm:$0xff] %v3450
      %3483 = vst [vmem:[#allocation3 + $0x38] sm:$0xff] %v3451
      %3484 = vst [vmem:[#allocation3 + $0x40] sm:$0xff] %v3452
      %3485 = vst [vmem:[#allocation3 + $0x48] sm:$0xff] %v3453
      %3486 = vst [vmem:[#allocation3 + $0x50] sm:$0xff] %v3454
      %3487 = vst [vmem:[#allocation3 + $0x58] sm:$0xff] %v3455
      %3488 = vst [vmem:[#allocation3 + $0x60] sm:$0xff] %v3456
      %3489 = vst [vmem:[#allocation3 + $0x68] sm:$0xff] %v3457
      %3490 = vst [vmem:[#allocation3 + $0x70] sm:$0xff] %v3458
      %3491 = vst [vmem:[#allocation3 + $0x78] sm:$0xff] %v3459
      %3492 = vst [vmem:[#allocation3 + $0x80] sm:$0xff] %v3460
      %3493 = vst [vmem:[#allocation3 + $0x88] sm:$0xff] %v3461
      %3494 = vst [vmem:[#allocation3 + $0x90] sm:$0xff] %v3462
      %3495 = vst [vmem:[#allocation3 + $0x98] sm:$0xff] %v3463
      %3496 = vst [vmem:[#allocation3 + $0xa0] sm:$0xff] %v3464
      %3497 = vst [vmem:[#allocation3 + $0xa8] sm:$0xff] %v3465
      %3498 = vst [vmem:[#allocation3 + $0xb0] sm:$0xff] %v3466
      %3499 = vst [vmem:[#allocation3 + $0xb8] sm:$0xff] %v3467
      %3500 = vst [vmem:[#allocation3 + $0xc0] sm:$0xff] %v3468
      %3501 = vst [vmem:[#allocation3 + $0xc8] sm:$0xff] %v3469
      %3502 = vst [vmem:[#allocation3 + $0xd0] sm:$0xff] %v3470
      %3503 = vst [vmem:[#allocation3 + $0xd8] sm:$0xff] %v3471
      %3504 = vst [vmem:[#allocation3 + $0xe0] sm:$0xff] %v3472
      %3505 = vst [vmem:[#allocation3 + $0xe8] sm:$0xff] %v3473
      %3506 = vst [vmem:[#allocation3 + $0xf0] sm:$0xff] %v3474
      %3507 = vst [vmem:[#allocation3 + $0xf8] sm:$0xff] %v3475
      %v3508 = vld [vmem:[%s301 + $0x14] sm:$0x8]
      %v3509 = vld [vmem:[%s301 + $0x18] sm:$0xf]
      %v3510 = vld [vmem:[%s301 + $0x1c] sm:$0xf]
      %v3511 = vld [vmem:[%s301 + $0x20] sm:$0xf]
      %v3512 = vld [vmem:[%s301 + $0x24] sm:$0xf]
      %v3513 = vld [vmem:[%s301 + $0x28] sm:$0xf]
      %v3514 = vld [vmem:[%s301 + $0x2c] sm:$0xf]
      %v3515 = vld [vmem:[%s301 + $0x30] sm:$0xf]
      %v3516 = vld [vmem:[%s301 + $0x34] sm:$0xf]
      %v3517 = vld [vmem:[%s301 + $0x38] sm:$0xf]
      %v3518 = vld [vmem:[%s301 + $0x3c] sm:$0xf]
      %v3519 = vld [vmem:[%s301 + $0x40] sm:$0xf]
      %v3520 = vld [vmem:[%s301 + $0x44] sm:$0xf]
      %v3521 = vld [vmem:[%s301 + $0x48] sm:$0xf]
      %v3522 = vld [vmem:[%s301 + $0x4c] sm:$0xf]
      %v3523 = vld [vmem:[%s301 + $0x50] sm:$0xf]
      %v3524 = vld [vmem:[%s301 + $0x54] sm:$0xf]
      %v3525 = vld [vmem:[%s301 + $0x58] sm:$0xf]
      %v3526 = vld [vmem:[%s301 + $0x5c] sm:$0xf]
      %v3527 = vld [vmem:[%s301 + $0x60] sm:$0xf]
      %v3528 = vld [vmem:[%s301 + $0x64] sm:$0xf]
      %v3529 = vld [vmem:[%s301 + $0x68] sm:$0xf]
      %v3530 = vld [vmem:[%s301 + $0x6c] sm:$0xf]
      %v3531 = vld [vmem:[%s301 + $0x70] sm:$0xf]
      %v3532 = vld [vmem:[%s301 + $0x74] sm:$0xf]
      %v3533 = vld [vmem:[%s301 + $0x78] sm:$0xf]
      %v3534 = vld [vmem:[%s301 + $0x7c] sm:$0xf]
      %v3535 = vld [vmem:[%s301 + $0x80] sm:$0xf]
      %v3536 = vld [vmem:[%s301 + $0x84] sm:$0xf]
      %v3537 = vld [vmem:[%s301 + $0x88] sm:$0xf]
      %v3538 = vld [vmem:[%s301 + $0x8c] sm:$0xf]
      %v3539 = vld [vmem:[%s301 + $0x90] sm:$0xf]
      %v3540 = vld [vmem:[%s301 + $0x94] sm:$0xf]
      %s3541 = scalar_lea.vmem %s2, 96
      %v3542 = vld [vmem:[%s3541] sm:$0xf]
      %v3543 = vld [vmem:[%s3541 + $0x4] sm:$0xf]
      %v3544 = vld [vmem:[%s3541 + $0x8] sm:$0xf]
      %v3545 = vld [vmem:[%s3541 + $0xc] sm:$0xf]
      %v3579 = vunpack.c.l.b16 %v3508
      %v3580 = vunpack.c.l.b16 %v3509
      %v3581 = vunpack.c.l.b16 %v3510
      %v3582 = vunpack.c.l.b16 %v3511
      %v3583 = vunpack.c.l.b16 %v3512
      %v3584 = vunpack.c.l.b16 %v3513
      %v3585 = vunpack.c.l.b16 %v3514
      %v3586 = vunpack.c.l.b16 %v3515
      %v3587 = vunpack.c.l.b16 %v3516
      %v3588 = vunpack.c.l.b16 %v3517
      %v3589 = vunpack.c.l.b16 %v3518
      %v3590 = vunpack.c.l.b16 %v3519
      %v3591 = vunpack.c.l.b16 %v3520
      %v3592 = vunpack.c.l.b16 %v3521
      %v3593 = vunpack.c.l.b16 %v3522
      %v3594 = vunpack.c.l.b16 %v3523
      %v3595 = vunpack.c.l.b16 %v3524
      %v3596 = vunpack.c.l.b16 %v3525
      %v3597 = vunpack.c.l.b16 %v3526
      %v3598 = vunpack.c.l.b16 %v3527
      %v3599 = vunpack.c.l.b16 %v3528
      %v3600 = vunpack.c.l.b16 %v3529
      %v3601 = vunpack.c.l.b16 %v3530
      %v3602 = vunpack.c.l.b16 %v3531
      %v3603 = vunpack.c.l.b16 %v3532
      %v3604 = vunpack.c.l.b16 %v3533
      %v3605 = vunpack.c.l.b16 %v3534
      %v3606 = vunpack.c.l.b16 %v3535
      %v3607 = vunpack.c.l.b16 %v3536
      %v3608 = vunpack.c.l.b16 %v3537
      %v3609 = vunpack.c.l.b16 %v3538
      %v3610 = vunpack.c.l.b16 %v3539
      %v3611 = vunpack.c.l.b16 %v3540
      %v3612 = vpack.c.b16 %v3580, %v3579
      %v3613 = vpack.c.b16 %v3582, %v3581
      %v3614 = vpack.c.b16 %v3584, %v3583
      %v3615 = vpack.c.b16 %v3586, %v3585
      %v3616 = vpack.c.b16 %v3588, %v3587
      %v3617 = vpack.c.b16 %v3590, %v3589
      %v3618 = vpack.c.b16 %v3592, %v3591
      %v3619 = vpack.c.b16 %v3594, %v3593
      %v3620 = vpack.c.b16 %v3596, %v3595
      %v3621 = vpack.c.b16 %v3598, %v3597
      %v3622 = vpack.c.b16 %v3600, %v3599
      %v3623 = vpack.c.b16 %v3602, %v3601
      %v3624 = vpack.c.b16 %v3604, %v3603
      %v3625 = vpack.c.b16 %v3606, %v3605
      %v3626 = vpack.c.b16 %v3608, %v3607
      %v3627 = vpack.c.b16 %v3610, %v3609
      %v3628 = vpack.c.b16 %v3611, %v3611
      %v3630 = vshrl.u32 %v3612, 16
      %v3632 = vrot.slane %v3630, 3
      %v3633 = vshll.u32 %v3612, 16
      %v3635 = vrot.slane %v3633, 4
      %v3636 = vor.u32 %v3632, %v3635
      %v3638 = vshrl.u32 %v3613, 16
      %v3640 = vrot.slane %v3638, 3
      %v3641 = vshll.u32 %v3613, 16
      %v3643 = vrot.slane %v3641, 4
      %v3644 = vor.u32 %v3640, %v3643
      %v3645 = vsel %vm502, %v3636, %v3644
      %v3647 = vshrl.u32 %v3614, 16
      %v3649 = vrot.slane %v3647, 3
      %v3650 = vshll.u32 %v3614, 16
      %v3652 = vrot.slane %v3650, 4
      %v3653 = vor.u32 %v3649, %v3652
      %v3654 = vsel %vm502, %v3644, %v3653
      %v3656 = vshrl.u32 %v3615, 16
      %v3658 = vrot.slane %v3656, 3
      %v3659 = vshll.u32 %v3615, 16
      %v3661 = vrot.slane %v3659, 4
      %v3662 = vor.u32 %v3658, %v3661
      %v3663 = vsel %vm502, %v3653, %v3662
      %v3665 = vshrl.u32 %v3616, 16
      %v3667 = vrot.slane %v3665, 3
      %v3668 = vshll.u32 %v3616, 16
      %v3670 = vrot.slane %v3668, 4
      %v3671 = vor.u32 %v3667, %v3670
      %v3672 = vsel %vm502, %v3662, %v3671
      %v3674 = vshrl.u32 %v3617, 16
      %v3676 = vrot.slane %v3674, 3
      %v3677 = vshll.u32 %v3617, 16
      %v3679 = vrot.slane %v3677, 4
      %v3680 = vor.u32 %v3676, %v3679
      %v3681 = vsel %vm502, %v3671, %v3680
      %v3683 = vshrl.u32 %v3618, 16
      %v3685 = vrot.slane %v3683, 3
      %v3686 = vshll.u32 %v3618, 16
      %v3688 = vrot.slane %v3686, 4
      %v3689 = vor.u32 %v3685, %v3688
      %v3690 = vsel %vm502, %v3680, %v3689
      %v3692 = vshrl.u32 %v3619, 16
      %v3694 = vrot.slane %v3692, 3
      %v3695 = vshll.u32 %v3619, 16
      %v3697 = vrot.slane %v3695, 4
      %v3698 = vor.u32 %v3694, %v3697
      %v3699 = vsel %vm502, %v3689, %v3698
      %v3701 = vshrl.u32 %v3620, 16
      %v3703 = vrot.slane %v3701, 3
      %v3704 = vshll.u32 %v3620, 16
      %v3706 = vrot.slane %v3704, 4
      %v3707 = vor.u32 %v3703, %v3706
      %v3708 = vsel %vm502, %v3698, %v3707
      %v3710 = vshrl.u32 %v3621, 16
      %v3712 = vrot.slane %v3710, 3
      %v3713 = vshll.u32 %v3621, 16
      %v3715 = vrot.slane %v3713, 4
      %v3716 = vor.u32 %v3712, %v3715
      %v3717 = vsel %vm502, %v3707, %v3716
      %v3719 = vshrl.u32 %v3622, 16
      %v3721 = vrot.slane %v3719, 3
      %v3722 = vshll.u32 %v3622, 16
      %v3724 = vrot.slane %v3722, 4
      %v3725 = vor.u32 %v3721, %v3724
      %v3726 = vsel %vm502, %v3716, %v3725
      %v3728 = vshrl.u32 %v3623, 16
      %v3730 = vrot.slane %v3728, 3
      %v3731 = vshll.u32 %v3623, 16
      %v3733 = vrot.slane %v3731, 4
      %v3734 = vor.u32 %v3730, %v3733
      %v3735 = vsel %vm502, %v3725, %v3734
      %v3737 = vshrl.u32 %v3624, 16
      %v3739 = vrot.slane %v3737, 3
      %v3740 = vshll.u32 %v3624, 16
      %v3742 = vrot.slane %v3740, 4
      %v3743 = vor.u32 %v3739, %v3742
      %v3744 = vsel %vm502, %v3734, %v3743
      %v3746 = vshrl.u32 %v3625, 16
      %v3748 = vrot.slane %v3746, 3
      %v3749 = vshll.u32 %v3625, 16
      %v3751 = vrot.slane %v3749, 4
      %v3752 = vor.u32 %v3748, %v3751
      %v3753 = vsel %vm502, %v3743, %v3752
      %v3755 = vshrl.u32 %v3626, 16
      %v3757 = vrot.slane %v3755, 3
      %v3758 = vshll.u32 %v3626, 16
      %v3760 = vrot.slane %v3758, 4
      %v3761 = vor.u32 %v3757, %v3760
      %v3762 = vsel %vm502, %v3752, %v3761
      %v3764 = vshrl.u32 %v3627, 16
      %v3766 = vrot.slane %v3764, 3
      %v3767 = vshll.u32 %v3627, 16
      %v3769 = vrot.slane %v3767, 4
      %v3770 = vor.u32 %v3766, %v3769
      %v3771 = vsel %vm502, %v3761, %v3770
      %v3773 = vshrl.u32 %v3628, 16
      %v3775 = vrot.slane %v3773, 3
      %v3776 = vshll.u32 %v3628, 16
      %v3778 = vrot.slane %v3776, 4
      %v3779 = vor.u32 %v3775, %v3778
      %v3780 = vsel %vm502, %v3770, %v3779
      %v3785 = vunpack.c.l.b16 %v3542
      %v3786 = vunpack.c.l.b16 %v3543
      %v3787 = vunpack.c.l.b16 %v3544
      %v3788 = vunpack.c.l.b16 %v3545
      %v3789 = vpack.c.b16 %v3786, %v3785
      %v3790 = vpack.c.b16 %v3788, %v3787
      %v3794 = vsel %vm667, %v3645, 0
      %v3797 = vsel %vm667, %v3654, 0
      %v3800 = vsel %vm667, %v3663, 0
      %v3803 = vsel %vm667, %v3672, 0
      %v3806 = vsel %vm667, %v3681, 0
      %v3809 = vsel %vm667, %v3690, 0
      %v3812 = vsel %vm667, %v3699, 0
      %v3815 = vsel %vm667, %v3708, 0
      %v3818 = vsel %vm667, %v3717, 0
      %v3821 = vsel %vm667, %v3726, 0
      %v3824 = vsel %vm667, %v3735, 0
      %v3827 = vsel %vm667, %v3744, 0
      %v3830 = vsel %vm667, %v3753, 0
      %v3833 = vsel %vm667, %v3762, 0
      %v3836 = vsel %vm667, %v3771, 0
      %v3839 = vsel %vm667, %v3780, 0
      %3841 = vmatprep.subr.bf16.mxu0 0
      %3842 = vmatpush1.bf16.msra.mxu0 0
      %3843 = vmatprep.subr.bf16.mxu0 0
      %3844 = vmatpush1.bf16.msra.mxu0 0
      %3845 = vmatprep.subr.bf16.mxu0 0
      %3846 = vmatpush1.bf16.msra.mxu0 0
      %3847 = vmatprep.subr.bf16.mxu0 0
      %3848 = vmatpush1.bf16.msra.mxu0 0
      %3849 = vmatprep.subr.bf16.mxu0 0
      %3850 = vmatpush1.bf16.msra.mxu0 0
      %3851 = vmatprep.subr.bf16.mxu0 0
      %3852 = vmatpush1.bf16.msra.mxu0 0
      %3853 = vmatprep.subr.bf16.mxu0 0
      %3854 = vmatpush1.bf16.msra.mxu0 %v3790
      %3855 = vmatprep.subr.bf16.mxu0 0
      %3856 = vmatpush1.bf16.msra.mxu0 %v3789
      %3857 = vmatprep.subr.bf16.mxu0 0
      %3858 = vmatpush2.bf16.msra.mxu0 0
      %3859 = vmatprep.subr.bf16.mxu0 0
      %3860 = vmatpush2.bf16.msra.mxu0 0
      %3861 = vmatprep.subr.bf16.mxu0 0
      %3862 = vmatpush2.bf16.msra.mxu0 0
      %3863 = vmatprep.subr.bf16.mxu0 0
      %3864 = vmatpush2.bf16.msra.mxu0 0
      %3865 = vmatprep.subr.bf16.mxu0 0
      %3866 = vmatpush2.bf16.msra.mxu0 0
      %3867 = vmatprep.subr.bf16.mxu0 0
      %3868 = vmatpush2.bf16.msra.mxu0 0
      %3869 = vmatprep.subr.bf16.mxu0 0
      %3870 = vmatpush2.bf16.msra.mxu0 0
      %3871 = vmatprep.subr.bf16.mxu0 0
      %3872 = vmatpush2.bf16.msra.mxu0 0
      %3873 = vmatprep.mubr.bf16.mxu0 0
      %3874 = vmatmul.mubr.bf16.gmra.mxu0 %v3794
      %v3875 = vpop.f32.mrf.mxu0
      %v3876 = vadd.f32 0.0, %v3875
      %v3877 = vpop.f32.mrf.mxu0
      %v3878 = vpop.f32.mrf.mxu0
      %v3879 = vadd.f32 0.0, %v3878
      %v3880 = vpop.f32.mrf.mxu0
      %3881 = vmatprep.mubr.bf16.mxu0 0
      %3882 = vmatmul.mubr.bf16.gmra.mxu0 %v3797
      %v3883 = vpop.f32.mrf.mxu0
      %v3884 = vadd.f32 0.0, %v3883
      %v3885 = vpop.f32.mrf.mxu0
      %v3886 = vpop.f32.mrf.mxu0
      %v3887 = vadd.f32 0.0, %v3886
      %v3888 = vpop.f32.mrf.mxu0
      %3889 = vmatprep.mubr.bf16.mxu0 0
      %3890 = vmatmul.mubr.bf16.gmra.mxu0 %v3800
      %v3891 = vpop.f32.mrf.mxu0
      %v3892 = vadd.f32 0.0, %v3891
      %v3893 = vpop.f32.mrf.mxu0
      %v3894 = vpop.f32.mrf.mxu0
      %v3895 = vadd.f32 0.0, %v3894
      %v3896 = vpop.f32.mrf.mxu0
      %3897 = vmatprep.mubr.bf16.mxu0 0
      %3898 = vmatmul.mubr.bf16.gmra.mxu0 %v3803
      %v3899 = vpop.f32.mrf.mxu0
      %v3900 = vadd.f32 0.0, %v3899
      %v3901 = vpop.f32.mrf.mxu0
      %v3902 = vpop.f32.mrf.mxu0
      %v3903 = vadd.f32 0.0, %v3902
      %v3904 = vpop.f32.mrf.mxu0
      %3905 = vmatprep.mubr.bf16.mxu0 0
      %3906 = vmatmul.mubr.bf16.gmra.mxu0 %v3806
      %v3907 = vpop.f32.mrf.mxu0
      %v3908 = vadd.f32 0.0, %v3907
      %v3909 = vpop.f32.mrf.mxu0
      %v3910 = vpop.f32.mrf.mxu0
      %v3911 = vadd.f32 0.0, %v3910
      %v3912 = vpop.f32.mrf.mxu0
      %3913 = vmatprep.mubr.bf16.mxu0 0
      %3914 = vmatmul.mubr.bf16.gmra.mxu0 %v3809
      %v3915 = vpop.f32.mrf.mxu0
      %v3916 = vadd.f32 0.0, %v3915
      %v3917 = vpop.f32.mrf.mxu0
      %v3918 = vpop.f32.mrf.mxu0
      %v3919 = vadd.f32 0.0, %v3918
      %v3920 = vpop.f32.mrf.mxu0
      %3921 = vmatprep.mubr.bf16.mxu0 0
      %3922 = vmatmul.mubr.bf16.gmra.mxu0 %v3812
      %v3923 = vpop.f32.mrf.mxu0
      %v3924 = vadd.f32 0.0, %v3923
      %v3925 = vpop.f32.mrf.mxu0
      %v3926 = vpop.f32.mrf.mxu0
      %v3927 = vadd.f32 0.0, %v3926
      %v3928 = vpop.f32.mrf.mxu0
      %3929 = vmatprep.mubr.bf16.mxu0 0
      %3930 = vmatmul.mubr.bf16.gmra.mxu0 %v3815
      %v3931 = vpop.f32.mrf.mxu0
      %v3932 = vadd.f32 0.0, %v3931
      %v3933 = vpop.f32.mrf.mxu0
      %v3934 = vpop.f32.mrf.mxu0
      %v3935 = vadd.f32 0.0, %v3934
      %v3936 = vpop.f32.mrf.mxu0
      %3937 = vmatprep.mubr.bf16.mxu0 0
      %3938 = vmatmul.mubr.bf16.gmra.mxu0 %v3818
      %v3939 = vpop.f32.mrf.mxu0
      %v3940 = vadd.f32 0.0, %v3939
      %v3941 = vpop.f32.mrf.mxu0
      %v3942 = vpop.f32.mrf.mxu0
      %v3943 = vadd.f32 0.0, %v3942
      %v3944 = vpop.f32.mrf.mxu0
      %3945 = vmatprep.mubr.bf16.mxu0 0
      %3946 = vmatmul.mubr.bf16.gmra.mxu0 %v3821
      %v3947 = vpop.f32.mrf.mxu0
      %v3948 = vadd.f32 0.0, %v3947
      %v3949 = vpop.f32.mrf.mxu0
      %v3950 = vpop.f32.mrf.mxu0
      %v3951 = vadd.f32 0.0, %v3950
      %v3952 = vpop.f32.mrf.mxu0
      %3953 = vmatprep.mubr.bf16.mxu0 0
      %3954 = vmatmul.mubr.bf16.gmra.mxu0 %v3824
      %v3955 = vpop.f32.mrf.mxu0
      %v3956 = vadd.f32 0.0, %v3955
      %v3957 = vpop.f32.mrf.mxu0
      %v3958 = vpop.f32.mrf.mxu0
      %v3959 = vadd.f32 0.0, %v3958
      %v3960 = vpop.f32.mrf.mxu0
      %3961 = vmatprep.mubr.bf16.mxu0 0
      %3962 = vmatmul.mubr.bf16.gmra.mxu0 %v3827
      %v3963 = vpop.f32.mrf.mxu0
      %v3964 = vadd.f32 0.0, %v3963
      %v3965 = vpop.f32.mrf.mxu0
      %v3966 = vpop.f32.mrf.mxu0
      %v3967 = vadd.f32 0.0, %v3966
      %v3968 = vpop.f32.mrf.mxu0
      %3969 = vmatprep.mubr.bf16.mxu0 0
      %3970 = vmatmul.mubr.bf16.gmra.mxu0 %v3830
      %v3971 = vpop.f32.mrf.mxu0
      %v3972 = vadd.f32 0.0, %v3971
      %v3973 = vpop.f32.mrf.mxu0
      %v3974 = vpop.f32.mrf.mxu0
      %v3975 = vadd.f32 0.0, %v3974
      %v3976 = vpop.f32.mrf.mxu0
      %3977 = vmatprep.mubr.bf16.mxu0 0
      %3978 = vmatmul.mubr.bf16.gmra.mxu0 %v3833
      %v3979 = vpop.f32.mrf.mxu0
      %v3980 = vadd.f32 0.0, %v3979
      %v3981 = vpop.f32.mrf.mxu0
      %v3982 = vpop.f32.mrf.mxu0
      %v3983 = vadd.f32 0.0, %v3982
      %v3984 = vpop.f32.mrf.mxu0
      %3985 = vmatprep.mubr.bf16.mxu0 0
      %3986 = vmatmul.mubr.bf16.gmra.mxu0 %v3836
      %v3987 = vpop.f32.mrf.mxu0
      %v3988 = vadd.f32 0.0, %v3987
      %v3989 = vpop.f32.mrf.mxu0
      %v3990 = vpop.f32.mrf.mxu0
      %v3991 = vadd.f32 0.0, %v3990
      %v3992 = vpop.f32.mrf.mxu0
      %3993 = vmatprep.mubr.bf16.mxu0 0
      %3994 = vmatmul.mubr.bf16.gmra.mxu0 %v3839
      %v3995 = vpop.f32.mrf.mxu0
      %v3996 = vadd.f32 0.0, %v3995
      %v3997 = vpop.f32.mrf.mxu0
      %v3998 = vpop.f32.mrf.mxu0
      %v3999 = vadd.f32 0.0, %v3998
      %v4000 = vpop.f32.mrf.mxu0
      %4001 = vdwg.mxu0
      %v4002 = vld [vmem:[#allocation3] sm:$0xff]
      %v4003 = vld [vmem:[#allocation3 + $0x8] sm:$0xff]
      %v4004 = vld [vmem:[#allocation3 + $0x10] sm:$0xff]
      %v4005 = vld [vmem:[#allocation3 + $0x18] sm:$0xff]
      %v4006 = vld [vmem:[#allocation3 + $0x20] sm:$0xff]
      %v4007 = vld [vmem:[#allocation3 + $0x28] sm:$0xff]
      %v4008 = vld [vmem:[#allocation3 + $0x30] sm:$0xff]
      %v4009 = vld [vmem:[#allocation3 + $0x38] sm:$0xff]
      %v4010 = vld [vmem:[#allocation3 + $0x40] sm:$0xff]
      %v4011 = vld [vmem:[#allocation3 + $0x48] sm:$0xff]
      %v4012 = vld [vmem:[#allocation3 + $0x50] sm:$0xff]
      %v4013 = vld [vmem:[#allocation3 + $0x58] sm:$0xff]
      %v4014 = vld [vmem:[#allocation3 + $0x60] sm:$0xff]
      %v4015 = vld [vmem:[#allocation3 + $0x68] sm:$0xff]
      %v4016 = vld [vmem:[#allocation3 + $0x70] sm:$0xff]
      %v4017 = vld [vmem:[#allocation3 + $0x78] sm:$0xff]
      %v4018 = vld [vmem:[#allocation3 + $0x80] sm:$0xff]
      %v4019 = vld [vmem:[#allocation3 + $0x88] sm:$0xff]
      %v4020 = vld [vmem:[#allocation3 + $0x90] sm:$0xff]
      %v4021 = vld [vmem:[#allocation3 + $0x98] sm:$0xff]
      %v4022 = vld [vmem:[#allocation3 + $0xa0] sm:$0xff]
      %v4023 = vld [vmem:[#allocation3 + $0xa8] sm:$0xff]
      %v4024 = vld [vmem:[#allocation3 + $0xb0] sm:$0xff]
      %v4025 = vld [vmem:[#allocation3 + $0xb8] sm:$0xff]
      %v4026 = vld [vmem:[#allocation3 + $0xc0] sm:$0xff]
      %v4027 = vld [vmem:[#allocation3 + $0xc8] sm:$0xff]
      %v4028 = vld [vmem:[#allocation3 + $0xd0] sm:$0xff]
      %v4029 = vld [vmem:[#allocation3 + $0xd8] sm:$0xff]
      %v4030 = vld [vmem:[#allocation3 + $0xe0] sm:$0xff]
      %v4031 = vld [vmem:[#allocation3 + $0xe8] sm:$0xff]
      %v4032 = vld [vmem:[#allocation3 + $0xf0] sm:$0xff]
      %v4033 = vld [vmem:[#allocation3 + $0xf8] sm:$0xff]
      %v4034 = vadd.f32 %v4002, %v3876
      %v4035 = vadd.f32 %v4003, %v3879
      %v4036 = vadd.f32 %v4004, %v3884
      %v4037 = vadd.f32 %v4005, %v3887
      %v4038 = vadd.f32 %v4006, %v3892
      %v4039 = vadd.f32 %v4007, %v3895
      %v4040 = vadd.f32 %v4008, %v3900
      %v4041 = vadd.f32 %v4009, %v3903
      %v4042 = vadd.f32 %v4010, %v3908
      %v4043 = vadd.f32 %v4011, %v3911
      %v4044 = vadd.f32 %v4012, %v3916
      %v4045 = vadd.f32 %v4013, %v3919
      %v4046 = vadd.f32 %v4014, %v3924
      %v4047 = vadd.f32 %v4015, %v3927
      %v4048 = vadd.f32 %v4016, %v3932
      %v4049 = vadd.f32 %v4017, %v3935
      %v4050 = vadd.f32 %v4018, %v3940
      %v4051 = vadd.f32 %v4019, %v3943
      %v4052 = vadd.f32 %v4020, %v3948
      %v4053 = vadd.f32 %v4021, %v3951
      %v4054 = vadd.f32 %v4022, %v3956
      %v4055 = vadd.f32 %v4023, %v3959
      %v4056 = vadd.f32 %v4024, %v3964
      %v4057 = vadd.f32 %v4025, %v3967
      %v4058 = vadd.f32 %v4026, %v3972
      %v4059 = vadd.f32 %v4027, %v3975
      %v4060 = vadd.f32 %v4028, %v3980
      %v4061 = vadd.f32 %v4029, %v3983
      %v4062 = vadd.f32 %v4030, %v3988
      %v4063 = vadd.f32 %v4031, %v3991
      %v4064 = vadd.f32 %v4032, %v3996
      %v4065 = vadd.f32 %v4033, %v3999
      %4066 = vst [vmem:[#allocation3] sm:$0xff] %v4034
      %4067 = vst [vmem:[#allocation3 + $0x8] sm:$0xff] %v4035
      %4068 = vst [vmem:[#allocation3 + $0x10] sm:$0xff] %v4036
      %4069 = vst [vmem:[#allocation3 + $0x18] sm:$0xff] %v4037
      %4070 = vst [vmem:[#allocation3 + $0x20] sm:$0xff] %v4038
      %4071 = vst [vmem:[#allocation3 + $0x28] sm:$0xff] %v4039
      %4072 = vst [vmem:[#allocation3 + $0x30] sm:$0xff] %v4040
      %4073 = vst [vmem:[#allocation3 + $0x38] sm:$0xff] %v4041
      %4074 = vst [vmem:[#allocation3 + $0x40] sm:$0xff] %v4042
      %4075 = vst [vmem:[#allocation3 + $0x48] sm:$0xff] %v4043
      %4076 = vst [vmem:[#allocation3 + $0x50] sm:$0xff] %v4044
      %4077 = vst [vmem:[#allocation3 + $0x58] sm:$0xff] %v4045
      %4078 = vst [vmem:[#allocation3 + $0x60] sm:$0xff] %v4046
      %4079 = vst [vmem:[#allocation3 + $0x68] sm:$0xff] %v4047
      %4080 = vst [vmem:[#allocation3 + $0x70] sm:$0xff] %v4048
      %4081 = vst [vmem:[#allocation3 + $0x78] sm:$0xff] %v4049
      %4082 = vst [vmem:[#allocation3 + $0x80] sm:$0xff] %v4050
      %4083 = vst [vmem:[#allocation3 + $0x88] sm:$0xff] %v4051
      %4084 = vst [vmem:[#allocation3 + $0x90] sm:$0xff] %v4052
      %4085 = vst [vmem:[#allocation3 + $0x98] sm:$0xff] %v4053
      %4086 = vst [vmem:[#allocation3 + $0xa0] sm:$0xff] %v4054
      %4087 = vst [vmem:[#allocation3 + $0xa8] sm:$0xff] %v4055
      %4088 = vst [vmem:[#allocation3 + $0xb0] sm:$0xff] %v4056
      %4089 = vst [vmem:[#allocation3 + $0xb8] sm:$0xff] %v4057
      %4090 = vst [vmem:[#allocation3 + $0xc0] sm:$0xff] %v4058
      %4091 = vst [vmem:[#allocation3 + $0xc8] sm:$0xff] %v4059
      %4092 = vst [vmem:[#allocation3 + $0xd0] sm:$0xff] %v4060
      %4093 = vst [vmem:[#allocation3 + $0xd8] sm:$0xff] %v4061
      %4094 = vst [vmem:[#allocation3 + $0xe0] sm:$0xff] %v4062
      %4095 = vst [vmem:[#allocation3 + $0xe8] sm:$0xff] %v4063
      %4096 = vst [vmem:[#allocation3 + $0xf0] sm:$0xff] %v4064
      %4097 = vst [vmem:[#allocation3 + $0xf8] sm:$0xff] %v4065
      %v4098 = vld [vmem:[%s301 + $0x18] sm:$0xf]
      %v4099 = vld [vmem:[%s301 + $0x1c] sm:$0xf]
      %v4100 = vld [vmem:[%s301 + $0x20] sm:$0xf]
      %v4101 = vld [vmem:[%s301 + $0x24] sm:$0xf]
      %v4102 = vld [vmem:[%s301 + $0x28] sm:$0xf]
      %v4103 = vld [vmem:[%s301 + $0x2c] sm:$0xf]
      %v4104 = vld [vmem:[%s301 + $0x30] sm:$0xf]
      %v4105 = vld [vmem:[%s301 + $0x34] sm:$0xf]
      %v4106 = vld [vmem:[%s301 + $0x38] sm:$0xf]
      %v4107 = vld [vmem:[%s301 + $0x3c] sm:$0xf]
      %v4108 = vld [vmem:[%s301 + $0x40] sm:$0xf]
      %v4109 = vld [vmem:[%s301 + $0x44] sm:$0xf]
      %v4110 = vld [vmem:[%s301 + $0x48] sm:$0xf]
      %v4111 = vld [vmem:[%s301 + $0x4c] sm:$0xf]
      %v4112 = vld [vmem:[%s301 + $0x50] sm:$0xf]
      %v4113 = vld [vmem:[%s301 + $0x54] sm:$0xf]
      %v4114 = vld [vmem:[%s301 + $0x58] sm:$0xf]
      %v4115 = vld [vmem:[%s301 + $0x5c] sm:$0xf]
      %v4116 = vld [vmem:[%s301 + $0x60] sm:$0xf]
      %v4117 = vld [vmem:[%s301 + $0x64] sm:$0xf]
      %v4118 = vld [vmem:[%s301 + $0x68] sm:$0xf]
      %v4119 = vld [vmem:[%s301 + $0x6c] sm:$0xf]
      %v4120 = vld [vmem:[%s301 + $0x70] sm:$0xf]
      %v4121 = vld [vmem:[%s301 + $0x74] sm:$0xf]
      %v4122 = vld [vmem:[%s301 + $0x78] sm:$0xf]
      %v4123 = vld [vmem:[%s301 + $0x7c] sm:$0xf]
      %v4124 = vld [vmem:[%s301 + $0x80] sm:$0xf]
      %v4125 = vld [vmem:[%s301 + $0x84] sm:$0xf]
      %v4126 = vld [vmem:[%s301 + $0x88] sm:$0xf]
      %v4127 = vld [vmem:[%s301 + $0x8c] sm:$0xf]
      %v4128 = vld [vmem:[%s301 + $0x90] sm:$0xf]
      %v4129 = vld [vmem:[%s301 + $0x94] sm:$0xf]
      %s4130 = scalar_lea.vmem %s2, 112
      %v4131 = vld [vmem:[%s4130] sm:$0xf]
      %v4132 = vld [vmem:[%s4130 + $0x4] sm:$0xf]
      %v4133 = vld [vmem:[%s4130 + $0x8] sm:$0xf]
      %v4134 = vld [vmem:[%s4130 + $0xc] sm:$0xf]
      %v4167 = vunpack.c.l.b16 %v4098
      %v4168 = vunpack.c.l.b16 %v4099
      %v4169 = vunpack.c.l.b16 %v4100
      %v4170 = vunpack.c.l.b16 %v4101
      %v4171 = vunpack.c.l.b16 %v4102
      %v4172 = vunpack.c.l.b16 %v4103
      %v4173 = vunpack.c.l.b16 %v4104
      %v4174 = vunpack.c.l.b16 %v4105
      %v4175 = vunpack.c.l.b16 %v4106
      %v4176 = vunpack.c.l.b16 %v4107
      %v4177 = vunpack.c.l.b16 %v4108
      %v4178 = vunpack.c.l.b16 %v4109
      %v4179 = vunpack.c.l.b16 %v4110
      %v4180 = vunpack.c.l.b16 %v4111
      %v4181 = vunpack.c.l.b16 %v4112
      %v4182 = vunpack.c.l.b16 %v4113
      %v4183 = vunpack.c.l.b16 %v4114
      %v4184 = vunpack.c.l.b16 %v4115
      %v4185 = vunpack.c.l.b16 %v4116
      %v4186 = vunpack.c.l.b16 %v4117
      %v4187 = vunpack.c.l.b16 %v4118
      %v4188 = vunpack.c.l.b16 %v4119
      %v4189 = vunpack.c.l.b16 %v4120
      %v4190 = vunpack.c.l.b16 %v4121
      %v4191 = vunpack.c.l.b16 %v4122
      %v4192 = vunpack.c.l.b16 %v4123
      %v4193 = vunpack.c.l.b16 %v4124
      %v4194 = vunpack.c.l.b16 %v4125
      %v4195 = vunpack.c.l.b16 %v4126
      %v4196 = vunpack.c.l.b16 %v4127
      %v4197 = vunpack.c.l.b16 %v4128
      %v4198 = vunpack.c.l.b16 %v4129
      %v4199 = vpack.c.b16 %v4168, %v4167
      %v4200 = vpack.c.b16 %v4170, %v4169
      %v4201 = vpack.c.b16 %v4172, %v4171
      %v4202 = vpack.c.b16 %v4174, %v4173
      %v4203 = vpack.c.b16 %v4176, %v4175
      %v4204 = vpack.c.b16 %v4178, %v4177
      %v4205 = vpack.c.b16 %v4180, %v4179
      %v4206 = vpack.c.b16 %v4182, %v4181
      %v4207 = vpack.c.b16 %v4184, %v4183
      %v4208 = vpack.c.b16 %v4186, %v4185
      %v4209 = vpack.c.b16 %v4188, %v4187
      %v4210 = vpack.c.b16 %v4190, %v4189
      %v4211 = vpack.c.b16 %v4192, %v4191
      %v4212 = vpack.c.b16 %v4194, %v4193
      %v4213 = vpack.c.b16 %v4196, %v4195
      %v4214 = vpack.c.b16 %v4198, %v4197
      %v4219 = vunpack.c.l.b16 %v4131
      %v4220 = vunpack.c.l.b16 %v4132
      %v4221 = vunpack.c.l.b16 %v4133
      %v4222 = vunpack.c.l.b16 %v4134
      %v4223 = vpack.c.b16 %v4220, %v4219
      %v4224 = vpack.c.b16 %v4222, %v4221
      %v4228 = vsel %vm667, %v4199, 0
      %v4231 = vsel %vm667, %v4200, 0
      %v4234 = vsel %vm667, %v4201, 0
      %v4237 = vsel %vm667, %v4202, 0
      %v4240 = vsel %vm667, %v4203, 0
      %v4243 = vsel %vm667, %v4204, 0
      %v4246 = vsel %vm667, %v4205, 0
      %v4249 = vsel %vm667, %v4206, 0
      %v4252 = vsel %vm667, %v4207, 0
      %v4255 = vsel %vm667, %v4208, 0
      %v4258 = vsel %vm667, %v4209, 0
      %v4261 = vsel %vm667, %v4210, 0
      %v4264 = vsel %vm667, %v4211, 0
      %v4267 = vsel %vm667, %v4212, 0
      %v4270 = vsel %vm667, %v4213, 0
      %v4273 = vsel %vm667, %v4214, 0
      %4275 = vmatprep.subr.bf16.mxu0 0
      %4276 = vmatpush1.bf16.msra.mxu0 0
      %4277 = vmatprep.subr.bf16.mxu0 0
      %4278 = vmatpush1.bf16.msra.mxu0 0
      %4279 = vmatprep.subr.bf16.mxu0 0
      %4280 = vmatpush1.bf16.msra.mxu0 0
      %4281 = vmatprep.subr.bf16.mxu0 0
      %4282 = vmatpush1.bf16.msra.mxu0 0
      %4283 = vmatprep.subr.bf16.mxu0 0
      %4284 = vmatpush1.bf16.msra.mxu0 0
      %4285 = vmatprep.subr.bf16.mxu0 0
      %4286 = vmatpush1.bf16.msra.mxu0 0
      %4287 = vmatprep.subr.bf16.mxu0 0
      %4288 = vmatpush1.bf16.msra.mxu0 %v4224
      %4289 = vmatprep.subr.bf16.mxu0 0
      %4290 = vmatpush1.bf16.msra.mxu0 %v4223
      %4291 = vmatprep.subr.bf16.mxu0 0
      %4292 = vmatpush2.bf16.msra.mxu0 0
      %4293 = vmatprep.subr.bf16.mxu0 0
      %4294 = vmatpush2.bf16.msra.mxu0 0
      %4295 = vmatprep.subr.bf16.mxu0 0
      %4296 = vmatpush2.bf16.msra.mxu0 0
      %4297 = vmatprep.subr.bf16.mxu0 0
      %4298 = vmatpush2.bf16.msra.mxu0 0
      %4299 = vmatprep.subr.bf16.mxu0 0
      %4300 = vmatpush2.bf16.msra.mxu0 0
      %4301 = vmatprep.subr.bf16.mxu0 0
      %4302 = vmatpush2.bf16.msra.mxu0 0
      %4303 = vmatprep.subr.bf16.mxu0 0
      %4304 = vmatpush2.bf16.msra.mxu0 0
      %4305 = vmatprep.subr.bf16.mxu0 0
      %4306 = vmatpush2.bf16.msra.mxu0 0
      %4307 = vmatprep.mubr.bf16.mxu0 0
      %4308 = vmatmul.mubr.bf16.gmra.mxu0 %v4228
      %v4309 = vpop.f32.mrf.mxu0
      %v4310 = vadd.f32 0.0, %v4309
      %v4311 = vpop.f32.mrf.mxu0
      %v4312 = vpop.f32.mrf.mxu0
      %v4313 = vadd.f32 0.0, %v4312
      %v4314 = vpop.f32.mrf.mxu0
      %4315 = vmatprep.mubr.bf16.mxu0 0
      %4316 = vmatmul.mubr.bf16.gmra.mxu0 %v4231
      %v4317 = vpop.f32.mrf.mxu0
      %v4318 = vadd.f32 0.0, %v4317
      %v4319 = vpop.f32.mrf.mxu0
      %v4320 = vpop.f32.mrf.mxu0
      %v4321 = vadd.f32 0.0, %v4320
      %v4322 = vpop.f32.mrf.mxu0
      %4323 = vmatprep.mubr.bf16.mxu0 0
      %4324 = vmatmul.mubr.bf16.gmra.mxu0 %v4234
      %v4325 = vpop.f32.mrf.mxu0
      %v4326 = vadd.f32 0.0, %v4325
      %v4327 = vpop.f32.mrf.mxu0
      %v4328 = vpop.f32.mrf.mxu0
      %v4329 = vadd.f32 0.0, %v4328
      %v4330 = vpop.f32.mrf.mxu0
      %4331 = vmatprep.mubr.bf16.mxu0 0
      %4332 = vmatmul.mubr.bf16.gmra.mxu0 %v4237
      %v4333 = vpop.f32.mrf.mxu0
      %v4334 = vadd.f32 0.0, %v4333
      %v4335 = vpop.f32.mrf.mxu0
      %v4336 = vpop.f32.mrf.mxu0
      %v4337 = vadd.f32 0.0, %v4336
      %v4338 = vpop.f32.mrf.mxu0
      %4339 = vmatprep.mubr.bf16.mxu0 0
      %4340 = vmatmul.mubr.bf16.gmra.mxu0 %v4240
      %v4341 = vpop.f32.mrf.mxu0
      %v4342 = vadd.f32 0.0, %v4341
      %v4343 = vpop.f32.mrf.mxu0
      %v4344 = vpop.f32.mrf.mxu0
      %v4345 = vadd.f32 0.0, %v4344
      %v4346 = vpop.f32.mrf.mxu0
      %4347 = vmatprep.mubr.bf16.mxu0 0
      %4348 = vmatmul.mubr.bf16.gmra.mxu0 %v4243
      %v4349 = vpop.f32.mrf.mxu0
      %v4350 = vadd.f32 0.0, %v4349
      %v4351 = vpop.f32.mrf.mxu0
      %v4352 = vpop.f32.mrf.mxu0
      %v4353 = vadd.f32 0.0, %v4352
      %v4354 = vpop.f32.mrf.mxu0
      %4355 = vmatprep.mubr.bf16.mxu0 0
      %4356 = vmatmul.mubr.bf16.gmra.mxu0 %v4246
      %v4357 = vpop.f32.mrf.mxu0
      %v4358 = vadd.f32 0.0, %v4357
      %v4359 = vpop.f32.mrf.mxu0
      %v4360 = vpop.f32.mrf.mxu0
      %v4361 = vadd.f32 0.0, %v4360
      %v4362 = vpop.f32.mrf.mxu0
      %4363 = vmatprep.mubr.bf16.mxu0 0
      %4364 = vmatmul.mubr.bf16.gmra.mxu0 %v4249
      %v4365 = vpop.f32.mrf.mxu0
      %v4366 = vadd.f32 0.0, %v4365
      %v4367 = vpop.f32.mrf.mxu0
      %v4368 = vpop.f32.mrf.mxu0
      %v4369 = vadd.f32 0.0, %v4368
      %v4370 = vpop.f32.mrf.mxu0
      %4371 = vmatprep.mubr.bf16.mxu0 0
      %4372 = vmatmul.mubr.bf16.gmra.mxu0 %v4252
      %v4373 = vpop.f32.mrf.mxu0
      %v4374 = vadd.f32 0.0, %v4373
      %v4375 = vpop.f32.mrf.mxu0
      %v4376 = vpop.f32.mrf.mxu0
      %v4377 = vadd.f32 0.0, %v4376
      %v4378 = vpop.f32.mrf.mxu0
      %4379 = vmatprep.mubr.bf16.mxu0 0
      %4380 = vmatmul.mubr.bf16.gmra.mxu0 %v4255
      %v4381 = vpop.f32.mrf.mxu0
      %v4382 = vadd.f32 0.0, %v4381
      %v4383 = vpop.f32.mrf.mxu0
      %v4384 = vpop.f32.mrf.mxu0
      %v4385 = vadd.f32 0.0, %v4384
      %v4386 = vpop.f32.mrf.mxu0
      %4387 = vmatprep.mubr.bf16.mxu0 0
      %4388 = vmatmul.mubr.bf16.gmra.mxu0 %v4258
      %v4389 = vpop.f32.mrf.mxu0
      %v4390 = vadd.f32 0.0, %v4389
      %v4391 = vpop.f32.mrf.mxu0
      %v4392 = vpop.f32.mrf.mxu0
      %v4393 = vadd.f32 0.0, %v4392
      %v4394 = vpop.f32.mrf.mxu0
      %4395 = vmatprep.mubr.bf16.mxu0 0
      %4396 = vmatmul.mubr.bf16.gmra.mxu0 %v4261
      %v4397 = vpop.f32.mrf.mxu0
      %v4398 = vadd.f32 0.0, %v4397
      %v4399 = vpop.f32.mrf.mxu0
      %v4400 = vpop.f32.mrf.mxu0
      %v4401 = vadd.f32 0.0, %v4400
      %v4402 = vpop.f32.mrf.mxu0
      %4403 = vmatprep.mubr.bf16.mxu0 0
      %4404 = vmatmul.mubr.bf16.gmra.mxu0 %v4264
      %v4405 = vpop.f32.mrf.mxu0
      %v4406 = vadd.f32 0.0, %v4405
      %v4407 = vpop.f32.mrf.mxu0
      %v4408 = vpop.f32.mrf.mxu0
      %v4409 = vadd.f32 0.0, %v4408
      %v4410 = vpop.f32.mrf.mxu0
      %4411 = vmatprep.mubr.bf16.mxu0 0
      %4412 = vmatmul.mubr.bf16.gmra.mxu0 %v4267
      %v4413 = vpop.f32.mrf.mxu0
      %v4414 = vadd.f32 0.0, %v4413
      %v4415 = vpop.f32.mrf.mxu0
      %v4416 = vpop.f32.mrf.mxu0
      %v4417 = vadd.f32 0.0, %v4416
      %v4418 = vpop.f32.mrf.mxu0
      %4419 = vmatprep.mubr.bf16.mxu0 0
      %4420 = vmatmul.mubr.bf16.gmra.mxu0 %v4270
      %v4421 = vpop.f32.mrf.mxu0
      %v4422 = vadd.f32 0.0, %v4421
      %v4423 = vpop.f32.mrf.mxu0
      %v4424 = vpop.f32.mrf.mxu0
      %v4425 = vadd.f32 0.0, %v4424
      %v4426 = vpop.f32.mrf.mxu0
      %4427 = vmatprep.mubr.bf16.mxu0 0
      %4428 = vmatmul.mubr.bf16.gmra.mxu0 %v4273
      %v4429 = vpop.f32.mrf.mxu0
      %v4430 = vadd.f32 0.0, %v4429
      %v4431 = vpop.f32.mrf.mxu0
      %v4432 = vpop.f32.mrf.mxu0
      %v4433 = vadd.f32 0.0, %v4432
      %v4434 = vpop.f32.mrf.mxu0
      %4435 = vdwg.mxu0
      %v4436 = vld [vmem:[#allocation3] sm:$0xff]
      %v4437 = vld [vmem:[#allocation3 + $0x8] sm:$0xff]
      %v4438 = vld [vmem:[#allocation3 + $0x10] sm:$0xff]
      %v4439 = vld [vmem:[#allocation3 + $0x18] sm:$0xff]
      %v4440 = vld [vmem:[#allocation3 + $0x20] sm:$0xff]
      %v4441 = vld [vmem:[#allocation3 + $0x28] sm:$0xff]
      %v4442 = vld [vmem:[#allocation3 + $0x30] sm:$0xff]
      %v4443 = vld [vmem:[#allocation3 + $0x38] sm:$0xff]
      %v4444 = vld [vmem:[#allocation3 + $0x40] sm:$0xff]
      %v4445 = vld [vmem:[#allocation3 + $0x48] sm:$0xff]
      %v4446 = vld [vmem:[#allocation3 + $0x50] sm:$0xff]
      %v4447 = vld [vmem:[#allocation3 + $0x58] sm:$0xff]
      %v4448 = vld [vmem:[#allocation3 + $0x60] sm:$0xff]
      %v4449 = vld [vmem:[#allocation3 + $0x68] sm:$0xff]
      %v4450 = vld [vmem:[#allocation3 + $0x70] sm:$0xff]
      %v4451 = vld [vmem:[#allocation3 + $0x78] sm:$0xff]
      %v4452 = vld [vmem:[#allocation3 + $0x80] sm:$0xff]
      %v4453 = vld [vmem:[#allocation3 + $0x88] sm:$0xff]
      %v4454 = vld [vmem:[#allocation3 + $0x90] sm:$0xff]
      %v4455 = vld [vmem:[#allocation3 + $0x98] sm:$0xff]
      %v4456 = vld [vmem:[#allocation3 + $0xa0] sm:$0xff]
      %v4457 = vld [vmem:[#allocation3 + $0xa8] sm:$0xff]
      %v4458 = vld [vmem:[#allocation3 + $0xb0] sm:$0xff]
      %v4459 = vld [vmem:[#allocation3 + $0xb8] sm:$0xff]
      %v4460 = vld [vmem:[#allocation3 + $0xc0] sm:$0xff]
      %v4461 = vld [vmem:[#allocation3 + $0xc8] sm:$0xff]
      %v4462 = vld [vmem:[#allocation3 + $0xd0] sm:$0xff]
      %v4463 = vld [vmem:[#allocation3 + $0xd8] sm:$0xff]
      %v4464 = vld [vmem:[#allocation3 + $0xe0] sm:$0xff]
      %v4465 = vld [vmem:[#allocation3 + $0xe8] sm:$0xff]
      %v4466 = vld [vmem:[#allocation3 + $0xf0] sm:$0xff]
      %v4467 = vld [vmem:[#allocation3 + $0xf8] sm:$0xff]
      %v4468 = vadd.f32 %v4436, %v4310
      %v4469 = vadd.f32 %v4437, %v4313
      %v4470 = vadd.f32 %v4438, %v4318
      %v4471 = vadd.f32 %v4439, %v4321
      %v4472 = vadd.f32 %v4440, %v4326
      %v4473 = vadd.f32 %v4441, %v4329
      %v4474 = vadd.f32 %v4442, %v4334
      %v4475 = vadd.f32 %v4443, %v4337
      %v4476 = vadd.f32 %v4444, %v4342
      %v4477 = vadd.f32 %v4445, %v4345
      %v4478 = vadd.f32 %v4446, %v4350
      %v4479 = vadd.f32 %v4447, %v4353
      %v4480 = vadd.f32 %v4448, %v4358
      %v4481 = vadd.f32 %v4449, %v4361
      %v4482 = vadd.f32 %v4450, %v4366
      %v4483 = vadd.f32 %v4451, %v4369
      %v4484 = vadd.f32 %v4452, %v4374
      %v4485 = vadd.f32 %v4453, %v4377
      %v4486 = vadd.f32 %v4454, %v4382
      %v4487 = vadd.f32 %v4455, %v4385
      %v4488 = vadd.f32 %v4456, %v4390
      %v4489 = vadd.f32 %v4457, %v4393
      %v4490 = vadd.f32 %v4458, %v4398
      %v4491 = vadd.f32 %v4459, %v4401
      %v4492 = vadd.f32 %v4460, %v4406
      %v4493 = vadd.f32 %v4461, %v4409
      %v4494 = vadd.f32 %v4462, %v4414
      %v4495 = vadd.f32 %v4463, %v4417
      %v4496 = vadd.f32 %v4464, %v4422
      %v4497 = vadd.f32 %v4465, %v4425
      %v4498 = vadd.f32 %v4466, %v4430
      %v4499 = vadd.f32 %v4467, %v4433
      %4500 = vst [vmem:[#allocation3] sm:$0xff] %v4468
      %4501 = vst [vmem:[#allocation3 + $0x8] sm:$0xff] %v4469
      %4502 = vst [vmem:[#allocation3 + $0x10] sm:$0xff] %v4470
      %4503 = vst [vmem:[#allocation3 + $0x18] sm:$0xff] %v4471
      %4504 = vst [vmem:[#allocation3 + $0x20] sm:$0xff] %v4472
      %4505 = vst [vmem:[#allocation3 + $0x28] sm:$0xff] %v4473
      %4506 = vst [vmem:[#allocation3 + $0x30] sm:$0xff] %v4474
      %4507 = vst [vmem:[#allocation3 + $0x38] sm:$0xff] %v4475
      %4508 = vst [vmem:[#allocation3 + $0x40] sm:$0xff] %v4476
      %4509 = vst [vmem:[#allocation3 + $0x48] sm:$0xff] %v4477
      %4510 = vst [vmem:[#allocation3 + $0x50] sm:$0xff] %v4478
      %4511 = vst [vmem:[#allocation3 + $0x58] sm:$0xff] %v4479
      %4512 = vst [vmem:[#allocation3 + $0x60] sm:$0xff] %v4480
      %4513 = vst [vmem:[#allocation3 + $0x68] sm:$0xff] %v4481
      %4514 = vst [vmem:[#allocation3 + $0x70] sm:$0xff] %v4482
      %4515 = vst [vmem:[#allocation3 + $0x78] sm:$0xff] %v4483
      %4516 = vst [vmem:[#allocation3 + $0x80] sm:$0xff] %v4484
      %4517 = vst [vmem:[#allocation3 + $0x88] sm:$0xff] %v4485
      %4518 = vst [vmem:[#allocation3 + $0x90] sm:$0xff] %v4486
      %4519 = vst [vmem:[#allocation3 + $0x98] sm:$0xff] %v4487
      %4520 = vst [vmem:[#allocation3 + $0xa0] sm:$0xff] %v4488
      %4521 = vst [vmem:[#allocation3 + $0xa8] sm:$0xff] %v4489
      %4522 = vst [vmem:[#allocation3 + $0xb0] sm:$0xff] %v4490
      %4523 = vst [vmem:[#allocation3 + $0xb8] sm:$0xff] %v4491
      %4524 = vst [vmem:[#allocation3 + $0xc0] sm:$0xff] %v4492
      %4525 = vst [vmem:[#allocation3 + $0xc8] sm:$0xff] %v4493
      %4526 = vst [vmem:[#allocation3 + $0xd0] sm:$0xff] %v4494
      %4527 = vst [vmem:[#allocation3 + $0xd8] sm:$0xff] %v4495
      %4528 = vst [vmem:[#allocation3 + $0xe0] sm:$0xff] %v4496
      %4529 = vst [vmem:[#allocation3 + $0xe8] sm:$0xff] %v4497
      %4530 = vst [vmem:[#allocation3 + $0xf0] sm:$0xff] %v4498
      %4531 = vst [vmem:[#allocation3 + $0xf8] sm:$0xff] %v4499
      %v4532 = vld [vmem:[%s301 + $0x18] sm:$0xf]
      %v4533 = vld [vmem:[%s301 + $0x1c] sm:$0xf]
      %v4534 = vld [vmem:[%s301 + $0x20] sm:$0xf]
      %v4535 = vld [vmem:[%s301 + $0x24] sm:$0xf]
      %v4536 = vld [vmem:[%s301 + $0x28] sm:$0xf]
      %v4537 = vld [vmem:[%s301 + $0x2c] sm:$0xf]
      %v4538 = vld [vmem:[%s301 + $0x30] sm:$0xf]
      %v4539 = vld [vmem:[%s301 + $0x34] sm:$0xf]
      %v4540 = vld [vmem:[%s301 + $0x38] sm:$0xf]
      %v4541 = vld [vmem:[%s301 + $0x3c] sm:$0xf]
      %v4542 = vld [vmem:[%s301 + $0x40] sm:$0xf]
      %v4543 = vld [vmem:[%s301 + $0x44] sm:$0xf]
      %v4544 = vld [vmem:[%s301 + $0x48] sm:$0xf]
      %v4545 = vld [vmem:[%s301 + $0x4c] sm:$0xf]
      %v4546 = vld [vmem:[%s301 + $0x50] sm:$0xf]
      %v4547 = vld [vmem:[%s301 + $0x54] sm:$0xf]
      %v4548 = vld [vmem:[%s301 + $0x58] sm:$0xf]
      %v4549 = vld [vmem:[%s301 + $0x5c] sm:$0xf]
      %v4550 = vld [vmem:[%s301 + $0x60] sm:$0xf]
      %v4551 = vld [vmem:[%s301 + $0x64] sm:$0xf]
      %v4552 = vld [vmem:[%s301 + $0x68] sm:$0xf]
      %v4553 = vld [vmem:[%s301 + $0x6c] sm:$0xf]
      %v4554 = vld [vmem:[%s301 + $0x70] sm:$0xf]
      %v4555 = vld [vmem:[%s301 + $0x74] sm:$0xf]
      %v4556 = vld [vmem:[%s301 + $0x78] sm:$0xf]
      %v4557 = vld [vmem:[%s301 + $0x7c] sm:$0xf]
      %v4558 = vld [vmem:[%s301 + $0x80] sm:$0xf]
      %v4559 = vld [vmem:[%s301 + $0x84] sm:$0xf]
      %v4560 = vld [vmem:[%s301 + $0x88] sm:$0xf]
      %v4561 = vld [vmem:[%s301 + $0x8c] sm:$0xf]
      %v4562 = vld [vmem:[%s301 + $0x90] sm:$0xf]
      %v4563 = vld [vmem:[%s301 + $0x94] sm:$0xf]
      %v4564 = vld [vmem:[%s301 + $0x98] sm:$0x1]
      %s4565 = scalar_lea.vmem %s2, 128
      %v4566 = vld [vmem:[%s4565] sm:$0xf]
      %v4567 = vld [vmem:[%s4565 + $0x4] sm:$0xf]
      %v4568 = vld [vmem:[%s4565 + $0x8] sm:$0xf]
      %v4569 = vld [vmem:[%s4565 + $0xc] sm:$0xf]
      %v4603 = vunpack.c.l.b16 %v4532
      %v4604 = vunpack.c.l.b16 %v4533
      %v4605 = vunpack.c.l.b16 %v4534
      %v4606 = vunpack.c.l.b16 %v4535
      %v4607 = vunpack.c.l.b16 %v4536
      %v4608 = vunpack.c.l.b16 %v4537
      %v4609 = vunpack.c.l.b16 %v4538
      %v4610 = vunpack.c.l.b16 %v4539
      %v4611 = vunpack.c.l.b16 %v4540
      %v4612 = vunpack.c.l.b16 %v4541
      %v4613 = vunpack.c.l.b16 %v4542
      %v4614 = vunpack.c.l.b16 %v4543
      %v4615 = vunpack.c.l.b16 %v4544
      %v4616 = vunpack.c.l.b16 %v4545
      %v4617 = vunpack.c.l.b16 %v4546
      %v4618 = vunpack.c.l.b16 %v4547
      %v4619 = vunpack.c.l.b16 %v4548
      %v4620 = vunpack.c.l.b16 %v4549
      %v4621 = vunpack.c.l.b16 %v4550
      %v4622 = vunpack.c.l.b16 %v4551
      %v4623 = vunpack.c.l.b16 %v4552
      %v4624 = vunpack.c.l.b16 %v4553
      %v4625 = vunpack.c.l.b16 %v4554
      %v4626 = vunpack.c.l.b16 %v4555
      %v4627 = vunpack.c.l.b16 %v4556
      %v4628 = vunpack.c.l.b16 %v4557
      %v4629 = vunpack.c.l.b16 %v4558
      %v4630 = vunpack.c.l.b16 %v4559
      %v4631 = vunpack.c.l.b16 %v4560
      %v4632 = vunpack.c.l.b16 %v4561
      %v4633 = vunpack.c.l.b16 %v4562
      %v4634 = vunpack.c.l.b16 %v4563
      %v4635 = vunpack.c.l.b16 %v4564
      %v4636 = vpack.c.b16 %v4604, %v4603
      %v4637 = vpack.c.b16 %v4606, %v4605
      %v4638 = vpack.c.b16 %v4608, %v4607
      %v4639 = vpack.c.b16 %v4610, %v4609
      %v4640 = vpack.c.b16 %v4612, %v4611
      %v4641 = vpack.c.b16 %v4614, %v4613
      %v4642 = vpack.c.b16 %v4616, %v4615
      %v4643 = vpack.c.b16 %v4618, %v4617
      %v4644 = vpack.c.b16 %v4620, %v4619
      %v4645 = vpack.c.b16 %v4622, %v4621
      %v4646 = vpack.c.b16 %v4624, %v4623
      %v4647 = vpack.c.b16 %v4626, %v4625
      %v4648 = vpack.c.b16 %v4628, %v4627
      %v4649 = vpack.c.b16 %v4630, %v4629
      %v4650 = vpack.c.b16 %v4632, %v4631
      %v4651 = vpack.c.b16 %v4634, %v4633
      %v4652 = vpack.c.b16 %v4635, %v4635
      %v4654 = vshrl.u32 %v4636, 16
      %v4656 = vshll.u32 %v4636, 16
      %v4658 = vrot.slane %v4656, 1
      %v4659 = vor.u32 %v4654, %v4658
      %v4661 = vshll.u32 %v4637, 16
      %v4663 = vrot.slane %v4661, 1
      %v4664 = vsel %vm1464, %v4659, %v4663
      %v4665 = vshrl.u32 %v4637, 16
      %v4667 = vor.u32 %v4665, %v4663
      %v4669 = vshll.u32 %v4638, 16
      %v4671 = vrot.slane %v4669, 1
      %v4672 = vsel %vm1464, %v4667, %v4671
      %v4673 = vshrl.u32 %v4638, 16
      %v4675 = vor.u32 %v4673, %v4671
      %v4677 = vshll.u32 %v4639, 16
      %v4679 = vrot.slane %v4677, 1
      %v4680 = vsel %vm1464, %v4675, %v4679
      %v4681 = vshrl.u32 %v4639, 16
      %v4683 = vor.u32 %v4681, %v4679
      %v4685 = vshll.u32 %v4640, 16
      %v4687 = vrot.slane %v4685, 1
      %v4688 = vsel %vm1464, %v4683, %v4687
      %v4689 = vshrl.u32 %v4640, 16
      %v4691 = vor.u32 %v4689, %v4687
      %v4693 = vshll.u32 %v4641, 16
      %v4695 = vrot.slane %v4693, 1
      %v4696 = vsel %vm1464, %v4691, %v4695
      %v4697 = vshrl.u32 %v4641, 16
      %v4699 = vor.u32 %v4697, %v4695
      %v4701 = vshll.u32 %v4642, 16
      %v4703 = vrot.slane %v4701, 1
      %v4704 = vsel %vm1464, %v4699, %v4703
      %v4705 = vshrl.u32 %v4642, 16
      %v4707 = vor.u32 %v4705, %v4703
      %v4709 = vshll.u32 %v4643, 16
      %v4711 = vrot.slane %v4709, 1
      %v4712 = vsel %vm1464, %v4707, %v4711
      %v4713 = vshrl.u32 %v4643, 16
      %v4715 = vor.u32 %v4713, %v4711
      %v4717 = vshll.u32 %v4644, 16
      %v4719 = vrot.slane %v4717, 1
      %v4720 = vsel %vm1464, %v4715, %v4719
      %v4721 = vshrl.u32 %v4644, 16
      %v4723 = vor.u32 %v4721, %v4719
      %v4725 = vshll.u32 %v4645, 16
      %v4727 = vrot.slane %v4725, 1
      %v4728 = vsel %vm1464, %v4723, %v4727
      %v4729 = vshrl.u32 %v4645, 16
      %v4731 = vor.u32 %v4729, %v4727
      %v4733 = vshll.u32 %v4646, 16
      %v4735 = vrot.slane %v4733, 1
      %v4736 = vsel %vm1464, %v4731, %v4735
      %v4737 = vshrl.u32 %v4646, 16
      %v4739 = vor.u32 %v4737, %v4735
      %v4741 = vshll.u32 %v4647, 16
      %v4743 = vrot.slane %v4741, 1
      %v4744 = vsel %vm1464, %v4739, %v4743
      %v4745 = vshrl.u32 %v4647, 16
      %v4747 = vor.u32 %v4745, %v4743
      %v4749 = vshll.u32 %v4648, 16
      %v4751 = vrot.slane %v4749, 1
      %v4752 = vsel %vm1464, %v4747, %v4751
      %v4753 = vshrl.u32 %v4648, 16
      %v4755 = vor.u32 %v4753, %v4751
      %v4757 = vshll.u32 %v4649, 16
      %v4759 = vrot.slane %v4757, 1
      %v4760 = vsel %vm1464, %v4755, %v4759
      %v4761 = vshrl.u32 %v4649, 16
      %v4763 = vor.u32 %v4761, %v4759
      %v4765 = vshll.u32 %v4650, 16
      %v4767 = vrot.slane %v4765, 1
      %v4768 = vsel %vm1464, %v4763, %v4767
      %v4769 = vshrl.u32 %v4650, 16
      %v4771 = vor.u32 %v4769, %v4767
      %v4773 = vshll.u32 %v4651, 16
      %v4775 = vrot.slane %v4773, 1
      %v4776 = vsel %vm1464, %v4771, %v4775
      %v4777 = vshrl.u32 %v4651, 16
      %v4779 = vor.u32 %v4777, %v4775
      %v4781 = vshll.u32 %v4652, 16
      %v4783 = vrot.slane %v4781, 1
      %v4784 = vsel %vm1464, %v4779, %v4783
      %v4789 = vunpack.c.l.b16 %v4566
      %v4790 = vunpack.c.l.b16 %v4567
      %v4791 = vunpack.c.l.b16 %v4568
      %v4792 = vunpack.c.l.b16 %v4569
      %v4793 = vpack.c.b16 %v4790, %v4789
      %v4794 = vpack.c.b16 %v4792, %v4791
      %v4798 = vsel %vm667, %v4664, 0
      %v4801 = vsel %vm667, %v4672, 0
      %v4804 = vsel %vm667, %v4680, 0
      %v4807 = vsel %vm667, %v4688, 0
      %v4810 = vsel %vm667, %v4696, 0
      %v4813 = vsel %vm667, %v4704, 0
      %v4816 = vsel %vm667, %v4712, 0
      %v4819 = vsel %vm667, %v4720, 0
      %v4822 = vsel %vm667, %v4728, 0
      %v4825 = vsel %vm667, %v4736, 0
      %v4828 = vsel %vm667, %v4744, 0
      %v4831 = vsel %vm667, %v4752, 0
      %v4834 = vsel %vm667, %v4760, 0
      %v4837 = vsel %vm667, %v4768, 0
      %v4840 = vsel %vm667, %v4776, 0
      %v4843 = vsel %vm667, %v4784, 0
      %4845 = vmatprep.subr.bf16.mxu0 0
      %4846 = vmatpush1.bf16.msra.mxu0 0
      %4847 = vmatprep.subr.bf16.mxu0 0
      %4848 = vmatpush1.bf16.msra.mxu0 0
      %4849 = vmatprep.subr.bf16.mxu0 0
      %4850 = vmatpush1.bf16.msra.mxu0 0
      %4851 = vmatprep.subr.bf16.mxu0 0
      %4852 = vmatpush1.bf16.msra.mxu0 0
      %4853 = vmatprep.subr.bf16.mxu0 0
      %4854 = vmatpush1.bf16.msra.mxu0 0
      %4855 = vmatprep.subr.bf16.mxu0 0
      %4856 = vmatpush1.bf16.msra.mxu0 0
      %4857 = vmatprep.subr.bf16.mxu0 0
      %4858 = vmatpush1.bf16.msra.mxu0 %v4794
      %4859 = vmatprep.subr.bf16.mxu0 0
      %4860 = vmatpush1.bf16.msra.mxu0 %v4793
      %4861 = vmatprep.subr.bf16.mxu0 0
      %4862 = vmatpush2.bf16.msra.mxu0 0
      %4863 = vmatprep.subr.bf16.mxu0 0
      %4864 = vmatpush2.bf16.msra.mxu0 0
      %4865 = vmatprep.subr.bf16.mxu0 0
      %4866 = vmatpush2.bf16.msra.mxu0 0
      %4867 = vmatprep.subr.bf16.mxu0 0
      %4868 = vmatpush2.bf16.msra.mxu0 0
      %4869 = vmatprep.subr.bf16.mxu0 0
      %4870 = vmatpush2.bf16.msra.mxu0 0
      %4871 = vmatprep.subr.bf16.mxu0 0
      %4872 = vmatpush2.bf16.msra.mxu0 0
      %4873 = vmatprep.subr.bf16.mxu0 0
      %4874 = vmatpush2.bf16.msra.mxu0 0
      %4875 = vmatprep.subr.bf16.mxu0 0
      %4876 = vmatpush2.bf16.msra.mxu0 0
      %4877 = vmatprep.mubr.bf16.mxu0 0
      %4878 = vmatmul.mubr.bf16.gmra.mxu0 %v4798
      %v4879 = vpop.f32.mrf.mxu0
      %v4880 = vadd.f32 0.0, %v4879
      %v4881 = vpop.f32.mrf.mxu0
      %v4882 = vpop.f32.mrf.mxu0
      %v4883 = vadd.f32 0.0, %v4882
      %v4884 = vpop.f32.mrf.mxu0
      %4885 = vmatprep.mubr.bf16.mxu0 0
      %4886 = vmatmul.mubr.bf16.gmra.mxu0 %v4801
      %v4887 = vpop.f32.mrf.mxu0
      %v4888 = vadd.f32 0.0, %v4887
      %v4889 = vpop.f32.mrf.mxu0
      %v4890 = vpop.f32.mrf.mxu0
      %v4891 = vadd.f32 0.0, %v4890
      %v4892 = vpop.f32.mrf.mxu0
      %4893 = vmatprep.mubr.bf16.mxu0 0
      %4894 = vmatmul.mubr.bf16.gmra.mxu0 %v4804
      %v4895 = vpop.f32.mrf.mxu0
      %v4896 = vadd.f32 0.0, %v4895
      %v4897 = vpop.f32.mrf.mxu0
      %v4898 = vpop.f32.mrf.mxu0
      %v4899 = vadd.f32 0.0, %v4898
      %v4900 = vpop.f32.mrf.mxu0
      %4901 = vmatprep.mubr.bf16.mxu0 0
      %4902 = vmatmul.mubr.bf16.gmra.mxu0 %v4807
      %v4903 = vpop.f32.mrf.mxu0
      %v4904 = vadd.f32 0.0, %v4903
      %v4905 = vpop.f32.mrf.mxu0
      %v4906 = vpop.f32.mrf.mxu0
      %v4907 = vadd.f32 0.0, %v4906
      %v4908 = vpop.f32.mrf.mxu0
      %4909 = vmatprep.mubr.bf16.mxu0 0
      %4910 = vmatmul.mubr.bf16.gmra.mxu0 %v4810
      %v4911 = vpop.f32.mrf.mxu0
      %v4912 = vadd.f32 0.0, %v4911
      %v4913 = vpop.f32.mrf.mxu0
      %v4914 = vpop.f32.mrf.mxu0
      %v4915 = vadd.f32 0.0, %v4914
      %v4916 = vpop.f32.mrf.mxu0
      %4917 = vmatprep.mubr.bf16.mxu0 0
      %4918 = vmatmul.mubr.bf16.gmra.mxu0 %v4813
      %v4919 = vpop.f32.mrf.mxu0
      %v4920 = vadd.f32 0.0, %v4919
      %v4921 = vpop.f32.mrf.mxu0
      %v4922 = vpop.f32.mrf.mxu0
      %v4923 = vadd.f32 0.0, %v4922
      %v4924 = vpop.f32.mrf.mxu0
      %4925 = vmatprep.mubr.bf16.mxu0 0
      %4926 = vmatmul.mubr.bf16.gmra.mxu0 %v4816
      %v4927 = vpop.f32.mrf.mxu0
      %v4928 = vadd.f32 0.0, %v4927
      %v4929 = vpop.f32.mrf.mxu0
      %v4930 = vpop.f32.mrf.mxu0
      %v4931 = vadd.f32 0.0, %v4930
      %v4932 = vpop.f32.mrf.mxu0
      %4933 = vmatprep.mubr.bf16.mxu0 0
      %4934 = vmatmul.mubr.bf16.gmra.mxu0 %v4819
      %v4935 = vpop.f32.mrf.mxu0
      %v4936 = vadd.f32 0.0, %v4935
      %v4937 = vpop.f32.mrf.mxu0
      %v4938 = vpop.f32.mrf.mxu0
      %v4939 = vadd.f32 0.0, %v4938
      %v4940 = vpop.f32.mrf.mxu0
      %4941 = vmatprep.mubr.bf16.mxu0 0
      %4942 = vmatmul.mubr.bf16.gmra.mxu0 %v4822
      %v4943 = vpop.f32.mrf.mxu0
      %v4944 = vadd.f32 0.0, %v4943
      %v4945 = vpop.f32.mrf.mxu0
      %v4946 = vpop.f32.mrf.mxu0
      %v4947 = vadd.f32 0.0, %v4946
      %v4948 = vpop.f32.mrf.mxu0
      %4949 = vmatprep.mubr.bf16.mxu0 0
      %4950 = vmatmul.mubr.bf16.gmra.mxu0 %v4825
      %v4951 = vpop.f32.mrf.mxu0
      %v4952 = vadd.f32 0.0, %v4951
      %v4953 = vpop.f32.mrf.mxu0
      %v4954 = vpop.f32.mrf.mxu0
      %v4955 = vadd.f32 0.0, %v4954
      %v4956 = vpop.f32.mrf.mxu0
      %4957 = vmatprep.mubr.bf16.mxu0 0
      %4958 = vmatmul.mubr.bf16.gmra.mxu0 %v4828
      %v4959 = vpop.f32.mrf.mxu0
      %v4960 = vadd.f32 0.0, %v4959
      %v4961 = vpop.f32.mrf.mxu0
      %v4962 = vpop.f32.mrf.mxu0
      %v4963 = vadd.f32 0.0, %v4962
      %v4964 = vpop.f32.mrf.mxu0
      %4965 = vmatprep.mubr.bf16.mxu0 0
      %4966 = vmatmul.mubr.bf16.gmra.mxu0 %v4831
      %v4967 = vpop.f32.mrf.mxu0
      %v4968 = vadd.f32 0.0, %v4967
      %v4969 = vpop.f32.mrf.mxu0
      %v4970 = vpop.f32.mrf.mxu0
      %v4971 = vadd.f32 0.0, %v4970
      %v4972 = vpop.f32.mrf.mxu0
      %4973 = vmatprep.mubr.bf16.mxu0 0
      %4974 = vmatmul.mubr.bf16.gmra.mxu0 %v4834
      %v4975 = vpop.f32.mrf.mxu0
      %v4976 = vadd.f32 0.0, %v4975
      %v4977 = vpop.f32.mrf.mxu0
      %v4978 = vpop.f32.mrf.mxu0
      %v4979 = vadd.f32 0.0, %v4978
      %v4980 = vpop.f32.mrf.mxu0
      %4981 = vmatprep.mubr.bf16.mxu0 0
      %4982 = vmatmul.mubr.bf16.gmra.mxu0 %v4837
      %v4983 = vpop.f32.mrf.mxu0
      %v4984 = vadd.f32 0.0, %v4983
      %v4985 = vpop.f32.mrf.mxu0
      %v4986 = vpop.f32.mrf.mxu0
      %v4987 = vadd.f32 0.0, %v4986
      %v4988 = vpop.f32.mrf.mxu0
      %4989 = vmatprep.mubr.bf16.mxu0 0
      %4990 = vmatmul.mubr.bf16.gmra.mxu0 %v4840
      %v4991 = vpop.f32.mrf.mxu0
      %v4992 = vadd.f32 0.0, %v4991
      %v4993 = vpop.f32.mrf.mxu0
      %v4994 = vpop.f32.mrf.mxu0
      %v4995 = vadd.f32 0.0, %v4994
      %v4996 = vpop.f32.mrf.mxu0
      %4997 = vmatprep.mubr.bf16.mxu0 0
      %4998 = vmatmul.mubr.bf16.gmra.mxu0 %v4843
      %v4999 = vpop.f32.mrf.mxu0
      %v5000 = vadd.f32 0.0, %v4999
      %v5001 = vpop.f32.mrf.mxu0
      %v5002 = vpop.f32.mrf.mxu0
      %v5003 = vadd.f32 0.0, %v5002
      %v5004 = vpop.f32.mrf.mxu0
      %5005 = vdwg.mxu0
      %v5006 = vld [vmem:[#allocation3] sm:$0xff]
      %v5007 = vld [vmem:[#allocation3 + $0x8] sm:$0xff]
      %v5008 = vld [vmem:[#allocation3 + $0x10] sm:$0xff]
      %v5009 = vld [vmem:[#allocation3 + $0x18] sm:$0xff]
      %v5010 = vld [vmem:[#allocation3 + $0x20] sm:$0xff]
      %v5011 = vld [vmem:[#allocation3 + $0x28] sm:$0xff]
      %v5012 = vld [vmem:[#allocation3 + $0x30] sm:$0xff]
      %v5013 = vld [vmem:[#allocation3 + $0x38] sm:$0xff]
      %v5014 = vld [vmem:[#allocation3 + $0x40] sm:$0xff]
      %v5015 = vld [vmem:[#allocation3 + $0x48] sm:$0xff]
      %v5016 = vld [vmem:[#allocation3 + $0x50] sm:$0xff]
      %v5017 = vld [vmem:[#allocation3 + $0x58] sm:$0xff]
      %v5018 = vld [vmem:[#allocation3 + $0x60] sm:$0xff]
      %v5019 = vld [vmem:[#allocation3 + $0x68] sm:$0xff]
      %v5020 = vld [vmem:[#allocation3 + $0x70] sm:$0xff]
      %v5021 = vld [vmem:[#allocation3 + $0x78] sm:$0xff]
      %v5022 = vld [vmem:[#allocation3 + $0x80] sm:$0xff]
      %v5023 = vld [vmem:[#allocation3 + $0x88] sm:$0xff]
      %v5024 = vld [vmem:[#allocation3 + $0x90] sm:$0xff]
      %v5025 = vld [vmem:[#allocation3 + $0x98] sm:$0xff]
      %v5026 = vld [vmem:[#allocation3 + $0xa0] sm:$0xff]
      %v5027 = vld [vmem:[#allocation3 + $0xa8] sm:$0xff]
      %v5028 = vld [vmem:[#allocation3 + $0xb0] sm:$0xff]
      %v5029 = vld [vmem:[#allocation3 + $0xb8] sm:$0xff]
      %v5030 = vld [vmem:[#allocation3 + $0xc0] sm:$0xff]
      %v5031 = vld [vmem:[#allocation3 + $0xc8] sm:$0xff]
      %v5032 = vld [vmem:[#allocation3 + $0xd0] sm:$0xff]
      %v5033 = vld [vmem:[#allocation3 + $0xd8] sm:$0xff]
      %v5034 = vld [vmem:[#allocation3 + $0xe0] sm:$0xff]
      %v5035 = vld [vmem:[#allocation3 + $0xe8] sm:$0xff]
      %v5036 = vld [vmem:[#allocation3 + $0xf0] sm:$0xff]
      %v5037 = vld [vmem:[#allocation3 + $0xf8] sm:$0xff]
      %v5038 = vadd.f32 %v5006, %v4880
      %v5039 = vadd.f32 %v5007, %v4883
      %v5040 = vadd.f32 %v5008, %v4888
      %v5041 = vadd.f32 %v5009, %v4891
      %v5042 = vadd.f32 %v5010, %v4896
      %v5043 = vadd.f32 %v5011, %v4899
      %v5044 = vadd.f32 %v5012, %v4904
      %v5045 = vadd.f32 %v5013, %v4907
      %v5046 = vadd.f32 %v5014, %v4912
      %v5047 = vadd.f32 %v5015, %v4915
      %v5048 = vadd.f32 %v5016, %v4920
      %v5049 = vadd.f32 %v5017, %v4923
      %v5050 = vadd.f32 %v5018, %v4928
      %v5051 = vadd.f32 %v5019, %v4931
      %v5052 = vadd.f32 %v5020, %v4936
      %v5053 = vadd.f32 %v5021, %v4939
      %v5054 = vadd.f32 %v5022, %v4944
      %v5055 = vadd.f32 %v5023, %v4947
      %v5056 = vadd.f32 %v5024, %v4952
      %v5057 = vadd.f32 %v5025, %v4955
      %v5058 = vadd.f32 %v5026, %v4960
      %v5059 = vadd.f32 %v5027, %v4963
      %v5060 = vadd.f32 %v5028, %v4968
      %v5061 = vadd.f32 %v5029, %v4971
      %v5062 = vadd.f32 %v5030, %v4976
      %v5063 = vadd.f32 %v5031, %v4979
      %v5064 = vadd.f32 %v5032, %v4984
      %v5065 = vadd.f32 %v5033, %v4987
      %v5066 = vadd.f32 %v5034, %v4992
      %v5067 = vadd.f32 %v5035, %v4995
      %v5068 = vadd.f32 %v5036, %v5000
      %v5069 = vadd.f32 %v5037, %v5003
      %5070 = vst [vmem:[#allocation3] sm:$0xff] %v5038
      %5071 = vst [vmem:[#allocation3 + $0x8] sm:$0xff] %v5039
      %5072 = vst [vmem:[#allocation3 + $0x10] sm:$0xff] %v5040
      %5073 = vst [vmem:[#allocation3 + $0x18] sm:$0xff] %v5041
      %5074 = vst [vmem:[#allocation3 + $0x20] sm:$0xff] %v5042
      %5075 = vst [vmem:[#allocation3 + $0x28] sm:$0xff] %v5043
      %5076 = vst [vmem:[#allocation3 + $0x30] sm:$0xff] %v5044
      %5077 = vst [vmem:[#allocation3 + $0x38] sm:$0xff] %v5045
      %5078 = vst [vmem:[#allocation3 + $0x40] sm:$0xff] %v5046
      %5079 = vst [vmem:[#allocation3 + $0x48] sm:$0xff] %v5047
      %5080 = vst [vmem:[#allocation3 + $0x50] sm:$0xff] %v5048
      %5081 = vst [vmem:[#allocation3 + $0x58] sm:$0xff] %v5049
      %5082 = vst [vmem:[#allocation3 + $0x60] sm:$0xff] %v5050
      %5083 = vst [vmem:[#allocation3 + $0x68] sm:$0xff] %v5051
      %5084 = vst [vmem:[#allocation3 + $0x70] sm:$0xff] %v5052
      %5085 = vst [vmem:[#allocation3 + $0x78] sm:$0xff] %v5053
      %5086 = vst [vmem:[#allocation3 + $0x80] sm:$0xff] %v5054
      %5087 = vst [vmem:[#allocation3 + $0x88] sm:$0xff] %v5055
      %5088 = vst [vmem:[#allocation3 + $0x90] sm:$0xff] %v5056
      %5089 = vst [vmem:[#allocation3 + $0x98] sm:$0xff] %v5057
      %5090 = vst [vmem:[#allocation3 + $0xa0] sm:$0xff] %v5058
      %5091 = vst [vmem:[#allocation3 + $0xa8] sm:$0xff] %v5059
      %5092 = vst [vmem:[#allocation3 + $0xb0] sm:$0xff] %v5060
      %5093 = vst [vmem:[#allocation3 + $0xb8] sm:$0xff] %v5061
      %5094 = vst [vmem:[#allocation3 + $0xc0] sm:$0xff] %v5062
      %5095 = vst [vmem:[#allocation3 + $0xc8] sm:$0xff] %v5063
      %5096 = vst [vmem:[#allocation3 + $0xd0] sm:$0xff] %v5064
      %5097 = vst [vmem:[#allocation3 + $0xd8] sm:$0xff] %v5065
      %5098 = vst [vmem:[#allocation3 + $0xe0] sm:$0xff] %v5066
      %5099 = vst [vmem:[#allocation3 + $0xe8] sm:$0xff] %v5067
      %5100 = vst [vmem:[#allocation3 + $0xf0] sm:$0xff] %v5068
      %5101 = vst [vmem:[#allocation3 + $0xf8] sm:$0xff] %v5069
      %v5102 = vld [vmem:[#allocation3] sm:$0xff]
      %v5103 = vld [vmem:[#allocation3 + $0x8] sm:$0xff]
      %v5104 = vld [vmem:[#allocation3 + $0x10] sm:$0xff]
      %v5105 = vld [vmem:[#allocation3 + $0x18] sm:$0xff]
      %v5106 = vld [vmem:[#allocation3 + $0x20] sm:$0xff]
      %v5107 = vld [vmem:[#allocation3 + $0x28] sm:$0xff]
      %v5108 = vld [vmem:[#allocation3 + $0x30] sm:$0xff]
      %v5109 = vld [vmem:[#allocation3 + $0x38] sm:$0xff]
      %v5110 = vld [vmem:[#allocation3 + $0x40] sm:$0xff]
      %v5111 = vld [vmem:[#allocation3 + $0x48] sm:$0xff]
      %v5112 = vld [vmem:[#allocation3 + $0x50] sm:$0xff]
      %v5113 = vld [vmem:[#allocation3 + $0x58] sm:$0xff]
      %v5114 = vld [vmem:[#allocation3 + $0x60] sm:$0xff]
      %v5115 = vld [vmem:[#allocation3 + $0x68] sm:$0xff]
      %v5116 = vld [vmem:[#allocation3 + $0x70] sm:$0xff]
      %v5117 = vld [vmem:[#allocation3 + $0x78] sm:$0xff]
      %v5118 = vld [vmem:[#allocation3 + $0x80] sm:$0xff]
      %v5119 = vld [vmem:[#allocation3 + $0x88] sm:$0xff]
      %v5120 = vld [vmem:[#allocation3 + $0x90] sm:$0xff]
      %v5121 = vld [vmem:[#allocation3 + $0x98] sm:$0xff]
      %v5122 = vld [vmem:[#allocation3 + $0xa0] sm:$0xff]
      %v5123 = vld [vmem:[#allocation3 + $0xa8] sm:$0xff]
      %v5124 = vld [vmem:[#allocation3 + $0xb0] sm:$0xff]
      %v5125 = vld [vmem:[#allocation3 + $0xb8] sm:$0xff]
      %v5126 = vld [vmem:[#allocation3 + $0xc0] sm:$0xff]
      %v5127 = vld [vmem:[#allocation3 + $0xc8] sm:$0xff]
      %v5128 = vld [vmem:[#allocation3 + $0xd0] sm:$0xff]
      %v5129 = vld [vmem:[#allocation3 + $0xd8] sm:$0xff]
      %v5130 = vld [vmem:[#allocation3 + $0xe0] sm:$0xff]
      %v5131 = vld [vmem:[#allocation3 + $0xe8] sm:$0xff]
      %v5132 = vld [vmem:[#allocation3 + $0xf0] sm:$0xff]
      %v5133 = vld [vmem:[#allocation3 + $0xf8] sm:$0xff]
      %v5134 = vld [vmem:[%s3] sm:$0x1]
      %v5136 = vlaneseq
      %v5137 = vshrl.u32 %v5136, 7
      %v5138 = vsub.s32 0, %v5137
      %v5139 = vrot.slane %v5134, %v5138
      %v5141 = vadd.f32 %v5102, %v5139
      %v5142 = vadd.f32 %v5103, %v5139
      %v5143 = vadd.f32 %v5104, %v5139
      %v5144 = vadd.f32 %v5105, %v5139
      %v5145 = vadd.f32 %v5106, %v5139
      %v5146 = vadd.f32 %v5107, %v5139
      %v5147 = vadd.f32 %v5108, %v5139
      %v5148 = vadd.f32 %v5109, %v5139
      %v5149 = vadd.f32 %v5110, %v5139
      %v5150 = vadd.f32 %v5111, %v5139
      %v5151 = vadd.f32 %v5112, %v5139
      %v5152 = vadd.f32 %v5113, %v5139
      %v5153 = vadd.f32 %v5114, %v5139
      %v5154 = vadd.f32 %v5115, %v5139
      %v5155 = vadd.f32 %v5116, %v5139
      %v5156 = vadd.f32 %v5117, %v5139
      %v5157 = vadd.f32 %v5118, %v5139
      %v5158 = vadd.f32 %v5119, %v5139
      %v5159 = vadd.f32 %v5120, %v5139
      %v5160 = vadd.f32 %v5121, %v5139
      %v5161 = vadd.f32 %v5122, %v5139
      %v5162 = vadd.f32 %v5123, %v5139
      %v5163 = vadd.f32 %v5124, %v5139
      %v5164 = vadd.f32 %v5125, %v5139
      %v5165 = vadd.f32 %v5126, %v5139
      %v5166 = vadd.f32 %v5127, %v5139
      %v5167 = vadd.f32 %v5128, %v5139
      %v5168 = vadd.f32 %v5129, %v5139
      %v5169 = vadd.f32 %v5130, %v5139
      %v5170 = vadd.f32 %v5131, %v5139
      %v5171 = vadd.f32 %v5132, %v5139
      %v5172 = vadd.f32 %v5133, %v5139
      %v5173 = vmax.f32 %v5141, 0.0
      %v5174 = vmax.f32 %v5142, 0.0
      %v5175 = vmax.f32 %v5143, 0.0
      %v5176 = vmax.f32 %v5144, 0.0
      %v5177 = vmax.f32 %v5145, 0.0
      %v5178 = vmax.f32 %v5146, 0.0
      %v5179 = vmax.f32 %v5147, 0.0
      %v5180 = vmax.f32 %v5148, 0.0
      %v5181 = vmax.f32 %v5149, 0.0
      %v5182 = vmax.f32 %v5150, 0.0
      %v5183 = vmax.f32 %v5151, 0.0
      %v5184 = vmax.f32 %v5152, 0.0
      %v5185 = vmax.f32 %v5153, 0.0
      %v5186 = vmax.f32 %v5154, 0.0
      %v5187 = vmax.f32 %v5155, 0.0
      %v5188 = vmax.f32 %v5156, 0.0
      %v5189 = vmax.f32 %v5157, 0.0
      %v5190 = vmax.f32 %v5158, 0.0
      %v5191 = vmax.f32 %v5159, 0.0
      %v5192 = vmax.f32 %v5160, 0.0
      %v5193 = vmax.f32 %v5161, 0.0
      %v5194 = vmax.f32 %v5162, 0.0
      %v5195 = vmax.f32 %v5163, 0.0
      %v5196 = vmax.f32 %v5164, 0.0
      %v5197 = vmax.f32 %v5165, 0.0
      %v5198 = vmax.f32 %v5166, 0.0
      %v5199 = vmax.f32 %v5167, 0.0
      %v5200 = vmax.f32 %v5168, 0.0
      %v5201 = vmax.f32 %v5169, 0.0
      %v5202 = vmax.f32 %v5170, 0.0
      %v5203 = vmax.f32 %v5171, 0.0
      %v5204 = vmax.f32 %v5172, 0.0
      %v5205 = vsel %vm342, 1, 0
      %v5206 = vsel %vm343, 1, 0
      %v5207 = vsel %vm344, 1, 0
      %v5208 = vsel %vm345, 1, 0
      %v5209 = vsel %vm346, 1, 0
      %v5210 = vsel %vm347, 1, 0
      %v5211 = vsel %vm348, 1, 0
      %v5212 = vsel %vm349, 1, 0
      %v5213 = vsel %vm350, 1, 0
      %v5214 = vsel %vm351, 1, 0
      %v5215 = vsel %vm352, 1, 0
      %v5216 = vsel %vm353, 1, 0
      %v5217 = vsel %vm354, 1, 0
      %v5218 = vsel %vm355, 1, 0
      %v5219 = vsel %vm356, 1, 0
      %v5220 = vsel %vm357, 1, 0
      %v5221 = vsel %vm358, 1, 0
      %v5222 = vsel %vm359, 1, 0
      %v5223 = vsel %vm360, 1, 0
      %v5224 = vsel %vm361, 1, 0
      %v5225 = vsel %vm362, 1, 0
      %v5226 = vsel %vm363, 1, 0
      %v5227 = vsel %vm364, 1, 0
      %v5228 = vsel %vm365, 1, 0
      %v5229 = vsel %vm366, 1, 0
      %v5230 = vsel %vm367, 1, 0
      %v5231 = vsel %vm368, 1, 0
      %v5232 = vsel %vm369, 1, 0
      %v5233 = vsel %vm370, 1, 0
      %v5234 = vsel %vm371, 1, 0
      %v5235 = vsel %vm372, 1, 0
      %v5236 = vsel %vm373, 1, 0
      %5237 = vset.pattern.permute.xlu0 0
      %5238 = vperm.xlu0 %5237, %v5205
      %v5239 = vpop.permute.xlu0 %5238
      %5240 = vset.pattern.permute.xlu0 0
      %5241 = vperm.xlu0 %5240, %v5206
      %v5242 = vpop.permute.xlu0 %5241
      %5243 = vset.pattern.permute.xlu0 0
      %5244 = vperm.xlu0 %5243, %v5207
      %v5245 = vpop.permute.xlu0 %5244
      %5246 = vset.pattern.permute.xlu0 0
      %5247 = vperm.xlu0 %5246, %v5208
      %v5248 = vpop.permute.xlu0 %5247
      %5249 = vset.pattern.permute.xlu0 0
      %5250 = vperm.xlu0 %5249, %v5209
      %v5251 = vpop.permute.xlu0 %5250
      %5252 = vset.pattern.permute.xlu0 0
      %5253 = vperm.xlu0 %5252, %v5210
      %v5254 = vpop.permute.xlu0 %5253
      %5255 = vset.pattern.permute.xlu0 0
      %5256 = vperm.xlu0 %5255, %v5211
      %v5257 = vpop.permute.xlu0 %5256
      %5258 = vset.pattern.permute.xlu0 0
      %5259 = vperm.xlu0 %5258, %v5212
      %v5260 = vpop.permute.xlu0 %5259
      %5261 = vset.pattern.permute.xlu0 0
      %5262 = vperm.xlu0 %5261, %v5213
      %v5263 = vpop.permute.xlu0 %5262
      %5264 = vset.pattern.permute.xlu0 0
      %5265 = vperm.xlu0 %5264, %v5214
      %v5266 = vpop.permute.xlu0 %5265
      %5267 = vset.pattern.permute.xlu0 0
      %5268 = vperm.xlu0 %5267, %v5215
      %v5269 = vpop.permute.xlu0 %5268
      %5270 = vset.pattern.permute.xlu0 0
      %5271 = vperm.xlu0 %5270, %v5216
      %v5272 = vpop.permute.xlu0 %5271
      %5273 = vset.pattern.permute.xlu0 0
      %5274 = vperm.xlu0 %5273, %v5217
      %v5275 = vpop.permute.xlu0 %5274
      %5276 = vset.pattern.permute.xlu0 0
      %5277 = vperm.xlu0 %5276, %v5218
      %v5278 = vpop.permute.xlu0 %5277
      %5279 = vset.pattern.permute.xlu0 0
      %5280 = vperm.xlu0 %5279, %v5219
      %v5281 = vpop.permute.xlu0 %5280
      %5282 = vset.pattern.permute.xlu0 0
      %5283 = vperm.xlu0 %5282, %v5220
      %v5284 = vpop.permute.xlu0 %5283
      %5285 = vset.pattern.permute.xlu0 0
      %5286 = vperm.xlu0 %5285, %v5221
      %v5287 = vpop.permute.xlu0 %5286
      %5288 = vset.pattern.permute.xlu0 0
      %5289 = vperm.xlu0 %5288, %v5222
      %v5290 = vpop.permute.xlu0 %5289
      %5291 = vset.pattern.permute.xlu0 0
      %5292 = vperm.xlu0 %5291, %v5223
      %v5293 = vpop.permute.xlu0 %5292
      %5294 = vset.pattern.permute.xlu0 0
      %5295 = vperm.xlu0 %5294, %v5224
      %v5296 = vpop.permute.xlu0 %5295
      %5297 = vset.pattern.permute.xlu0 0
      %5298 = vperm.xlu0 %5297, %v5225
      %v5299 = vpop.permute.xlu0 %5298
      %5300 = vset.pattern.permute.xlu0 0
      %5301 = vperm.xlu0 %5300, %v5226
      %v5302 = vpop.permute.xlu0 %5301
      %5303 = vset.pattern.permute.xlu0 0
      %5304 = vperm.xlu0 %5303, %v5227
      %v5305 = vpop.permute.xlu0 %5304
      %5306 = vset.pattern.permute.xlu0 0
      %5307 = vperm.xlu0 %5306, %v5228
      %v5308 = vpop.permute.xlu0 %5307
      %5309 = vset.pattern.permute.xlu0 0
      %5310 = vperm.xlu0 %5309, %v5229
      %v5311 = vpop.permute.xlu0 %5310
      %5312 = vset.pattern.permute.xlu0 0
      %5313 = vperm.xlu0 %5312, %v5230
      %v5314 = vpop.permute.xlu0 %5313
      %5315 = vset.pattern.permute.xlu0 0
      %5316 = vperm.xlu0 %5315, %v5231
      %v5317 = vpop.permute.xlu0 %5316
      %5318 = vset.pattern.permute.xlu0 0
      %5319 = vperm.xlu0 %5318, %v5232
      %v5320 = vpop.permute.xlu0 %5319
      %5321 = vset.pattern.permute.xlu0 0
      %5322 = vperm.xlu0 %5321, %v5233
      %v5323 = vpop.permute.xlu0 %5322
      %5324 = vset.pattern.permute.xlu0 0
      %5325 = vperm.xlu0 %5324, %v5234
      %v5326 = vpop.permute.xlu0 %5325
      %5327 = vset.pattern.permute.xlu0 0
      %5328 = vperm.xlu0 %5327, %v5235
      %v5329 = vpop.permute.xlu0 %5328
      %5330 = vset.pattern.permute.xlu0 0
      %5331 = vperm.xlu0 %5330, %v5236
      %v5332 = vpop.permute.xlu0 %5331
      %vm5333 = vcmp.eq.s32.totalorder %v5239, 1
      %vm5334 = vcmp.eq.s32.totalorder %v5242, 1
      %vm5335 = vcmp.eq.s32.totalorder %v5245, 1
      %vm5336 = vcmp.eq.s32.totalorder %v5248, 1
      %vm5337 = vcmp.eq.s32.totalorder %v5251, 1
      %vm5338 = vcmp.eq.s32.totalorder %v5254, 1
      %vm5339 = vcmp.eq.s32.totalorder %v5257, 1
      %vm5340 = vcmp.eq.s32.totalorder %v5260, 1
      %vm5341 = vcmp.eq.s32.totalorder %v5263, 1
      %vm5342 = vcmp.eq.s32.totalorder %v5266, 1
      %vm5343 = vcmp.eq.s32.totalorder %v5269, 1
      %vm5344 = vcmp.eq.s32.totalorder %v5272, 1
      %vm5345 = vcmp.eq.s32.totalorder %v5275, 1
      %vm5346 = vcmp.eq.s32.totalorder %v5278, 1
      %vm5347 = vcmp.eq.s32.totalorder %v5281, 1
      %vm5348 = vcmp.eq.s32.totalorder %v5284, 1
      %vm5349 = vcmp.eq.s32.totalorder %v5287, 1
      %vm5350 = vcmp.eq.s32.totalorder %v5290, 1
      %vm5351 = vcmp.eq.s32.totalorder %v5293, 1
      %vm5352 = vcmp.eq.s32.totalorder %v5296, 1
      %vm5353 = vcmp.eq.s32.totalorder %v5299, 1
      %vm5354 = vcmp.eq.s32.totalorder %v5302, 1
      %vm5355 = vcmp.eq.s32.totalorder %v5305, 1
      %vm5356 = vcmp.eq.s32.totalorder %v5308, 1
      %vm5357 = vcmp.eq.s32.totalorder %v5311, 1
      %vm5358 = vcmp.eq.s32.totalorder %v5314, 1
      %vm5359 = vcmp.eq.s32.totalorder %v5317, 1
      %vm5360 = vcmp.eq.s32.totalorder %v5320, 1
      %vm5361 = vcmp.eq.s32.totalorder %v5323, 1
      %vm5362 = vcmp.eq.s32.totalorder %v5326, 1
      %vm5363 = vcmp.eq.s32.totalorder %v5329, 1
      %vm5364 = vcmp.eq.s32.totalorder %v5332, 1
      %v5365 = vsel %vm5333, %v5173, 0.0
      %v5366 = vsel %vm5334, %v5174, 0.0
      %v5367 = vsel %vm5335, %v5175, 0.0
      %v5368 = vsel %vm5336, %v5176, 0.0
      %v5369 = vsel %vm5337, %v5177, 0.0
      %v5370 = vsel %vm5338, %v5178, 0.0
      %v5371 = vsel %vm5339, %v5179, 0.0
      %v5372 = vsel %vm5340, %v5180, 0.0
      %v5373 = vsel %vm5341, %v5181, 0.0
      %v5374 = vsel %vm5342, %v5182, 0.0
      %v5375 = vsel %vm5343, %v5183, 0.0
      %v5376 = vsel %vm5344, %v5184, 0.0
      %v5377 = vsel %vm5345, %v5185, 0.0
      %v5378 = vsel %vm5346, %v5186, 0.0
      %v5379 = vsel %vm5347, %v5187, 0.0
      %v5380 = vsel %vm5348, %v5188, 0.0
      %v5381 = vsel %vm5349, %v5189, 0.0
      %v5382 = vsel %vm5350, %v5190, 0.0
      %v5383 = vsel %vm5351, %v5191, 0.0
      %v5384 = vsel %vm5352, %v5192, 0.0
      %v5385 = vsel %vm5353, %v5193, 0.0
      %v5386 = vsel %vm5354, %v5194, 0.0
      %v5387 = vsel %vm5355, %v5195, 0.0
      %v5388 = vsel %vm5356, %v5196, 0.0
      %v5389 = vsel %vm5357, %v5197, 0.0
      %v5390 = vsel %vm5358, %v5198, 0.0
      %v5391 = vsel %vm5359, %v5199, 0.0
      %v5392 = vsel %vm5360, %v5200, 0.0
      %v5393 = vsel %vm5361, %v5201, 0.0
      %v5394 = vsel %vm5362, %v5202, 0.0
      %v5395 = vsel %vm5363, %v5203, 0.0
      %v5396 = vsel %vm5364, %v5204, 0.0
      %v5397 = vpack.c.bf16 %v5366, %v5365
      %v5398 = vpack.c.bf16 %v5368, %v5367
      %v5399 = vpack.c.bf16 %v5370, %v5369
      %v5400 = vpack.c.bf16 %v5372, %v5371
      %v5401 = vpack.c.bf16 %v5374, %v5373
      %v5402 = vpack.c.bf16 %v5376, %v5375
      %v5403 = vpack.c.bf16 %v5378, %v5377
      %v5404 = vpack.c.bf16 %v5380, %v5379
      %v5405 = vpack.c.bf16 %v5382, %v5381
      %v5406 = vpack.c.bf16 %v5384, %v5383
      %v5407 = vpack.c.bf16 %v5386, %v5385
      %v5408 = vpack.c.bf16 %v5388, %v5387
      %v5409 = vpack.c.bf16 %v5390, %v5389
      %v5410 = vpack.c.bf16 %v5392, %v5391
      %v5411 = vpack.c.bf16 %v5394, %v5393
      %v5412 = vpack.c.bf16 %v5396, %v5395
      %v5429 = vunpack.c.l.b16 %v5397
      %v5430 = vunpack.c.h.b16 %v5397
      %v5431 = vunpack.c.l.b16 %v5398
      %v5432 = vunpack.c.h.b16 %v5398
      %v5433 = vunpack.c.l.b16 %v5399
      %v5434 = vunpack.c.h.b16 %v5399
      %v5435 = vunpack.c.l.b16 %v5400
      %v5436 = vunpack.c.h.b16 %v5400
      %v5437 = vunpack.c.l.b16 %v5401
      %v5438 = vunpack.c.h.b16 %v5401
      %v5439 = vunpack.c.l.b16 %v5402
      %v5440 = vunpack.c.h.b16 %v5402
      %v5441 = vunpack.c.l.b16 %v5403
      %v5442 = vunpack.c.h.b16 %v5403
      %v5443 = vunpack.c.l.b16 %v5404
      %v5444 = vunpack.c.h.b16 %v5404
      %v5445 = vunpack.c.l.b16 %v5405
      %v5446 = vunpack.c.h.b16 %v5405
      %v5447 = vunpack.c.l.b16 %v5406
      %v5448 = vunpack.c.h.b16 %v5406
      %v5449 = vunpack.c.l.b16 %v5407
      %v5450 = vunpack.c.h.b16 %v5407
      %v5451 = vunpack.c.l.b16 %v5408
      %v5452 = vunpack.c.h.b16 %v5408
      %v5453 = vunpack.c.l.b16 %v5409
      %v5454 = vunpack.c.h.b16 %v5409
      %v5455 = vunpack.c.l.b16 %v5410
      %v5456 = vunpack.c.h.b16 %v5410
      %v5457 = vunpack.c.l.b16 %v5411
      %v5458 = vunpack.c.h.b16 %v5411
      %v5459 = vunpack.c.l.b16 %v5412
      %v5460 = vunpack.c.h.b16 %v5412
      %v5461 = vpack.c.b16 %v5429, %v5429
      %v5462 = vpack.c.b16 %v5430, %v5430
      %v5463 = vpack.c.b16 %v5431, %v5431
      %v5464 = vpack.c.b16 %v5432, %v5432
      %v5465 = vpack.c.b16 %v5433, %v5433
      %v5466 = vpack.c.b16 %v5434, %v5434
      %v5467 = vpack.c.b16 %v5435, %v5435
      %v5468 = vpack.c.b16 %v5436, %v5436
      %v5469 = vpack.c.b16 %v5437, %v5437
      %v5470 = vpack.c.b16 %v5438, %v5438
      %v5471 = vpack.c.b16 %v5439, %v5439
      %v5472 = vpack.c.b16 %v5440, %v5440
      %v5473 = vpack.c.b16 %v5441, %v5441
      %v5474 = vpack.c.b16 %v5442, %v5442
      %v5475 = vpack.c.b16 %v5443, %v5443
      %v5476 = vpack.c.b16 %v5444, %v5444
      %v5477 = vpack.c.b16 %v5445, %v5445
      %v5478 = vpack.c.b16 %v5446, %v5446
      %v5479 = vpack.c.b16 %v5447, %v5447
      %v5480 = vpack.c.b16 %v5448, %v5448
      %v5481 = vpack.c.b16 %v5449, %v5449
      %v5482 = vpack.c.b16 %v5450, %v5450
      %v5483 = vpack.c.b16 %v5451, %v5451
      %v5484 = vpack.c.b16 %v5452, %v5452
      %v5485 = vpack.c.b16 %v5453, %v5453
      %v5486 = vpack.c.b16 %v5454, %v5454
      %v5487 = vpack.c.b16 %v5455, %v5455
      %v5488 = vpack.c.b16 %v5456, %v5456
      %v5489 = vpack.c.b16 %v5457, %v5457
      %v5490 = vpack.c.b16 %v5458, %v5458
      %v5491 = vpack.c.b16 %v5459, %v5459
      %v5492 = vpack.c.b16 %v5460, %v5460
      %5525 = vst [vmem:[#allocation2 + $0x10] sm:$0xf] %v5461
      %5526 = vst [vmem:[#allocation2 + $0x14] sm:$0xf] %v5462
      %5527 = vst [vmem:[#allocation2 + $0x18] sm:$0xf] %v5463
      %5528 = vst [vmem:[#allocation2 + $0x1c] sm:$0xf] %v5464
      %5529 = vst [vmem:[#allocation2 + $0x20] sm:$0xf] %v5465
      %5530 = vst [vmem:[#allocation2 + $0x24] sm:$0xf] %v5466
      %5531 = vst [vmem:[#allocation2 + $0x28] sm:$0xf] %v5467
      %5532 = vst [vmem:[#allocation2 + $0x2c] sm:$0xf] %v5468
      %5533 = vst [vmem:[#allocation2 + $0x30] sm:$0xf] %v5469
      %5534 = vst [vmem:[#allocation2 + $0x34] sm:$0xf] %v5470
      %5535 = vst [vmem:[#allocation2 + $0x38] sm:$0xf] %v5471
      %5536 = vst [vmem:[#allocation2 + $0x3c] sm:$0xf] %v5472
      %5537 = vst [vmem:[#allocation2 + $0x40] sm:$0xf] %v5473
      %5538 = vst [vmem:[#allocation2 + $0x44] sm:$0xf] %v5474
      %5539 = vst [vmem:[#allocation2 + $0x48] sm:$0xf] %v5475
      %5540 = vst [vmem:[#allocation2 + $0x4c] sm:$0xf] %v5476
      %5541 = vst [vmem:[#allocation2 + $0x50] sm:$0xf] %v5477
      %5542 = vst [vmem:[#allocation2 + $0x54] sm:$0xf] %v5478
      %5543 = vst [vmem:[#allocation2 + $0x58] sm:$0xf] %v5479
      %5544 = vst [vmem:[#allocation2 + $0x5c] sm:$0xf] %v5480
      %5545 = vst [vmem:[#allocation2 + $0x60] sm:$0xf] %v5481
      %5546 = vst [vmem:[#allocation2 + $0x64] sm:$0xf] %v5482
      %5547 = vst [vmem:[#allocation2 + $0x68] sm:$0xf] %v5483
      %5548 = vst [vmem:[#allocation2 + $0x6c] sm:$0xf] %v5484
      %5549 = vst [vmem:[#allocation2 + $0x70] sm:$0xf] %v5485
      %5550 = vst [vmem:[#allocation2 + $0x74] sm:$0xf] %v5486
      %5551 = vst [vmem:[#allocation2 + $0x78] sm:$0xf] %v5487
      %5552 = vst [vmem:[#allocation2 + $0x7c] sm:$0xf] %v5488
      %5553 = vst [vmem:[#allocation2 + $0x80] sm:$0xf] %v5489
      %5554 = vst [vmem:[#allocation2 + $0x84] sm:$0xf] %v5490
      %5555 = vst [vmem:[#allocation2 + $0x88] sm:$0xf] %v5491
      %5556 = vst [vmem:[#allocation2 + $0x8c] sm:$0xf] %v5492
      %v5557 = vld [vmem:[#allocation2 + $0x4] sm:$0x8]
      %v5558 = vld [vmem:[#allocation2 + $0x8] sm:$0xf]
      %v5559 = vld [vmem:[#allocation2 + $0xc] sm:$0xf]
      %v5560 = vld [vmem:[#allocation2 + $0x10] sm:$0xf]
      %v5561 = vld [vmem:[#allocation2 + $0x14] sm:$0xf]
      %v5562 = vld [vmem:[#allocation2 + $0x18] sm:$0xf]
      %v5563 = vld [vmem:[#allocation2 + $0x1c] sm:$0xf]
      %v5564 = vld [vmem:[#allocation2 + $0x20] sm:$0xf]
      %v5565 = vld [vmem:[#allocation2 + $0x24] sm:$0xf]
      %v5566 = vld [vmem:[#allocation2 + $0x28] sm:$0xf]
      %v5567 = vld [vmem:[#allocation2 + $0x2c] sm:$0xf]
      %v5568 = vld [vmem:[#allocation2 + $0x30] sm:$0xf]
      %v5569 = vld [vmem:[#allocation2 + $0x34] sm:$0xf]
      %v5570 = vld [vmem:[#allocation2 + $0x38] sm:$0xf]
      %v5571 = vld [vmem:[#allocation2 + $0x3c] sm:$0xf]
      %v5572 = vld [vmem:[#allocation2 + $0x40] sm:$0xf]
      %v5573 = vld [vmem:[#allocation2 + $0x44] sm:$0xf]
      %v5574 = vld [vmem:[#allocation2 + $0x48] sm:$0xf]
      %v5575 = vld [vmem:[#allocation2 + $0x4c] sm:$0xf]
      %v5576 = vld [vmem:[#allocation2 + $0x50] sm:$0xf]
      %v5577 = vld [vmem:[#allocation2 + $0x54] sm:$0xf]
      %v5578 = vld [vmem:[#allocation2 + $0x58] sm:$0xf]
      %v5579 = vld [vmem:[#allocation2 + $0x5c] sm:$0xf]
      %v5580 = vld [vmem:[#allocation2 + $0x60] sm:$0xf]
      %v5581 = vld [vmem:[#allocation2 + $0x64] sm:$0xf]
      %v5582 = vld [vmem:[#allocation2 + $0x68] sm:$0xf]
      %v5583 = vld [vmem:[#allocation2 + $0x6c] sm:$0xf]
      %v5584 = vld [vmem:[#allocation2 + $0x70] sm:$0xf]
      %v5585 = vld [vmem:[#allocation2 + $0x74] sm:$0xf]
      %v5586 = vld [vmem:[#allocation2 + $0x78] sm:$0xf]
      %v5587 = vld [vmem:[#allocation2 + $0x7c] sm:$0xf]
      %v5588 = vld [vmem:[#allocation2 + $0x80] sm:$0xf]
      %v5589 = vld [vmem:[#allocation2 + $0x84] sm:$0xf]
      %v5590 = vld [vmem:[%s4] sm:$0xf]
      %v5591 = vld [vmem:[%s4 + $0x4] sm:$0xf]
      %v5592 = vld [vmem:[%s4 + $0x8] sm:$0xf]
      %v5593 = vld [vmem:[%s4 + $0xc] sm:$0xf]
      %v5594 = vld [vmem:[%s4 + $0x10] sm:$0xf]
      %v5595 = vld [vmem:[%s4 + $0x14] sm:$0xf]
      %v5596 = vld [vmem:[%s4 + $0x18] sm:$0xf]
      %v5597 = vld [vmem:[%s4 + $0x1c] sm:$0xf]
      %v5598 = vld [vmem:[%s4 + $0x20] sm:$0xf]
      %v5599 = vld [vmem:[%s4 + $0x24] sm:$0xf]
      %v5600 = vld [vmem:[%s4 + $0x28] sm:$0xf]
      %v5601 = vld [vmem:[%s4 + $0x2c] sm:$0xf]
      %v5602 = vld [vmem:[%s4 + $0x30] sm:$0xf]
      %v5603 = vld [vmem:[%s4 + $0x34] sm:$0xf]
      %v5604 = vld [vmem:[%s4 + $0x38] sm:$0xf]
      %v5605 = vld [vmem:[%s4 + $0x3c] sm:$0xf]
      %v5639 = vunpack.c.l.b16 %v5557
      %v5640 = vunpack.c.l.b16 %v5558
      %v5641 = vunpack.c.l.b16 %v5559
      %v5642 = vunpack.c.l.b16 %v5560
      %v5643 = vunpack.c.l.b16 %v5561
      %v5644 = vunpack.c.l.b16 %v5562
      %v5645 = vunpack.c.l.b16 %v5563
      %v5646 = vunpack.c.l.b16 %v5564
      %v5647 = vunpack.c.l.b16 %v5565
      %v5648 = vunpack.c.l.b16 %v5566
      %v5649 = vunpack.c.l.b16 %v5567
      %v5650 = vunpack.c.l.b16 %v5568
      %v5651 = vunpack.c.l.b16 %v5569
      %v5652 = vunpack.c.l.b16 %v5570
      %v5653 = vunpack.c.l.b16 %v5571
      %v5654 = vunpack.c.l.b16 %v5572
      %v5655 = vunpack.c.l.b16 %v5573
      %v5656 = vunpack.c.l.b16 %v5574
      %v5657 = vunpack.c.l.b16 %v5575
      %v5658 = vunpack.c.l.b16 %v5576
      %v5659 = vunpack.c.l.b16 %v5577
      %v5660 = vunpack.c.l.b16 %v5578
      %v5661 = vunpack.c.l.b16 %v5579
      %v5662 = vunpack.c.l.b16 %v5580
      %v5663 = vunpack.c.l.b16 %v5581
      %v5664 = vunpack.c.l.b16 %v5582
      %v5665 = vunpack.c.l.b16 %v5583
      %v5666 = vunpack.c.l.b16 %v5584
      %v5667 = vunpack.c.l.b16 %v5585
      %v5668 = vunpack.c.l.b16 %v5586
      %v5669 = vunpack.c.l.b16 %v5587
      %v5670 = vunpack.c.l.b16 %v5588
      %v5671 = vunpack.c.l.b16 %v5589
      %v5672 = vpack.c.b16 %v5640, %v5639
      %v5673 = vpack.c.b16 %v5642, %v5641
      %v5674 = vpack.c.b16 %v5644, %v5643
      %v5675 = vpack.c.b16 %v5646, %v5645
      %v5676 = vpack.c.b16 %v5648, %v5647
      %v5677 = vpack.c.b16 %v5650, %v5649
      %v5678 = vpack.c.b16 %v5652, %v5651
      %v5679 = vpack.c.b16 %v5654, %v5653
      %v5680 = vpack.c.b16 %v5656, %v5655
      %v5681 = vpack.c.b16 %v5658, %v5657
      %v5682 = vpack.c.b16 %v5660, %v5659
      %v5683 = vpack.c.b16 %v5662, %v5661
      %v5684 = vpack.c.b16 %v5664, %v5663
      %v5685 = vpack.c.b16 %v5666, %v5665
      %v5686 = vpack.c.b16 %v5668, %v5667
      %v5687 = vpack.c.b16 %v5670, %v5669
      %v5688 = vpack.c.b16 %v5671, %v5671
      %v5690 = vshrl.u32 %v5672, 16
      %v5692 = vrot.slane %v5690, 3
      %v5693 = vshll.u32 %v5672, 16
      %v5695 = vrot.slane %v5693, 4
      %v5696 = vor.u32 %v5692, %v5695
      %v5698 = vshrl.u32 %v5673, 16
      %v5700 = vrot.slane %v5698, 3
      %v5701 = vshll.u32 %v5673, 16
      %v5703 = vrot.slane %v5701, 4
      %v5704 = vor.u32 %v5700, %v5703
      %v5705 = vsel %vm502, %v5696, %v5704
      %v5707 = vshrl.u32 %v5674, 16
      %v5709 = vrot.slane %v5707, 3
      %v5710 = vshll.u32 %v5674, 16
      %v5712 = vrot.slane %v5710, 4
      %v5713 = vor.u32 %v5709, %v5712
      %v5714 = vsel %vm502, %v5704, %v5713
      %v5716 = vshrl.u32 %v5675, 16
      %v5718 = vrot.slane %v5716, 3
      %v5719 = vshll.u32 %v5675, 16
      %v5721 = vrot.slane %v5719, 4
      %v5722 = vor.u32 %v5718, %v5721
      %v5723 = vsel %vm502, %v5713, %v5722
      %v5725 = vshrl.u32 %v5676, 16
      %v5727 = vrot.slane %v5725, 3
      %v5728 = vshll.u32 %v5676, 16
      %v5730 = vrot.slane %v5728, 4
      %v5731 = vor.u32 %v5727, %v5730
      %v5732 = vsel %vm502, %v5722, %v5731
      %v5734 = vshrl.u32 %v5677, 16
      %v5736 = vrot.slane %v5734, 3
      %v5737 = vshll.u32 %v5677, 16
      %v5739 = vrot.slane %v5737, 4
      %v5740 = vor.u32 %v5736, %v5739
      %v5741 = vsel %vm502, %v5731, %v5740
      %v5743 = vshrl.u32 %v5678, 16
      %v5745 = vrot.slane %v5743, 3
      %v5746 = vshll.u32 %v5678, 16
      %v5748 = vrot.slane %v5746, 4
      %v5749 = vor.u32 %v5745, %v5748
      %v5750 = vsel %vm502, %v5740, %v5749
      %v5752 = vshrl.u32 %v5679, 16
      %v5754 = vrot.slane %v5752, 3
      %v5755 = vshll.u32 %v5679, 16
      %v5757 = vrot.slane %v5755, 4
      %v5758 = vor.u32 %v5754, %v5757
      %v5759 = vsel %vm502, %v5749, %v5758
      %v5761 = vshrl.u32 %v5680, 16
      %v5763 = vrot.slane %v5761, 3
      %v5764 = vshll.u32 %v5680, 16
      %v5766 = vrot.slane %v5764, 4
      %v5767 = vor.u32 %v5763, %v5766
      %v5768 = vsel %vm502, %v5758, %v5767
      %v5770 = vshrl.u32 %v5681, 16
      %v5772 = vrot.slane %v5770, 3
      %v5773 = vshll.u32 %v5681, 16
      %v5775 = vrot.slane %v5773, 4
      %v5776 = vor.u32 %v5772, %v5775
      %v5777 = vsel %vm502, %v5767, %v5776
      %v5779 = vshrl.u32 %v5682, 16
      %v5781 = vrot.slane %v5779, 3
      %v5782 = vshll.u32 %v5682, 16
      %v5784 = vrot.slane %v5782, 4
      %v5785 = vor.u32 %v5781, %v5784
      %v5786 = vsel %vm502, %v5776, %v5785
      %v5788 = vshrl.u32 %v5683, 16
      %v5790 = vrot.slane %v5788, 3
      %v5791 = vshll.u32 %v5683, 16
      %v5793 = vrot.slane %v5791, 4
      %v5794 = vor.u32 %v5790, %v5793
      %v5795 = vsel %vm502, %v5785, %v5794
      %v5797 = vshrl.u32 %v5684, 16
      %v5799 = vrot.slane %v5797, 3
      %v5800 = vshll.u32 %v5684, 16
      %v5802 = vrot.slane %v5800, 4
      %v5803 = vor.u32 %v5799, %v5802
      %v5804 = vsel %vm502, %v5794, %v5803
      %v5806 = vshrl.u32 %v5685, 16
      %v5808 = vrot.slane %v5806, 3
      %v5809 = vshll.u32 %v5685, 16
      %v5811 = vrot.slane %v5809, 4
      %v5812 = vor.u32 %v5808, %v5811
      %v5813 = vsel %vm502, %v5803, %v5812
      %v5815 = vshrl.u32 %v5686, 16
      %v5817 = vrot.slane %v5815, 3
      %v5818 = vshll.u32 %v5686, 16
      %v5820 = vrot.slane %v5818, 4
      %v5821 = vor.u32 %v5817, %v5820
      %v5822 = vsel %vm502, %v5812, %v5821
      %v5824 = vshrl.u32 %v5687, 16
      %v5826 = vrot.slane %v5824, 3
      %v5827 = vshll.u32 %v5687, 16
      %v5829 = vrot.slane %v5827, 4
      %v5830 = vor.u32 %v5826, %v5829
      %v5831 = vsel %vm502, %v5821, %v5830
      %v5833 = vshrl.u32 %v5688, 16
      %v5835 = vrot.slane %v5833, 3
      %v5836 = vshll.u32 %v5688, 16
      %v5838 = vrot.slane %v5836, 4
      %v5839 = vor.u32 %v5835, %v5838
      %v5840 = vsel %vm502, %v5830, %v5839
      %v5873 = vunpack.c.l.b16 %v5590
      %v5874 = vunpack.c.l.b16 %v5591
      %v5875 = vunpack.c.l.b16 %v5592
      %v5876 = vunpack.c.l.b16 %v5593
      %v5877 = vunpack.c.l.b16 %v5594
      %v5878 = vunpack.c.l.b16 %v5595
      %v5879 = vunpack.c.l.b16 %v5596
      %v5880 = vunpack.c.l.b16 %v5597
      %v5881 = vunpack.c.l.b16 %v5598
      %v5882 = vunpack.c.l.b16 %v5599
      %v5883 = vunpack.c.l.b16 %v5600
      %v5884 = vunpack.c.l.b16 %v5601
      %v5885 = vunpack.c.l.b16 %v5602
      %v5886 = vunpack.c.l.b16 %v5603
      %v5887 = vunpack.c.l.b16 %v5604
      %v5888 = vunpack.c.l.b16 %v5605
      %v5889 = vpack.c.b16 %v5874, %v5873
      %v5890 = vpack.c.b16 %v5876, %v5875
      %v5891 = vpack.c.b16 %v5878, %v5877
      %v5892 = vpack.c.b16 %v5880, %v5879
      %v5893 = vpack.c.b16 %v5882, %v5881
      %v5894 = vpack.c.b16 %v5884, %v5883
      %v5895 = vpack.c.b16 %v5886, %v5885
      %v5896 = vpack.c.b16 %v5888, %v5887
      %5905 = vmatprep.subr.bf16.mxu0 0
      %5906 = vmatpush1.bf16.msra.mxu0 %v5896
      %5907 = vmatprep.subr.bf16.mxu0 0
      %5908 = vmatpush1.bf16.msra.mxu0 %v5895
      %5909 = vmatprep.subr.bf16.mxu0 0
      %5910 = vmatpush1.bf16.msra.mxu0 %v5894
      %5911 = vmatprep.subr.bf16.mxu0 0
      %5912 = vmatpush1.bf16.msra.mxu0 %v5893
      %5913 = vmatprep.subr.bf16.mxu0 0
      %5914 = vmatpush1.bf16.msra.mxu0 %v5892
      %5915 = vmatprep.subr.bf16.mxu0 0
      %5916 = vmatpush1.bf16.msra.mxu0 %v5891
      %5917 = vmatprep.subr.bf16.mxu0 0
      %5918 = vmatpush1.bf16.msra.mxu0 %v5890
      %5919 = vmatprep.subr.bf16.mxu0 0
      %5920 = vmatpush1.bf16.msra.mxu0 %v5889
      %5921 = vmatprep.subr.bf16.mxu0 0
      %5922 = vmatpush2.bf16.msra.mxu0 0
      %5923 = vmatprep.subr.bf16.mxu0 0
      %5924 = vmatpush2.bf16.msra.mxu0 0
      %5925 = vmatprep.subr.bf16.mxu0 0
      %5926 = vmatpush2.bf16.msra.mxu0 0
      %5927 = vmatprep.subr.bf16.mxu0 0
      %5928 = vmatpush2.bf16.msra.mxu0 0
      %5929 = vmatprep.subr.bf16.mxu0 0
      %5930 = vmatpush2.bf16.msra.mxu0 0
      %5931 = vmatprep.subr.bf16.mxu0 0
      %5932 = vmatpush2.bf16.msra.mxu0 0
      %5933 = vmatprep.subr.bf16.mxu0 0
      %5934 = vmatpush2.bf16.msra.mxu0 0
      %5935 = vmatprep.subr.bf16.mxu0 0
      %5936 = vmatpush2.bf16.msra.mxu0 0
      %5937 = vmatprep.mubr.bf16.mxu0 0
      %5938 = vmatmul.mubr.bf16.gmra.mxu0 %v5705
      %v5939 = vpop.f32.mrf.mxu0
      %v5940 = vadd.f32 0.0, %v5939
      %v5941 = vpop.f32.mrf.mxu0
      %v5942 = vpop.f32.mrf.mxu0
      %v5943 = vadd.f32 0.0, %v5942
      %v5944 = vpop.f32.mrf.mxu0
      %5945 = vmatprep.mubr.bf16.mxu0 0
      %5946 = vmatmul.mubr.bf16.gmra.mxu0 %v5714
      %v5947 = vpop.f32.mrf.mxu0
      %v5948 = vadd.f32 0.0, %v5947
      %v5949 = vpop.f32.mrf.mxu0
      %v5950 = vpop.f32.mrf.mxu0
      %v5951 = vadd.f32 0.0, %v5950
      %v5952 = vpop.f32.mrf.mxu0
      %5953 = vmatprep.mubr.bf16.mxu0 0
      %5954 = vmatmul.mubr.bf16.gmra.mxu0 %v5723
      %v5955 = vpop.f32.mrf.mxu0
      %v5956 = vadd.f32 0.0, %v5955
      %v5957 = vpop.f32.mrf.mxu0
      %v5958 = vpop.f32.mrf.mxu0
      %v5959 = vadd.f32 0.0, %v5958
      %v5960 = vpop.f32.mrf.mxu0
      %5961 = vmatprep.mubr.bf16.mxu0 0
      %5962 = vmatmul.mubr.bf16.gmra.mxu0 %v5732
      %v5963 = vpop.f32.mrf.mxu0
      %v5964 = vadd.f32 0.0, %v5963
      %v5965 = vpop.f32.mrf.mxu0
      %v5966 = vpop.f32.mrf.mxu0
      %v5967 = vadd.f32 0.0, %v5966
      %v5968 = vpop.f32.mrf.mxu0
      %5969 = vmatprep.mubr.bf16.mxu0 0
      %5970 = vmatmul.mubr.bf16.gmra.mxu0 %v5741
      %v5971 = vpop.f32.mrf.mxu0
      %v5972 = vadd.f32 0.0, %v5971
      %v5973 = vpop.f32.mrf.mxu0
      %v5974 = vpop.f32.mrf.mxu0
      %v5975 = vadd.f32 0.0, %v5974
      %v5976 = vpop.f32.mrf.mxu0
      %5977 = vmatprep.mubr.bf16.mxu0 0
      %5978 = vmatmul.mubr.bf16.gmra.mxu0 %v5750
      %v5979 = vpop.f32.mrf.mxu0
      %v5980 = vadd.f32 0.0, %v5979
      %v5981 = vpop.f32.mrf.mxu0
      %v5982 = vpop.f32.mrf.mxu0
      %v5983 = vadd.f32 0.0, %v5982
      %v5984 = vpop.f32.mrf.mxu0
      %5985 = vmatprep.mubr.bf16.mxu0 0
      %5986 = vmatmul.mubr.bf16.gmra.mxu0 %v5759
      %v5987 = vpop.f32.mrf.mxu0
      %v5988 = vadd.f32 0.0, %v5987
      %v5989 = vpop.f32.mrf.mxu0
      %v5990 = vpop.f32.mrf.mxu0
      %v5991 = vadd.f32 0.0, %v5990
      %v5992 = vpop.f32.mrf.mxu0
      %5993 = vmatprep.mubr.bf16.mxu0 0
      %5994 = vmatmul.mubr.bf16.gmra.mxu0 %v5768
      %v5995 = vpop.f32.mrf.mxu0
      %v5996 = vadd.f32 0.0, %v5995
      %v5997 = vpop.f32.mrf.mxu0
      %v5998 = vpop.f32.mrf.mxu0
      %v5999 = vadd.f32 0.0, %v5998
      %v6000 = vpop.f32.mrf.mxu0
      %6001 = vmatprep.mubr.bf16.mxu0 0
      %6002 = vmatmul.mubr.bf16.gmra.mxu0 %v5777
      %v6003 = vpop.f32.mrf.mxu0
      %v6004 = vadd.f32 0.0, %v6003
      %v6005 = vpop.f32.mrf.mxu0
      %v6006 = vpop.f32.mrf.mxu0
      %v6007 = vadd.f32 0.0, %v6006
      %v6008 = vpop.f32.mrf.mxu0
      %6009 = vmatprep.mubr.bf16.mxu0 0
      %6010 = vmatmul.mubr.bf16.gmra.mxu0 %v5786
      %v6011 = vpop.f32.mrf.mxu0
      %v6012 = vadd.f32 0.0, %v6011
      %v6013 = vpop.f32.mrf.mxu0
      %v6014 = vpop.f32.mrf.mxu0
      %v6015 = vadd.f32 0.0, %v6014
      %v6016 = vpop.f32.mrf.mxu0
      %6017 = vmatprep.mubr.bf16.mxu0 0
      %6018 = vmatmul.mubr.bf16.gmra.mxu0 %v5795
      %v6019 = vpop.f32.mrf.mxu0
      %v6020 = vadd.f32 0.0, %v6019
      %v6021 = vpop.f32.mrf.mxu0
      %v6022 = vpop.f32.mrf.mxu0
      %v6023 = vadd.f32 0.0, %v6022
      %v6024 = vpop.f32.mrf.mxu0
      %6025 = vmatprep.mubr.bf16.mxu0 0
      %6026 = vmatmul.mubr.bf16.gmra.mxu0 %v5804
      %v6027 = vpop.f32.mrf.mxu0
      %v6028 = vadd.f32 0.0, %v6027
      %v6029 = vpop.f32.mrf.mxu0
      %v6030 = vpop.f32.mrf.mxu0
      %v6031 = vadd.f32 0.0, %v6030
      %v6032 = vpop.f32.mrf.mxu0
      %6033 = vmatprep.mubr.bf16.mxu0 0
      %6034 = vmatmul.mubr.bf16.gmra.mxu0 %v5813
      %v6035 = vpop.f32.mrf.mxu0
      %v6036 = vadd.f32 0.0, %v6035
      %v6037 = vpop.f32.mrf.mxu0
      %v6038 = vpop.f32.mrf.mxu0
      %v6039 = vadd.f32 0.0, %v6038
      %v6040 = vpop.f32.mrf.mxu0
      %6041 = vmatprep.mubr.bf16.mxu0 0
      %6042 = vmatmul.mubr.bf16.gmra.mxu0 %v5822
      %v6043 = vpop.f32.mrf.mxu0
      %v6044 = vadd.f32 0.0, %v6043
      %v6045 = vpop.f32.mrf.mxu0
      %v6046 = vpop.f32.mrf.mxu0
      %v6047 = vadd.f32 0.0, %v6046
      %v6048 = vpop.f32.mrf.mxu0
      %6049 = vmatprep.mubr.bf16.mxu0 0
      %6050 = vmatmul.mubr.bf16.gmra.mxu0 %v5831
      %v6051 = vpop.f32.mrf.mxu0
      %v6052 = vadd.f32 0.0, %v6051
      %v6053 = vpop.f32.mrf.mxu0
      %v6054 = vpop.f32.mrf.mxu0
      %v6055 = vadd.f32 0.0, %v6054
      %v6056 = vpop.f32.mrf.mxu0
      %6057 = vmatprep.mubr.bf16.mxu0 0
      %6058 = vmatmul.mubr.bf16.gmra.mxu0 %v5840
      %v6059 = vpop.f32.mrf.mxu0
      %v6060 = vadd.f32 0.0, %v6059
      %v6061 = vpop.f32.mrf.mxu0
      %v6062 = vpop.f32.mrf.mxu0
      %v6063 = vadd.f32 0.0, %v6062
      %v6064 = vpop.f32.mrf.mxu0
      %6065 = vdwg.mxu0
      %6066 = vst [vmem:[#allocation3] sm:$0xff] %v5940
      %6067 = vst [vmem:[#allocation3 + $0x8] sm:$0xff] %v5943
      %6068 = vst [vmem:[#allocation3 + $0x10] sm:$0xff] %v5948
      %6069 = vst [vmem:[#allocation3 + $0x18] sm:$0xff] %v5951
      %6070 = vst [vmem:[#allocation3 + $0x20] sm:$0xff] %v5956
      %6071 = vst [vmem:[#allocation3 + $0x28] sm:$0xff] %v5959
      %6072 = vst [vmem:[#allocation3 + $0x30] sm:$0xff] %v5964
      %6073 = vst [vmem:[#allocation3 + $0x38] sm:$0xff] %v5967
      %6074 = vst [vmem:[#allocation3 + $0x40] sm:$0xff] %v5972
      %6075 = vst [vmem:[#allocation3 + $0x48] sm:$0xff] %v5975
      %6076 = vst [vmem:[#allocation3 + $0x50] sm:$0xff] %v5980
      %6077 = vst [vmem:[#allocation3 + $0x58] sm:$0xff] %v5983
      %6078 = vst [vmem:[#allocation3 + $0x60] sm:$0xff] %v5988
      %6079 = vst [vmem:[#allocation3 + $0x68] sm:$0xff] %v5991
      %6080 = vst [vmem:[#allocation3 + $0x70] sm:$0xff] %v5996
      %6081 = vst [vmem:[#allocation3 + $0x78] sm:$0xff] %v5999
      %6082 = vst [vmem:[#allocation3 + $0x80] sm:$0xff] %v6004
      %6083 = vst [vmem:[#allocation3 + $0x88] sm:$0xff] %v6007
      %6084 = vst [vmem:[#allocation3 + $0x90] sm:$0xff] %v6012
      %6085 = vst [vmem:[#allocation3 + $0x98] sm:$0xff] %v6015
      %6086 = vst [vmem:[#allocation3 + $0xa0] sm:$0xff] %v6020
      %6087 = vst [vmem:[#allocation3 + $0xa8] sm:$0xff] %v6023
      %6088 = vst [vmem:[#allocation3 + $0xb0] sm:$0xff] %v6028
      %6089 = vst [vmem:[#allocation3 + $0xb8] sm:$0xff] %v6031
      %6090 = vst [vmem:[#allocation3 + $0xc0] sm:$0xff] %v6036
      %6091 = vst [vmem:[#allocation3 + $0xc8] sm:$0xff] %v6039
      %6092 = vst [vmem:[#allocation3 + $0xd0] sm:$0xff] %v6044
      %6093 = vst [vmem:[#allocation3 + $0xd8] sm:$0xff] %v6047
      %6094 = vst [vmem:[#allocation3 + $0xe0] sm:$0xff] %v6052
      %6095 = vst [vmem:[#allocation3 + $0xe8] sm:$0xff] %v6055
      %6096 = vst [vmem:[#allocation3 + $0xf0] sm:$0xff] %v6060
      %6097 = vst [vmem:[#allocation3 + $0xf8] sm:$0xff] %v6063
      %v6098 = vld [vmem:[#allocation2 + $0x8] sm:$0xf]
      %v6099 = vld [vmem:[#allocation2 + $0xc] sm:$0xf]
      %v6100 = vld [vmem:[#allocation2 + $0x10] sm:$0xf]
      %v6101 = vld [vmem:[#allocation2 + $0x14] sm:$0xf]
      %v6102 = vld [vmem:[#allocation2 + $0x18] sm:$0xf]
      %v6103 = vld [vmem:[#allocation2 + $0x1c] sm:$0xf]
      %v6104 = vld [vmem:[#allocation2 + $0x20] sm:$0xf]
      %v6105 = vld [vmem:[#allocation2 + $0x24] sm:$0xf]
      %v6106 = vld [vmem:[#allocation2 + $0x28] sm:$0xf]
      %v6107 = vld [vmem:[#allocation2 + $0x2c] sm:$0xf]
      %v6108 = vld [vmem:[#allocation2 + $0x30] sm:$0xf]
      %v6109 = vld [vmem:[#allocation2 + $0x34] sm:$0xf]
      %v6110 = vld [vmem:[#allocation2 + $0x38] sm:$0xf]
      %v6111 = vld [vmem:[#allocation2 + $0x3c] sm:$0xf]
      %v6112 = vld [vmem:[#allocation2 + $0x40] sm:$0xf]
      %v6113 = vld [vmem:[#allocation2 + $0x44] sm:$0xf]
      %v6114 = vld [vmem:[#allocation2 + $0x48] sm:$0xf]
      %v6115 = vld [vmem:[#allocation2 + $0x4c] sm:$0xf]
      %v6116 = vld [vmem:[#allocation2 + $0x50] sm:$0xf]
      %v6117 = vld [vmem:[#allocation2 + $0x54] sm:$0xf]
      %v6118 = vld [vmem:[#allocation2 + $0x58] sm:$0xf]
      %v6119 = vld [vmem:[#allocation2 + $0x5c] sm:$0xf]
      %v6120 = vld [vmem:[#allocation2 + $0x60] sm:$0xf]
      %v6121 = vld [vmem:[#allocation2 + $0x64] sm:$0xf]
      %v6122 = vld [vmem:[#allocation2 + $0x68] sm:$0xf]
      %v6123 = vld [vmem:[#allocation2 + $0x6c] sm:$0xf]
      %v6124 = vld [vmem:[#allocation2 + $0x70] sm:$0xf]
      %v6125 = vld [vmem:[#allocation2 + $0x74] sm:$0xf]
      %v6126 = vld [vmem:[#allocation2 + $0x78] sm:$0xf]
      %v6127 = vld [vmem:[#allocation2 + $0x7c] sm:$0xf]
      %v6128 = vld [vmem:[#allocation2 + $0x80] sm:$0xf]
      %v6129 = vld [vmem:[#allocation2 + $0x84] sm:$0xf]
      %s6130 = scalar_lea.vmem %s4, 64
      %v6131 = vld [vmem:[%s6130] sm:$0xf]
      %v6132 = vld [vmem:[%s6130 + $0x4] sm:$0xf]
      %v6133 = vld [vmem:[%s6130 + $0x8] sm:$0xf]
      %v6134 = vld [vmem:[%s6130 + $0xc] sm:$0xf]
      %v6135 = vld [vmem:[%s6130 + $0x10] sm:$0xf]
      %v6136 = vld [vmem:[%s6130 + $0x14] sm:$0xf]
      %v6137 = vld [vmem:[%s6130 + $0x18] sm:$0xf]
      %v6138 = vld [vmem:[%s6130 + $0x1c] sm:$0xf]
      %v6139 = vld [vmem:[%s6130 + $0x20] sm:$0xf]
      %v6140 = vld [vmem:[%s6130 + $0x24] sm:$0xf]
      %v6141 = vld [vmem:[%s6130 + $0x28] sm:$0xf]
      %v6142 = vld [vmem:[%s6130 + $0x2c] sm:$0xf]
      %v6143 = vld [vmem:[%s6130 + $0x30] sm:$0xf]
      %v6144 = vld [vmem:[%s6130 + $0x34] sm:$0xf]
      %v6145 = vld [vmem:[%s6130 + $0x38] sm:$0xf]
      %v6146 = vld [vmem:[%s6130 + $0x3c] sm:$0xf]
      %v6179 = vunpack.c.l.b16 %v6098
      %v6180 = vunpack.c.l.b16 %v6099
      %v6181 = vunpack.c.l.b16 %v6100
      %v6182 = vunpack.c.l.b16 %v6101
      %v6183 = vunpack.c.l.b16 %v6102
      %v6184 = vunpack.c.l.b16 %v6103
      %v6185 = vunpack.c.l.b16 %v6104
      %v6186 = vunpack.c.l.b16 %v6105
      %v6187 = vunpack.c.l.b16 %v6106
      %v6188 = vunpack.c.l.b16 %v6107
      %v6189 = vunpack.c.l.b16 %v6108
      %v6190 = vunpack.c.l.b16 %v6109
      %v6191 = vunpack.c.l.b16 %v6110
      %v6192 = vunpack.c.l.b16 %v6111
      %v6193 = vunpack.c.l.b16 %v6112
      %v6194 = vunpack.c.l.b16 %v6113
      %v6195 = vunpack.c.l.b16 %v6114
      %v6196 = vunpack.c.l.b16 %v6115
      %v6197 = vunpack.c.l.b16 %v6116
      %v6198 = vunpack.c.l.b16 %v6117
      %v6199 = vunpack.c.l.b16 %v6118
      %v6200 = vunpack.c.l.b16 %v6119
      %v6201 = vunpack.c.l.b16 %v6120
      %v6202 = vunpack.c.l.b16 %v6121
      %v6203 = vunpack.c.l.b16 %v6122
      %v6204 = vunpack.c.l.b16 %v6123
      %v6205 = vunpack.c.l.b16 %v6124
      %v6206 = vunpack.c.l.b16 %v6125
      %v6207 = vunpack.c.l.b16 %v6126
      %v6208 = vunpack.c.l.b16 %v6127
      %v6209 = vunpack.c.l.b16 %v6128
      %v6210 = vunpack.c.l.b16 %v6129
      %v6211 = vpack.c.b16 %v6180, %v6179
      %v6212 = vpack.c.b16 %v6182, %v6181
      %v6213 = vpack.c.b16 %v6184, %v6183
      %v6214 = vpack.c.b16 %v6186, %v6185
      %v6215 = vpack.c.b16 %v6188, %v6187
      %v6216 = vpack.c.b16 %v6190, %v6189
      %v6217 = vpack.c.b16 %v6192, %v6191
      %v6218 = vpack.c.b16 %v6194, %v6193
      %v6219 = vpack.c.b16 %v6196, %v6195
      %v6220 = vpack.c.b16 %v6198, %v6197
      %v6221 = vpack.c.b16 %v6200, %v6199
      %v6222 = vpack.c.b16 %v6202, %v6201
      %v6223 = vpack.c.b16 %v6204, %v6203
      %v6224 = vpack.c.b16 %v6206, %v6205
      %v6225 = vpack.c.b16 %v6208, %v6207
      %v6226 = vpack.c.b16 %v6210, %v6209
      %v6259 = vunpack.c.l.b16 %v6131
      %v6260 = vunpack.c.l.b16 %v6132
      %v6261 = vunpack.c.l.b16 %v6133
      %v6262 = vunpack.c.l.b16 %v6134
      %v6263 = vunpack.c.l.b16 %v6135
      %v6264 = vunpack.c.l.b16 %v6136
      %v6265 = vunpack.c.l.b16 %v6137
      %v6266 = vunpack.c.l.b16 %v6138
      %v6267 = vunpack.c.l.b16 %v6139
      %v6268 = vunpack.c.l.b16 %v6140
      %v6269 = vunpack.c.l.b16 %v6141
      %v6270 = vunpack.c.l.b16 %v6142
      %v6271 = vunpack.c.l.b16 %v6143
      %v6272 = vunpack.c.l.b16 %v6144
      %v6273 = vunpack.c.l.b16 %v6145
      %v6274 = vunpack.c.l.b16 %v6146
      %v6275 = vpack.c.b16 %v6260, %v6259
      %v6276 = vpack.c.b16 %v6262, %v6261
      %v6277 = vpack.c.b16 %v6264, %v6263
      %v6278 = vpack.c.b16 %v6266, %v6265
      %v6279 = vpack.c.b16 %v6268, %v6267
      %v6280 = vpack.c.b16 %v6270, %v6269
      %v6281 = vpack.c.b16 %v6272, %v6271
      %v6282 = vpack.c.b16 %v6274, %v6273
      %6291 = vmatprep.subr.bf16.mxu0 0
      %6292 = vmatpush1.bf16.msra.mxu0 %v6282
      %6293 = vmatprep.subr.bf16.mxu0 0
      %6294 = vmatpush1.bf16.msra.mxu0 %v6281
      %6295 = vmatprep.subr.bf16.mxu0 0
      %6296 = vmatpush1.bf16.msra.mxu0 %v6280
      %6297 = vmatprep.subr.bf16.mxu0 0
      %6298 = vmatpush1.bf16.msra.mxu0 %v6279
      %6299 = vmatprep.subr.bf16.mxu0 0
      %6300 = vmatpush1.bf16.msra.mxu0 %v6278
      %6301 = vmatprep.subr.bf16.mxu0 0
      %6302 = vmatpush1.bf16.msra.mxu0 %v6277
      %6303 = vmatprep.subr.bf16.mxu0 0
      %6304 = vmatpush1.bf16.msra.mxu0 %v6276
      %6305 = vmatprep.subr.bf16.mxu0 0
      %6306 = vmatpush1.bf16.msra.mxu0 %v6275
      %6307 = vmatprep.subr.bf16.mxu0 0
      %6308 = vmatpush2.bf16.msra.mxu0 0
      %6309 = vmatprep.subr.bf16.mxu0 0
      %6310 = vmatpush2.bf16.msra.mxu0 0
      %6311 = vmatprep.subr.bf16.mxu0 0
      %6312 = vmatpush2.bf16.msra.mxu0 0
      %6313 = vmatprep.subr.bf16.mxu0 0
      %6314 = vmatpush2.bf16.msra.mxu0 0
      %6315 = vmatprep.subr.bf16.mxu0 0
      %6316 = vmatpush2.bf16.msra.mxu0 0
      %6317 = vmatprep.subr.bf16.mxu0 0
      %6318 = vmatpush2.bf16.msra.mxu0 0
      %6319 = vmatprep.subr.bf16.mxu0 0
      %6320 = vmatpush2.bf16.msra.mxu0 0
      %6321 = vmatprep.subr.bf16.mxu0 0
      %6322 = vmatpush2.bf16.msra.mxu0 0
      %6323 = vmatprep.mubr.bf16.mxu0 0
      %6324 = vmatmul.mubr.bf16.gmra.mxu0 %v6211
      %v6325 = vpop.f32.mrf.mxu0
      %v6326 = vadd.f32 0.0, %v6325
      %v6327 = vpop.f32.mrf.mxu0
      %v6328 = vpop.f32.mrf.mxu0
      %v6329 = vadd.f32 0.0, %v6328
      %v6330 = vpop.f32.mrf.mxu0
      %6331 = vmatprep.mubr.bf16.mxu0 0
      %6332 = vmatmul.mubr.bf16.gmra.mxu0 %v6212
      %v6333 = vpop.f32.mrf.mxu0
      %v6334 = vadd.f32 0.0, %v6333
      %v6335 = vpop.f32.mrf.mxu0
      %v6336 = vpop.f32.mrf.mxu0
      %v6337 = vadd.f32 0.0, %v6336
      %v6338 = vpop.f32.mrf.mxu0
      %6339 = vmatprep.mubr.bf16.mxu0 0
      %6340 = vmatmul.mubr.bf16.gmra.mxu0 %v6213
      %v6341 = vpop.f32.mrf.mxu0
      %v6342 = vadd.f32 0.0, %v6341
      %v6343 = vpop.f32.mrf.mxu0
      %v6344 = vpop.f32.mrf.mxu0
      %v6345 = vadd.f32 0.0, %v6344
      %v6346 = vpop.f32.mrf.mxu0
      %6347 = vmatprep.mubr.bf16.mxu0 0
      %6348 = vmatmul.mubr.bf16.gmra.mxu0 %v6214
      %v6349 = vpop.f32.mrf.mxu0
      %v6350 = vadd.f32 0.0, %v6349
      %v6351 = vpop.f32.mrf.mxu0
      %v6352 = vpop.f32.mrf.mxu0
      %v6353 = vadd.f32 0.0, %v6352
      %v6354 = vpop.f32.mrf.mxu0
      %6355 = vmatprep.mubr.bf16.mxu0 0
      %6356 = vmatmul.mubr.bf16.gmra.mxu0 %v6215
      %v6357 = vpop.f32.mrf.mxu0
      %v6358 = vadd.f32 0.0, %v6357
      %v6359 = vpop.f32.mrf.mxu0
      %v6360 = vpop.f32.mrf.mxu0
      %v6361 = vadd.f32 0.0, %v6360
      %v6362 = vpop.f32.mrf.mxu0
      %6363 = vmatprep.mubr.bf16.mxu0 0
      %6364 = vmatmul.mubr.bf16.gmra.mxu0 %v6216
      %v6365 = vpop.f32.mrf.mxu0
      %v6366 = vadd.f32 0.0, %v6365
      %v6367 = vpop.f32.mrf.mxu0
      %v6368 = vpop.f32.mrf.mxu0
      %v6369 = vadd.f32 0.0, %v6368
      %v6370 = vpop.f32.mrf.mxu0
      %6371 = vmatprep.mubr.bf16.mxu0 0
      %6372 = vmatmul.mubr.bf16.gmra.mxu0 %v6217
      %v6373 = vpop.f32.mrf.mxu0
      %v6374 = vadd.f32 0.0, %v6373
      %v6375 = vpop.f32.mrf.mxu0
      %v6376 = vpop.f32.mrf.mxu0
      %v6377 = vadd.f32 0.0, %v6376
      %v6378 = vpop.f32.mrf.mxu0
      %6379 = vmatprep.mubr.bf16.mxu0 0
      %6380 = vmatmul.mubr.bf16.gmra.mxu0 %v6218
      %v6381 = vpop.f32.mrf.mxu0
      %v6382 = vadd.f32 0.0, %v6381
      %v6383 = vpop.f32.mrf.mxu0
      %v6384 = vpop.f32.mrf.mxu0
      %v6385 = vadd.f32 0.0, %v6384
      %v6386 = vpop.f32.mrf.mxu0
      %6387 = vmatprep.mubr.bf16.mxu0 0
      %6388 = vmatmul.mubr.bf16.gmra.mxu0 %v6219
      %v6389 = vpop.f32.mrf.mxu0
      %v6390 = vadd.f32 0.0, %v6389
      %v6391 = vpop.f32.mrf.mxu0
      %v6392 = vpop.f32.mrf.mxu0
      %v6393 = vadd.f32 0.0, %v6392
      %v6394 = vpop.f32.mrf.mxu0
      %6395 = vmatprep.mubr.bf16.mxu0 0
      %6396 = vmatmul.mubr.bf16.gmra.mxu0 %v6220
      %v6397 = vpop.f32.mrf.mxu0
      %v6398 = vadd.f32 0.0, %v6397
      %v6399 = vpop.f32.mrf.mxu0
      %v6400 = vpop.f32.mrf.mxu0
      %v6401 = vadd.f32 0.0, %v6400
      %v6402 = vpop.f32.mrf.mxu0
      %6403 = vmatprep.mubr.bf16.mxu0 0
      %6404 = vmatmul.mubr.bf16.gmra.mxu0 %v6221
      %v6405 = vpop.f32.mrf.mxu0
      %v6406 = vadd.f32 0.0, %v6405
      %v6407 = vpop.f32.mrf.mxu0
      %v6408 = vpop.f32.mrf.mxu0
      %v6409 = vadd.f32 0.0, %v6408
      %v6410 = vpop.f32.mrf.mxu0
      %6411 = vmatprep.mubr.bf16.mxu0 0
      %6412 = vmatmul.mubr.bf16.gmra.mxu0 %v6222
      %v6413 = vpop.f32.mrf.mxu0
      %v6414 = vadd.f32 0.0, %v6413
      %v6415 = vpop.f32.mrf.mxu0
      %v6416 = vpop.f32.mrf.mxu0
      %v6417 = vadd.f32 0.0, %v6416
      %v6418 = vpop.f32.mrf.mxu0
      %6419 = vmatprep.mubr.bf16.mxu0 0
      %6420 = vmatmul.mubr.bf16.gmra.mxu0 %v6223
      %v6421 = vpop.f32.mrf.mxu0
      %v6422 = vadd.f32 0.0, %v6421
      %v6423 = vpop.f32.mrf.mxu0
      %v6424 = vpop.f32.mrf.mxu0
      %v6425 = vadd.f32 0.0, %v6424
      %v6426 = vpop.f32.mrf.mxu0
      %6427 = vmatprep.mubr.bf16.mxu0 0
      %6428 = vmatmul.mubr.bf16.gmra.mxu0 %v6224
      %v6429 = vpop.f32.mrf.mxu0
      %v6430 = vadd.f32 0.0, %v6429
      %v6431 = vpop.f32.mrf.mxu0
      %v6432 = vpop.f32.mrf.mxu0
      %v6433 = vadd.f32 0.0, %v6432
      %v6434 = vpop.f32.mrf.mxu0
      %6435 = vmatprep.mubr.bf16.mxu0 0
      %6436 = vmatmul.mubr.bf16.gmra.mxu0 %v6225
      %v6437 = vpop.f32.mrf.mxu0
      %v6438 = vadd.f32 0.0, %v6437
      %v6439 = vpop.f32.mrf.mxu0
      %v6440 = vpop.f32.mrf.mxu0
      %v6441 = vadd.f32 0.0, %v6440
      %v6442 = vpop.f32.mrf.mxu0
      %6443 = vmatprep.mubr.bf16.mxu0 0
      %6444 = vmatmul.mubr.bf16.gmra.mxu0 %v6226
      %v6445 = vpop.f32.mrf.mxu0
      %v6446 = vadd.f32 0.0, %v6445
      %v6447 = vpop.f32.mrf.mxu0
      %v6448 = vpop.f32.mrf.mxu0
      %v6449 = vadd.f32 0.0, %v6448
      %v6450 = vpop.f32.mrf.mxu0
      %6451 = vdwg.mxu0
      %v6452 = vld [vmem:[#allocation3] sm:$0xff]
      %v6453 = vld [vmem:[#allocation3 + $0x8] sm:$0xff]
      %v6454 = vld [vmem:[#allocation3 + $0x10] sm:$0xff]
      %v6455 = vld [vmem:[#allocation3 + $0x18] sm:$0xff]
      %v6456 = vld [vmem:[#allocation3 + $0x20] sm:$0xff]
      %v6457 = vld [vmem:[#allocation3 + $0x28] sm:$0xff]
      %v6458 = vld [vmem:[#allocation3 + $0x30] sm:$0xff]
      %v6459 = vld [vmem:[#allocation3 + $0x38] sm:$0xff]
      %v6460 = vld [vmem:[#allocation3 + $0x40] sm:$0xff]
      %v6461 = vld [vmem:[#allocation3 + $0x48] sm:$0xff]
      %v6462 = vld [vmem:[#allocation3 + $0x50] sm:$0xff]
      %v6463 = vld [vmem:[#allocation3 + $0x58] sm:$0xff]
      %v6464 = vld [vmem:[#allocation3 + $0x60] sm:$0xff]
      %v6465 = vld [vmem:[#allocation3 + $0x68] sm:$0xff]
      %v6466 = vld [vmem:[#allocation3 + $0x70] sm:$0xff]
      %v6467 = vld [vmem:[#allocation3 + $0x78] sm:$0xff]
      %v6468 = vld [vmem:[#allocation3 + $0x80] sm:$0xff]
      %v6469 = vld [vmem:[#allocation3 + $0x88] sm:$0xff]
      %v6470 = vld [vmem:[#allocation3 + $0x90] sm:$0xff]
      %v6471 = vld [vmem:[#allocation3 + $0x98] sm:$0xff]
      %v6472 = vld [vmem:[#allocation3 + $0xa0] sm:$0xff]
      %v6473 = vld [vmem:[#allocation3 + $0xa8] sm:$0xff]
      %v6474 = vld [vmem:[#allocation3 + $0xb0] sm:$0xff]
      %v6475 = vld [vmem:[#allocation3 + $0xb8] sm:$0xff]
      %v6476 = vld [vmem:[#allocation3 + $0xc0] sm:$0xff]
      %v6477 = vld [vmem:[#allocation3 + $0xc8] sm:$0xff]
      %v6478 = vld [vmem:[#allocation3 + $0xd0] sm:$0xff]
      %v6479 = vld [vmem:[#allocation3 + $0xd8] sm:$0xff]
      %v6480 = vld [vmem:[#allocation3 + $0xe0] sm:$0xff]
      %v6481 = vld [vmem:[#allocation3 + $0xe8] sm:$0xff]
      %v6482 = vld [vmem:[#allocation3 + $0xf0] sm:$0xff]
      %v6483 = vld [vmem:[#allocation3 + $0xf8] sm:$0xff]
      %v6484 = vadd.f32 %v6452, %v6326
      %v6485 = vadd.f32 %v6453, %v6329
      %v6486 = vadd.f32 %v6454, %v6334
      %v6487 = vadd.f32 %v6455, %v6337
      %v6488 = vadd.f32 %v6456, %v6342
      %v6489 = vadd.f32 %v6457, %v6345
      %v6490 = vadd.f32 %v6458, %v6350
      %v6491 = vadd.f32 %v6459, %v6353
      %v6492 = vadd.f32 %v6460, %v6358
      %v6493 = vadd.f32 %v6461, %v6361
      %v6494 = vadd.f32 %v6462, %v6366
      %v6495 = vadd.f32 %v6463, %v6369
      %v6496 = vadd.f32 %v6464, %v6374
      %v6497 = vadd.f32 %v6465, %v6377
      %v6498 = vadd.f32 %v6466, %v6382
      %v6499 = vadd.f32 %v6467, %v6385
      %v6500 = vadd.f32 %v6468, %v6390
      %v6501 = vadd.f32 %v6469, %v6393
      %v6502 = vadd.f32 %v6470, %v6398
      %v6503 = vadd.f32 %v6471, %v6401
      %v6504 = vadd.f32 %v6472, %v6406
      %v6505 = vadd.f32 %v6473, %v6409
      %v6506 = vadd.f32 %v6474, %v6414
      %v6507 = vadd.f32 %v6475, %v6417
      %v6508 = vadd.f32 %v6476, %v6422
      %v6509 = vadd.f32 %v6477, %v6425
      %v6510 = vadd.f32 %v6478, %v6430
      %v6511 = vadd.f32 %v6479, %v6433
      %v6512 = vadd.f32 %v6480, %v6438
      %v6513 = vadd.f32 %v6481, %v6441
      %v6514 = vadd.f32 %v6482, %v6446
      %v6515 = vadd.f32 %v6483, %v6449
      %6516 = vst [vmem:[#allocation3] sm:$0xff] %v6484
      %6517 = vst [vmem:[#allocation3 + $0x8] sm:$0xff] %v6485
      %6518 = vst [vmem:[#allocation3 + $0x10] sm:$0xff] %v6486
      %6519 = vst [vmem:[#allocation3 + $0x18] sm:$0xff] %v6487
      %6520 = vst [vmem:[#allocation3 + $0x20] sm:$0xff] %v6488
      %6521 = vst [vmem:[#allocation3 + $0x28] sm:$0xff] %v6489
      %6522 = vst [vmem:[#allocation3 + $0x30] sm:$0xff] %v6490
      %6523 = vst [vmem:[#allocation3 + $0x38] sm:$0xff] %v6491
      %6524 = vst [vmem:[#allocation3 + $0x40] sm:$0xff] %v6492
      %6525 = vst [vmem:[#allocation3 + $0x48] sm:$0xff] %v6493
      %6526 = vst [vmem:[#allocation3 + $0x50] sm:$0xff] %v6494
      %6527 = vst [vmem:[#allocation3 + $0x58] sm:$0xff] %v6495
      %6528 = vst [vmem:[#allocation3 + $0x60] sm:$0xff] %v6496
      %6529 = vst [vmem:[#allocation3 + $0x68] sm:$0xff] %v6497
      %6530 = vst [vmem:[#allocation3 + $0x70] sm:$0xff] %v6498
      %6531 = vst [vmem:[#allocation3 + $0x78] sm:$0xff] %v6499
      %6532 = vst [vmem:[#allocation3 + $0x80] sm:$0xff] %v6500
      %6533 = vst [vmem:[#allocation3 + $0x88] sm:$0xff] %v6501
      %6534 = vst [vmem:[#allocation3 + $0x90] sm:$0xff] %v6502
      %6535 = vst [vmem:[#allocation3 + $0x98] sm:$0xff] %v6503
      %6536 = vst [vmem:[#allocation3 + $0xa0] sm:$0xff] %v6504
      %6537 = vst [vmem:[#allocation3 + $0xa8] sm:$0xff] %v6505
      %6538 = vst [vmem:[#allocation3 + $0xb0] sm:$0xff] %v6506
      %6539 = vst [vmem:[#allocation3 + $0xb8] sm:$0xff] %v6507
      %6540 = vst [vmem:[#allocation3 + $0xc0] sm:$0xff] %v6508
      %6541 = vst [vmem:[#allocation3 + $0xc8] sm:$0xff] %v6509
      %6542 = vst [vmem:[#allocation3 + $0xd0] sm:$0xff] %v6510
      %6543 = vst [vmem:[#allocation3 + $0xd8] sm:$0xff] %v6511
      %6544 = vst [vmem:[#allocation3 + $0xe0] sm:$0xff] %v6512
      %6545 = vst [vmem:[#allocation3 + $0xe8] sm:$0xff] %v6513
      %6546 = vst [vmem:[#allocation3 + $0xf0] sm:$0xff] %v6514
      %6547 = vst [vmem:[#allocation3 + $0xf8] sm:$0xff] %v6515
      %v6548 = vld [vmem:[#allocation2 + $0x8] sm:$0xf]
      %v6549 = vld [vmem:[#allocation2 + $0xc] sm:$0xf]
      %v6550 = vld [vmem:[#allocation2 + $0x10] sm:$0xf]
      %v6551 = vld [vmem:[#allocation2 + $0x14] sm:$0xf]
      %v6552 = vld [vmem:[#allocation2 + $0x18] sm:$0xf]
      %v6553 = vld [vmem:[#allocation2 + $0x1c] sm:$0xf]
      %v6554 = vld [vmem:[#allocation2 + $0x20] sm:$0xf]
      %v6555 = vld [vmem:[#allocation2 + $0x24] sm:$0xf]
      %v6556 = vld [vmem:[#allocation2 + $0x28] sm:$0xf]
      %v6557 = vld [vmem:[#allocation2 + $0x2c] sm:$0xf]
      %v6558 = vld [vmem:[#allocation2 + $0x30] sm:$0xf]
      %v6559 = vld [vmem:[#allocation2 + $0x34] sm:$0xf]
      %v6560 = vld [vmem:[#allocation2 + $0x38] sm:$0xf]
      %v6561 = vld [vmem:[#allocation2 + $0x3c] sm:$0xf]
      %v6562 = vld [vmem:[#allocation2 + $0x40] sm:$0xf]
      %v6563 = vld [vmem:[#allocation2 + $0x44] sm:$0xf]
      %v6564 = vld [vmem:[#allocation2 + $0x48] sm:$0xf]
      %v6565 = vld [vmem:[#allocation2 + $0x4c] sm:$0xf]
      %v6566 = vld [vmem:[#allocation2 + $0x50] sm:$0xf]
      %v6567 = vld [vmem:[#allocation2 + $0x54] sm:$0xf]
      %v6568 = vld [vmem:[#allocation2 + $0x58] sm:$0xf]
      %v6569 = vld [vmem:[#allocation2 + $0x5c] sm:$0xf]
      %v6570 = vld [vmem:[#allocation2 + $0x60] sm:$0xf]
      %v6571 = vld [vmem:[#allocation2 + $0x64] sm:$0xf]
      %v6572 = vld [vmem:[#allocation2 + $0x68] sm:$0xf]
      %v6573 = vld [vmem:[#allocation2 + $0x6c] sm:$0xf]
      %v6574 = vld [vmem:[#allocation2 + $0x70] sm:$0xf]
      %v6575 = vld [vmem:[#allocation2 + $0x74] sm:$0xf]
      %v6576 = vld [vmem:[#allocation2 + $0x78] sm:$0xf]
      %v6577 = vld [vmem:[#allocation2 + $0x7c] sm:$0xf]
      %v6578 = vld [vmem:[#allocation2 + $0x80] sm:$0xf]
      %v6579 = vld [vmem:[#allocation2 + $0x84] sm:$0xf]
      %v6580 = vld [vmem:[#allocation2 + $0x88] sm:$0x1]
      %s6581 = scalar_lea.vmem %s4, 128
      %v6582 = vld [vmem:[%s6581] sm:$0xf]
      %v6583 = vld [vmem:[%s6581 + $0x4] sm:$0xf]
      %v6584 = vld [vmem:[%s6581 + $0x8] sm:$0xf]
      %v6585 = vld [vmem:[%s6581 + $0xc] sm:$0xf]
      %v6586 = vld [vmem:[%s6581 + $0x10] sm:$0xf]
      %v6587 = vld [vmem:[%s6581 + $0x14] sm:$0xf]
      %v6588 = vld [vmem:[%s6581 + $0x18] sm:$0xf]
      %v6589 = vld [vmem:[%s6581 + $0x1c] sm:$0xf]
      %v6590 = vld [vmem:[%s6581 + $0x20] sm:$0xf]
      %v6591 = vld [vmem:[%s6581 + $0x24] sm:$0xf]
      %v6592 = vld [vmem:[%s6581 + $0x28] sm:$0xf]
      %v6593 = vld [vmem:[%s6581 + $0x2c] sm:$0xf]
      %v6594 = vld [vmem:[%s6581 + $0x30] sm:$0xf]
      %v6595 = vld [vmem:[%s6581 + $0x34] sm:$0xf]
      %v6596 = vld [vmem:[%s6581 + $0x38] sm:$0xf]
      %v6597 = vld [vmem:[%s6581 + $0x3c] sm:$0xf]
      %v6631 = vunpack.c.l.b16 %v6548
      %v6632 = vunpack.c.l.b16 %v6549
      %v6633 = vunpack.c.l.b16 %v6550
      %v6634 = vunpack.c.l.b16 %v6551
      %v6635 = vunpack.c.l.b16 %v6552
      %v6636 = vunpack.c.l.b16 %v6553
      %v6637 = vunpack.c.l.b16 %v6554
      %v6638 = vunpack.c.l.b16 %v6555
      %v6639 = vunpack.c.l.b16 %v6556
      %v6640 = vunpack.c.l.b16 %v6557
      %v6641 = vunpack.c.l.b16 %v6558
      %v6642 = vunpack.c.l.b16 %v6559
      %v6643 = vunpack.c.l.b16 %v6560
      %v6644 = vunpack.c.l.b16 %v6561
      %v6645 = vunpack.c.l.b16 %v6562
      %v6646 = vunpack.c.l.b16 %v6563
      %v6647 = vunpack.c.l.b16 %v6564
      %v6648 = vunpack.c.l.b16 %v6565
      %v6649 = vunpack.c.l.b16 %v6566
      %v6650 = vunpack.c.l.b16 %v6567
      %v6651 = vunpack.c.l.b16 %v6568
      %v6652 = vunpack.c.l.b16 %v6569
      %v6653 = vunpack.c.l.b16 %v6570
      %v6654 = vunpack.c.l.b16 %v6571
      %v6655 = vunpack.c.l.b16 %v6572
      %v6656 = vunpack.c.l.b16 %v6573
      %v6657 = vunpack.c.l.b16 %v6574
      %v6658 = vunpack.c.l.b16 %v6575
      %v6659 = vunpack.c.l.b16 %v6576
      %v6660 = vunpack.c.l.b16 %v6577
      %v6661 = vunpack.c.l.b16 %v6578
      %v6662 = vunpack.c.l.b16 %v6579
      %v6663 = vunpack.c.l.b16 %v6580
      %v6664 = vpack.c.b16 %v6632, %v6631
      %v6665 = vpack.c.b16 %v6634, %v6633
      %v6666 = vpack.c.b16 %v6636, %v6635
      %v6667 = vpack.c.b16 %v6638, %v6637
      %v6668 = vpack.c.b16 %v6640, %v6639
      %v6669 = vpack.c.b16 %v6642, %v6641
      %v6670 = vpack.c.b16 %v6644, %v6643
      %v6671 = vpack.c.b16 %v6646, %v6645
      %v6672 = vpack.c.b16 %v6648, %v6647
      %v6673 = vpack.c.b16 %v6650, %v6649
      %v6674 = vpack.c.b16 %v6652, %v6651
      %v6675 = vpack.c.b16 %v6654, %v6653
      %v6676 = vpack.c.b16 %v6656, %v6655
      %v6677 = vpack.c.b16 %v6658, %v6657
      %v6678 = vpack.c.b16 %v6660, %v6659
      %v6679 = vpack.c.b16 %v6662, %v6661
      %v6680 = vpack.c.b16 %v6663, %v6663
      %v6682 = vshrl.u32 %v6664, 16
      %v6684 = vshll.u32 %v6664, 16
      %v6686 = vrot.slane %v6684, 1
      %v6687 = vor.u32 %v6682, %v6686
      %v6689 = vshll.u32 %v6665, 16
      %v6691 = vrot.slane %v6689, 1
      %v6692 = vsel %vm1464, %v6687, %v6691
      %v6693 = vshrl.u32 %v6665, 16
      %v6695 = vor.u32 %v6693, %v6691
      %v6697 = vshll.u32 %v6666, 16
      %v6699 = vrot.slane %v6697, 1
      %v6700 = vsel %vm1464, %v6695, %v6699
      %v6701 = vshrl.u32 %v6666, 16
      %v6703 = vor.u32 %v6701, %v6699
      %v6705 = vshll.u32 %v6667, 16
      %v6707 = vrot.slane %v6705, 1
      %v6708 = vsel %vm1464, %v6703, %v6707
      %v6709 = vshrl.u32 %v6667, 16
      %v6711 = vor.u32 %v6709, %v6707
      %v6713 = vshll.u32 %v6668, 16
      %v6715 = vrot.slane %v6713, 1
      %v6716 = vsel %vm1464, %v6711, %v6715
      %v6717 = vshrl.u32 %v6668, 16
      %v6719 = vor.u32 %v6717, %v6715
      %v6721 = vshll.u32 %v6669, 16
      %v6723 = vrot.slane %v6721, 1
      %v6724 = vsel %vm1464, %v6719, %v6723
      %v6725 = vshrl.u32 %v6669, 16
      %v6727 = vor.u32 %v6725, %v6723
      %v6729 = vshll.u32 %v6670, 16
      %v6731 = vrot.slane %v6729, 1
      %v6732 = vsel %vm1464, %v6727, %v6731
      %v6733 = vshrl.u32 %v6670, 16
      %v6735 = vor.u32 %v6733, %v6731
      %v6737 = vshll.u32 %v6671, 16
      %v6739 = vrot.slane %v6737, 1
      %v6740 = vsel %vm1464, %v6735, %v6739
      %v6741 = vshrl.u32 %v6671, 16
      %v6743 = vor.u32 %v6741, %v6739
      %v6745 = vshll.u32 %v6672, 16
      %v6747 = vrot.slane %v6745, 1
      %v6748 = vsel %vm1464, %v6743, %v6747
      %v6749 = vshrl.u32 %v6672, 16
      %v6751 = vor.u32 %v6749, %v6747
      %v6753 = vshll.u32 %v6673, 16
      %v6755 = vrot.slane %v6753, 1
      %v6756 = vsel %vm1464, %v6751, %v6755
      %v6757 = vshrl.u32 %v6673, 16
      %v6759 = vor.u32 %v6757, %v6755
      %v6761 = vshll.u32 %v6674, 16
      %v6763 = vrot.slane %v6761, 1
      %v6764 = vsel %vm1464, %v6759, %v6763
      %v6765 = vshrl.u32 %v6674, 16
      %v6767 = vor.u32 %v6765, %v6763
      %v6769 = vshll.u32 %v6675, 16
      %v6771 = vrot.slane %v6769, 1
      %v6772 = vsel %vm1464, %v6767, %v6771
      %v6773 = vshrl.u32 %v6675, 16
      %v6775 = vor.u32 %v6773, %v6771
      %v6777 = vshll.u32 %v6676, 16
      %v6779 = vrot.slane %v6777, 1
      %v6780 = vsel %vm1464, %v6775, %v6779
      %v6781 = vshrl.u32 %v6676, 16
      %v6783 = vor.u32 %v6781, %v6779
      %v6785 = vshll.u32 %v6677, 16
      %v6787 = vrot.slane %v6785, 1
      %v6788 = vsel %vm1464, %v6783, %v6787
      %v6789 = vshrl.u32 %v6677, 16
      %v6791 = vor.u32 %v6789, %v6787
      %v6793 = vshll.u32 %v6678, 16
      %v6795 = vrot.slane %v6793, 1
      %v6796 = vsel %vm1464, %v6791, %v6795
      %v6797 = vshrl.u32 %v6678, 16
      %v6799 = vor.u32 %v6797, %v6795
      %v6801 = vshll.u32 %v6679, 16
      %v6803 = vrot.slane %v6801, 1
      %v6804 = vsel %vm1464, %v6799, %v6803
      %v6805 = vshrl.u32 %v6679, 16
      %v6807 = vor.u32 %v6805, %v6803
      %v6809 = vshll.u32 %v6680, 16
      %v6811 = vrot.slane %v6809, 1
      %v6812 = vsel %vm1464, %v6807, %v6811
      %v6845 = vunpack.c.l.b16 %v6582
      %v6846 = vunpack.c.l.b16 %v6583
      %v6847 = vunpack.c.l.b16 %v6584
      %v6848 = vunpack.c.l.b16 %v6585
      %v6849 = vunpack.c.l.b16 %v6586
      %v6850 = vunpack.c.l.b16 %v6587
      %v6851 = vunpack.c.l.b16 %v6588
      %v6852 = vunpack.c.l.b16 %v6589
      %v6853 = vunpack.c.l.b16 %v6590
      %v6854 = vunpack.c.l.b16 %v6591
      %v6855 = vunpack.c.l.b16 %v6592
      %v6856 = vunpack.c.l.b16 %v6593
      %v6857 = vunpack.c.l.b16 %v6594
      %v6858 = vunpack.c.l.b16 %v6595
      %v6859 = vunpack.c.l.b16 %v6596
      %v6860 = vunpack.c.l.b16 %v6597
      %v6861 = vpack.c.b16 %v6846, %v6845
      %v6862 = vpack.c.b16 %v6848, %v6847
      %v6863 = vpack.c.b16 %v6850, %v6849
      %v6864 = vpack.c.b16 %v6852, %v6851
      %v6865 = vpack.c.b16 %v6854, %v6853
      %v6866 = vpack.c.b16 %v6856, %v6855
      %v6867 = vpack.c.b16 %v6858, %v6857
      %v6868 = vpack.c.b16 %v6860, %v6859
      %6877 = vmatprep.subr.bf16.mxu0 0
      %6878 = vmatpush1.bf16.msra.mxu0 %v6868
      %6879 = vmatprep.subr.bf16.mxu0 0
      %6880 = vmatpush1.bf16.msra.mxu0 %v6867
      %6881 = vmatprep.subr.bf16.mxu0 0
      %6882 = vmatpush1.bf16.msra.mxu0 %v6866
      %6883 = vmatprep.subr.bf16.mxu0 0
      %6884 = vmatpush1.bf16.msra.mxu0 %v6865
      %6885 = vmatprep.subr.bf16.mxu0 0
      %6886 = vmatpush1.bf16.msra.mxu0 %v6864
      %6887 = vmatprep.subr.bf16.mxu0 0
      %6888 = vmatpush1.bf16.msra.mxu0 %v6863
      %6889 = vmatprep.subr.bf16.mxu0 0
      %6890 = vmatpush1.bf16.msra.mxu0 %v6862
      %6891 = vmatprep.subr.bf16.mxu0 0
      %6892 = vmatpush1.bf16.msra.mxu0 %v6861
      %6893 = vmatprep.subr.bf16.mxu0 0
      %6894 = vmatpush2.bf16.msra.mxu0 0
      %6895 = vmatprep.subr.bf16.mxu0 0
      %6896 = vmatpush2.bf16.msra.mxu0 0
      %6897 = vmatprep.subr.bf16.mxu0 0
      %6898 = vmatpush2.bf16.msra.mxu0 0
      %6899 = vmatprep.subr.bf16.mxu0 0
      %6900 = vmatpush2.bf16.msra.mxu0 0
      %6901 = vmatprep.subr.bf16.mxu0 0
      %6902 = vmatpush2.bf16.msra.mxu0 0
      %6903 = vmatprep.subr.bf16.mxu0 0
      %6904 = vmatpush2.bf16.msra.mxu0 0
      %6905 = vmatprep.subr.bf16.mxu0 0
      %6906 = vmatpush2.bf16.msra.mxu0 0
      %6907 = vmatprep.subr.bf16.mxu0 0
      %6908 = vmatpush2.bf16.msra.mxu0 0
      %6909 = vmatprep.mubr.bf16.mxu0 0
      %6910 = vmatmul.mubr.bf16.gmra.mxu0 %v6692
      %v6911 = vpop.f32.mrf.mxu0
      %v6912 = vadd.f32 0.0, %v6911
      %v6913 = vpop.f32.mrf.mxu0
      %v6914 = vpop.f32.mrf.mxu0
      %v6915 = vadd.f32 0.0, %v6914
      %v6916 = vpop.f32.mrf.mxu0
      %6917 = vmatprep.mubr.bf16.mxu0 0
      %6918 = vmatmul.mubr.bf16.gmra.mxu0 %v6700
      %v6919 = vpop.f32.mrf.mxu0
      %v6920 = vadd.f32 0.0, %v6919
      %v6921 = vpop.f32.mrf.mxu0
      %v6922 = vpop.f32.mrf.mxu0
      %v6923 = vadd.f32 0.0, %v6922
      %v6924 = vpop.f32.mrf.mxu0
      %6925 = vmatprep.mubr.bf16.mxu0 0
      %6926 = vmatmul.mubr.bf16.gmra.mxu0 %v6708
      %v6927 = vpop.f32.mrf.mxu0
      %v6928 = vadd.f32 0.0, %v6927
      %v6929 = vpop.f32.mrf.mxu0
      %v6930 = vpop.f32.mrf.mxu0
      %v6931 = vadd.f32 0.0, %v6930
      %v6932 = vpop.f32.mrf.mxu0
      %6933 = vmatprep.mubr.bf16.mxu0 0
      %6934 = vmatmul.mubr.bf16.gmra.mxu0 %v6716
      %v6935 = vpop.f32.mrf.mxu0
      %v6936 = vadd.f32 0.0, %v6935
      %v6937 = vpop.f32.mrf.mxu0
      %v6938 = vpop.f32.mrf.mxu0
      %v6939 = vadd.f32 0.0, %v6938
      %v6940 = vpop.f32.mrf.mxu0
      %6941 = vmatprep.mubr.bf16.mxu0 0
      %6942 = vmatmul.mubr.bf16.gmra.mxu0 %v6724
      %v6943 = vpop.f32.mrf.mxu0
      %v6944 = vadd.f32 0.0, %v6943
      %v6945 = vpop.f32.mrf.mxu0
      %v6946 = vpop.f32.mrf.mxu0
      %v6947 = vadd.f32 0.0, %v6946
      %v6948 = vpop.f32.mrf.mxu0
      %6949 = vmatprep.mubr.bf16.mxu0 0
      %6950 = vmatmul.mubr.bf16.gmra.mxu0 %v6732
      %v6951 = vpop.f32.mrf.mxu0
      %v6952 = vadd.f32 0.0, %v6951
      %v6953 = vpop.f32.mrf.mxu0
      %v6954 = vpop.f32.mrf.mxu0
      %v6955 = vadd.f32 0.0, %v6954
      %v6956 = vpop.f32.mrf.mxu0
      %6957 = vmatprep.mubr.bf16.mxu0 0
      %6958 = vmatmul.mubr.bf16.gmra.mxu0 %v6740
      %v6959 = vpop.f32.mrf.mxu0
      %v6960 = vadd.f32 0.0, %v6959
      %v6961 = vpop.f32.mrf.mxu0
      %v6962 = vpop.f32.mrf.mxu0
      %v6963 = vadd.f32 0.0, %v6962
      %v6964 = vpop.f32.mrf.mxu0
      %6965 = vmatprep.mubr.bf16.mxu0 0
      %6966 = vmatmul.mubr.bf16.gmra.mxu0 %v6748
      %v6967 = vpop.f32.mrf.mxu0
      %v6968 = vadd.f32 0.0, %v6967
      %v6969 = vpop.f32.mrf.mxu0
      %v6970 = vpop.f32.mrf.mxu0
      %v6971 = vadd.f32 0.0, %v6970
      %v6972 = vpop.f32.mrf.mxu0
      %6973 = vmatprep.mubr.bf16.mxu0 0
      %6974 = vmatmul.mubr.bf16.gmra.mxu0 %v6756
      %v6975 = vpop.f32.mrf.mxu0
      %v6976 = vadd.f32 0.0, %v6975
      %v6977 = vpop.f32.mrf.mxu0
      %v6978 = vpop.f32.mrf.mxu0
      %v6979 = vadd.f32 0.0, %v6978
      %v6980 = vpop.f32.mrf.mxu0
      %6981 = vmatprep.mubr.bf16.mxu0 0
      %6982 = vmatmul.mubr.bf16.gmra.mxu0 %v6764
      %v6983 = vpop.f32.mrf.mxu0
      %v6984 = vadd.f32 0.0, %v6983
      %v6985 = vpop.f32.mrf.mxu0
      %v6986 = vpop.f32.mrf.mxu0
      %v6987 = vadd.f32 0.0, %v6986
      %v6988 = vpop.f32.mrf.mxu0
      %6989 = vmatprep.mubr.bf16.mxu0 0
      %6990 = vmatmul.mubr.bf16.gmra.mxu0 %v6772
      %v6991 = vpop.f32.mrf.mxu0
      %v6992 = vadd.f32 0.0, %v6991
      %v6993 = vpop.f32.mrf.mxu0
      %v6994 = vpop.f32.mrf.mxu0
      %v6995 = vadd.f32 0.0, %v6994
      %v6996 = vpop.f32.mrf.mxu0
      %6997 = vmatprep.mubr.bf16.mxu0 0
      %6998 = vmatmul.mubr.bf16.gmra.mxu0 %v6780
      %v6999 = vpop.f32.mrf.mxu0
      %v7000 = vadd.f32 0.0, %v6999
      %v7001 = vpop.f32.mrf.mxu0
      %v7002 = vpop.f32.mrf.mxu0
      %v7003 = vadd.f32 0.0, %v7002
      %v7004 = vpop.f32.mrf.mxu0
      %7005 = vmatprep.mubr.bf16.mxu0 0
      %7006 = vmatmul.mubr.bf16.gmra.mxu0 %v6788
      %v7007 = vpop.f32.mrf.mxu0
      %v7008 = vadd.f32 0.0, %v7007
      %v7009 = vpop.f32.mrf.mxu0
      %v7010 = vpop.f32.mrf.mxu0
      %v7011 = vadd.f32 0.0, %v7010
      %v7012 = vpop.f32.mrf.mxu0
      %7013 = vmatprep.mubr.bf16.mxu0 0
      %7014 = vmatmul.mubr.bf16.gmra.mxu0 %v6796
      %v7015 = vpop.f32.mrf.mxu0
      %v7016 = vadd.f32 0.0, %v7015
      %v7017 = vpop.f32.mrf.mxu0
      %v7018 = vpop.f32.mrf.mxu0
      %v7019 = vadd.f32 0.0, %v7018
      %v7020 = vpop.f32.mrf.mxu0
      %7021 = vmatprep.mubr.bf16.mxu0 0
      %7022 = vmatmul.mubr.bf16.gmra.mxu0 %v6804
      %v7023 = vpop.f32.mrf.mxu0
      %v7024 = vadd.f32 0.0, %v7023
      %v7025 = vpop.f32.mrf.mxu0
      %v7026 = vpop.f32.mrf.mxu0
      %v7027 = vadd.f32 0.0, %v7026
      %v7028 = vpop.f32.mrf.mxu0
      %7029 = vmatprep.mubr.bf16.mxu0 0
      %7030 = vmatmul.mubr.bf16.gmra.mxu0 %v6812
      %v7031 = vpop.f32.mrf.mxu0
      %v7032 = vadd.f32 0.0, %v7031
      %v7033 = vpop.f32.mrf.mxu0
      %v7034 = vpop.f32.mrf.mxu0
      %v7035 = vadd.f32 0.0, %v7034
      %v7036 = vpop.f32.mrf.mxu0
      %7037 = vdwg.mxu0
      %v7038 = vld [vmem:[#allocation3] sm:$0xff]
      %v7039 = vld [vmem:[#allocation3 + $0x8] sm:$0xff]
      %v7040 = vld [vmem:[#allocation3 + $0x10] sm:$0xff]
      %v7041 = vld [vmem:[#allocation3 + $0x18] sm:$0xff]
      %v7042 = vld [vmem:[#allocation3 + $0x20] sm:$0xff]
      %v7043 = vld [vmem:[#allocation3 + $0x28] sm:$0xff]
      %v7044 = vld [vmem:[#allocation3 + $0x30] sm:$0xff]
      %v7045 = vld [vmem:[#allocation3 + $0x38] sm:$0xff]
      %v7046 = vld [vmem:[#allocation3 + $0x40] sm:$0xff]
      %v7047 = vld [vmem:[#allocation3 + $0x48] sm:$0xff]
      %v7048 = vld [vmem:[#allocation3 + $0x50] sm:$0xff]
      %v7049 = vld [vmem:[#allocation3 + $0x58] sm:$0xff]
      %v7050 = vld [vmem:[#allocation3 + $0x60] sm:$0xff]
      %v7051 = vld [vmem:[#allocation3 + $0x68] sm:$0xff]
      %v7052 = vld [vmem:[#allocation3 + $0x70] sm:$0xff]
      %v7053 = vld [vmem:[#allocation3 + $0x78] sm:$0xff]
      %v7054 = vld [vmem:[#allocation3 + $0x80] sm:$0xff]
      %v7055 = vld [vmem:[#allocation3 + $0x88] sm:$0xff]
      %v7056 = vld [vmem:[#allocation3 + $0x90] sm:$0xff]
      %v7057 = vld [vmem:[#allocation3 + $0x98] sm:$0xff]
      %v7058 = vld [vmem:[#allocation3 + $0xa0] sm:$0xff]
      %v7059 = vld [vmem:[#allocation3 + $0xa8] sm:$0xff]
      %v7060 = vld [vmem:[#allocation3 + $0xb0] sm:$0xff]
      %v7061 = vld [vmem:[#allocation3 + $0xb8] sm:$0xff]
      %v7062 = vld [vmem:[#allocation3 + $0xc0] sm:$0xff]
      %v7063 = vld [vmem:[#allocation3 + $0xc8] sm:$0xff]
      %v7064 = vld [vmem:[#allocation3 + $0xd0] sm:$0xff]
      %v7065 = vld [vmem:[#allocation3 + $0xd8] sm:$0xff]
      %v7066 = vld [vmem:[#allocation3 + $0xe0] sm:$0xff]
      %v7067 = vld [vmem:[#allocation3 + $0xe8] sm:$0xff]
      %v7068 = vld [vmem:[#allocation3 + $0xf0] sm:$0xff]
      %v7069 = vld [vmem:[#allocation3 + $0xf8] sm:$0xff]
      %v7070 = vadd.f32 %v7038, %v6912
      %v7071 = vadd.f32 %v7039, %v6915
      %v7072 = vadd.f32 %v7040, %v6920
      %v7073 = vadd.f32 %v7041, %v6923
      %v7074 = vadd.f32 %v7042, %v6928
      %v7075 = vadd.f32 %v7043, %v6931
      %v7076 = vadd.f32 %v7044, %v6936
      %v7077 = vadd.f32 %v7045, %v6939
      %v7078 = vadd.f32 %v7046, %v6944
      %v7079 = vadd.f32 %v7047, %v6947
      %v7080 = vadd.f32 %v7048, %v6952
      %v7081 = vadd.f32 %v7049, %v6955
      %v7082 = vadd.f32 %v7050, %v6960
      %v7083 = vadd.f32 %v7051, %v6963
      %v7084 = vadd.f32 %v7052, %v6968
      %v7085 = vadd.f32 %v7053, %v6971
      %v7086 = vadd.f32 %v7054, %v6976
      %v7087 = vadd.f32 %v7055, %v6979
      %v7088 = vadd.f32 %v7056, %v6984
      %v7089 = vadd.f32 %v7057, %v6987
      %v7090 = vadd.f32 %v7058, %v6992
      %v7091 = vadd.f32 %v7059, %v6995
      %v7092 = vadd.f32 %v7060, %v7000
      %v7093 = vadd.f32 %v7061, %v7003
      %v7094 = vadd.f32 %v7062, %v7008
      %v7095 = vadd.f32 %v7063, %v7011
      %v7096 = vadd.f32 %v7064, %v7016
      %v7097 = vadd.f32 %v7065, %v7019
      %v7098 = vadd.f32 %v7066, %v7024
      %v7099 = vadd.f32 %v7067, %v7027
      %v7100 = vadd.f32 %v7068, %v7032
      %v7101 = vadd.f32 %v7069, %v7035
      %7102 = vst [vmem:[#allocation3] sm:$0xff] %v7070
      %7103 = vst [vmem:[#allocation3 + $0x8] sm:$0xff] %v7071
      %7104 = vst [vmem:[#allocation3 + $0x10] sm:$0xff] %v7072
      %7105 = vst [vmem:[#allocation3 + $0x18] sm:$0xff] %v7073
      %7106 = vst [vmem:[#allocation3 + $0x20] sm:$0xff] %v7074
      %7107 = vst [vmem:[#allocation3 + $0x28] sm:$0xff] %v7075
      %7108 = vst [vmem:[#allocation3 + $0x30] sm:$0xff] %v7076
      %7109 = vst [vmem:[#allocation3 + $0x38] sm:$0xff] %v7077
      %7110 = vst [vmem:[#allocation3 + $0x40] sm:$0xff] %v7078
      %7111 = vst [vmem:[#allocation3 + $0x48] sm:$0xff] %v7079
      %7112 = vst [vmem:[#allocation3 + $0x50] sm:$0xff] %v7080
      %7113 = vst [vmem:[#allocation3 + $0x58] sm:$0xff] %v7081
      %7114 = vst [vmem:[#allocation3 + $0x60] sm:$0xff] %v7082
      %7115 = vst [vmem:[#allocation3 + $0x68] sm:$0xff] %v7083
      %7116 = vst [vmem:[#allocation3 + $0x70] sm:$0xff] %v7084
      %7117 = vst [vmem:[#allocation3 + $0x78] sm:$0xff] %v7085
      %7118 = vst [vmem:[#allocation3 + $0x80] sm:$0xff] %v7086
      %7119 = vst [vmem:[#allocation3 + $0x88] sm:$0xff] %v7087
      %7120 = vst [vmem:[#allocation3 + $0x90] sm:$0xff] %v7088
      %7121 = vst [vmem:[#allocation3 + $0x98] sm:$0xff] %v7089
      %7122 = vst [vmem:[#allocation3 + $0xa0] sm:$0xff] %v7090
      %7123 = vst [vmem:[#allocation3 + $0xa8] sm:$0xff] %v7091
      %7124 = vst [vmem:[#allocation3 + $0xb0] sm:$0xff] %v7092
      %7125 = vst [vmem:[#allocation3 + $0xb8] sm:$0xff] %v7093
      %7126 = vst [vmem:[#allocation3 + $0xc0] sm:$0xff] %v7094
      %7127 = vst [vmem:[#allocation3 + $0xc8] sm:$0xff] %v7095
      %7128 = vst [vmem:[#allocation3 + $0xd0] sm:$0xff] %v7096
      %7129 = vst [vmem:[#allocation3 + $0xd8] sm:$0xff] %v7097
      %7130 = vst [vmem:[#allocation3 + $0xe0] sm:$0xff] %v7098
      %7131 = vst [vmem:[#allocation3 + $0xe8] sm:$0xff] %v7099
      %7132 = vst [vmem:[#allocation3 + $0xf0] sm:$0xff] %v7100
      %7133 = vst [vmem:[#allocation3 + $0xf8] sm:$0xff] %v7101
      %v7134 = vld [vmem:[#allocation2 + $0xc] sm:$0x8]
      %v7135 = vld [vmem:[#allocation2 + $0x10] sm:$0xf]
      %v7136 = vld [vmem:[#allocation2 + $0x14] sm:$0xf]
      %v7137 = vld [vmem:[#allocation2 + $0x18] sm:$0xf]
      %v7138 = vld [vmem:[#allocation2 + $0x1c] sm:$0xf]
      %v7139 = vld [vmem:[#allocation2 + $0x20] sm:$0xf]
      %v7140 = vld [vmem:[#allocation2 + $0x24] sm:$0xf]
      %v7141 = vld [vmem:[#allocation2 + $0x28] sm:$0xf]
      %v7142 = vld [vmem:[#allocation2 + $0x2c] sm:$0xf]
      %v7143 = vld [vmem:[#allocation2 + $0x30] sm:$0xf]
      %v7144 = vld [vmem:[#allocation2 + $0x34] sm:$0xf]
      %v7145 = vld [vmem:[#allocation2 + $0x38] sm:$0xf]
      %v7146 = vld [vmem:[#allocation2 + $0x3c] sm:$0xf]
      %v7147 = vld [vmem:[#allocation2 + $0x40] sm:$0xf]
      %v7148 = vld [vmem:[#allocation2 + $0x44] sm:$0xf]
      %v7149 = vld [vmem:[#allocation2 + $0x48] sm:$0xf]
      %v7150 = vld [vmem:[#allocation2 + $0x4c] sm:$0xf]
      %v7151 = vld [vmem:[#allocation2 + $0x50] sm:$0xf]
      %v7152 = vld [vmem:[#allocation2 + $0x54] sm:$0xf]
      %v7153 = vld [vmem:[#allocation2 + $0x58] sm:$0xf]
      %v7154 = vld [vmem:[#allocation2 + $0x5c] sm:$0xf]
      %v7155 = vld [vmem:[#allocation2 + $0x60] sm:$0xf]
      %v7156 = vld [vmem:[#allocation2 + $0x64] sm:$0xf]
      %v7157 = vld [vmem:[#allocation2 + $0x68] sm:$0xf]
      %v7158 = vld [vmem:[#allocation2 + $0x6c] sm:$0xf]
      %v7159 = vld [vmem:[#allocation2 + $0x70] sm:$0xf]
      %v7160 = vld [vmem:[#allocation2 + $0x74] sm:$0xf]
      %v7161 = vld [vmem:[#allocation2 + $0x78] sm:$0xf]
      %v7162 = vld [vmem:[#allocation2 + $0x7c] sm:$0xf]
      %v7163 = vld [vmem:[#allocation2 + $0x80] sm:$0xf]
      %v7164 = vld [vmem:[#allocation2 + $0x84] sm:$0xf]
      %v7165 = vld [vmem:[#allocation2 + $0x88] sm:$0xf]
      %v7166 = vld [vmem:[#allocation2 + $0x8c] sm:$0xf]
      %s7167 = scalar_lea.vmem %s4, 192
      %v7168 = vld [vmem:[%s7167] sm:$0xf]
      %v7169 = vld [vmem:[%s7167 + $0x4] sm:$0xf]
      %v7170 = vld [vmem:[%s7167 + $0x8] sm:$0xf]
      %v7171 = vld [vmem:[%s7167 + $0xc] sm:$0xf]
      %v7172 = vld [vmem:[%s7167 + $0x10] sm:$0xf]
      %v7173 = vld [vmem:[%s7167 + $0x14] sm:$0xf]
      %v7174 = vld [vmem:[%s7167 + $0x18] sm:$0xf]
      %v7175 = vld [vmem:[%s7167 + $0x1c] sm:$0xf]
      %v7176 = vld [vmem:[%s7167 + $0x20] sm:$0xf]
      %v7177 = vld [vmem:[%s7167 + $0x24] sm:$0xf]
      %v7178 = vld [vmem:[%s7167 + $0x28] sm:$0xf]
      %v7179 = vld [vmem:[%s7167 + $0x2c] sm:$0xf]
      %v7180 = vld [vmem:[%s7167 + $0x30] sm:$0xf]
      %v7181 = vld [vmem:[%s7167 + $0x34] sm:$0xf]
      %v7182 = vld [vmem:[%s7167 + $0x38] sm:$0xf]
      %v7183 = vld [vmem:[%s7167 + $0x3c] sm:$0xf]
      %v7217 = vunpack.c.l.b16 %v7134
      %v7218 = vunpack.c.l.b16 %v7135
      %v7219 = vunpack.c.l.b16 %v7136
      %v7220 = vunpack.c.l.b16 %v7137
      %v7221 = vunpack.c.l.b16 %v7138
      %v7222 = vunpack.c.l.b16 %v7139
      %v7223 = vunpack.c.l.b16 %v7140
      %v7224 = vunpack.c.l.b16 %v7141
      %v7225 = vunpack.c.l.b16 %v7142
      %v7226 = vunpack.c.l.b16 %v7143
      %v7227 = vunpack.c.l.b16 %v7144
      %v7228 = vunpack.c.l.b16 %v7145
      %v7229 = vunpack.c.l.b16 %v7146
      %v7230 = vunpack.c.l.b16 %v7147
      %v7231 = vunpack.c.l.b16 %v7148
      %v7232 = vunpack.c.l.b16 %v7149
      %v7233 = vunpack.c.l.b16 %v7150
      %v7234 = vunpack.c.l.b16 %v7151
      %v7235 = vunpack.c.l.b16 %v7152
      %v7236 = vunpack.c.l.b16 %v7153
      %v7237 = vunpack.c.l.b16 %v7154
      %v7238 = vunpack.c.l.b16 %v7155
      %v7239 = vunpack.c.l.b16 %v7156
      %v7240 = vunpack.c.l.b16 %v7157
      %v7241 = vunpack.c.l.b16 %v7158
      %v7242 = vunpack.c.l.b16 %v7159
      %v7243 = vunpack.c.l.b16 %v7160
      %v7244 = vunpack.c.l.b16 %v7161
      %v7245 = vunpack.c.l.b16 %v7162
      %v7246 = vunpack.c.l.b16 %v7163
      %v7247 = vunpack.c.l.b16 %v7164
      %v7248 = vunpack.c.l.b16 %v7165
      %v7249 = vunpack.c.l.b16 %v7166
      %v7250 = vpack.c.b16 %v7218, %v7217
      %v7251 = vpack.c.b16 %v7220, %v7219
      %v7252 = vpack.c.b16 %v7222, %v7221
      %v7253 = vpack.c.b16 %v7224, %v7223
      %v7254 = vpack.c.b16 %v7226, %v7225
      %v7255 = vpack.c.b16 %v7228, %v7227
      %v7256 = vpack.c.b16 %v7230, %v7229
      %v7257 = vpack.c.b16 %v7232, %v7231
      %v7258 = vpack.c.b16 %v7234, %v7233
      %v7259 = vpack.c.b16 %v7236, %v7235
      %v7260 = vpack.c.b16 %v7238, %v7237
      %v7261 = vpack.c.b16 %v7240, %v7239
      %v7262 = vpack.c.b16 %v7242, %v7241
      %v7263 = vpack.c.b16 %v7244, %v7243
      %v7264 = vpack.c.b16 %v7246, %v7245
      %v7265 = vpack.c.b16 %v7248, %v7247
      %v7266 = vpack.c.b16 %v7249, %v7249
      %v7268 = vshrl.u32 %v7250, 16
      %v7270 = vrot.slane %v7268, 3
      %v7271 = vshll.u32 %v7250, 16
      %v7273 = vrot.slane %v7271, 4
      %v7274 = vor.u32 %v7270, %v7273
      %v7276 = vshrl.u32 %v7251, 16
      %v7278 = vrot.slane %v7276, 3
      %v7279 = vshll.u32 %v7251, 16
      %v7281 = vrot.slane %v7279, 4
      %v7282 = vor.u32 %v7278, %v7281
      %v7283 = vsel %vm502, %v7274, %v7282
      %v7285 = vshrl.u32 %v7252, 16
      %v7287 = vrot.slane %v7285, 3
      %v7288 = vshll.u32 %v7252, 16
      %v7290 = vrot.slane %v7288, 4
      %v7291 = vor.u32 %v7287, %v7290
      %v7292 = vsel %vm502, %v7282, %v7291
      %v7294 = vshrl.u32 %v7253, 16
      %v7296 = vrot.slane %v7294, 3
      %v7297 = vshll.u32 %v7253, 16
      %v7299 = vrot.slane %v7297, 4
      %v7300 = vor.u32 %v7296, %v7299
      %v7301 = vsel %vm502, %v7291, %v7300
      %v7303 = vshrl.u32 %v7254, 16
      %v7305 = vrot.slane %v7303, 3
      %v7306 = vshll.u32 %v7254, 16
      %v7308 = vrot.slane %v7306, 4
      %v7309 = vor.u32 %v7305, %v7308
      %v7310 = vsel %vm502, %v7300, %v7309
      %v7312 = vshrl.u32 %v7255, 16
      %v7314 = vrot.slane %v7312, 3
      %v7315 = vshll.u32 %v7255, 16
      %v7317 = vrot.slane %v7315, 4
      %v7318 = vor.u32 %v7314, %v7317
      %v7319 = vsel %vm502, %v7309, %v7318
      %v7321 = vshrl.u32 %v7256, 16
      %v7323 = vrot.slane %v7321, 3
      %v7324 = vshll.u32 %v7256, 16
      %v7326 = vrot.slane %v7324, 4
      %v7327 = vor.u32 %v7323, %v7326
      %v7328 = vsel %vm502, %v7318, %v7327
      %v7330 = vshrl.u32 %v7257, 16
      %v7332 = vrot.slane %v7330, 3
      %v7333 = vshll.u32 %v7257, 16
      %v7335 = vrot.slane %v7333, 4
      %v7336 = vor.u32 %v7332, %v7335
      %v7337 = vsel %vm502, %v7327, %v7336
      %v7339 = vshrl.u32 %v7258, 16
      %v7341 = vrot.slane %v7339, 3
      %v7342 = vshll.u32 %v7258, 16
      %v7344 = vrot.slane %v7342, 4
      %v7345 = vor.u32 %v7341, %v7344
      %v7346 = vsel %vm502, %v7336, %v7345
      %v7348 = vshrl.u32 %v7259, 16
      %v7350 = vrot.slane %v7348, 3
      %v7351 = vshll.u32 %v7259, 16
      %v7353 = vrot.slane %v7351, 4
      %v7354 = vor.u32 %v7350, %v7353
      %v7355 = vsel %vm502, %v7345, %v7354
      %v7357 = vshrl.u32 %v7260, 16
      %v7359 = vrot.slane %v7357, 3
      %v7360 = vshll.u32 %v7260, 16
      %v7362 = vrot.slane %v7360, 4
      %v7363 = vor.u32 %v7359, %v7362
      %v7364 = vsel %vm502, %v7354, %v7363
      %v7366 = vshrl.u32 %v7261, 16
      %v7368 = vrot.slane %v7366, 3
      %v7369 = vshll.u32 %v7261, 16
      %v7371 = vrot.slane %v7369, 4
      %v7372 = vor.u32 %v7368, %v7371
      %v7373 = vsel %vm502, %v7363, %v7372
      %v7375 = vshrl.u32 %v7262, 16
      %v7377 = vrot.slane %v7375, 3
      %v7378 = vshll.u32 %v7262, 16
      %v7380 = vrot.slane %v7378, 4
      %v7381 = vor.u32 %v7377, %v7380
      %v7382 = vsel %vm502, %v7372, %v7381
      %v7384 = vshrl.u32 %v7263, 16
      %v7386 = vrot.slane %v7384, 3
      %v7387 = vshll.u32 %v7263, 16
      %v7389 = vrot.slane %v7387, 4
      %v7390 = vor.u32 %v7386, %v7389
      %v7391 = vsel %vm502, %v7381, %v7390
      %v7393 = vshrl.u32 %v7264, 16
      %v7395 = vrot.slane %v7393, 3
      %v7396 = vshll.u32 %v7264, 16
      %v7398 = vrot.slane %v7396, 4
      %v7399 = vor.u32 %v7395, %v7398
      %v7400 = vsel %vm502, %v7390, %v7399
      %v7402 = vshrl.u32 %v7265, 16
      %v7404 = vrot.slane %v7402, 3
      %v7405 = vshll.u32 %v7265, 16
      %v7407 = vrot.slane %v7405, 4
      %v7408 = vor.u32 %v7404, %v7407
      %v7409 = vsel %vm502, %v7399, %v7408
      %v7411 = vshrl.u32 %v7266, 16
      %v7413 = vrot.slane %v7411, 3
      %v7414 = vshll.u32 %v7266, 16
      %v7416 = vrot.slane %v7414, 4
      %v7417 = vor.u32 %v7413, %v7416
      %v7418 = vsel %vm502, %v7408, %v7417
      %v7451 = vunpack.c.l.b16 %v7168
      %v7452 = vunpack.c.l.b16 %v7169
      %v7453 = vunpack.c.l.b16 %v7170
      %v7454 = vunpack.c.l.b16 %v7171
      %v7455 = vunpack.c.l.b16 %v7172
      %v7456 = vunpack.c.l.b16 %v7173
      %v7457 = vunpack.c.l.b16 %v7174
      %v7458 = vunpack.c.l.b16 %v7175
      %v7459 = vunpack.c.l.b16 %v7176
      %v7460 = vunpack.c.l.b16 %v7177
      %v7461 = vunpack.c.l.b16 %v7178
      %v7462 = vunpack.c.l.b16 %v7179
      %v7463 = vunpack.c.l.b16 %v7180
      %v7464 = vunpack.c.l.b16 %v7181
      %v7465 = vunpack.c.l.b16 %v7182
      %v7466 = vunpack.c.l.b16 %v7183
      %v7467 = vpack.c.b16 %v7452, %v7451
      %v7468 = vpack.c.b16 %v7454, %v7453
      %v7469 = vpack.c.b16 %v7456, %v7455
      %v7470 = vpack.c.b16 %v7458, %v7457
      %v7471 = vpack.c.b16 %v7460, %v7459
      %v7472 = vpack.c.b16 %v7462, %v7461
      %v7473 = vpack.c.b16 %v7464, %v7463
      %v7474 = vpack.c.b16 %v7466, %v7465
      %7483 = vmatprep.subr.bf16.mxu0 0
      %7484 = vmatpush1.bf16.msra.mxu0 %v7474
      %7485 = vmatprep.subr.bf16.mxu0 0
      %7486 = vmatpush1.bf16.msra.mxu0 %v7473
      %7487 = vmatprep.subr.bf16.mxu0 0
      %7488 = vmatpush1.bf16.msra.mxu0 %v7472
      %7489 = vmatprep.subr.bf16.mxu0 0
      %7490 = vmatpush1.bf16.msra.mxu0 %v7471
      %7491 = vmatprep.subr.bf16.mxu0 0
      %7492 = vmatpush1.bf16.msra.mxu0 %v7470
      %7493 = vmatprep.subr.bf16.mxu0 0
      %7494 = vmatpush1.bf16.msra.mxu0 %v7469
      %7495 = vmatprep.subr.bf16.mxu0 0
      %7496 = vmatpush1.bf16.msra.mxu0 %v7468
      %7497 = vmatprep.subr.bf16.mxu0 0
      %7498 = vmatpush1.bf16.msra.mxu0 %v7467
      %7499 = vmatprep.subr.bf16.mxu0 0
      %7500 = vmatpush2.bf16.msra.mxu0 0
      %7501 = vmatprep.subr.bf16.mxu0 0
      %7502 = vmatpush2.bf16.msra.mxu0 0
      %7503 = vmatprep.subr.bf16.mxu0 0
      %7504 = vmatpush2.bf16.msra.mxu0 0
      %7505 = vmatprep.subr.bf16.mxu0 0
      %7506 = vmatpush2.bf16.msra.mxu0 0
      %7507 = vmatprep.subr.bf16.mxu0 0
      %7508 = vmatpush2.bf16.msra.mxu0 0
      %7509 = vmatprep.subr.bf16.mxu0 0
      %7510 = vmatpush2.bf16.msra.mxu0 0
      %7511 = vmatprep.subr.bf16.mxu0 0
      %7512 = vmatpush2.bf16.msra.mxu0 0
      %7513 = vmatprep.subr.bf16.mxu0 0
      %7514 = vmatpush2.bf16.msra.mxu0 0
      %7515 = vmatprep.mubr.bf16.mxu0 0
      %7516 = vmatmul.mubr.bf16.gmra.mxu0 %v7283
      %v7517 = vpop.f32.mrf.mxu0
      %v7518 = vadd.f32 0.0, %v7517
      %v7519 = vpop.f32.mrf.mxu0
      %v7520 = vpop.f32.mrf.mxu0
      %v7521 = vadd.f32 0.0, %v7520
      %v7522 = vpop.f32.mrf.mxu0
      %7523 = vmatprep.mubr.bf16.mxu0 0
      %7524 = vmatmul.mubr.bf16.gmra.mxu0 %v7292
      %v7525 = vpop.f32.mrf.mxu0
      %v7526 = vadd.f32 0.0, %v7525
      %v7527 = vpop.f32.mrf.mxu0
      %v7528 = vpop.f32.mrf.mxu0
      %v7529 = vadd.f32 0.0, %v7528
      %v7530 = vpop.f32.mrf.mxu0
      %7531 = vmatprep.mubr.bf16.mxu0 0
      %7532 = vmatmul.mubr.bf16.gmra.mxu0 %v7301
      %v7533 = vpop.f32.mrf.mxu0
      %v7534 = vadd.f32 0.0, %v7533
      %v7535 = vpop.f32.mrf.mxu0
      %v7536 = vpop.f32.mrf.mxu0
      %v7537 = vadd.f32 0.0, %v7536
      %v7538 = vpop.f32.mrf.mxu0
      %7539 = vmatprep.mubr.bf16.mxu0 0
      %7540 = vmatmul.mubr.bf16.gmra.mxu0 %v7310
      %v7541 = vpop.f32.mrf.mxu0
      %v7542 = vadd.f32 0.0, %v7541
      %v7543 = vpop.f32.mrf.mxu0
      %v7544 = vpop.f32.mrf.mxu0
      %v7545 = vadd.f32 0.0, %v7544
      %v7546 = vpop.f32.mrf.mxu0
      %7547 = vmatprep.mubr.bf16.mxu0 0
      %7548 = vmatmul.mubr.bf16.gmra.mxu0 %v7319
      %v7549 = vpop.f32.mrf.mxu0
      %v7550 = vadd.f32 0.0, %v7549
      %v7551 = vpop.f32.mrf.mxu0
      %v7552 = vpop.f32.mrf.mxu0
      %v7553 = vadd.f32 0.0, %v7552
      %v7554 = vpop.f32.mrf.mxu0
      %7555 = vmatprep.mubr.bf16.mxu0 0
      %7556 = vmatmul.mubr.bf16.gmra.mxu0 %v7328
      %v7557 = vpop.f32.mrf.mxu0
      %v7558 = vadd.f32 0.0, %v7557
      %v7559 = vpop.f32.mrf.mxu0
      %v7560 = vpop.f32.mrf.mxu0
      %v7561 = vadd.f32 0.0, %v7560
      %v7562 = vpop.f32.mrf.mxu0
      %7563 = vmatprep.mubr.bf16.mxu0 0
      %7564 = vmatmul.mubr.bf16.gmra.mxu0 %v7337
      %v7565 = vpop.f32.mrf.mxu0
      %v7566 = vadd.f32 0.0, %v7565
      %v7567 = vpop.f32.mrf.mxu0
      %v7568 = vpop.f32.mrf.mxu0
      %v7569 = vadd.f32 0.0, %v7568
      %v7570 = vpop.f32.mrf.mxu0
      %7571 = vmatprep.mubr.bf16.mxu0 0
      %7572 = vmatmul.mubr.bf16.gmra.mxu0 %v7346
      %v7573 = vpop.f32.mrf.mxu0
      %v7574 = vadd.f32 0.0, %v7573
      %v7575 = vpop.f32.mrf.mxu0
      %v7576 = vpop.f32.mrf.mxu0
      %v7577 = vadd.f32 0.0, %v7576
      %v7578 = vpop.f32.mrf.mxu0
      %7579 = vmatprep.mubr.bf16.mxu0 0
      %7580 = vmatmul.mubr.bf16.gmra.mxu0 %v7355
      %v7581 = vpop.f32.mrf.mxu0
      %v7582 = vadd.f32 0.0, %v7581
      %v7583 = vpop.f32.mrf.mxu0
      %v7584 = vpop.f32.mrf.mxu0
      %v7585 = vadd.f32 0.0, %v7584
      %v7586 = vpop.f32.mrf.mxu0
      %7587 = vmatprep.mubr.bf16.mxu0 0
      %7588 = vmatmul.mubr.bf16.gmra.mxu0 %v7364
      %v7589 = vpop.f32.mrf.mxu0
      %v7590 = vadd.f32 0.0, %v7589
      %v7591 = vpop.f32.mrf.mxu0
      %v7592 = vpop.f32.mrf.mxu0
      %v7593 = vadd.f32 0.0, %v7592
      %v7594 = vpop.f32.mrf.mxu0
      %7595 = vmatprep.mubr.bf16.mxu0 0
      %7596 = vmatmul.mubr.bf16.gmra.mxu0 %v7373
      %v7597 = vpop.f32.mrf.mxu0
      %v7598 = vadd.f32 0.0, %v7597
      %v7599 = vpop.f32.mrf.mxu0
      %v7600 = vpop.f32.mrf.mxu0
      %v7601 = vadd.f32 0.0, %v7600
      %v7602 = vpop.f32.mrf.mxu0
      %7603 = vmatprep.mubr.bf16.mxu0 0
      %7604 = vmatmul.mubr.bf16.gmra.mxu0 %v7382
      %v7605 = vpop.f32.mrf.mxu0
      %v7606 = vadd.f32 0.0, %v7605
      %v7607 = vpop.f32.mrf.mxu0
      %v7608 = vpop.f32.mrf.mxu0
      %v7609 = vadd.f32 0.0, %v7608
      %v7610 = vpop.f32.mrf.mxu0
      %7611 = vmatprep.mubr.bf16.mxu0 0
      %7612 = vmatmul.mubr.bf16.gmra.mxu0 %v7391
      %v7613 = vpop.f32.mrf.mxu0
      %v7614 = vadd.f32 0.0, %v7613
      %v7615 = vpop.f32.mrf.mxu0
      %v7616 = vpop.f32.mrf.mxu0
      %v7617 = vadd.f32 0.0, %v7616
      %v7618 = vpop.f32.mrf.mxu0
      %7619 = vmatprep.mubr.bf16.mxu0 0
      %7620 = vmatmul.mubr.bf16.gmra.mxu0 %v7400
      %v7621 = vpop.f32.mrf.mxu0
      %v7622 = vadd.f32 0.0, %v7621
      %v7623 = vpop.f32.mrf.mxu0
      %v7624 = vpop.f32.mrf.mxu0
      %v7625 = vadd.f32 0.0, %v7624
      %v7626 = vpop.f32.mrf.mxu0
      %7627 = vmatprep.mubr.bf16.mxu0 0
      %7628 = vmatmul.mubr.bf16.gmra.mxu0 %v7409
      %v7629 = vpop.f32.mrf.mxu0
      %v7630 = vadd.f32 0.0, %v7629
      %v7631 = vpop.f32.mrf.mxu0
      %v7632 = vpop.f32.mrf.mxu0
      %v7633 = vadd.f32 0.0, %v7632
      %v7634 = vpop.f32.mrf.mxu0
      %7635 = vmatprep.mubr.bf16.mxu0 0
      %7636 = vmatmul.mubr.bf16.gmra.mxu0 %v7418
      %v7637 = vpop.f32.mrf.mxu0
      %v7638 = vadd.f32 0.0, %v7637
      %v7639 = vpop.f32.mrf.mxu0
      %v7640 = vpop.f32.mrf.mxu0
      %v7641 = vadd.f32 0.0, %v7640
      %v7642 = vpop.f32.mrf.mxu0
      %7643 = vdwg.mxu0
      %v7644 = vld [vmem:[#allocation3] sm:$0xff]
      %v7645 = vld [vmem:[#allocation3 + $0x8] sm:$0xff]
      %v7646 = vld [vmem:[#allocation3 + $0x10] sm:$0xff]
      %v7647 = vld [vmem:[#allocation3 + $0x18] sm:$0xff]
      %v7648 = vld [vmem:[#allocation3 + $0x20] sm:$0xff]
      %v7649 = vld [vmem:[#allocation3 + $0x28] sm:$0xff]
      %v7650 = vld [vmem:[#allocation3 + $0x30] sm:$0xff]
      %v7651 = vld [vmem:[#allocation3 + $0x38] sm:$0xff]
      %v7652 = vld [vmem:[#allocation3 + $0x40] sm:$0xff]
      %v7653 = vld [vmem:[#allocation3 + $0x48] sm:$0xff]
      %v7654 = vld [vmem:[#allocation3 + $0x50] sm:$0xff]
      %v7655 = vld [vmem:[#allocation3 + $0x58] sm:$0xff]
      %v7656 = vld [vmem:[#allocation3 + $0x60] sm:$0xff]
      %v7657 = vld [vmem:[#allocation3 + $0x68] sm:$0xff]
      %v7658 = vld [vmem:[#allocation3 + $0x70] sm:$0xff]
      %v7659 = vld [vmem:[#allocation3 + $0x78] sm:$0xff]
      %v7660 = vld [vmem:[#allocation3 + $0x80] sm:$0xff]
      %v7661 = vld [vmem:[#allocation3 + $0x88] sm:$0xff]
      %v7662 = vld [vmem:[#allocation3 + $0x90] sm:$0xff]
      %v7663 = vld [vmem:[#allocation3 + $0x98] sm:$0xff]
      %v7664 = vld [vmem:[#allocation3 + $0xa0] sm:$0xff]
      %v7665 = vld [vmem:[#allocation3 + $0xa8] sm:$0xff]
      %v7666 = vld [vmem:[#allocation3 + $0xb0] sm:$0xff]
      %v7667 = vld [vmem:[#allocation3 + $0xb8] sm:$0xff]
      %v7668 = vld [vmem:[#allocation3 + $0xc0] sm:$0xff]
      %v7669 = vld [vmem:[#allocation3 + $0xc8] sm:$0xff]
      %v7670 = vld [vmem:[#allocation3 + $0xd0] sm:$0xff]
      %v7671 = vld [vmem:[#allocation3 + $0xd8] sm:$0xff]
      %v7672 = vld [vmem:[#allocation3 + $0xe0] sm:$0xff]
      %v7673 = vld [vmem:[#allocation3 + $0xe8] sm:$0xff]
      %v7674 = vld [vmem:[#allocation3 + $0xf0] sm:$0xff]
      %v7675 = vld [vmem:[#allocation3 + $0xf8] sm:$0xff]
      %v7676 = vadd.f32 %v7644, %v7518
      %v7677 = vadd.f32 %v7645, %v7521
      %v7678 = vadd.f32 %v7646, %v7526
      %v7679 = vadd.f32 %v7647, %v7529
      %v7680 = vadd.f32 %v7648, %v7534
      %v7681 = vadd.f32 %v7649, %v7537
      %v7682 = vadd.f32 %v7650, %v7542
      %v7683 = vadd.f32 %v7651, %v7545
      %v7684 = vadd.f32 %v7652, %v7550
      %v7685 = vadd.f32 %v7653, %v7553
      %v7686 = vadd.f32 %v7654, %v7558
      %v7687 = vadd.f32 %v7655, %v7561
      %v7688 = vadd.f32 %v7656, %v7566
      %v7689 = vadd.f32 %v7657, %v7569
      %v7690 = vadd.f32 %v7658, %v7574
      %v7691 = vadd.f32 %v7659, %v7577
      %v7692 = vadd.f32 %v7660, %v7582
      %v7693 = vadd.f32 %v7661, %v7585
      %v7694 = vadd.f32 %v7662, %v7590
      %v7695 = vadd.f32 %v7663, %v7593
      %v7696 = vadd.f32 %v7664, %v7598
      %v7697 = vadd.f32 %v7665, %v7601
      %v7698 = vadd.f32 %v7666, %v7606
      %v7699 = vadd.f32 %v7667, %v7609
      %v7700 = vadd.f32 %v7668, %v7614
      %v7701 = vadd.f32 %v7669, %v7617
      %v7702 = vadd.f32 %v7670, %v7622
      %v7703 = vadd.f32 %v7671, %v7625
      %v7704 = vadd.f32 %v7672, %v7630
      %v7705 = vadd.f32 %v7673, %v7633
      %v7706 = vadd.f32 %v7674, %v7638
      %v7707 = vadd.f32 %v7675, %v7641
      %7708 = vst [vmem:[#allocation3] sm:$0xff] %v7676
      %7709 = vst [vmem:[#allocation3 + $0x8] sm:$0xff] %v7677
      %7710 = vst [vmem:[#allocation3 + $0x10] sm:$0xff] %v7678
      %7711 = vst [vmem:[#allocation3 + $0x18] sm:$0xff] %v7679
      %7712 = vst [vmem:[#allocation3 + $0x20] sm:$0xff] %v7680
      %7713 = vst [vmem:[#allocation3 + $0x28] sm:$0xff] %v7681
      %7714 = vst [vmem:[#allocation3 + $0x30] sm:$0xff] %v7682
      %7715 = vst [vmem:[#allocation3 + $0x38] sm:$0xff] %v7683
      %7716 = vst [vmem:[#allocation3 + $0x40] sm:$0xff] %v7684
      %7717 = vst [vmem:[#allocation3 + $0x48] sm:$0xff] %v7685
      %7718 = vst [vmem:[#allocation3 + $0x50] sm:$0xff] %v7686
      %7719 = vst [vmem:[#allocation3 + $0x58] sm:$0xff] %v7687
      %7720 = vst [vmem:[#allocation3 + $0x60] sm:$0xff] %v7688
      %7721 = vst [vmem:[#allocation3 + $0x68] sm:$0xff] %v7689
      %7722 = vst [vmem:[#allocation3 + $0x70] sm:$0xff] %v7690
      %7723 = vst [vmem:[#allocation3 + $0x78] sm:$0xff] %v7691
      %7724 = vst [vmem:[#allocation3 + $0x80] sm:$0xff] %v7692
      %7725 = vst [vmem:[#allocation3 + $0x88] sm:$0xff] %v7693
      %7726 = vst [vmem:[#allocation3 + $0x90] sm:$0xff] %v7694
      %7727 = vst [vmem:[#allocation3 + $0x98] sm:$0xff] %v7695
      %7728 = vst [vmem:[#allocation3 + $0xa0] sm:$0xff] %v7696
      %7729 = vst [vmem:[#allocation3 + $0xa8] sm:$0xff] %v7697
      %7730 = vst [vmem:[#allocation3 + $0xb0] sm:$0xff] %v7698
      %7731 = vst [vmem:[#allocation3 + $0xb8] sm:$0xff] %v7699
      %7732 = vst [vmem:[#allocation3 + $0xc0] sm:$0xff] %v7700
      %7733 = vst [vmem:[#allocation3 + $0xc8] sm:$0xff] %v7701
      %7734 = vst [vmem:[#allocation3 + $0xd0] sm:$0xff] %v7702
      %7735 = vst [vmem:[#allocation3 + $0xd8] sm:$0xff] %v7703
      %7736 = vst [vmem:[#allocation3 + $0xe0] sm:$0xff] %v7704
      %7737 = vst [vmem:[#allocation3 + $0xe8] sm:$0xff] %v7705
      %7738 = vst [vmem:[#allocation3 + $0xf0] sm:$0xff] %v7706
      %7739 = vst [vmem:[#allocation3 + $0xf8] sm:$0xff] %v7707
      %v7740 = vld [vmem:[#allocation2 + $0x10] sm:$0xf]
      %v7741 = vld [vmem:[#allocation2 + $0x14] sm:$0xf]
      %v7742 = vld [vmem:[#allocation2 + $0x18] sm:$0xf]
      %v7743 = vld [vmem:[#allocation2 + $0x1c] sm:$0xf]
      %v7744 = vld [vmem:[#allocation2 + $0x20] sm:$0xf]
      %v7745 = vld [vmem:[#allocation2 + $0x24] sm:$0xf]
      %v7746 = vld [vmem:[#allocation2 + $0x28] sm:$0xf]
      %v7747 = vld [vmem:[#allocation2 + $0x2c] sm:$0xf]
      %v7748 = vld [vmem:[#allocation2 + $0x30] sm:$0xf]
      %v7749 = vld [vmem:[#allocation2 + $0x34] sm:$0xf]
      %v7750 = vld [vmem:[#allocation2 + $0x38] sm:$0xf]
      %v7751 = vld [vmem:[#allocation2 + $0x3c] sm:$0xf]
      %v7752 = vld [vmem:[#allocation2 + $0x40] sm:$0xf]
      %v7753 = vld [vmem:[#allocation2 + $0x44] sm:$0xf]
      %v7754 = vld [vmem:[#allocation2 + $0x48] sm:$0xf]
      %v7755 = vld [vmem:[#allocation2 + $0x4c] sm:$0xf]
      %v7756 = vld [vmem:[#allocation2 + $0x50] sm:$0xf]
      %v7757 = vld [vmem:[#allocation2 + $0x54] sm:$0xf]
      %v7758 = vld [vmem:[#allocation2 + $0x58] sm:$0xf]
      %v7759 = vld [vmem:[#allocation2 + $0x5c] sm:$0xf]
      %v7760 = vld [vmem:[#allocation2 + $0x60] sm:$0xf]
      %v7761 = vld [vmem:[#allocation2 + $0x64] sm:$0xf]
      %v7762 = vld [vmem:[#allocation2 + $0x68] sm:$0xf]
      %v7763 = vld [vmem:[#allocation2 + $0x6c] sm:$0xf]
      %v7764 = vld [vmem:[#allocation2 + $0x70] sm:$0xf]
      %v7765 = vld [vmem:[#allocation2 + $0x74] sm:$0xf]
      %v7766 = vld [vmem:[#allocation2 + $0x78] sm:$0xf]
      %v7767 = vld [vmem:[#allocation2 + $0x7c] sm:$0xf]
      %v7768 = vld [vmem:[#allocation2 + $0x80] sm:$0xf]
      %v7769 = vld [vmem:[#allocation2 + $0x84] sm:$0xf]
      %v7770 = vld [vmem:[#allocation2 + $0x88] sm:$0xf]
      %v7771 = vld [vmem:[#allocation2 + $0x8c] sm:$0xf]
      %s7772 = scalar_lea.vmem %s4, 256
      %v7773 = vld [vmem:[%s7772] sm:$0xf]
      %v7774 = vld [vmem:[%s7772 + $0x4] sm:$0xf]
      %v7775 = vld [vmem:[%s7772 + $0x8] sm:$0xf]
      %v7776 = vld [vmem:[%s7772 + $0xc] sm:$0xf]
      %v7777 = vld [vmem:[%s7772 + $0x10] sm:$0xf]
      %v7778 = vld [vmem:[%s7772 + $0x14] sm:$0xf]
      %v7779 = vld [vmem:[%s7772 + $0x18] sm:$0xf]
      %v7780 = vld [vmem:[%s7772 + $0x1c] sm:$0xf]
      %v7781 = vld [vmem:[%s7772 + $0x20] sm:$0xf]
      %v7782 = vld [vmem:[%s7772 + $0x24] sm:$0xf]
      %v7783 = vld [vmem:[%s7772 + $0x28] sm:$0xf]
      %v7784 = vld [vmem:[%s7772 + $0x2c] sm:$0xf]
      %v7785 = vld [vmem:[%s7772 + $0x30] sm:$0xf]
      %v7786 = vld [vmem:[%s7772 + $0x34] sm:$0xf]
      %v7787 = vld [vmem:[%s7772 + $0x38] sm:$0xf]
      %v7788 = vld [vmem:[%s7772 + $0x3c] sm:$0xf]
      %v7821 = vunpack.c.l.b16 %v7740
      %v7822 = vunpack.c.l.b16 %v7741
      %v7823 = vunpack.c.l.b16 %v7742
      %v7824 = vunpack.c.l.b16 %v7743
      %v7825 = vunpack.c.l.b16 %v7744
      %v7826 = vunpack.c.l.b16 %v7745
      %v7827 = vunpack.c.l.b16 %v7746
      %v7828 = vunpack.c.l.b16 %v7747
      %v7829 = vunpack.c.l.b16 %v7748
      %v7830 = vunpack.c.l.b16 %v7749
      %v7831 = vunpack.c.l.b16 %v7750
      %v7832 = vunpack.c.l.b16 %v7751
      %v7833 = vunpack.c.l.b16 %v7752
      %v7834 = vunpack.c.l.b16 %v7753
      %v7835 = vunpack.c.l.b16 %v7754
      %v7836 = vunpack.c.l.b16 %v7755
      %v7837 = vunpack.c.l.b16 %v7756
      %v7838 = vunpack.c.l.b16 %v7757
      %v7839 = vunpack.c.l.b16 %v7758
      %v7840 = vunpack.c.l.b16 %v7759
      %v7841 = vunpack.c.l.b16 %v7760
      %v7842 = vunpack.c.l.b16 %v7761
      %v7843 = vunpack.c.l.b16 %v7762
      %v7844 = vunpack.c.l.b16 %v7763
      %v7845 = vunpack.c.l.b16 %v7764
      %v7846 = vunpack.c.l.b16 %v7765
      %v7847 = vunpack.c.l.b16 %v7766
      %v7848 = vunpack.c.l.b16 %v7767
      %v7849 = vunpack.c.l.b16 %v7768
      %v7850 = vunpack.c.l.b16 %v7769
      %v7851 = vunpack.c.l.b16 %v7770
      %v7852 = vunpack.c.l.b16 %v7771
      %v7853 = vpack.c.b16 %v7822, %v7821
      %v7854 = vpack.c.b16 %v7824, %v7823
      %v7855 = vpack.c.b16 %v7826, %v7825
      %v7856 = vpack.c.b16 %v7828, %v7827
      %v7857 = vpack.c.b16 %v7830, %v7829
      %v7858 = vpack.c.b16 %v7832, %v7831
      %v7859 = vpack.c.b16 %v7834, %v7833
      %v7860 = vpack.c.b16 %v7836, %v7835
      %v7861 = vpack.c.b16 %v7838, %v7837
      %v7862 = vpack.c.b16 %v7840, %v7839
      %v7863 = vpack.c.b16 %v7842, %v7841
      %v7864 = vpack.c.b16 %v7844, %v7843
      %v7865 = vpack.c.b16 %v7846, %v7845
      %v7866 = vpack.c.b16 %v7848, %v7847
      %v7867 = vpack.c.b16 %v7850, %v7849
      %v7868 = vpack.c.b16 %v7852, %v7851
      %v7901 = vunpack.c.l.b16 %v7773
      %v7902 = vunpack.c.l.b16 %v7774
      %v7903 = vunpack.c.l.b16 %v7775
      %v7904 = vunpack.c.l.b16 %v7776
      %v7905 = vunpack.c.l.b16 %v7777
      %v7906 = vunpack.c.l.b16 %v7778
      %v7907 = vunpack.c.l.b16 %v7779
      %v7908 = vunpack.c.l.b16 %v7780
      %v7909 = vunpack.c.l.b16 %v7781
      %v7910 = vunpack.c.l.b16 %v7782
      %v7911 = vunpack.c.l.b16 %v7783
      %v7912 = vunpack.c.l.b16 %v7784
      %v7913 = vunpack.c.l.b16 %v7785
      %v7914 = vunpack.c.l.b16 %v7786
      %v7915 = vunpack.c.l.b16 %v7787
      %v7916 = vunpack.c.l.b16 %v7788
      %v7917 = vpack.c.b16 %v7902, %v7901
      %v7918 = vpack.c.b16 %v7904, %v7903
      %v7919 = vpack.c.b16 %v7906, %v7905
      %v7920 = vpack.c.b16 %v7908, %v7907
      %v7921 = vpack.c.b16 %v7910, %v7909
      %v7922 = vpack.c.b16 %v7912, %v7911
      %v7923 = vpack.c.b16 %v7914, %v7913
      %v7924 = vpack.c.b16 %v7916, %v7915
      %7933 = vmatprep.subr.bf16.mxu0 0
      %7934 = vmatpush1.bf16.msra.mxu0 %v7924
      %7935 = vmatprep.subr.bf16.mxu0 0
      %7936 = vmatpush1.bf16.msra.mxu0 %v7923
      %7937 = vmatprep.subr.bf16.mxu0 0
      %7938 = vmatpush1.bf16.msra.mxu0 %v7922
      %7939 = vmatprep.subr.bf16.mxu0 0
      %7940 = vmatpush1.bf16.msra.mxu0 %v7921
      %7941 = vmatprep.subr.bf16.mxu0 0
      %7942 = vmatpush1.bf16.msra.mxu0 %v7920
      %7943 = vmatprep.subr.bf16.mxu0 0
      %7944 = vmatpush1.bf16.msra.mxu0 %v7919
      %7945 = vmatprep.subr.bf16.mxu0 0
      %7946 = vmatpush1.bf16.msra.mxu0 %v7918
      %7947 = vmatprep.subr.bf16.mxu0 0
      %7948 = vmatpush1.bf16.msra.mxu0 %v7917
      %7949 = vmatprep.subr.bf16.mxu0 0
      %7950 = vmatpush2.bf16.msra.mxu0 0
      %7951 = vmatprep.subr.bf16.mxu0 0
      %7952 = vmatpush2.bf16.msra.mxu0 0
      %7953 = vmatprep.subr.bf16.mxu0 0
      %7954 = vmatpush2.bf16.msra.mxu0 0
      %7955 = vmatprep.subr.bf16.mxu0 0
      %7956 = vmatpush2.bf16.msra.mxu0 0
      %7957 = vmatprep.subr.bf16.mxu0 0
      %7958 = vmatpush2.bf16.msra.mxu0 0
      %7959 = vmatprep.subr.bf16.mxu0 0
      %7960 = vmatpush2.bf16.msra.mxu0 0
      %7961 = vmatprep.subr.bf16.mxu0 0
      %7962 = vmatpush2.bf16.msra.mxu0 0
      %7963 = vmatprep.subr.bf16.mxu0 0
      %7964 = vmatpush2.bf16.msra.mxu0 0
      %7965 = vmatprep.mubr.bf16.mxu0 0
      %7966 = vmatmul.mubr.bf16.gmra.mxu0 %v7853
      %v7967 = vpop.f32.mrf.mxu0
      %v7968 = vadd.f32 0.0, %v7967
      %v7969 = vpop.f32.mrf.mxu0
      %v7970 = vpop.f32.mrf.mxu0
      %v7971 = vadd.f32 0.0, %v7970
      %v7972 = vpop.f32.mrf.mxu0
      %7973 = vmatprep.mubr.bf16.mxu0 0
      %7974 = vmatmul.mubr.bf16.gmra.mxu0 %v7854
      %v7975 = vpop.f32.mrf.mxu0
      %v7976 = vadd.f32 0.0, %v7975
      %v7977 = vpop.f32.mrf.mxu0
      %v7978 = vpop.f32.mrf.mxu0
      %v7979 = vadd.f32 0.0, %v7978
      %v7980 = vpop.f32.mrf.mxu0
      %7981 = vmatprep.mubr.bf16.mxu0 0
      %7982 = vmatmul.mubr.bf16.gmra.mxu0 %v7855
      %v7983 = vpop.f32.mrf.mxu0
      %v7984 = vadd.f32 0.0, %v7983
      %v7985 = vpop.f32.mrf.mxu0
      %v7986 = vpop.f32.mrf.mxu0
      %v7987 = vadd.f32 0.0, %v7986
      %v7988 = vpop.f32.mrf.mxu0
      %7989 = vmatprep.mubr.bf16.mxu0 0
      %7990 = vmatmul.mubr.bf16.gmra.mxu0 %v7856
      %v7991 = vpop.f32.mrf.mxu0
      %v7992 = vadd.f32 0.0, %v7991
      %v7993 = vpop.f32.mrf.mxu0
      %v7994 = vpop.f32.mrf.mxu0
      %v7995 = vadd.f32 0.0, %v7994
      %v7996 = vpop.f32.mrf.mxu0
      %7997 = vmatprep.mubr.bf16.mxu0 0
      %7998 = vmatmul.mubr.bf16.gmra.mxu0 %v7857
      %v7999 = vpop.f32.mrf.mxu0
      %v8000 = vadd.f32 0.0, %v7999
      %v8001 = vpop.f32.mrf.mxu0
      %v8002 = vpop.f32.mrf.mxu0
      %v8003 = vadd.f32 0.0, %v8002
      %v8004 = vpop.f32.mrf.mxu0
      %8005 = vmatprep.mubr.bf16.mxu0 0
      %8006 = vmatmul.mubr.bf16.gmra.mxu0 %v7858
      %v8007 = vpop.f32.mrf.mxu0
      %v8008 = vadd.f32 0.0, %v8007
      %v8009 = vpop.f32.mrf.mxu0
      %v8010 = vpop.f32.mrf.mxu0
      %v8011 = vadd.f32 0.0, %v8010
      %v8012 = vpop.f32.mrf.mxu0
      %8013 = vmatprep.mubr.bf16.mxu0 0
      %8014 = vmatmul.mubr.bf16.gmra.mxu0 %v7859
      %v8015 = vpop.f32.mrf.mxu0
      %v8016 = vadd.f32 0.0, %v8015
      %v8017 = vpop.f32.mrf.mxu0
      %v8018 = vpop.f32.mrf.mxu0
      %v8019 = vadd.f32 0.0, %v8018
      %v8020 = vpop.f32.mrf.mxu0
      %8021 = vmatprep.mubr.bf16.mxu0 0
      %8022 = vmatmul.mubr.bf16.gmra.mxu0 %v7860
      %v8023 = vpop.f32.mrf.mxu0
      %v8024 = vadd.f32 0.0, %v8023
      %v8025 = vpop.f32.mrf.mxu0
      %v8026 = vpop.f32.mrf.mxu0
      %v8027 = vadd.f32 0.0, %v8026
      %v8028 = vpop.f32.mrf.mxu0
      %8029 = vmatprep.mubr.bf16.mxu0 0
      %8030 = vmatmul.mubr.bf16.gmra.mxu0 %v7861
      %v8031 = vpop.f32.mrf.mxu0
      %v8032 = vadd.f32 0.0, %v8031
      %v8033 = vpop.f32.mrf.mxu0
      %v8034 = vpop.f32.mrf.mxu0
      %v8035 = vadd.f32 0.0, %v8034
      %v8036 = vpop.f32.mrf.mxu0
      %8037 = vmatprep.mubr.bf16.mxu0 0
      %8038 = vmatmul.mubr.bf16.gmra.mxu0 %v7862
      %v8039 = vpop.f32.mrf.mxu0
      %v8040 = vadd.f32 0.0, %v8039
      %v8041 = vpop.f32.mrf.mxu0
      %v8042 = vpop.f32.mrf.mxu0
      %v8043 = vadd.f32 0.0, %v8042
      %v8044 = vpop.f32.mrf.mxu0
      %8045 = vmatprep.mubr.bf16.mxu0 0
      %8046 = vmatmul.mubr.bf16.gmra.mxu0 %v7863
      %v8047 = vpop.f32.mrf.mxu0
      %v8048 = vadd.f32 0.0, %v8047
      %v8049 = vpop.f32.mrf.mxu0
      %v8050 = vpop.f32.mrf.mxu0
      %v8051 = vadd.f32 0.0, %v8050
      %v8052 = vpop.f32.mrf.mxu0
      %8053 = vmatprep.mubr.bf16.mxu0 0
      %8054 = vmatmul.mubr.bf16.gmra.mxu0 %v7864
      %v8055 = vpop.f32.mrf.mxu0
      %v8056 = vadd.f32 0.0, %v8055
      %v8057 = vpop.f32.mrf.mxu0
      %v8058 = vpop.f32.mrf.mxu0
      %v8059 = vadd.f32 0.0, %v8058
      %v8060 = vpop.f32.mrf.mxu0
      %8061 = vmatprep.mubr.bf16.mxu0 0
      %8062 = vmatmul.mubr.bf16.gmra.mxu0 %v7865
      %v8063 = vpop.f32.mrf.mxu0
      %v8064 = vadd.f32 0.0, %v8063
      %v8065 = vpop.f32.mrf.mxu0
      %v8066 = vpop.f32.mrf.mxu0
      %v8067 = vadd.f32 0.0, %v8066
      %v8068 = vpop.f32.mrf.mxu0
      %8069 = vmatprep.mubr.bf16.mxu0 0
      %8070 = vmatmul.mubr.bf16.gmra.mxu0 %v7866
      %v8071 = vpop.f32.mrf.mxu0
      %v8072 = vadd.f32 0.0, %v8071
      %v8073 = vpop.f32.mrf.mxu0
      %v8074 = vpop.f32.mrf.mxu0
      %v8075 = vadd.f32 0.0, %v8074
      %v8076 = vpop.f32.mrf.mxu0
      %8077 = vmatprep.mubr.bf16.mxu0 0
      %8078 = vmatmul.mubr.bf16.gmra.mxu0 %v7867
      %v8079 = vpop.f32.mrf.mxu0
      %v8080 = vadd.f32 0.0, %v8079
      %v8081 = vpop.f32.mrf.mxu0
      %v8082 = vpop.f32.mrf.mxu0
      %v8083 = vadd.f32 0.0, %v8082
      %v8084 = vpop.f32.mrf.mxu0
      %8085 = vmatprep.mubr.bf16.mxu0 0
      %8086 = vmatmul.mubr.bf16.gmra.mxu0 %v7868
      %v8087 = vpop.f32.mrf.mxu0
      %v8088 = vadd.f32 0.0, %v8087
      %v8089 = vpop.f32.mrf.mxu0
      %v8090 = vpop.f32.mrf.mxu0
      %v8091 = vadd.f32 0.0, %v8090
      %v8092 = vpop.f32.mrf.mxu0
      %8093 = vdwg.mxu0
      %v8094 = vld [vmem:[#allocation3] sm:$0xff]
      %v8095 = vld [vmem:[#allocation3 + $0x8] sm:$0xff]
      %v8096 = vld [vmem:[#allocation3 + $0x10] sm:$0xff]
      %v8097 = vld [vmem:[#allocation3 + $0x18] sm:$0xff]
      %v8098 = vld [vmem:[#allocation3 + $0x20] sm:$0xff]
      %v8099 = vld [vmem:[#allocation3 + $0x28] sm:$0xff]
      %v8100 = vld [vmem:[#allocation3 + $0x30] sm:$0xff]
      %v8101 = vld [vmem:[#allocation3 + $0x38] sm:$0xff]
      %v8102 = vld [vmem:[#allocation3 + $0x40] sm:$0xff]
      %v8103 = vld [vmem:[#allocation3 + $0x48] sm:$0xff]
      %v8104 = vld [vmem:[#allocation3 + $0x50] sm:$0xff]
      %v8105 = vld [vmem:[#allocation3 + $0x58] sm:$0xff]
      %v8106 = vld [vmem:[#allocation3 + $0x60] sm:$0xff]
      %v8107 = vld [vmem:[#allocation3 + $0x68] sm:$0xff]
      %v8108 = vld [vmem:[#allocation3 + $0x70] sm:$0xff]
      %v8109 = vld [vmem:[#allocation3 + $0x78] sm:$0xff]
      %v8110 = vld [vmem:[#allocation3 + $0x80] sm:$0xff]
      %v8111 = vld [vmem:[#allocation3 + $0x88] sm:$0xff]
      %v8112 = vld [vmem:[#allocation3 + $0x90] sm:$0xff]
      %v8113 = vld [vmem:[#allocation3 + $0x98] sm:$0xff]
      %v8114 = vld [vmem:[#allocation3 + $0xa0] sm:$0xff]
      %v8115 = vld [vmem:[#allocation3 + $0xa8] sm:$0xff]
      %v8116 = vld [vmem:[#allocation3 + $0xb0] sm:$0xff]
      %v8117 = vld [vmem:[#allocation3 + $0xb8] sm:$0xff]
      %v8118 = vld [vmem:[#allocation3 + $0xc0] sm:$0xff]
      %v8119 = vld [vmem:[#allocation3 + $0xc8] sm:$0xff]
      %v8120 = vld [vmem:[#allocation3 + $0xd0] sm:$0xff]
      %v8121 = vld [vmem:[#allocation3 + $0xd8] sm:$0xff]
      %v8122 = vld [vmem:[#allocation3 + $0xe0] sm:$0xff]
      %v8123 = vld [vmem:[#allocation3 + $0xe8] sm:$0xff]
      %v8124 = vld [vmem:[#allocation3 + $0xf0] sm:$0xff]
      %v8125 = vld [vmem:[#allocation3 + $0xf8] sm:$0xff]
      %v8126 = vadd.f32 %v8094, %v7968
      %v8127 = vadd.f32 %v8095, %v7971
      %v8128 = vadd.f32 %v8096, %v7976
      %v8129 = vadd.f32 %v8097, %v7979
      %v8130 = vadd.f32 %v8098, %v7984
      %v8131 = vadd.f32 %v8099, %v7987
      %v8132 = vadd.f32 %v8100, %v7992
      %v8133 = vadd.f32 %v8101, %v7995
      %v8134 = vadd.f32 %v8102, %v8000
      %v8135 = vadd.f32 %v8103, %v8003
      %v8136 = vadd.f32 %v8104, %v8008
      %v8137 = vadd.f32 %v8105, %v8011
      %v8138 = vadd.f32 %v8106, %v8016
      %v8139 = vadd.f32 %v8107, %v8019
      %v8140 = vadd.f32 %v8108, %v8024
      %v8141 = vadd.f32 %v8109, %v8027
      %v8142 = vadd.f32 %v8110, %v8032
      %v8143 = vadd.f32 %v8111, %v8035
      %v8144 = vadd.f32 %v8112, %v8040
      %v8145 = vadd.f32 %v8113, %v8043
      %v8146 = vadd.f32 %v8114, %v8048
      %v8147 = vadd.f32 %v8115, %v8051
      %v8148 = vadd.f32 %v8116, %v8056
      %v8149 = vadd.f32 %v8117, %v8059
      %v8150 = vadd.f32 %v8118, %v8064
      %v8151 = vadd.f32 %v8119, %v8067
      %v8152 = vadd.f32 %v8120, %v8072
      %v8153 = vadd.f32 %v8121, %v8075
      %v8154 = vadd.f32 %v8122, %v8080
      %v8155 = vadd.f32 %v8123, %v8083
      %v8156 = vadd.f32 %v8124, %v8088
      %v8157 = vadd.f32 %v8125, %v8091
      %8158 = vst [vmem:[#allocation3] sm:$0xff] %v8126
      %8159 = vst [vmem:[#allocation3 + $0x8] sm:$0xff] %v8127
      %8160 = vst [vmem:[#allocation3 + $0x10] sm:$0xff] %v8128
      %8161 = vst [vmem:[#allocation3 + $0x18] sm:$0xff] %v8129
      %8162 = vst [vmem:[#allocation3 + $0x20] sm:$0xff] %v8130
      %8163 = vst [vmem:[#allocation3 + $0x28] sm:$0xff] %v8131
      %8164 = vst [vmem:[#allocation3 + $0x30] sm:$0xff] %v8132
      %8165 = vst [vmem:[#allocation3 + $0x38] sm:$0xff] %v8133
      %8166 = vst [vmem:[#allocation3 + $0x40] sm:$0xff] %v8134
      %8167 = vst [vmem:[#allocation3 + $0x48] sm:$0xff] %v8135
      %8168 = vst [vmem:[#allocation3 + $0x50] sm:$0xff] %v8136
      %8169 = vst [vmem:[#allocation3 + $0x58] sm:$0xff] %v8137
      %8170 = vst [vmem:[#allocation3 + $0x60] sm:$0xff] %v8138
      %8171 = vst [vmem:[#allocation3 + $0x68] sm:$0xff] %v8139
      %8172 = vst [vmem:[#allocation3 + $0x70] sm:$0xff] %v8140
      %8173 = vst [vmem:[#allocation3 + $0x78] sm:$0xff] %v8141
      %8174 = vst [vmem:[#allocation3 + $0x80] sm:$0xff] %v8142
      %8175 = vst [vmem:[#allocation3 + $0x88] sm:$0xff] %v8143
      %8176 = vst [vmem:[#allocation3 + $0x90] sm:$0xff] %v8144
      %8177 = vst [vmem:[#allocation3 + $0x98] sm:$0xff] %v8145
      %8178 = vst [vmem:[#allocation3 + $0xa0] sm:$0xff] %v8146
      %8179 = vst [vmem:[#allocation3 + $0xa8] sm:$0xff] %v8147
      %8180 = vst [vmem:[#allocation3 + $0xb0] sm:$0xff] %v8148
      %8181 = vst [vmem:[#allocation3 + $0xb8] sm:$0xff] %v8149
      %8182 = vst [vmem:[#allocation3 + $0xc0] sm:$0xff] %v8150
      %8183 = vst [vmem:[#allocation3 + $0xc8] sm:$0xff] %v8151
      %8184 = vst [vmem:[#allocation3 + $0xd0] sm:$0xff] %v8152
      %8185 = vst [vmem:[#allocation3 + $0xd8] sm:$0xff] %v8153
      %8186 = vst [vmem:[#allocation3 + $0xe0] sm:$0xff] %v8154
      %8187 = vst [vmem:[#allocation3 + $0xe8] sm:$0xff] %v8155
      %8188 = vst [vmem:[#allocation3 + $0xf0] sm:$0xff] %v8156
      %8189 = vst [vmem:[#allocation3 + $0xf8] sm:$0xff] %v8157
      %v8190 = vld [vmem:[#allocation2 + $0x10] sm:$0xf]
      %v8191 = vld [vmem:[#allocation2 + $0x14] sm:$0xf]
      %v8192 = vld [vmem:[#allocation2 + $0x18] sm:$0xf]
      %v8193 = vld [vmem:[#allocation2 + $0x1c] sm:$0xf]
      %v8194 = vld [vmem:[#allocation2 + $0x20] sm:$0xf]
      %v8195 = vld [vmem:[#allocation2 + $0x24] sm:$0xf]
      %v8196 = vld [vmem:[#allocation2 + $0x28] sm:$0xf]
      %v8197 = vld [vmem:[#allocation2 + $0x2c] sm:$0xf]
      %v8198 = vld [vmem:[#allocation2 + $0x30] sm:$0xf]
      %v8199 = vld [vmem:[#allocation2 + $0x34] sm:$0xf]
      %v8200 = vld [vmem:[#allocation2 + $0x38] sm:$0xf]
      %v8201 = vld [vmem:[#allocation2 + $0x3c] sm:$0xf]
      %v8202 = vld [vmem:[#allocation2 + $0x40] sm:$0xf]
      %v8203 = vld [vmem:[#allocation2 + $0x44] sm:$0xf]
      %v8204 = vld [vmem:[#allocation2 + $0x48] sm:$0xf]
      %v8205 = vld [vmem:[#allocation2 + $0x4c] sm:$0xf]
      %v8206 = vld [vmem:[#allocation2 + $0x50] sm:$0xf]
      %v8207 = vld [vmem:[#allocation2 + $0x54] sm:$0xf]
      %v8208 = vld [vmem:[#allocation2 + $0x58] sm:$0xf]
      %v8209 = vld [vmem:[#allocation2 + $0x5c] sm:$0xf]
      %v8210 = vld [vmem:[#allocation2 + $0x60] sm:$0xf]
      %v8211 = vld [vmem:[#allocation2 + $0x64] sm:$0xf]
      %v8212 = vld [vmem:[#allocation2 + $0x68] sm:$0xf]
      %v8213 = vld [vmem:[#allocation2 + $0x6c] sm:$0xf]
      %v8214 = vld [vmem:[#allocation2 + $0x70] sm:$0xf]
      %v8215 = vld [vmem:[#allocation2 + $0x74] sm:$0xf]
      %v8216 = vld [vmem:[#allocation2 + $0x78] sm:$0xf]
      %v8217 = vld [vmem:[#allocation2 + $0x7c] sm:$0xf]
      %v8218 = vld [vmem:[#allocation2 + $0x80] sm:$0xf]
      %v8219 = vld [vmem:[#allocation2 + $0x84] sm:$0xf]
      %v8220 = vld [vmem:[#allocation2 + $0x88] sm:$0xf]
      %v8221 = vld [vmem:[#allocation2 + $0x8c] sm:$0xf]
      %v8222 = vld [vmem:[#allocation2 + $0x90] sm:$0x1]
      %s8223 = scalar_lea.vmem %s4, 320
      %v8224 = vld [vmem:[%s8223] sm:$0xf]
      %v8225 = vld [vmem:[%s8223 + $0x4] sm:$0xf]
      %v8226 = vld [vmem:[%s8223 + $0x8] sm:$0xf]
      %v8227 = vld [vmem:[%s8223 + $0xc] sm:$0xf]
      %v8228 = vld [vmem:[%s8223 + $0x10] sm:$0xf]
      %v8229 = vld [vmem:[%s8223 + $0x14] sm:$0xf]
      %v8230 = vld [vmem:[%s8223 + $0x18] sm:$0xf]
      %v8231 = vld [vmem:[%s8223 + $0x1c] sm:$0xf]
      %v8232 = vld [vmem:[%s8223 + $0x20] sm:$0xf]
      %v8233 = vld [vmem:[%s8223 + $0x24] sm:$0xf]
      %v8234 = vld [vmem:[%s8223 + $0x28] sm:$0xf]
      %v8235 = vld [vmem:[%s8223 + $0x2c] sm:$0xf]
      %v8236 = vld [vmem:[%s8223 + $0x30] sm:$0xf]
      %v8237 = vld [vmem:[%s8223 + $0x34] sm:$0xf]
      %v8238 = vld [vmem:[%s8223 + $0x38] sm:$0xf]
      %v8239 = vld [vmem:[%s8223 + $0x3c] sm:$0xf]
      %v8273 = vunpack.c.l.b16 %v8190
      %v8274 = vunpack.c.l.b16 %v8191
      %v8275 = vunpack.c.l.b16 %v8192
      %v8276 = vunpack.c.l.b16 %v8193
      %v8277 = vunpack.c.l.b16 %v8194
      %v8278 = vunpack.c.l.b16 %v8195
      %v8279 = vunpack.c.l.b16 %v8196
      %v8280 = vunpack.c.l.b16 %v8197
      %v8281 = vunpack.c.l.b16 %v8198
      %v8282 = vunpack.c.l.b16 %v8199
      %v8283 = vunpack.c.l.b16 %v8200
      %v8284 = vunpack.c.l.b16 %v8201
      %v8285 = vunpack.c.l.b16 %v8202
      %v8286 = vunpack.c.l.b16 %v8203
      %v8287 = vunpack.c.l.b16 %v8204
      %v8288 = vunpack.c.l.b16 %v8205
      %v8289 = vunpack.c.l.b16 %v8206
      %v8290 = vunpack.c.l.b16 %v8207
      %v8291 = vunpack.c.l.b16 %v8208
      %v8292 = vunpack.c.l.b16 %v8209
      %v8293 = vunpack.c.l.b16 %v8210
      %v8294 = vunpack.c.l.b16 %v8211
      %v8295 = vunpack.c.l.b16 %v8212
      %v8296 = vunpack.c.l.b16 %v8213
      %v8297 = vunpack.c.l.b16 %v8214
      %v8298 = vunpack.c.l.b16 %v8215
      %v8299 = vunpack.c.l.b16 %v8216
      %v8300 = vunpack.c.l.b16 %v8217
      %v8301 = vunpack.c.l.b16 %v8218
      %v8302 = vunpack.c.l.b16 %v8219
      %v8303 = vunpack.c.l.b16 %v8220
      %v8304 = vunpack.c.l.b16 %v8221
      %v8305 = vunpack.c.l.b16 %v8222
      %v8306 = vpack.c.b16 %v8274, %v8273
      %v8307 = vpack.c.b16 %v8276, %v8275
      %v8308 = vpack.c.b16 %v8278, %v8277
      %v8309 = vpack.c.b16 %v8280, %v8279
      %v8310 = vpack.c.b16 %v8282, %v8281
      %v8311 = vpack.c.b16 %v8284, %v8283
      %v8312 = vpack.c.b16 %v8286, %v8285
      %v8313 = vpack.c.b16 %v8288, %v8287
      %v8314 = vpack.c.b16 %v8290, %v8289
      %v8315 = vpack.c.b16 %v8292, %v8291
      %v8316 = vpack.c.b16 %v8294, %v8293
      %v8317 = vpack.c.b16 %v8296, %v8295
      %v8318 = vpack.c.b16 %v8298, %v8297
      %v8319 = vpack.c.b16 %v8300, %v8299
      %v8320 = vpack.c.b16 %v8302, %v8301
      %v8321 = vpack.c.b16 %v8304, %v8303
      %v8322 = vpack.c.b16 %v8305, %v8305
      %v8324 = vshrl.u32 %v8306, 16
      %v8326 = vshll.u32 %v8306, 16
      %v8328 = vrot.slane %v8326, 1
      %v8329 = vor.u32 %v8324, %v8328
      %v8331 = vshll.u32 %v8307, 16
      %v8333 = vrot.slane %v8331, 1
      %v8334 = vsel %vm1464, %v8329, %v8333
      %v8335 = vshrl.u32 %v8307, 16
      %v8337 = vor.u32 %v8335, %v8333
      %v8339 = vshll.u32 %v8308, 16
      %v8341 = vrot.slane %v8339, 1
      %v8342 = vsel %vm1464, %v8337, %v8341
      %v8343 = vshrl.u32 %v8308, 16
      %v8345 = vor.u32 %v8343, %v8341
      %v8347 = vshll.u32 %v8309, 16
      %v8349 = vrot.slane %v8347, 1
      %v8350 = vsel %vm1464, %v8345, %v8349
      %v8351 = vshrl.u32 %v8309, 16
      %v8353 = vor.u32 %v8351, %v8349
      %v8355 = vshll.u32 %v8310, 16
      %v8357 = vrot.slane %v8355, 1
      %v8358 = vsel %vm1464, %v8353, %v8357
      %v8359 = vshrl.u32 %v8310, 16
      %v8361 = vor.u32 %v8359, %v8357
      %v8363 = vshll.u32 %v8311, 16
      %v8365 = vrot.slane %v8363, 1
      %v8366 = vsel %vm1464, %v8361, %v8365
      %v8367 = vshrl.u32 %v8311, 16
      %v8369 = vor.u32 %v8367, %v8365
      %v8371 = vshll.u32 %v8312, 16
      %v8373 = vrot.slane %v8371, 1
      %v8374 = vsel %vm1464, %v8369, %v8373
      %v8375 = vshrl.u32 %v8312, 16
      %v8377 = vor.u32 %v8375, %v8373
      %v8379 = vshll.u32 %v8313, 16
      %v8381 = vrot.slane %v8379, 1
      %v8382 = vsel %vm1464, %v8377, %v8381
      %v8383 = vshrl.u32 %v8313, 16
      %v8385 = vor.u32 %v8383, %v8381
      %v8387 = vshll.u32 %v8314, 16
      %v8389 = vrot.slane %v8387, 1
      %v8390 = vsel %vm1464, %v8385, %v8389
      %v8391 = vshrl.u32 %v8314, 16
      %v8393 = vor.u32 %v8391, %v8389
      %v8395 = vshll.u32 %v8315, 16
      %v8397 = vrot.slane %v8395, 1
      %v8398 = vsel %vm1464, %v8393, %v8397
      %v8399 = vshrl.u32 %v8315, 16
      %v8401 = vor.u32 %v8399, %v8397
      %v8403 = vshll.u32 %v8316, 16
      %v8405 = vrot.slane %v8403, 1
      %v8406 = vsel %vm1464, %v8401, %v8405
      %v8407 = vshrl.u32 %v8316, 16
      %v8409 = vor.u32 %v8407, %v8405
      %v8411 = vshll.u32 %v8317, 16
      %v8413 = vrot.slane %v8411, 1
      %v8414 = vsel %vm1464, %v8409, %v8413
      %v8415 = vshrl.u32 %v8317, 16
      %v8417 = vor.u32 %v8415, %v8413
      %v8419 = vshll.u32 %v8318, 16
      %v8421 = vrot.slane %v8419, 1
      %v8422 = vsel %vm1464, %v8417, %v8421
      %v8423 = vshrl.u32 %v8318, 16
      %v8425 = vor.u32 %v8423, %v8421
      %v8427 = vshll.u32 %v8319, 16
      %v8429 = vrot.slane %v8427, 1
      %v8430 = vsel %vm1464, %v8425, %v8429
      %v8431 = vshrl.u32 %v8319, 16
      %v8433 = vor.u32 %v8431, %v8429
      %v8435 = vshll.u32 %v8320, 16
      %v8437 = vrot.slane %v8435, 1
      %v8438 = vsel %vm1464, %v8433, %v8437
      %v8439 = vshrl.u32 %v8320, 16
      %v8441 = vor.u32 %v8439, %v8437
      %v8443 = vshll.u32 %v8321, 16
      %v8445 = vrot.slane %v8443, 1
      %v8446 = vsel %vm1464, %v8441, %v8445
      %v8447 = vshrl.u32 %v8321, 16
      %v8449 = vor.u32 %v8447, %v8445
      %v8451 = vshll.u32 %v8322, 16
      %v8453 = vrot.slane %v8451, 1
      %v8454 = vsel %vm1464, %v8449, %v8453
      %v8487 = vunpack.c.l.b16 %v8224
      %v8488 = vunpack.c.l.b16 %v8225
      %v8489 = vunpack.c.l.b16 %v8226
      %v8490 = vunpack.c.l.b16 %v8227
      %v8491 = vunpack.c.l.b16 %v8228
      %v8492 = vunpack.c.l.b16 %v8229
      %v8493 = vunpack.c.l.b16 %v8230
      %v8494 = vunpack.c.l.b16 %v8231
      %v8495 = vunpack.c.l.b16 %v8232
      %v8496 = vunpack.c.l.b16 %v8233
      %v8497 = vunpack.c.l.b16 %v8234
      %v8498 = vunpack.c.l.b16 %v8235
      %v8499 = vunpack.c.l.b16 %v8236
      %v8500 = vunpack.c.l.b16 %v8237
      %v8501 = vunpack.c.l.b16 %v8238
      %v8502 = vunpack.c.l.b16 %v8239
      %v8503 = vpack.c.b16 %v8488, %v8487
      %v8504 = vpack.c.b16 %v8490, %v8489
      %v8505 = vpack.c.b16 %v8492, %v8491
      %v8506 = vpack.c.b16 %v8494, %v8493
      %v8507 = vpack.c.b16 %v8496, %v8495
      %v8508 = vpack.c.b16 %v8498, %v8497
      %v8509 = vpack.c.b16 %v8500, %v8499
      %v8510 = vpack.c.b16 %v8502, %v8501
      %8519 = vmatprep.subr.bf16.mxu0 0
      %8520 = vmatpush1.bf16.msra.mxu0 %v8510
      %8521 = vmatprep.subr.bf16.mxu0 0
      %8522 = vmatpush1.bf16.msra.mxu0 %v8509
      %8523 = vmatprep.subr.bf16.mxu0 0
      %8524 = vmatpush1.bf16.msra.mxu0 %v8508
      %8525 = vmatprep.subr.bf16.mxu0 0
      %8526 = vmatpush1.bf16.msra.mxu0 %v8507
      %8527 = vmatprep.subr.bf16.mxu0 0
      %8528 = vmatpush1.bf16.msra.mxu0 %v8506
      %8529 = vmatprep.subr.bf16.mxu0 0
      %8530 = vmatpush1.bf16.msra.mxu0 %v8505
      %8531 = vmatprep.subr.bf16.mxu0 0
      %8532 = vmatpush1.bf16.msra.mxu0 %v8504
      %8533 = vmatprep.subr.bf16.mxu0 0
      %8534 = vmatpush1.bf16.msra.mxu0 %v8503
      %8535 = vmatprep.subr.bf16.mxu0 0
      %8536 = vmatpush2.bf16.msra.mxu0 0
      %8537 = vmatprep.subr.bf16.mxu0 0
      %8538 = vmatpush2.bf16.msra.mxu0 0
      %8539 = vmatprep.subr.bf16.mxu0 0
      %8540 = vmatpush2.bf16.msra.mxu0 0
      %8541 = vmatprep.subr.bf16.mxu0 0
      %8542 = vmatpush2.bf16.msra.mxu0 0
      %8543 = vmatprep.subr.bf16.mxu0 0
      %8544 = vmatpush2.bf16.msra.mxu0 0
      %8545 = vmatprep.subr.bf16.mxu0 0
      %8546 = vmatpush2.bf16.msra.mxu0 0
      %8547 = vmatprep.subr.bf16.mxu0 0
      %8548 = vmatpush2.bf16.msra.mxu0 0
      %8549 = vmatprep.subr.bf16.mxu0 0
      %8550 = vmatpush2.bf16.msra.mxu0 0
      %8551 = vmatprep.mubr.bf16.mxu0 0
      %8552 = vmatmul.mubr.bf16.gmra.mxu0 %v8334
      %v8553 = vpop.f32.mrf.mxu0
      %v8554 = vadd.f32 0.0, %v8553
      %v8555 = vpop.f32.mrf.mxu0
      %v8556 = vpop.f32.mrf.mxu0
      %v8557 = vadd.f32 0.0, %v8556
      %v8558 = vpop.f32.mrf.mxu0
      %8559 = vmatprep.mubr.bf16.mxu0 0
      %8560 = vmatmul.mubr.bf16.gmra.mxu0 %v8342
      %v8561 = vpop.f32.mrf.mxu0
      %v8562 = vadd.f32 0.0, %v8561
      %v8563 = vpop.f32.mrf.mxu0
      %v8564 = vpop.f32.mrf.mxu0
      %v8565 = vadd.f32 0.0, %v8564
      %v8566 = vpop.f32.mrf.mxu0
      %8567 = vmatprep.mubr.bf16.mxu0 0
      %8568 = vmatmul.mubr.bf16.gmra.mxu0 %v8350
      %v8569 = vpop.f32.mrf.mxu0
      %v8570 = vadd.f32 0.0, %v8569
      %v8571 = vpop.f32.mrf.mxu0
      %v8572 = vpop.f32.mrf.mxu0
      %v8573 = vadd.f32 0.0, %v8572
      %v8574 = vpop.f32.mrf.mxu0
      %8575 = vmatprep.mubr.bf16.mxu0 0
      %8576 = vmatmul.mubr.bf16.gmra.mxu0 %v8358
      %v8577 = vpop.f32.mrf.mxu0
      %v8578 = vadd.f32 0.0, %v8577
      %v8579 = vpop.f32.mrf.mxu0
      %v8580 = vpop.f32.mrf.mxu0
      %v8581 = vadd.f32 0.0, %v8580
      %v8582 = vpop.f32.mrf.mxu0
      %8583 = vmatprep.mubr.bf16.mxu0 0
      %8584 = vmatmul.mubr.bf16.gmra.mxu0 %v8366
      %v8585 = vpop.f32.mrf.mxu0
      %v8586 = vadd.f32 0.0, %v8585
      %v8587 = vpop.f32.mrf.mxu0
      %v8588 = vpop.f32.mrf.mxu0
      %v8589 = vadd.f32 0.0, %v8588
      %v8590 = vpop.f32.mrf.mxu0
      %8591 = vmatprep.mubr.bf16.mxu0 0
      %8592 = vmatmul.mubr.bf16.gmra.mxu0 %v8374
      %v8593 = vpop.f32.mrf.mxu0
      %v8594 = vadd.f32 0.0, %v8593
      %v8595 = vpop.f32.mrf.mxu0
      %v8596 = vpop.f32.mrf.mxu0
      %v8597 = vadd.f32 0.0, %v8596
      %v8598 = vpop.f32.mrf.mxu0
      %8599 = vmatprep.mubr.bf16.mxu0 0
      %8600 = vmatmul.mubr.bf16.gmra.mxu0 %v8382
      %v8601 = vpop.f32.mrf.mxu0
      %v8602 = vadd.f32 0.0, %v8601
      %v8603 = vpop.f32.mrf.mxu0
      %v8604 = vpop.f32.mrf.mxu0
      %v8605 = vadd.f32 0.0, %v8604
      %v8606 = vpop.f32.mrf.mxu0
      %8607 = vmatprep.mubr.bf16.mxu0 0
      %8608 = vmatmul.mubr.bf16.gmra.mxu0 %v8390
      %v8609 = vpop.f32.mrf.mxu0
      %v8610 = vadd.f32 0.0, %v8609
      %v8611 = vpop.f32.mrf.mxu0
      %v8612 = vpop.f32.mrf.mxu0
      %v8613 = vadd.f32 0.0, %v8612
      %v8614 = vpop.f32.mrf.mxu0
      %8615 = vmatprep.mubr.bf16.mxu0 0
      %8616 = vmatmul.mubr.bf16.gmra.mxu0 %v8398
      %v8617 = vpop.f32.mrf.mxu0
      %v8618 = vadd.f32 0.0, %v8617
      %v8619 = vpop.f32.mrf.mxu0
      %v8620 = vpop.f32.mrf.mxu0
      %v8621 = vadd.f32 0.0, %v8620
      %v8622 = vpop.f32.mrf.mxu0
      %8623 = vmatprep.mubr.bf16.mxu0 0
      %8624 = vmatmul.mubr.bf16.gmra.mxu0 %v8406
      %v8625 = vpop.f32.mrf.mxu0
      %v8626 = vadd.f32 0.0, %v8625
      %v8627 = vpop.f32.mrf.mxu0
      %v8628 = vpop.f32.mrf.mxu0
      %v8629 = vadd.f32 0.0, %v8628
      %v8630 = vpop.f32.mrf.mxu0
      %8631 = vmatprep.mubr.bf16.mxu0 0
      %8632 = vmatmul.mubr.bf16.gmra.mxu0 %v8414
      %v8633 = vpop.f32.mrf.mxu0
      %v8634 = vadd.f32 0.0, %v8633
      %v8635 = vpop.f32.mrf.mxu0
      %v8636 = vpop.f32.mrf.mxu0
      %v8637 = vadd.f32 0.0, %v8636
      %v8638 = vpop.f32.mrf.mxu0
      %8639 = vmatprep.mubr.bf16.mxu0 0
      %8640 = vmatmul.mubr.bf16.gmra.mxu0 %v8422
      %v8641 = vpop.f32.mrf.mxu0
      %v8642 = vadd.f32 0.0, %v8641
      %v8643 = vpop.f32.mrf.mxu0
      %v8644 = vpop.f32.mrf.mxu0
      %v8645 = vadd.f32 0.0, %v8644
      %v8646 = vpop.f32.mrf.mxu0
      %8647 = vmatprep.mubr.bf16.mxu0 0
      %8648 = vmatmul.mubr.bf16.gmra.mxu0 %v8430
      %v8649 = vpop.f32.mrf.mxu0
      %v8650 = vadd.f32 0.0, %v8649
      %v8651 = vpop.f32.mrf.mxu0
      %v8652 = vpop.f32.mrf.mxu0
      %v8653 = vadd.f32 0.0, %v8652
      %v8654 = vpop.f32.mrf.mxu0
      %8655 = vmatprep.mubr.bf16.mxu0 0
      %8656 = vmatmul.mubr.bf16.gmra.mxu0 %v8438
      %v8657 = vpop.f32.mrf.mxu0
      %v8658 = vadd.f32 0.0, %v8657
      %v8659 = vpop.f32.mrf.mxu0
      %v8660 = vpop.f32.mrf.mxu0
      %v8661 = vadd.f32 0.0, %v8660
      %v8662 = vpop.f32.mrf.mxu0
      %8663 = vmatprep.mubr.bf16.mxu0 0
      %8664 = vmatmul.mubr.bf16.gmra.mxu0 %v8446
      %v8665 = vpop.f32.mrf.mxu0
      %v8666 = vadd.f32 0.0, %v8665
      %v8667 = vpop.f32.mrf.mxu0
      %v8668 = vpop.f32.mrf.mxu0
      %v8669 = vadd.f32 0.0, %v8668
      %v8670 = vpop.f32.mrf.mxu0
      %8671 = vmatprep.mubr.bf16.mxu0 0
      %8672 = vmatmul.mubr.bf16.gmra.mxu0 %v8454
      %v8673 = vpop.f32.mrf.mxu0
      %v8674 = vadd.f32 0.0, %v8673
      %v8675 = vpop.f32.mrf.mxu0
      %v8676 = vpop.f32.mrf.mxu0
      %v8677 = vadd.f32 0.0, %v8676
      %v8678 = vpop.f32.mrf.mxu0
      %8679 = vdwg.mxu0
      %v8680 = vld [vmem:[#allocation3] sm:$0xff]
      %v8681 = vld [vmem:[#allocation3 + $0x8] sm:$0xff]
      %v8682 = vld [vmem:[#allocation3 + $0x10] sm:$0xff]
      %v8683 = vld [vmem:[#allocation3 + $0x18] sm:$0xff]
      %v8684 = vld [vmem:[#allocation3 + $0x20] sm:$0xff]
      %v8685 = vld [vmem:[#allocation3 + $0x28] sm:$0xff]
      %v8686 = vld [vmem:[#allocation3 + $0x30] sm:$0xff]
      %v8687 = vld [vmem:[#allocation3 + $0x38] sm:$0xff]
      %v8688 = vld [vmem:[#allocation3 + $0x40] sm:$0xff]
      %v8689 = vld [vmem:[#allocation3 + $0x48] sm:$0xff]
      %v8690 = vld [vmem:[#allocation3 + $0x50] sm:$0xff]
      %v8691 = vld [vmem:[#allocation3 + $0x58] sm:$0xff]
      %v8692 = vld [vmem:[#allocation3 + $0x60] sm:$0xff]
      %v8693 = vld [vmem:[#allocation3 + $0x68] sm:$0xff]
      %v8694 = vld [vmem:[#allocation3 + $0x70] sm:$0xff]
      %v8695 = vld [vmem:[#allocation3 + $0x78] sm:$0xff]
      %v8696 = vld [vmem:[#allocation3 + $0x80] sm:$0xff]
      %v8697 = vld [vmem:[#allocation3 + $0x88] sm:$0xff]
      %v8698 = vld [vmem:[#allocation3 + $0x90] sm:$0xff]
      %v8699 = vld [vmem:[#allocation3 + $0x98] sm:$0xff]
      %v8700 = vld [vmem:[#allocation3 + $0xa0] sm:$0xff]
      %v8701 = vld [vmem:[#allocation3 + $0xa8] sm:$0xff]
      %v8702 = vld [vmem:[#allocation3 + $0xb0] sm:$0xff]
      %v8703 = vld [vmem:[#allocation3 + $0xb8] sm:$0xff]
      %v8704 = vld [vmem:[#allocation3 + $0xc0] sm:$0xff]
      %v8705 = vld [vmem:[#allocation3 + $0xc8] sm:$0xff]
      %v8706 = vld [vmem:[#allocation3 + $0xd0] sm:$0xff]
      %v8707 = vld [vmem:[#allocation3 + $0xd8] sm:$0xff]
      %v8708 = vld [vmem:[#allocation3 + $0xe0] sm:$0xff]
      %v8709 = vld [vmem:[#allocation3 + $0xe8] sm:$0xff]
      %v8710 = vld [vmem:[#allocation3 + $0xf0] sm:$0xff]
      %v8711 = vld [vmem:[#allocation3 + $0xf8] sm:$0xff]
      %v8712 = vadd.f32 %v8680, %v8554
      %v8713 = vadd.f32 %v8681, %v8557
      %v8714 = vadd.f32 %v8682, %v8562
      %v8715 = vadd.f32 %v8683, %v8565
      %v8716 = vadd.f32 %v8684, %v8570
      %v8717 = vadd.f32 %v8685, %v8573
      %v8718 = vadd.f32 %v8686, %v8578
      %v8719 = vadd.f32 %v8687, %v8581
      %v8720 = vadd.f32 %v8688, %v8586
      %v8721 = vadd.f32 %v8689, %v8589
      %v8722 = vadd.f32 %v8690, %v8594
      %v8723 = vadd.f32 %v8691, %v8597
      %v8724 = vadd.f32 %v8692, %v8602
      %v8725 = vadd.f32 %v8693, %v8605
      %v8726 = vadd.f32 %v8694, %v8610
      %v8727 = vadd.f32 %v8695, %v8613
      %v8728 = vadd.f32 %v8696, %v8618
      %v8729 = vadd.f32 %v8697, %v8621
      %v8730 = vadd.f32 %v8698, %v8626
      %v8731 = vadd.f32 %v8699, %v8629
      %v8732 = vadd.f32 %v8700, %v8634
      %v8733 = vadd.f32 %v8701, %v8637
      %v8734 = vadd.f32 %v8702, %v8642
      %v8735 = vadd.f32 %v8703, %v8645
      %v8736 = vadd.f32 %v8704, %v8650
      %v8737 = vadd.f32 %v8705, %v8653
      %v8738 = vadd.f32 %v8706, %v8658
      %v8739 = vadd.f32 %v8707, %v8661
      %v8740 = vadd.f32 %v8708, %v8666
      %v8741 = vadd.f32 %v8709, %v8669
      %v8742 = vadd.f32 %v8710, %v8674
      %v8743 = vadd.f32 %v8711, %v8677
      %8744 = vst [vmem:[#allocation3] sm:$0xff] %v8712
      %8745 = vst [vmem:[#allocation3 + $0x8] sm:$0xff] %v8713
      %8746 = vst [vmem:[#allocation3 + $0x10] sm:$0xff] %v8714
      %8747 = vst [vmem:[#allocation3 + $0x18] sm:$0xff] %v8715
      %8748 = vst [vmem:[#allocation3 + $0x20] sm:$0xff] %v8716
      %8749 = vst [vmem:[#allocation3 + $0x28] sm:$0xff] %v8717
      %8750 = vst [vmem:[#allocation3 + $0x30] sm:$0xff] %v8718
      %8751 = vst [vmem:[#allocation3 + $0x38] sm:$0xff] %v8719
      %8752 = vst [vmem:[#allocation3 + $0x40] sm:$0xff] %v8720
      %8753 = vst [vmem:[#allocation3 + $0x48] sm:$0xff] %v8721
      %8754 = vst [vmem:[#allocation3 + $0x50] sm:$0xff] %v8722
      %8755 = vst [vmem:[#allocation3 + $0x58] sm:$0xff] %v8723
      %8756 = vst [vmem:[#allocation3 + $0x60] sm:$0xff] %v8724
      %8757 = vst [vmem:[#allocation3 + $0x68] sm:$0xff] %v8725
      %8758 = vst [vmem:[#allocation3 + $0x70] sm:$0xff] %v8726
      %8759 = vst [vmem:[#allocation3 + $0x78] sm:$0xff] %v8727
      %8760 = vst [vmem:[#allocation3 + $0x80] sm:$0xff] %v8728
      %8761 = vst [vmem:[#allocation3 + $0x88] sm:$0xff] %v8729
      %8762 = vst [vmem:[#allocation3 + $0x90] sm:$0xff] %v8730
      %8763 = vst [vmem:[#allocation3 + $0x98] sm:$0xff] %v8731
      %8764 = vst [vmem:[#allocation3 + $0xa0] sm:$0xff] %v8732
      %8765 = vst [vmem:[#allocation3 + $0xa8] sm:$0xff] %v8733
      %8766 = vst [vmem:[#allocation3 + $0xb0] sm:$0xff] %v8734
      %8767 = vst [vmem:[#allocation3 + $0xb8] sm:$0xff] %v8735
      %8768 = vst [vmem:[#allocation3 + $0xc0] sm:$0xff] %v8736
      %8769 = vst [vmem:[#allocation3 + $0xc8] sm:$0xff] %v8737
      %8770 = vst [vmem:[#allocation3 + $0xd0] sm:$0xff] %v8738
      %8771 = vst [vmem:[#allocation3 + $0xd8] sm:$0xff] %v8739
      %8772 = vst [vmem:[#allocation3 + $0xe0] sm:$0xff] %v8740
      %8773 = vst [vmem:[#allocation3 + $0xe8] sm:$0xff] %v8741
      %8774 = vst [vmem:[#allocation3 + $0xf0] sm:$0xff] %v8742
      %8775 = vst [vmem:[#allocation3 + $0xf8] sm:$0xff] %v8743
      %v8776 = vld [vmem:[#allocation2 + $0x14] sm:$0x8]
      %v8777 = vld [vmem:[#allocation2 + $0x18] sm:$0xf]
      %v8778 = vld [vmem:[#allocation2 + $0x1c] sm:$0xf]
      %v8779 = vld [vmem:[#allocation2 + $0x20] sm:$0xf]
      %v8780 = vld [vmem:[#allocation2 + $0x24] sm:$0xf]
      %v8781 = vld [vmem:[#allocation2 + $0x28] sm:$0xf]
      %v8782 = vld [vmem:[#allocation2 + $0x2c] sm:$0xf]
      %v8783 = vld [vmem:[#allocation2 + $0x30] sm:$0xf]
      %v8784 = vld [vmem:[#allocation2 + $0x34] sm:$0xf]
      %v8785 = vld [vmem:[#allocation2 + $0x38] sm:$0xf]
      %v8786 = vld [vmem:[#allocation2 + $0x3c] sm:$0xf]
      %v8787 = vld [vmem:[#allocation2 + $0x40] sm:$0xf]
      %v8788 = vld [vmem:[#allocation2 + $0x44] sm:$0xf]
      %v8789 = vld [vmem:[#allocation2 + $0x48] sm:$0xf]
      %v8790 = vld [vmem:[#allocation2 + $0x4c] sm:$0xf]
      %v8791 = vld [vmem:[#allocation2 + $0x50] sm:$0xf]
      %v8792 = vld [vmem:[#allocation2 + $0x54] sm:$0xf]
      %v8793 = vld [vmem:[#allocation2 + $0x58] sm:$0xf]
      %v8794 = vld [vmem:[#allocation2 + $0x5c] sm:$0xf]
      %v8795 = vld [vmem:[#allocation2 + $0x60] sm:$0xf]
      %v8796 = vld [vmem:[#allocation2 + $0x64] sm:$0xf]
      %v8797 = vld [vmem:[#allocation2 + $0x68] sm:$0xf]
      %v8798 = vld [vmem:[#allocation2 + $0x6c] sm:$0xf]
      %v8799 = vld [vmem:[#allocation2 + $0x70] sm:$0xf]
      %v8800 = vld [vmem:[#allocation2 + $0x74] sm:$0xf]
      %v8801 = vld [vmem:[#allocation2 + $0x78] sm:$0xf]
      %v8802 = vld [vmem:[#allocation2 + $0x7c] sm:$0xf]
      %v8803 = vld [vmem:[#allocation2 + $0x80] sm:$0xf]
      %v8804 = vld [vmem:[#allocation2 + $0x84] sm:$0xf]
      %v8805 = vld [vmem:[#allocation2 + $0x88] sm:$0xf]
      %v8806 = vld [vmem:[#allocation2 + $0x8c] sm:$0xf]
      %v8807 = vld [vmem:[#allocation2 + $0x90] sm:$0xf]
      %v8808 = vld [vmem:[#allocation2 + $0x94] sm:$0xf]
      %s8809 = scalar_lea.vmem %s4, 384
      %v8810 = vld [vmem:[%s8809] sm:$0xf]
      %v8811 = vld [vmem:[%s8809 + $0x4] sm:$0xf]
      %v8812 = vld [vmem:[%s8809 + $0x8] sm:$0xf]
      %v8813 = vld [vmem:[%s8809 + $0xc] sm:$0xf]
      %v8814 = vld [vmem:[%s8809 + $0x10] sm:$0xf]
      %v8815 = vld [vmem:[%s8809 + $0x14] sm:$0xf]
      %v8816 = vld [vmem:[%s8809 + $0x18] sm:$0xf]
      %v8817 = vld [vmem:[%s8809 + $0x1c] sm:$0xf]
      %v8818 = vld [vmem:[%s8809 + $0x20] sm:$0xf]
      %v8819 = vld [vmem:[%s8809 + $0x24] sm:$0xf]
      %v8820 = vld [vmem:[%s8809 + $0x28] sm:$0xf]
      %v8821 = vld [vmem:[%s8809 + $0x2c] sm:$0xf]
      %v8822 = vld [vmem:[%s8809 + $0x30] sm:$0xf]
      %v8823 = vld [vmem:[%s8809 + $0x34] sm:$0xf]
      %v8824 = vld [vmem:[%s8809 + $0x38] sm:$0xf]
      %v8825 = vld [vmem:[%s8809 + $0x3c] sm:$0xf]
      %v8859 = vunpack.c.l.b16 %v8776
      %v8860 = vunpack.c.l.b16 %v8777
      %v8861 = vunpack.c.l.b16 %v8778
      %v8862 = vunpack.c.l.b16 %v8779
      %v8863 = vunpack.c.l.b16 %v8780
      %v8864 = vunpack.c.l.b16 %v8781
      %v8865 = vunpack.c.l.b16 %v8782
      %v8866 = vunpack.c.l.b16 %v8783
      %v8867 = vunpack.c.l.b16 %v8784
      %v8868 = vunpack.c.l.b16 %v8785
      %v8869 = vunpack.c.l.b16 %v8786
      %v8870 = vunpack.c.l.b16 %v8787
      %v8871 = vunpack.c.l.b16 %v8788
      %v8872 = vunpack.c.l.b16 %v8789
      %v8873 = vunpack.c.l.b16 %v8790
      %v8874 = vunpack.c.l.b16 %v8791
      %v8875 = vunpack.c.l.b16 %v8792
      %v8876 = vunpack.c.l.b16 %v8793
      %v8877 = vunpack.c.l.b16 %v8794
      %v8878 = vunpack.c.l.b16 %v8795
      %v8879 = vunpack.c.l.b16 %v8796
      %v8880 = vunpack.c.l.b16 %v8797
      %v8881 = vunpack.c.l.b16 %v8798
      %v8882 = vunpack.c.l.b16 %v8799
      %v8883 = vunpack.c.l.b16 %v8800
      %v8884 = vunpack.c.l.b16 %v8801
      %v8885 = vunpack.c.l.b16 %v8802
      %v8886 = vunpack.c.l.b16 %v8803
      %v8887 = vunpack.c.l.b16 %v8804
      %v8888 = vunpack.c.l.b16 %v8805
      %v8889 = vunpack.c.l.b16 %v8806
      %v8890 = vunpack.c.l.b16 %v8807
      %v8891 = vunpack.c.l.b16 %v8808
      %v8892 = vpack.c.b16 %v8860, %v8859
      %v8893 = vpack.c.b16 %v8862, %v8861
      %v8894 = vpack.c.b16 %v8864, %v8863
      %v8895 = vpack.c.b16 %v8866, %v8865
      %v8896 = vpack.c.b16 %v8868, %v8867
      %v8897 = vpack.c.b16 %v8870, %v8869
      %v8898 = vpack.c.b16 %v8872, %v8871
      %v8899 = vpack.c.b16 %v8874, %v8873
      %v8900 = vpack.c.b16 %v8876, %v8875
      %v8901 = vpack.c.b16 %v8878, %v8877
      %v8902 = vpack.c.b16 %v8880, %v8879
      %v8903 = vpack.c.b16 %v8882, %v8881
      %v8904 = vpack.c.b16 %v8884, %v8883
      %v8905 = vpack.c.b16 %v8886, %v8885
      %v8906 = vpack.c.b16 %v8888, %v8887
      %v8907 = vpack.c.b16 %v8890, %v8889
      %v8908 = vpack.c.b16 %v8891, %v8891
      %v8910 = vshrl.u32 %v8892, 16
      %v8912 = vrot.slane %v8910, 3
      %v8913 = vshll.u32 %v8892, 16
      %v8915 = vrot.slane %v8913, 4
      %v8916 = vor.u32 %v8912, %v8915
      %v8918 = vshrl.u32 %v8893, 16
      %v8920 = vrot.slane %v8918, 3
      %v8921 = vshll.u32 %v8893, 16
      %v8923 = vrot.slane %v8921, 4
      %v8924 = vor.u32 %v8920, %v8923
      %v8925 = vsel %vm502, %v8916, %v8924
      %v8927 = vshrl.u32 %v8894, 16
      %v8929 = vrot.slane %v8927, 3
      %v8930 = vshll.u32 %v8894, 16
      %v8932 = vrot.slane %v8930, 4
      %v8933 = vor.u32 %v8929, %v8932
      %v8934 = vsel %vm502, %v8924, %v8933
      %v8936 = vshrl.u32 %v8895, 16
      %v8938 = vrot.slane %v8936, 3
      %v8939 = vshll.u32 %v8895, 16
      %v8941 = vrot.slane %v8939, 4
      %v8942 = vor.u32 %v8938, %v8941
      %v8943 = vsel %vm502, %v8933, %v8942
      %v8945 = vshrl.u32 %v8896, 16
      %v8947 = vrot.slane %v8945, 3
      %v8948 = vshll.u32 %v8896, 16
      %v8950 = vrot.slane %v8948, 4
      %v8951 = vor.u32 %v8947, %v8950
      %v8952 = vsel %vm502, %v8942, %v8951
      %v8954 = vshrl.u32 %v8897, 16
      %v8956 = vrot.slane %v8954, 3
      %v8957 = vshll.u32 %v8897, 16
      %v8959 = vrot.slane %v8957, 4
      %v8960 = vor.u32 %v8956, %v8959
      %v8961 = vsel %vm502, %v8951, %v8960
      %v8963 = vshrl.u32 %v8898, 16
      %v8965 = vrot.slane %v8963, 3
      %v8966 = vshll.u32 %v8898, 16
      %v8968 = vrot.slane %v8966, 4
      %v8969 = vor.u32 %v8965, %v8968
      %v8970 = vsel %vm502, %v8960, %v8969
      %v8972 = vshrl.u32 %v8899, 16
      %v8974 = vrot.slane %v8972, 3
      %v8975 = vshll.u32 %v8899, 16
      %v8977 = vrot.slane %v8975, 4
      %v8978 = vor.u32 %v8974, %v8977
      %v8979 = vsel %vm502, %v8969, %v8978
      %v8981 = vshrl.u32 %v8900, 16
      %v8983 = vrot.slane %v8981, 3
      %v8984 = vshll.u32 %v8900, 16
      %v8986 = vrot.slane %v8984, 4
      %v8987 = vor.u32 %v8983, %v8986
      %v8988 = vsel %vm502, %v8978, %v8987
      %v8990 = vshrl.u32 %v8901, 16
      %v8992 = vrot.slane %v8990, 3
      %v8993 = vshll.u32 %v8901, 16
      %v8995 = vrot.slane %v8993, 4
      %v8996 = vor.u32 %v8992, %v8995
      %v8997 = vsel %vm502, %v8987, %v8996
      %v8999 = vshrl.u32 %v8902, 16
      %v9001 = vrot.slane %v8999, 3
      %v9002 = vshll.u32 %v8902, 16
      %v9004 = vrot.slane %v9002, 4
      %v9005 = vor.u32 %v9001, %v9004
      %v9006 = vsel %vm502, %v8996, %v9005
      %v9008 = vshrl.u32 %v8903, 16
      %v9010 = vrot.slane %v9008, 3
      %v9011 = vshll.u32 %v8903, 16
      %v9013 = vrot.slane %v9011, 4
      %v9014 = vor.u32 %v9010, %v9013
      %v9015 = vsel %vm502, %v9005, %v9014
      %v9017 = vshrl.u32 %v8904, 16
      %v9019 = vrot.slane %v9017, 3
      %v9020 = vshll.u32 %v8904, 16
      %v9022 = vrot.slane %v9020, 4
      %v9023 = vor.u32 %v9019, %v9022
      %v9024 = vsel %vm502, %v9014, %v9023
      %v9026 = vshrl.u32 %v8905, 16
      %v9028 = vrot.slane %v9026, 3
      %v9029 = vshll.u32 %v8905, 16
      %v9031 = vrot.slane %v9029, 4
      %v9032 = vor.u32 %v9028, %v9031
      %v9033 = vsel %vm502, %v9023, %v9032
      %v9035 = vshrl.u32 %v8906, 16
      %v9037 = vrot.slane %v9035, 3
      %v9038 = vshll.u32 %v8906, 16
      %v9040 = vrot.slane %v9038, 4
      %v9041 = vor.u32 %v9037, %v9040
      %v9042 = vsel %vm502, %v9032, %v9041
      %v9044 = vshrl.u32 %v8907, 16
      %v9046 = vrot.slane %v9044, 3
      %v9047 = vshll.u32 %v8907, 16
      %v9049 = vrot.slane %v9047, 4
      %v9050 = vor.u32 %v9046, %v9049
      %v9051 = vsel %vm502, %v9041, %v9050
      %v9053 = vshrl.u32 %v8908, 16
      %v9055 = vrot.slane %v9053, 3
      %v9056 = vshll.u32 %v8908, 16
      %v9058 = vrot.slane %v9056, 4
      %v9059 = vor.u32 %v9055, %v9058
      %v9060 = vsel %vm502, %v9050, %v9059
      %v9093 = vunpack.c.l.b16 %v8810
      %v9094 = vunpack.c.l.b16 %v8811
      %v9095 = vunpack.c.l.b16 %v8812
      %v9096 = vunpack.c.l.b16 %v8813
      %v9097 = vunpack.c.l.b16 %v8814
      %v9098 = vunpack.c.l.b16 %v8815
      %v9099 = vunpack.c.l.b16 %v8816
      %v9100 = vunpack.c.l.b16 %v8817
      %v9101 = vunpack.c.l.b16 %v8818
      %v9102 = vunpack.c.l.b16 %v8819
      %v9103 = vunpack.c.l.b16 %v8820
      %v9104 = vunpack.c.l.b16 %v8821
      %v9105 = vunpack.c.l.b16 %v8822
      %v9106 = vunpack.c.l.b16 %v8823
      %v9107 = vunpack.c.l.b16 %v8824
      %v9108 = vunpack.c.l.b16 %v8825
      %v9109 = vpack.c.b16 %v9094, %v9093
      %v9110 = vpack.c.b16 %v9096, %v9095
      %v9111 = vpack.c.b16 %v9098, %v9097
      %v9112 = vpack.c.b16 %v9100, %v9099
      %v9113 = vpack.c.b16 %v9102, %v9101
      %v9114 = vpack.c.b16 %v9104, %v9103
      %v9115 = vpack.c.b16 %v9106, %v9105
      %v9116 = vpack.c.b16 %v9108, %v9107
      %9125 = vmatprep.subr.bf16.mxu0 0
      %9126 = vmatpush1.bf16.msra.mxu0 %v9116
      %9127 = vmatprep.subr.bf16.mxu0 0
      %9128 = vmatpush1.bf16.msra.mxu0 %v9115
      %9129 = vmatprep.subr.bf16.mxu0 0
      %9130 = vmatpush1.bf16.msra.mxu0 %v9114
      %9131 = vmatprep.subr.bf16.mxu0 0
      %9132 = vmatpush1.bf16.msra.mxu0 %v9113
      %9133 = vmatprep.subr.bf16.mxu0 0
      %9134 = vmatpush1.bf16.msra.mxu0 %v9112
      %9135 = vmatprep.subr.bf16.mxu0 0
      %9136 = vmatpush1.bf16.msra.mxu0 %v9111
      %9137 = vmatprep.subr.bf16.mxu0 0
      %9138 = vmatpush1.bf16.msra.mxu0 %v9110
      %9139 = vmatprep.subr.bf16.mxu0 0
      %9140 = vmatpush1.bf16.msra.mxu0 %v9109
      %9141 = vmatprep.subr.bf16.mxu0 0
      %9142 = vmatpush2.bf16.msra.mxu0 0
      %9143 = vmatprep.subr.bf16.mxu0 0
      %9144 = vmatpush2.bf16.msra.mxu0 0
      %9145 = vmatprep.subr.bf16.mxu0 0
      %9146 = vmatpush2.bf16.msra.mxu0 0
      %9147 = vmatprep.subr.bf16.mxu0 0
      %9148 = vmatpush2.bf16.msra.mxu0 0
      %9149 = vmatprep.subr.bf16.mxu0 0
      %9150 = vmatpush2.bf16.msra.mxu0 0
      %9151 = vmatprep.subr.bf16.mxu0 0
      %9152 = vmatpush2.bf16.msra.mxu0 0
      %9153 = vmatprep.subr.bf16.mxu0 0
      %9154 = vmatpush2.bf16.msra.mxu0 0
      %9155 = vmatprep.subr.bf16.mxu0 0
      %9156 = vmatpush2.bf16.msra.mxu0 0
      %9157 = vmatprep.mubr.bf16.mxu0 0
      %9158 = vmatmul.mubr.bf16.gmra.mxu0 %v8925
      %v9159 = vpop.f32.mrf.mxu0
      %v9160 = vadd.f32 0.0, %v9159
      %v9161 = vpop.f32.mrf.mxu0
      %v9162 = vpop.f32.mrf.mxu0
      %v9163 = vadd.f32 0.0, %v9162
      %v9164 = vpop.f32.mrf.mxu0
      %9165 = vmatprep.mubr.bf16.mxu0 0
      %9166 = vmatmul.mubr.bf16.gmra.mxu0 %v8934
      %v9167 = vpop.f32.mrf.mxu0
      %v9168 = vadd.f32 0.0, %v9167
      %v9169 = vpop.f32.mrf.mxu0
      %v9170 = vpop.f32.mrf.mxu0
      %v9171 = vadd.f32 0.0, %v9170
      %v9172 = vpop.f32.mrf.mxu0
      %9173 = vmatprep.mubr.bf16.mxu0 0
      %9174 = vmatmul.mubr.bf16.gmra.mxu0 %v8943
      %v9175 = vpop.f32.mrf.mxu0
      %v9176 = vadd.f32 0.0, %v9175
      %v9177 = vpop.f32.mrf.mxu0
      %v9178 = vpop.f32.mrf.mxu0
      %v9179 = vadd.f32 0.0, %v9178
      %v9180 = vpop.f32.mrf.mxu0
      %9181 = vmatprep.mubr.bf16.mxu0 0
      %9182 = vmatmul.mubr.bf16.gmra.mxu0 %v8952
      %v9183 = vpop.f32.mrf.mxu0
      %v9184 = vadd.f32 0.0, %v9183
      %v9185 = vpop.f32.mrf.mxu0
      %v9186 = vpop.f32.mrf.mxu0
      %v9187 = vadd.f32 0.0, %v9186
      %v9188 = vpop.f32.mrf.mxu0
      %9189 = vmatprep.mubr.bf16.mxu0 0
      %9190 = vmatmul.mubr.bf16.gmra.mxu0 %v8961
      %v9191 = vpop.f32.mrf.mxu0
      %v9192 = vadd.f32 0.0, %v9191
      %v9193 = vpop.f32.mrf.mxu0
      %v9194 = vpop.f32.mrf.mxu0
      %v9195 = vadd.f32 0.0, %v9194
      %v9196 = vpop.f32.mrf.mxu0
      %9197 = vmatprep.mubr.bf16.mxu0 0
      %9198 = vmatmul.mubr.bf16.gmra.mxu0 %v8970
      %v9199 = vpop.f32.mrf.mxu0
      %v9200 = vadd.f32 0.0, %v9199
      %v9201 = vpop.f32.mrf.mxu0
      %v9202 = vpop.f32.mrf.mxu0
      %v9203 = vadd.f32 0.0, %v9202
      %v9204 = vpop.f32.mrf.mxu0
      %9205 = vmatprep.mubr.bf16.mxu0 0
      %9206 = vmatmul.mubr.bf16.gmra.mxu0 %v8979
      %v9207 = vpop.f32.mrf.mxu0
      %v9208 = vadd.f32 0.0, %v9207
      %v9209 = vpop.f32.mrf.mxu0
      %v9210 = vpop.f32.mrf.mxu0
      %v9211 = vadd.f32 0.0, %v9210
      %v9212 = vpop.f32.mrf.mxu0
      %9213 = vmatprep.mubr.bf16.mxu0 0
      %9214 = vmatmul.mubr.bf16.gmra.mxu0 %v8988
      %v9215 = vpop.f32.mrf.mxu0
      %v9216 = vadd.f32 0.0, %v9215
      %v9217 = vpop.f32.mrf.mxu0
      %v9218 = vpop.f32.mrf.mxu0
      %v9219 = vadd.f32 0.0, %v9218
      %v9220 = vpop.f32.mrf.mxu0
      %9221 = vmatprep.mubr.bf16.mxu0 0
      %9222 = vmatmul.mubr.bf16.gmra.mxu0 %v8997
      %v9223 = vpop.f32.mrf.mxu0
      %v9224 = vadd.f32 0.0, %v9223
      %v9225 = vpop.f32.mrf.mxu0
      %v9226 = vpop.f32.mrf.mxu0
      %v9227 = vadd.f32 0.0, %v9226
      %v9228 = vpop.f32.mrf.mxu0
      %9229 = vmatprep.mubr.bf16.mxu0 0
      %9230 = vmatmul.mubr.bf16.gmra.mxu0 %v9006
      %v9231 = vpop.f32.mrf.mxu0
      %v9232 = vadd.f32 0.0, %v9231
      %v9233 = vpop.f32.mrf.mxu0
      %v9234 = vpop.f32.mrf.mxu0
      %v9235 = vadd.f32 0.0, %v9234
      %v9236 = vpop.f32.mrf.mxu0
      %9237 = vmatprep.mubr.bf16.mxu0 0
      %9238 = vmatmul.mubr.bf16.gmra.mxu0 %v9015
      %v9239 = vpop.f32.mrf.mxu0
      %v9240 = vadd.f32 0.0, %v9239
      %v9241 = vpop.f32.mrf.mxu0
      %v9242 = vpop.f32.mrf.mxu0
      %v9243 = vadd.f32 0.0, %v9242
      %v9244 = vpop.f32.mrf.mxu0
      %9245 = vmatprep.mubr.bf16.mxu0 0
      %9246 = vmatmul.mubr.bf16.gmra.mxu0 %v9024
      %v9247 = vpop.f32.mrf.mxu0
      %v9248 = vadd.f32 0.0, %v9247
      %v9249 = vpop.f32.mrf.mxu0
      %v9250 = vpop.f32.mrf.mxu0
      %v9251 = vadd.f32 0.0, %v9250
      %v9252 = vpop.f32.mrf.mxu0
      %9253 = vmatprep.mubr.bf16.mxu0 0
      %9254 = vmatmul.mubr.bf16.gmra.mxu0 %v9033
      %v9255 = vpop.f32.mrf.mxu0
      %v9256 = vadd.f32 0.0, %v9255
      %v9257 = vpop.f32.mrf.mxu0
      %v9258 = vpop.f32.mrf.mxu0
      %v9259 = vadd.f32 0.0, %v9258
      %v9260 = vpop.f32.mrf.mxu0
      %9261 = vmatprep.mubr.bf16.mxu0 0
      %9262 = vmatmul.mubr.bf16.gmra.mxu0 %v9042
      %v9263 = vpop.f32.mrf.mxu0
      %v9264 = vadd.f32 0.0, %v9263
      %v9265 = vpop.f32.mrf.mxu0
      %v9266 = vpop.f32.mrf.mxu0
      %v9267 = vadd.f32 0.0, %v9266
      %v9268 = vpop.f32.mrf.mxu0
      %9269 = vmatprep.mubr.bf16.mxu0 0
      %9270 = vmatmul.mubr.bf16.gmra.mxu0 %v9051
      %v9271 = vpop.f32.mrf.mxu0
      %v9272 = vadd.f32 0.0, %v9271
      %v9273 = vpop.f32.mrf.mxu0
      %v9274 = vpop.f32.mrf.mxu0
      %v9275 = vadd.f32 0.0, %v9274
      %v9276 = vpop.f32.mrf.mxu0
      %9277 = vmatprep.mubr.bf16.mxu0 0
      %9278 = vmatmul.mubr.bf16.gmra.mxu0 %v9060
      %v9279 = vpop.f32.mrf.mxu0
      %v9280 = vadd.f32 0.0, %v9279
      %v9281 = vpop.f32.mrf.mxu0
      %v9282 = vpop.f32.mrf.mxu0
      %v9283 = vadd.f32 0.0, %v9282
      %v9284 = vpop.f32.mrf.mxu0
      %9285 = vdwg.mxu0
      %v9286 = vld [vmem:[#allocation3] sm:$0xff]
      %v9287 = vld [vmem:[#allocation3 + $0x8] sm:$0xff]
      %v9288 = vld [vmem:[#allocation3 + $0x10] sm:$0xff]
      %v9289 = vld [vmem:[#allocation3 + $0x18] sm:$0xff]
      %v9290 = vld [vmem:[#allocation3 + $0x20] sm:$0xff]
      %v9291 = vld [vmem:[#allocation3 + $0x28] sm:$0xff]
      %v9292 = vld [vmem:[#allocation3 + $0x30] sm:$0xff]
      %v9293 = vld [vmem:[#allocation3 + $0x38] sm:$0xff]
      %v9294 = vld [vmem:[#allocation3 + $0x40] sm:$0xff]
      %v9295 = vld [vmem:[#allocation3 + $0x48] sm:$0xff]
      %v9296 = vld [vmem:[#allocation3 + $0x50] sm:$0xff]
      %v9297 = vld [vmem:[#allocation3 + $0x58] sm:$0xff]
      %v9298 = vld [vmem:[#allocation3 + $0x60] sm:$0xff]
      %v9299 = vld [vmem:[#allocation3 + $0x68] sm:$0xff]
      %v9300 = vld [vmem:[#allocation3 + $0x70] sm:$0xff]
      %v9301 = vld [vmem:[#allocation3 + $0x78] sm:$0xff]
      %v9302 = vld [vmem:[#allocation3 + $0x80] sm:$0xff]
      %v9303 = vld [vmem:[#allocation3 + $0x88] sm:$0xff]
      %v9304 = vld [vmem:[#allocation3 + $0x90] sm:$0xff]
      %v9305 = vld [vmem:[#allocation3 + $0x98] sm:$0xff]
      %v9306 = vld [vmem:[#allocation3 + $0xa0] sm:$0xff]
      %v9307 = vld [vmem:[#allocation3 + $0xa8] sm:$0xff]
      %v9308 = vld [vmem:[#allocation3 + $0xb0] sm:$0xff]
      %v9309 = vld [vmem:[#allocation3 + $0xb8] sm:$0xff]
      %v9310 = vld [vmem:[#allocation3 + $0xc0] sm:$0xff]
      %v9311 = vld [vmem:[#allocation3 + $0xc8] sm:$0xff]
      %v9312 = vld [vmem:[#allocation3 + $0xd0] sm:$0xff]
      %v9313 = vld [vmem:[#allocation3 + $0xd8] sm:$0xff]
      %v9314 = vld [vmem:[#allocation3 + $0xe0] sm:$0xff]
      %v9315 = vld [vmem:[#allocation3 + $0xe8] sm:$0xff]
      %v9316 = vld [vmem:[#allocation3 + $0xf0] sm:$0xff]
      %v9317 = vld [vmem:[#allocation3 + $0xf8] sm:$0xff]
      %v9318 = vadd.f32 %v9286, %v9160
      %v9319 = vadd.f32 %v9287, %v9163
      %v9320 = vadd.f32 %v9288, %v9168
      %v9321 = vadd.f32 %v9289, %v9171
      %v9322 = vadd.f32 %v9290, %v9176
      %v9323 = vadd.f32 %v9291, %v9179
      %v9324 = vadd.f32 %v9292, %v9184
      %v9325 = vadd.f32 %v9293, %v9187
      %v9326 = vadd.f32 %v9294, %v9192
      %v9327 = vadd.f32 %v9295, %v9195
      %v9328 = vadd.f32 %v9296, %v9200
      %v9329 = vadd.f32 %v9297, %v9203
      %v9330 = vadd.f32 %v9298, %v9208
      %v9331 = vadd.f32 %v9299, %v9211
      %v9332 = vadd.f32 %v9300, %v9216
      %v9333 = vadd.f32 %v9301, %v9219
      %v9334 = vadd.f32 %v9302, %v9224
      %v9335 = vadd.f32 %v9303, %v9227
      %v9336 = vadd.f32 %v9304, %v9232
      %v9337 = vadd.f32 %v9305, %v9235
      %v9338 = vadd.f32 %v9306, %v9240
      %v9339 = vadd.f32 %v9307, %v9243
      %v9340 = vadd.f32 %v9308, %v9248
      %v9341 = vadd.f32 %v9309, %v9251
      %v9342 = vadd.f32 %v9310, %v9256
      %v9343 = vadd.f32 %v9311, %v9259
      %v9344 = vadd.f32 %v9312, %v9264
      %v9345 = vadd.f32 %v9313, %v9267
      %v9346 = vadd.f32 %v9314, %v9272
      %v9347 = vadd.f32 %v9315, %v9275
      %v9348 = vadd.f32 %v9316, %v9280
      %v9349 = vadd.f32 %v9317, %v9283
      %9350 = vst [vmem:[#allocation3] sm:$0xff] %v9318
      %9351 = vst [vmem:[#allocation3 + $0x8] sm:$0xff] %v9319
      %9352 = vst [vmem:[#allocation3 + $0x10] sm:$0xff] %v9320
      %9353 = vst [vmem:[#allocation3 + $0x18] sm:$0xff] %v9321
      %9354 = vst [vmem:[#allocation3 + $0x20] sm:$0xff] %v9322
      %9355 = vst [vmem:[#allocation3 + $0x28] sm:$0xff] %v9323
      %9356 = vst [vmem:[#allocation3 + $0x30] sm:$0xff] %v9324
      %9357 = vst [vmem:[#allocation3 + $0x38] sm:$0xff] %v9325
      %9358 = vst [vmem:[#allocation3 + $0x40] sm:$0xff] %v9326
      %9359 = vst [vmem:[#allocation3 + $0x48] sm:$0xff] %v9327
      %9360 = vst [vmem:[#allocation3 + $0x50] sm:$0xff] %v9328
      %9361 = vst [vmem:[#allocation3 + $0x58] sm:$0xff] %v9329
      %9362 = vst [vmem:[#allocation3 + $0x60] sm:$0xff] %v9330
      %9363 = vst [vmem:[#allocation3 + $0x68] sm:$0xff] %v9331
      %9364 = vst [vmem:[#allocation3 + $0x70] sm:$0xff] %v9332
      %9365 = vst [vmem:[#allocation3 + $0x78] sm:$0xff] %v9333
      %9366 = vst [vmem:[#allocation3 + $0x80] sm:$0xff] %v9334
      %9367 = vst [vmem:[#allocation3 + $0x88] sm:$0xff] %v9335
      %9368 = vst [vmem:[#allocation3 + $0x90] sm:$0xff] %v9336
      %9369 = vst [vmem:[#allocation3 + $0x98] sm:$0xff] %v9337
      %9370 = vst [vmem:[#allocation3 + $0xa0] sm:$0xff] %v9338
      %9371 = vst [vmem:[#allocation3 + $0xa8] sm:$0xff] %v9339
      %9372 = vst [vmem:[#allocation3 + $0xb0] sm:$0xff] %v9340
      %9373 = vst [vmem:[#allocation3 + $0xb8] sm:$0xff] %v9341
      %9374 = vst [vmem:[#allocation3 + $0xc0] sm:$0xff] %v9342
      %9375 = vst [vmem:[#allocation3 + $0xc8] sm:$0xff] %v9343
      %9376 = vst [vmem:[#allocation3 + $0xd0] sm:$0xff] %v9344
      %9377 = vst [vmem:[#allocation3 + $0xd8] sm:$0xff] %v9345
      %9378 = vst [vmem:[#allocation3 + $0xe0] sm:$0xff] %v9346
      %9379 = vst [vmem:[#allocation3 + $0xe8] sm:$0xff] %v9347
      %9380 = vst [vmem:[#allocation3 + $0xf0] sm:$0xff] %v9348
      %9381 = vst [vmem:[#allocation3 + $0xf8] sm:$0xff] %v9349
      %v9382 = vld [vmem:[#allocation2 + $0x18] sm:$0xf]
      %v9383 = vld [vmem:[#allocation2 + $0x1c] sm:$0xf]
      %v9384 = vld [vmem:[#allocation2 + $0x20] sm:$0xf]
      %v9385 = vld [vmem:[#allocation2 + $0x24] sm:$0xf]
      %v9386 = vld [vmem:[#allocation2 + $0x28] sm:$0xf]
      %v9387 = vld [vmem:[#allocation2 + $0x2c] sm:$0xf]
      %v9388 = vld [vmem:[#allocation2 + $0x30] sm:$0xf]
      %v9389 = vld [vmem:[#allocation2 + $0x34] sm:$0xf]
      %v9390 = vld [vmem:[#allocation2 + $0x38] sm:$0xf]
      %v9391 = vld [vmem:[#allocation2 + $0x3c] sm:$0xf]
      %v9392 = vld [vmem:[#allocation2 + $0x40] sm:$0xf]
      %v9393 = vld [vmem:[#allocation2 + $0x44] sm:$0xf]
      %v9394 = vld [vmem:[#allocation2 + $0x48] sm:$0xf]
      %v9395 = vld [vmem:[#allocation2 + $0x4c] sm:$0xf]
      %v9396 = vld [vmem:[#allocation2 + $0x50] sm:$0xf]
      %v9397 = vld [vmem:[#allocation2 + $0x54] sm:$0xf]
      %v9398 = vld [vmem:[#allocation2 + $0x58] sm:$0xf]
      %v9399 = vld [vmem:[#allocation2 + $0x5c] sm:$0xf]
      %v9400 = vld [vmem:[#allocation2 + $0x60] sm:$0xf]
      %v9401 = vld [vmem:[#allocation2 + $0x64] sm:$0xf]
      %v9402 = vld [vmem:[#allocation2 + $0x68] sm:$0xf]
      %v9403 = vld [vmem:[#allocation2 + $0x6c] sm:$0xf]
      %v9404 = vld [vmem:[#allocation2 + $0x70] sm:$0xf]
      %v9405 = vld [vmem:[#allocation2 + $0x74] sm:$0xf]
      %v9406 = vld [vmem:[#allocation2 + $0x78] sm:$0xf]
      %v9407 = vld [vmem:[#allocation2 + $0x7c] sm:$0xf]
      %v9408 = vld [vmem:[#allocation2 + $0x80] sm:$0xf]
      %v9409 = vld [vmem:[#allocation2 + $0x84] sm:$0xf]
      %v9410 = vld [vmem:[#allocation2 + $0x88] sm:$0xf]
      %v9411 = vld [vmem:[#allocation2 + $0x8c] sm:$0xf]
      %v9412 = vld [vmem:[#allocation2 + $0x90] sm:$0xf]
      %v9413 = vld [vmem:[#allocation2 + $0x94] sm:$0xf]
      %s9414 = scalar_lea.vmem %s4, 448
      %v9415 = vld [vmem:[%s9414] sm:$0xf]
      %v9416 = vld [vmem:[%s9414 + $0x4] sm:$0xf]
      %v9417 = vld [vmem:[%s9414 + $0x8] sm:$0xf]
      %v9418 = vld [vmem:[%s9414 + $0xc] sm:$0xf]
      %v9419 = vld [vmem:[%s9414 + $0x10] sm:$0xf]
      %v9420 = vld [vmem:[%s9414 + $0x14] sm:$0xf]
      %v9421 = vld [vmem:[%s9414 + $0x18] sm:$0xf]
      %v9422 = vld [vmem:[%s9414 + $0x1c] sm:$0xf]
      %v9423 = vld [vmem:[%s9414 + $0x20] sm:$0xf]
      %v9424 = vld [vmem:[%s9414 + $0x24] sm:$0xf]
      %v9425 = vld [vmem:[%s9414 + $0x28] sm:$0xf]
      %v9426 = vld [vmem:[%s9414 + $0x2c] sm:$0xf]
      %v9427 = vld [vmem:[%s9414 + $0x30] sm:$0xf]
      %v9428 = vld [vmem:[%s9414 + $0x34] sm:$0xf]
      %v9429 = vld [vmem:[%s9414 + $0x38] sm:$0xf]
      %v9430 = vld [vmem:[%s9414 + $0x3c] sm:$0xf]
      %v9463 = vunpack.c.l.b16 %v9382
      %v9464 = vunpack.c.l.b16 %v9383
      %v9465 = vunpack.c.l.b16 %v9384
      %v9466 = vunpack.c.l.b16 %v9385
      %v9467 = vunpack.c.l.b16 %v9386
      %v9468 = vunpack.c.l.b16 %v9387
      %v9469 = vunpack.c.l.b16 %v9388
      %v9470 = vunpack.c.l.b16 %v9389
      %v9471 = vunpack.c.l.b16 %v9390
      %v9472 = vunpack.c.l.b16 %v9391
      %v9473 = vunpack.c.l.b16 %v9392
      %v9474 = vunpack.c.l.b16 %v9393
      %v9475 = vunpack.c.l.b16 %v9394
      %v9476 = vunpack.c.l.b16 %v9395
      %v9477 = vunpack.c.l.b16 %v9396
      %v9478 = vunpack.c.l.b16 %v9397
      %v9479 = vunpack.c.l.b16 %v9398
      %v9480 = vunpack.c.l.b16 %v9399
      %v9481 = vunpack.c.l.b16 %v9400
      %v9482 = vunpack.c.l.b16 %v9401
      %v9483 = vunpack.c.l.b16 %v9402
      %v9484 = vunpack.c.l.b16 %v9403
      %v9485 = vunpack.c.l.b16 %v9404
      %v9486 = vunpack.c.l.b16 %v9405
      %v9487 = vunpack.c.l.b16 %v9406
      %v9488 = vunpack.c.l.b16 %v9407
      %v9489 = vunpack.c.l.b16 %v9408
      %v9490 = vunpack.c.l.b16 %v9409
      %v9491 = vunpack.c.l.b16 %v9410
      %v9492 = vunpack.c.l.b16 %v9411
      %v9493 = vunpack.c.l.b16 %v9412
      %v9494 = vunpack.c.l.b16 %v9413
      %v9495 = vpack.c.b16 %v9464, %v9463
      %v9496 = vpack.c.b16 %v9466, %v9465
      %v9497 = vpack.c.b16 %v9468, %v9467
      %v9498 = vpack.c.b16 %v9470, %v9469
      %v9499 = vpack.c.b16 %v9472, %v9471
      %v9500 = vpack.c.b16 %v9474, %v9473
      %v9501 = vpack.c.b16 %v9476, %v9475
      %v9502 = vpack.c.b16 %v9478, %v9477
      %v9503 = vpack.c.b16 %v9480, %v9479
      %v9504 = vpack.c.b16 %v9482, %v9481
      %v9505 = vpack.c.b16 %v9484, %v9483
      %v9506 = vpack.c.b16 %v9486, %v9485
      %v9507 = vpack.c.b16 %v9488, %v9487
      %v9508 = vpack.c.b16 %v9490, %v9489
      %v9509 = vpack.c.b16 %v9492, %v9491
      %v9510 = vpack.c.b16 %v9494, %v9493
      %v9543 = vunpack.c.l.b16 %v9415
      %v9544 = vunpack.c.l.b16 %v9416
      %v9545 = vunpack.c.l.b16 %v9417
      %v9546 = vunpack.c.l.b16 %v9418
      %v9547 = vunpack.c.l.b16 %v9419
      %v9548 = vunpack.c.l.b16 %v9420
      %v9549 = vunpack.c.l.b16 %v9421
      %v9550 = vunpack.c.l.b16 %v9422
      %v9551 = vunpack.c.l.b16 %v9423
      %v9552 = vunpack.c.l.b16 %v9424
      %v9553 = vunpack.c.l.b16 %v9425
      %v9554 = vunpack.c.l.b16 %v9426
      %v9555 = vunpack.c.l.b16 %v9427
      %v9556 = vunpack.c.l.b16 %v9428
      %v9557 = vunpack.c.l.b16 %v9429
      %v9558 = vunpack.c.l.b16 %v9430
      %v9559 = vpack.c.b16 %v9544, %v9543
      %v9560 = vpack.c.b16 %v9546, %v9545
      %v9561 = vpack.c.b16 %v9548, %v9547
      %v9562 = vpack.c.b16 %v9550, %v9549
      %v9563 = vpack.c.b16 %v9552, %v9551
      %v9564 = vpack.c.b16 %v9554, %v9553
      %v9565 = vpack.c.b16 %v9556, %v9555
      %v9566 = vpack.c.b16 %v9558, %v9557
      %9575 = vmatprep.subr.bf16.mxu0 0
      %9576 = vmatpush1.bf16.msra.mxu0 %v9566
      %9577 = vmatprep.subr.bf16.mxu0 0
      %9578 = vmatpush1.bf16.msra.mxu0 %v9565
      %9579 = vmatprep.subr.bf16.mxu0 0
      %9580 = vmatpush1.bf16.msra.mxu0 %v9564
      %9581 = vmatprep.subr.bf16.mxu0 0
      %9582 = vmatpush1.bf16.msra.mxu0 %v9563
      %9583 = vmatprep.subr.bf16.mxu0 0
      %9584 = vmatpush1.bf16.msra.mxu0 %v9562
      %9585 = vmatprep.subr.bf16.mxu0 0
      %9586 = vmatpush1.bf16.msra.mxu0 %v9561
      %9587 = vmatprep.subr.bf16.mxu0 0
      %9588 = vmatpush1.bf16.msra.mxu0 %v9560
      %9589 = vmatprep.subr.bf16.mxu0 0
      %9590 = vmatpush1.bf16.msra.mxu0 %v9559
      %9591 = vmatprep.subr.bf16.mxu0 0
      %9592 = vmatpush2.bf16.msra.mxu0 0
      %9593 = vmatprep.subr.bf16.mxu0 0
      %9594 = vmatpush2.bf16.msra.mxu0 0
      %9595 = vmatprep.subr.bf16.mxu0 0
      %9596 = vmatpush2.bf16.msra.mxu0 0
      %9597 = vmatprep.subr.bf16.mxu0 0
      %9598 = vmatpush2.bf16.msra.mxu0 0
      %9599 = vmatprep.subr.bf16.mxu0 0
      %9600 = vmatpush2.bf16.msra.mxu0 0
      %9601 = vmatprep.subr.bf16.mxu0 0
      %9602 = vmatpush2.bf16.msra.mxu0 0
      %9603 = vmatprep.subr.bf16.mxu0 0
      %9604 = vmatpush2.bf16.msra.mxu0 0
      %9605 = vmatprep.subr.bf16.mxu0 0
      %9606 = vmatpush2.bf16.msra.mxu0 0
      %9607 = vmatprep.mubr.bf16.mxu0 0
      %9608 = vmatmul.mubr.bf16.gmra.mxu0 %v9495
      %v9609 = vpop.f32.mrf.mxu0
      %v9610 = vadd.f32 0.0, %v9609
      %v9611 = vpop.f32.mrf.mxu0
      %v9612 = vpop.f32.mrf.mxu0
      %v9613 = vadd.f32 0.0, %v9612
      %v9614 = vpop.f32.mrf.mxu0
      %9615 = vmatprep.mubr.bf16.mxu0 0
      %9616 = vmatmul.mubr.bf16.gmra.mxu0 %v9496
      %v9617 = vpop.f32.mrf.mxu0
      %v9618 = vadd.f32 0.0, %v9617
      %v9619 = vpop.f32.mrf.mxu0
      %v9620 = vpop.f32.mrf.mxu0
      %v9621 = vadd.f32 0.0, %v9620
      %v9622 = vpop.f32.mrf.mxu0
      %9623 = vmatprep.mubr.bf16.mxu0 0
      %9624 = vmatmul.mubr.bf16.gmra.mxu0 %v9497
      %v9625 = vpop.f32.mrf.mxu0
      %v9626 = vadd.f32 0.0, %v9625
      %v9627 = vpop.f32.mrf.mxu0
      %v9628 = vpop.f32.mrf.mxu0
      %v9629 = vadd.f32 0.0, %v9628
      %v9630 = vpop.f32.mrf.mxu0
      %9631 = vmatprep.mubr.bf16.mxu0 0
      %9632 = vmatmul.mubr.bf16.gmra.mxu0 %v9498
      %v9633 = vpop.f32.mrf.mxu0
      %v9634 = vadd.f32 0.0, %v9633
      %v9635 = vpop.f32.mrf.mxu0
      %v9636 = vpop.f32.mrf.mxu0
      %v9637 = vadd.f32 0.0, %v9636
      %v9638 = vpop.f32.mrf.mxu0
      %9639 = vmatprep.mubr.bf16.mxu0 0
      %9640 = vmatmul.mubr.bf16.gmra.mxu0 %v9499
      %v9641 = vpop.f32.mrf.mxu0
      %v9642 = vadd.f32 0.0, %v9641
      %v9643 = vpop.f32.mrf.mxu0
      %v9644 = vpop.f32.mrf.mxu0
      %v9645 = vadd.f32 0.0, %v9644
      %v9646 = vpop.f32.mrf.mxu0
      %9647 = vmatprep.mubr.bf16.mxu0 0
      %9648 = vmatmul.mubr.bf16.gmra.mxu0 %v9500
      %v9649 = vpop.f32.mrf.mxu0
      %v9650 = vadd.f32 0.0, %v9649
      %v9651 = vpop.f32.mrf.mxu0
      %v9652 = vpop.f32.mrf.mxu0
      %v9653 = vadd.f32 0.0, %v9652
      %v9654 = vpop.f32.mrf.mxu0
      %9655 = vmatprep.mubr.bf16.mxu0 0
      %9656 = vmatmul.mubr.bf16.gmra.mxu0 %v9501
      %v9657 = vpop.f32.mrf.mxu0
      %v9658 = vadd.f32 0.0, %v9657
      %v9659 = vpop.f32.mrf.mxu0
      %v9660 = vpop.f32.mrf.mxu0
      %v9661 = vadd.f32 0.0, %v9660
      %v9662 = vpop.f32.mrf.mxu0
      %9663 = vmatprep.mubr.bf16.mxu0 0
      %9664 = vmatmul.mubr.bf16.gmra.mxu0 %v9502
      %v9665 = vpop.f32.mrf.mxu0
      %v9666 = vadd.f32 0.0, %v9665
      %v9667 = vpop.f32.mrf.mxu0
      %v9668 = vpop.f32.mrf.mxu0
      %v9669 = vadd.f32 0.0, %v9668
      %v9670 = vpop.f32.mrf.mxu0
      %9671 = vmatprep.mubr.bf16.mxu0 0
      %9672 = vmatmul.mubr.bf16.gmra.mxu0 %v9503
      %v9673 = vpop.f32.mrf.mxu0
      %v9674 = vadd.f32 0.0, %v9673
      %v9675 = vpop.f32.mrf.mxu0
      %v9676 = vpop.f32.mrf.mxu0
      %v9677 = vadd.f32 0.0, %v9676
      %v9678 = vpop.f32.mrf.mxu0
      %9679 = vmatprep.mubr.bf16.mxu0 0
      %9680 = vmatmul.mubr.bf16.gmra.mxu0 %v9504
      %v9681 = vpop.f32.mrf.mxu0
      %v9682 = vadd.f32 0.0, %v9681
      %v9683 = vpop.f32.mrf.mxu0
      %v9684 = vpop.f32.mrf.mxu0
      %v9685 = vadd.f32 0.0, %v9684
      %v9686 = vpop.f32.mrf.mxu0
      %9687 = vmatprep.mubr.bf16.mxu0 0
      %9688 = vmatmul.mubr.bf16.gmra.mxu0 %v9505
      %v9689 = vpop.f32.mrf.mxu0
      %v9690 = vadd.f32 0.0, %v9689
      %v9691 = vpop.f32.mrf.mxu0
      %v9692 = vpop.f32.mrf.mxu0
      %v9693 = vadd.f32 0.0, %v9692
      %v9694 = vpop.f32.mrf.mxu0
      %9695 = vmatprep.mubr.bf16.mxu0 0
      %9696 = vmatmul.mubr.bf16.gmra.mxu0 %v9506
      %v9697 = vpop.f32.mrf.mxu0
      %v9698 = vadd.f32 0.0, %v9697
      %v9699 = vpop.f32.mrf.mxu0
      %v9700 = vpop.f32.mrf.mxu0
      %v9701 = vadd.f32 0.0, %v9700
      %v9702 = vpop.f32.mrf.mxu0
      %9703 = vmatprep.mubr.bf16.mxu0 0
      %9704 = vmatmul.mubr.bf16.gmra.mxu0 %v9507
      %v9705 = vpop.f32.mrf.mxu0
      %v9706 = vadd.f32 0.0, %v9705
      %v9707 = vpop.f32.mrf.mxu0
      %v9708 = vpop.f32.mrf.mxu0
      %v9709 = vadd.f32 0.0, %v9708
      %v9710 = vpop.f32.mrf.mxu0
      %9711 = vmatprep.mubr.bf16.mxu0 0
      %9712 = vmatmul.mubr.bf16.gmra.mxu0 %v9508
      %v9713 = vpop.f32.mrf.mxu0
      %v9714 = vadd.f32 0.0, %v9713
      %v9715 = vpop.f32.mrf.mxu0
      %v9716 = vpop.f32.mrf.mxu0
      %v9717 = vadd.f32 0.0, %v9716
      %v9718 = vpop.f32.mrf.mxu0
      %9719 = vmatprep.mubr.bf16.mxu0 0
      %9720 = vmatmul.mubr.bf16.gmra.mxu0 %v9509
      %v9721 = vpop.f32.mrf.mxu0
      %v9722 = vadd.f32 0.0, %v9721
      %v9723 = vpop.f32.mrf.mxu0
      %v9724 = vpop.f32.mrf.mxu0
      %v9725 = vadd.f32 0.0, %v9724
      %v9726 = vpop.f32.mrf.mxu0
      %9727 = vmatprep.mubr.bf16.mxu0 0
      %9728 = vmatmul.mubr.bf16.gmra.mxu0 %v9510
      %v9729 = vpop.f32.mrf.mxu0
      %v9730 = vadd.f32 0.0, %v9729
      %v9731 = vpop.f32.mrf.mxu0
      %v9732 = vpop.f32.mrf.mxu0
      %v9733 = vadd.f32 0.0, %v9732
      %v9734 = vpop.f32.mrf.mxu0
      %9735 = vdwg.mxu0
      %v9736 = vld [vmem:[#allocation3] sm:$0xff]
      %v9737 = vld [vmem:[#allocation3 + $0x8] sm:$0xff]
      %v9738 = vld [vmem:[#allocation3 + $0x10] sm:$0xff]
      %v9739 = vld [vmem:[#allocation3 + $0x18] sm:$0xff]
      %v9740 = vld [vmem:[#allocation3 + $0x20] sm:$0xff]
      %v9741 = vld [vmem:[#allocation3 + $0x28] sm:$0xff]
      %v9742 = vld [vmem:[#allocation3 + $0x30] sm:$0xff]
      %v9743 = vld [vmem:[#allocation3 + $0x38] sm:$0xff]
      %v9744 = vld [vmem:[#allocation3 + $0x40] sm:$0xff]
      %v9745 = vld [vmem:[#allocation3 + $0x48] sm:$0xff]
      %v9746 = vld [vmem:[#allocation3 + $0x50] sm:$0xff]
      %v9747 = vld [vmem:[#allocation3 + $0x58] sm:$0xff]
      %v9748 = vld [vmem:[#allocation3 + $0x60] sm:$0xff]
      %v9749 = vld [vmem:[#allocation3 + $0x68] sm:$0xff]
      %v9750 = vld [vmem:[#allocation3 + $0x70] sm:$0xff]
      %v9751 = vld [vmem:[#allocation3 + $0x78] sm:$0xff]
      %v9752 = vld [vmem:[#allocation3 + $0x80] sm:$0xff]
      %v9753 = vld [vmem:[#allocation3 + $0x88] sm:$0xff]
      %v9754 = vld [vmem:[#allocation3 + $0x90] sm:$0xff]
      %v9755 = vld [vmem:[#allocation3 + $0x98] sm:$0xff]
      %v9756 = vld [vmem:[#allocation3 + $0xa0] sm:$0xff]
      %v9757 = vld [vmem:[#allocation3 + $0xa8] sm:$0xff]
      %v9758 = vld [vmem:[#allocation3 + $0xb0] sm:$0xff]
      %v9759 = vld [vmem:[#allocation3 + $0xb8] sm:$0xff]
      %v9760 = vld [vmem:[#allocation3 + $0xc0] sm:$0xff]
      %v9761 = vld [vmem:[#allocation3 + $0xc8] sm:$0xff]
      %v9762 = vld [vmem:[#allocation3 + $0xd0] sm:$0xff]
      %v9763 = vld [vmem:[#allocation3 + $0xd8] sm:$0xff]
      %v9764 = vld [vmem:[#allocation3 + $0xe0] sm:$0xff]
      %v9765 = vld [vmem:[#allocation3 + $0xe8] sm:$0xff]
      %v9766 = vld [vmem:[#allocation3 + $0xf0] sm:$0xff]
      %v9767 = vld [vmem:[#allocation3 + $0xf8] sm:$0xff]
      %v9768 = vadd.f32 %v9736, %v9610
      %v9769 = vadd.f32 %v9737, %v9613
      %v9770 = vadd.f32 %v9738, %v9618
      %v9771 = vadd.f32 %v9739, %v9621
      %v9772 = vadd.f32 %v9740, %v9626
      %v9773 = vadd.f32 %v9741, %v9629
      %v9774 = vadd.f32 %v9742, %v9634
      %v9775 = vadd.f32 %v9743, %v9637
      %v9776 = vadd.f32 %v9744, %v9642
      %v9777 = vadd.f32 %v9745, %v9645
      %v9778 = vadd.f32 %v9746, %v9650
      %v9779 = vadd.f32 %v9747, %v9653
      %v9780 = vadd.f32 %v9748, %v9658
      %v9781 = vadd.f32 %v9749, %v9661
      %v9782 = vadd.f32 %v9750, %v9666
      %v9783 = vadd.f32 %v9751, %v9669
      %v9784 = vadd.f32 %v9752, %v9674
      %v9785 = vadd.f32 %v9753, %v9677
      %v9786 = vadd.f32 %v9754, %v9682
      %v9787 = vadd.f32 %v9755, %v9685
      %v9788 = vadd.f32 %v9756, %v9690
      %v9789 = vadd.f32 %v9757, %v9693
      %v9790 = vadd.f32 %v9758, %v9698
      %v9791 = vadd.f32 %v9759, %v9701
      %v9792 = vadd.f32 %v9760, %v9706
      %v9793 = vadd.f32 %v9761, %v9709
      %v9794 = vadd.f32 %v9762, %v9714
      %v9795 = vadd.f32 %v9763, %v9717
      %v9796 = vadd.f32 %v9764, %v9722
      %v9797 = vadd.f32 %v9765, %v9725
      %v9798 = vadd.f32 %v9766, %v9730
      %v9799 = vadd.f32 %v9767, %v9733
      %9800 = vst [vmem:[#allocation3] sm:$0xff] %v9768
      %9801 = vst [vmem:[#allocation3 + $0x8] sm:$0xff] %v9769
      %9802 = vst [vmem:[#allocation3 + $0x10] sm:$0xff] %v9770
      %9803 = vst [vmem:[#allocation3 + $0x18] sm:$0xff] %v9771
      %9804 = vst [vmem:[#allocation3 + $0x20] sm:$0xff] %v9772
      %9805 = vst [vmem:[#allocation3 + $0x28] sm:$0xff] %v9773
      %9806 = vst [vmem:[#allocation3 + $0x30] sm:$0xff] %v9774
      %9807 = vst [vmem:[#allocation3 + $0x38] sm:$0xff] %v9775
      %9808 = vst [vmem:[#allocation3 + $0x40] sm:$0xff] %v9776
      %9809 = vst [vmem:[#allocation3 + $0x48] sm:$0xff] %v9777
      %9810 = vst [vmem:[#allocation3 + $0x50] sm:$0xff] %v9778
      %9811 = vst [vmem:[#allocation3 + $0x58] sm:$0xff] %v9779
      %9812 = vst [vmem:[#allocation3 + $0x60] sm:$0xff] %v9780
      %9813 = vst [vmem:[#allocation3 + $0x68] sm:$0xff] %v9781
      %9814 = vst [vmem:[#allocation3 + $0x70] sm:$0xff] %v9782
      %9815 = vst [vmem:[#allocation3 + $0x78] sm:$0xff] %v9783
      %9816 = vst [vmem:[#allocation3 + $0x80] sm:$0xff] %v9784
      %9817 = vst [vmem:[#allocation3 + $0x88] sm:$0xff] %v9785
      %9818 = vst [vmem:[#allocation3 + $0x90] sm:$0xff] %v9786
      %9819 = vst [vmem:[#allocation3 + $0x98] sm:$0xff] %v9787
      %9820 = vst [vmem:[#allocation3 + $0xa0] sm:$0xff] %v9788
      %9821 = vst [vmem:[#allocation3 + $0xa8] sm:$0xff] %v9789
      %9822 = vst [vmem:[#allocation3 + $0xb0] sm:$0xff] %v9790
      %9823 = vst [vmem:[#allocation3 + $0xb8] sm:$0xff] %v9791
      %9824 = vst [vmem:[#allocation3 + $0xc0] sm:$0xff] %v9792
      %9825 = vst [vmem:[#allocation3 + $0xc8] sm:$0xff] %v9793
      %9826 = vst [vmem:[#allocation3 + $0xd0] sm:$0xff] %v9794
      %9827 = vst [vmem:[#allocation3 + $0xd8] sm:$0xff] %v9795
      %9828 = vst [vmem:[#allocation3 + $0xe0] sm:$0xff] %v9796
      %9829 = vst [vmem:[#allocation3 + $0xe8] sm:$0xff] %v9797
      %9830 = vst [vmem:[#allocation3 + $0xf0] sm:$0xff] %v9798
      %9831 = vst [vmem:[#allocation3 + $0xf8] sm:$0xff] %v9799
      %v9832 = vld [vmem:[#allocation2 + $0x18] sm:$0xf]
      %v9833 = vld [vmem:[#allocation2 + $0x1c] sm:$0xf]
      %v9834 = vld [vmem:[#allocation2 + $0x20] sm:$0xf]
      %v9835 = vld [vmem:[#allocation2 + $0x24] sm:$0xf]
      %v9836 = vld [vmem:[#allocation2 + $0x28] sm:$0xf]
      %v9837 = vld [vmem:[#allocation2 + $0x2c] sm:$0xf]
      %v9838 = vld [vmem:[#allocation2 + $0x30] sm:$0xf]
      %v9839 = vld [vmem:[#allocation2 + $0x34] sm:$0xf]
      %v9840 = vld [vmem:[#allocation2 + $0x38] sm:$0xf]
      %v9841 = vld [vmem:[#allocation2 + $0x3c] sm:$0xf]
      %v9842 = vld [vmem:[#allocation2 + $0x40] sm:$0xf]
      %v9843 = vld [vmem:[#allocation2 + $0x44] sm:$0xf]
      %v9844 = vld [vmem:[#allocation2 + $0x48] sm:$0xf]
      %v9845 = vld [vmem:[#allocation2 + $0x4c] sm:$0xf]
      %v9846 = vld [vmem:[#allocation2 + $0x50] sm:$0xf]
      %v9847 = vld [vmem:[#allocation2 + $0x54] sm:$0xf]
      %v9848 = vld [vmem:[#allocation2 + $0x58] sm:$0xf]
      %v9849 = vld [vmem:[#allocation2 + $0x5c] sm:$0xf]
      %v9850 = vld [vmem:[#allocation2 + $0x60] sm:$0xf]
      %v9851 = vld [vmem:[#allocation2 + $0x64] sm:$0xf]
      %v9852 = vld [vmem:[#allocation2 + $0x68] sm:$0xf]
      %v9853 = vld [vmem:[#allocation2 + $0x6c] sm:$0xf]
      %v9854 = vld [vmem:[#allocation2 + $0x70] sm:$0xf]
      %v9855 = vld [vmem:[#allocation2 + $0x74] sm:$0xf]
      %v9856 = vld [vmem:[#allocation2 + $0x78] sm:$0xf]
      %v9857 = vld [vmem:[#allocation2 + $0x7c] sm:$0xf]
      %v9858 = vld [vmem:[#allocation2 + $0x80] sm:$0xf]
      %v9859 = vld [vmem:[#allocation2 + $0x84] sm:$0xf]
      %v9860 = vld [vmem:[#allocation2 + $0x88] sm:$0xf]
      %v9861 = vld [vmem:[#allocation2 + $0x8c] sm:$0xf]
      %v9862 = vld [vmem:[#allocation2 + $0x90] sm:$0xf]
      %v9863 = vld [vmem:[#allocation2 + $0x94] sm:$0xf]
      %v9864 = vld [vmem:[#allocation2 + $0x98] sm:$0x1]
      %s9865 = scalar_lea.vmem %s4, 512
      %v9866 = vld [vmem:[%s9865] sm:$0xf]
      %v9867 = vld [vmem:[%s9865 + $0x4] sm:$0xf]
      %v9868 = vld [vmem:[%s9865 + $0x8] sm:$0xf]
      %v9869 = vld [vmem:[%s9865 + $0xc] sm:$0xf]
      %v9870 = vld [vmem:[%s9865 + $0x10] sm:$0xf]
      %v9871 = vld [vmem:[%s9865 + $0x14] sm:$0xf]
      %v9872 = vld [vmem:[%s9865 + $0x18] sm:$0xf]
      %v9873 = vld [vmem:[%s9865 + $0x1c] sm:$0xf]
      %v9874 = vld [vmem:[%s9865 + $0x20] sm:$0xf]
      %v9875 = vld [vmem:[%s9865 + $0x24] sm:$0xf]
      %v9876 = vld [vmem:[%s9865 + $0x28] sm:$0xf]
      %v9877 = vld [vmem:[%s9865 + $0x2c] sm:$0xf]
      %v9878 = vld [vmem:[%s9865 + $0x30] sm:$0xf]
      %v9879 = vld [vmem:[%s9865 + $0x34] sm:$0xf]
      %v9880 = vld [vmem:[%s9865 + $0x38] sm:$0xf]
      %v9881 = vld [vmem:[%s9865 + $0x3c] sm:$0xf]
      %v9915 = vunpack.c.l.b16 %v9832
      %v9916 = vunpack.c.l.b16 %v9833
      %v9917 = vunpack.c.l.b16 %v9834
      %v9918 = vunpack.c.l.b16 %v9835
      %v9919 = vunpack.c.l.b16 %v9836
      %v9920 = vunpack.c.l.b16 %v9837
      %v9921 = vunpack.c.l.b16 %v9838
      %v9922 = vunpack.c.l.b16 %v9839
      %v9923 = vunpack.c.l.b16 %v9840
      %v9924 = vunpack.c.l.b16 %v9841
      %v9925 = vunpack.c.l.b16 %v9842
      %v9926 = vunpack.c.l.b16 %v9843
      %v9927 = vunpack.c.l.b16 %v9844
      %v9928 = vunpack.c.l.b16 %v9845
      %v9929 = vunpack.c.l.b16 %v9846
      %v9930 = vunpack.c.l.b16 %v9847
      %v9931 = vunpack.c.l.b16 %v9848
      %v9932 = vunpack.c.l.b16 %v9849
      %v9933 = vunpack.c.l.b16 %v9850
      %v9934 = vunpack.c.l.b16 %v9851
      %v9935 = vunpack.c.l.b16 %v9852
      %v9936 = vunpack.c.l.b16 %v9853
      %v9937 = vunpack.c.l.b16 %v9854
      %v9938 = vunpack.c.l.b16 %v9855
      %v9939 = vunpack.c.l.b16 %v9856
      %v9940 = vunpack.c.l.b16 %v9857
      %v9941 = vunpack.c.l.b16 %v9858
      %v9942 = vunpack.c.l.b16 %v9859
      %v9943 = vunpack.c.l.b16 %v9860
      %v9944 = vunpack.c.l.b16 %v9861
      %v9945 = vunpack.c.l.b16 %v9862
      %v9946 = vunpack.c.l.b16 %v9863
      %v9947 = vunpack.c.l.b16 %v9864
      %v9948 = vpack.c.b16 %v9916, %v9915
      %v9949 = vpack.c.b16 %v9918, %v9917
      %v9950 = vpack.c.b16 %v9920, %v9919
      %v9951 = vpack.c.b16 %v9922, %v9921
      %v9952 = vpack.c.b16 %v9924, %v9923
      %v9953 = vpack.c.b16 %v9926, %v9925
      %v9954 = vpack.c.b16 %v9928, %v9927
      %v9955 = vpack.c.b16 %v9930, %v9929
      %v9956 = vpack.c.b16 %v9932, %v9931
      %v9957 = vpack.c.b16 %v9934, %v9933
      %v9958 = vpack.c.b16 %v9936, %v9935
      %v9959 = vpack.c.b16 %v9938, %v9937
      %v9960 = vpack.c.b16 %v9940, %v9939
      %v9961 = vpack.c.b16 %v9942, %v9941
      %v9962 = vpack.c.b16 %v9944, %v9943
      %v9963 = vpack.c.b16 %v9946, %v9945
      %v9964 = vpack.c.b16 %v9947, %v9947
      %v9966 = vshrl.u32 %v9948, 16
      %v9968 = vshll.u32 %v9948, 16
      %v9970 = vrot.slane %v9968, 1
      %v9971 = vor.u32 %v9966, %v9970
      %v9973 = vshll.u32 %v9949, 16
      %v9975 = vrot.slane %v9973, 1
      %v9976 = vsel %vm1464, %v9971, %v9975
      %v9977 = vshrl.u32 %v9949, 16
      %v9979 = vor.u32 %v9977, %v9975
      %v9981 = vshll.u32 %v9950, 16
      %v9983 = vrot.slane %v9981, 1
      %v9984 = vsel %vm1464, %v9979, %v9983
      %v9985 = vshrl.u32 %v9950, 16
      %v9987 = vor.u32 %v9985, %v9983
      %v9989 = vshll.u32 %v9951, 16
      %v9991 = vrot.slane %v9989, 1
      %v9992 = vsel %vm1464, %v9987, %v9991
      %v9993 = vshrl.u32 %v9951, 16
      %v9995 = vor.u32 %v9993, %v9991
      %v9997 = vshll.u32 %v9952, 16
      %v9999 = vrot.slane %v9997, 1
      %v10000 = vsel %vm1464, %v9995, %v9999
      %v10001 = vshrl.u32 %v9952, 16
      %v10003 = vor.u32 %v10001, %v9999
      %v10005 = vshll.u32 %v9953, 16
      %v10007 = vrot.slane %v10005, 1
      %v10008 = vsel %vm1464, %v10003, %v10007
      %v10009 = vshrl.u32 %v9953, 16
      %v10011 = vor.u32 %v10009, %v10007
      %v10013 = vshll.u32 %v9954, 16
      %v10015 = vrot.slane %v10013, 1
      %v10016 = vsel %vm1464, %v10011, %v10015
      %v10017 = vshrl.u32 %v9954, 16
      %v10019 = vor.u32 %v10017, %v10015
      %v10021 = vshll.u32 %v9955, 16
      %v10023 = vrot.slane %v10021, 1
      %v10024 = vsel %vm1464, %v10019, %v10023
      %v10025 = vshrl.u32 %v9955, 16
      %v10027 = vor.u32 %v10025, %v10023
      %v10029 = vshll.u32 %v9956, 16
      %v10031 = vrot.slane %v10029, 1
      %v10032 = vsel %vm1464, %v10027, %v10031
      %v10033 = vshrl.u32 %v9956, 16
      %v10035 = vor.u32 %v10033, %v10031
      %v10037 = vshll.u32 %v9957, 16
      %v10039 = vrot.slane %v10037, 1
      %v10040 = vsel %vm1464, %v10035, %v10039
      %v10041 = vshrl.u32 %v9957, 16
      %v10043 = vor.u32 %v10041, %v10039
      %v10045 = vshll.u32 %v9958, 16
      %v10047 = vrot.slane %v10045, 1
      %v10048 = vsel %vm1464, %v10043, %v10047
      %v10049 = vshrl.u32 %v9958, 16
      %v10051 = vor.u32 %v10049, %v10047
      %v10053 = vshll.u32 %v9959, 16
      %v10055 = vrot.slane %v10053, 1
      %v10056 = vsel %vm1464, %v10051, %v10055
      %v10057 = vshrl.u32 %v9959, 16
      %v10059 = vor.u32 %v10057, %v10055
      %v10061 = vshll.u32 %v9960, 16
      %v10063 = vrot.slane %v10061, 1
      %v10064 = vsel %vm1464, %v10059, %v10063
      %v10065 = vshrl.u32 %v9960, 16
      %v10067 = vor.u32 %v10065, %v10063
      %v10069 = vshll.u32 %v9961, 16
      %v10071 = vrot.slane %v10069, 1
      %v10072 = vsel %vm1464, %v10067, %v10071
      %v10073 = vshrl.u32 %v9961, 16
      %v10075 = vor.u32 %v10073, %v10071
      %v10077 = vshll.u32 %v9962, 16
      %v10079 = vrot.slane %v10077, 1
      %v10080 = vsel %vm1464, %v10075, %v10079
      %v10081 = vshrl.u32 %v9962, 16
      %v10083 = vor.u32 %v10081, %v10079
      %v10085 = vshll.u32 %v9963, 16
      %v10087 = vrot.slane %v10085, 1
      %v10088 = vsel %vm1464, %v10083, %v10087
      %v10089 = vshrl.u32 %v9963, 16
      %v10091 = vor.u32 %v10089, %v10087
      %v10093 = vshll.u32 %v9964, 16
      %v10095 = vrot.slane %v10093, 1
      %v10096 = vsel %vm1464, %v10091, %v10095
      %v10129 = vunpack.c.l.b16 %v9866
      %v10130 = vunpack.c.l.b16 %v9867
      %v10131 = vunpack.c.l.b16 %v9868
      %v10132 = vunpack.c.l.b16 %v9869
      %v10133 = vunpack.c.l.b16 %v9870
      %v10134 = vunpack.c.l.b16 %v9871
      %v10135 = vunpack.c.l.b16 %v9872
      %v10136 = vunpack.c.l.b16 %v9873
      %v10137 = vunpack.c.l.b16 %v9874
      %v10138 = vunpack.c.l.b16 %v9875
      %v10139 = vunpack.c.l.b16 %v9876
      %v10140 = vunpack.c.l.b16 %v9877
      %v10141 = vunpack.c.l.b16 %v9878
      %v10142 = vunpack.c.l.b16 %v9879
      %v10143 = vunpack.c.l.b16 %v9880
      %v10144 = vunpack.c.l.b16 %v9881
      %v10145 = vpack.c.b16 %v10130, %v10129
      %v10146 = vpack.c.b16 %v10132, %v10131
      %v10147 = vpack.c.b16 %v10134, %v10133
      %v10148 = vpack.c.b16 %v10136, %v10135
      %v10149 = vpack.c.b16 %v10138, %v10137
      %v10150 = vpack.c.b16 %v10140, %v10139
      %v10151 = vpack.c.b16 %v10142, %v10141
      %v10152 = vpack.c.b16 %v10144, %v10143
      %10161 = vmatprep.subr.bf16.mxu0 0
      %10162 = vmatpush1.bf16.msra.mxu0 %v10152
      %10163 = vmatprep.subr.bf16.mxu0 0
      %10164 = vmatpush1.bf16.msra.mxu0 %v10151
      %10165 = vmatprep.subr.bf16.mxu0 0
      %10166 = vmatpush1.bf16.msra.mxu0 %v10150
      %10167 = vmatprep.subr.bf16.mxu0 0
      %10168 = vmatpush1.bf16.msra.mxu0 %v10149
      %10169 = vmatprep.subr.bf16.mxu0 0
      %10170 = vmatpush1.bf16.msra.mxu0 %v10148
      %10171 = vmatprep.subr.bf16.mxu0 0
      %10172 = vmatpush1.bf16.msra.mxu0 %v10147
      %10173 = vmatprep.subr.bf16.mxu0 0
      %10174 = vmatpush1.bf16.msra.mxu0 %v10146
      %10175 = vmatprep.subr.bf16.mxu0 0
      %10176 = vmatpush1.bf16.msra.mxu0 %v10145
      %10177 = vmatprep.subr.bf16.mxu0 0
      %10178 = vmatpush2.bf16.msra.mxu0 0
      %10179 = vmatprep.subr.bf16.mxu0 0
      %10180 = vmatpush2.bf16.msra.mxu0 0
      %10181 = vmatprep.subr.bf16.mxu0 0
      %10182 = vmatpush2.bf16.msra.mxu0 0
      %10183 = vmatprep.subr.bf16.mxu0 0
      %10184 = vmatpush2.bf16.msra.mxu0 0
      %10185 = vmatprep.subr.bf16.mxu0 0
      %10186 = vmatpush2.bf16.msra.mxu0 0
      %10187 = vmatprep.subr.bf16.mxu0 0
      %10188 = vmatpush2.bf16.msra.mxu0 0
      %10189 = vmatprep.subr.bf16.mxu0 0
      %10190 = vmatpush2.bf16.msra.mxu0 0
      %10191 = vmatprep.subr.bf16.mxu0 0
      %10192 = vmatpush2.bf16.msra.mxu0 0
      %10193 = vmatprep.mubr.bf16.mxu0 0
      %10194 = vmatmul.mubr.bf16.gmra.mxu0 %v9976
      %v10195 = vpop.f32.mrf.mxu0
      %v10196 = vadd.f32 0.0, %v10195
      %v10197 = vpop.f32.mrf.mxu0
      %v10198 = vpop.f32.mrf.mxu0
      %v10199 = vadd.f32 0.0, %v10198
      %v10200 = vpop.f32.mrf.mxu0
      %10201 = vmatprep.mubr.bf16.mxu0 0
      %10202 = vmatmul.mubr.bf16.gmra.mxu0 %v9984
      %v10203 = vpop.f32.mrf.mxu0
      %v10204 = vadd.f32 0.0, %v10203
      %v10205 = vpop.f32.mrf.mxu0
      %v10206 = vpop.f32.mrf.mxu0
      %v10207 = vadd.f32 0.0, %v10206
      %v10208 = vpop.f32.mrf.mxu0
      %10209 = vmatprep.mubr.bf16.mxu0 0
      %10210 = vmatmul.mubr.bf16.gmra.mxu0 %v9992
      %v10211 = vpop.f32.mrf.mxu0
      %v10212 = vadd.f32 0.0, %v10211
      %v10213 = vpop.f32.mrf.mxu0
      %v10214 = vpop.f32.mrf.mxu0
      %v10215 = vadd.f32 0.0, %v10214
      %v10216 = vpop.f32.mrf.mxu0
      %10217 = vmatprep.mubr.bf16.mxu0 0
      %10218 = vmatmul.mubr.bf16.gmra.mxu0 %v10000
      %v10219 = vpop.f32.mrf.mxu0
      %v10220 = vadd.f32 0.0, %v10219
      %v10221 = vpop.f32.mrf.mxu0
      %v10222 = vpop.f32.mrf.mxu0
      %v10223 = vadd.f32 0.0, %v10222
      %v10224 = vpop.f32.mrf.mxu0
      %10225 = vmatprep.mubr.bf16.mxu0 0
      %10226 = vmatmul.mubr.bf16.gmra.mxu0 %v10008
      %v10227 = vpop.f32.mrf.mxu0
      %v10228 = vadd.f32 0.0, %v10227
      %v10229 = vpop.f32.mrf.mxu0
      %v10230 = vpop.f32.mrf.mxu0
      %v10231 = vadd.f32 0.0, %v10230
      %v10232 = vpop.f32.mrf.mxu0
      %10233 = vmatprep.mubr.bf16.mxu0 0
      %10234 = vmatmul.mubr.bf16.gmra.mxu0 %v10016
      %v10235 = vpop.f32.mrf.mxu0
      %v10236 = vadd.f32 0.0, %v10235
      %v10237 = vpop.f32.mrf.mxu0
      %v10238 = vpop.f32.mrf.mxu0
      %v10239 = vadd.f32 0.0, %v10238
      %v10240 = vpop.f32.mrf.mxu0
      %10241 = vmatprep.mubr.bf16.mxu0 0
      %10242 = vmatmul.mubr.bf16.gmra.mxu0 %v10024
      %v10243 = vpop.f32.mrf.mxu0
      %v10244 = vadd.f32 0.0, %v10243
      %v10245 = vpop.f32.mrf.mxu0
      %v10246 = vpop.f32.mrf.mxu0
      %v10247 = vadd.f32 0.0, %v10246
      %v10248 = vpop.f32.mrf.mxu0
      %10249 = vmatprep.mubr.bf16.mxu0 0
      %10250 = vmatmul.mubr.bf16.gmra.mxu0 %v10032
      %v10251 = vpop.f32.mrf.mxu0
      %v10252 = vadd.f32 0.0, %v10251
      %v10253 = vpop.f32.mrf.mxu0
      %v10254 = vpop.f32.mrf.mxu0
      %v10255 = vadd.f32 0.0, %v10254
      %v10256 = vpop.f32.mrf.mxu0
      %10257 = vmatprep.mubr.bf16.mxu0 0
      %10258 = vmatmul.mubr.bf16.gmra.mxu0 %v10040
      %v10259 = vpop.f32.mrf.mxu0
      %v10260 = vadd.f32 0.0, %v10259
      %v10261 = vpop.f32.mrf.mxu0
      %v10262 = vpop.f32.mrf.mxu0
      %v10263 = vadd.f32 0.0, %v10262
      %v10264 = vpop.f32.mrf.mxu0
      %10265 = vmatprep.mubr.bf16.mxu0 0
      %10266 = vmatmul.mubr.bf16.gmra.mxu0 %v10048
      %v10267 = vpop.f32.mrf.mxu0
      %v10268 = vadd.f32 0.0, %v10267
      %v10269 = vpop.f32.mrf.mxu0
      %v10270 = vpop.f32.mrf.mxu0
      %v10271 = vadd.f32 0.0, %v10270
      %v10272 = vpop.f32.mrf.mxu0
      %10273 = vmatprep.mubr.bf16.mxu0 0
      %10274 = vmatmul.mubr.bf16.gmra.mxu0 %v10056
      %v10275 = vpop.f32.mrf.mxu0
      %v10276 = vadd.f32 0.0, %v10275
      %v10277 = vpop.f32.mrf.mxu0
      %v10278 = vpop.f32.mrf.mxu0
      %v10279 = vadd.f32 0.0, %v10278
      %v10280 = vpop.f32.mrf.mxu0
      %10281 = vmatprep.mubr.bf16.mxu0 0
      %10282 = vmatmul.mubr.bf16.gmra.mxu0 %v10064
      %v10283 = vpop.f32.mrf.mxu0
      %v10284 = vadd.f32 0.0, %v10283
      %v10285 = vpop.f32.mrf.mxu0
      %v10286 = vpop.f32.mrf.mxu0
      %v10287 = vadd.f32 0.0, %v10286
      %v10288 = vpop.f32.mrf.mxu0
      %10289 = vmatprep.mubr.bf16.mxu0 0
      %10290 = vmatmul.mubr.bf16.gmra.mxu0 %v10072
      %v10291 = vpop.f32.mrf.mxu0
      %v10292 = vadd.f32 0.0, %v10291
      %v10293 = vpop.f32.mrf.mxu0
      %v10294 = vpop.f32.mrf.mxu0
      %v10295 = vadd.f32 0.0, %v10294
      %v10296 = vpop.f32.mrf.mxu0
      %10297 = vmatprep.mubr.bf16.mxu0 0
      %10298 = vmatmul.mubr.bf16.gmra.mxu0 %v10080
      %v10299 = vpop.f32.mrf.mxu0
      %v10300 = vadd.f32 0.0, %v10299
      %v10301 = vpop.f32.mrf.mxu0
      %v10302 = vpop.f32.mrf.mxu0
      %v10303 = vadd.f32 0.0, %v10302
      %v10304 = vpop.f32.mrf.mxu0
      %10305 = vmatprep.mubr.bf16.mxu0 0
      %10306 = vmatmul.mubr.bf16.gmra.mxu0 %v10088
      %v10307 = vpop.f32.mrf.mxu0
      %v10308 = vadd.f32 0.0, %v10307
      %v10309 = vpop.f32.mrf.mxu0
      %v10310 = vpop.f32.mrf.mxu0
      %v10311 = vadd.f32 0.0, %v10310
      %v10312 = vpop.f32.mrf.mxu0
      %10313 = vmatprep.mubr.bf16.mxu0 0
      %10314 = vmatmul.mubr.bf16.gmra.mxu0 %v10096
      %v10315 = vpop.f32.mrf.mxu0
      %v10316 = vadd.f32 0.0, %v10315
      %v10317 = vpop.f32.mrf.mxu0
      %v10318 = vpop.f32.mrf.mxu0
      %v10319 = vadd.f32 0.0, %v10318
      %v10320 = vpop.f32.mrf.mxu0
      %10321 = vdwg.mxu0
      %v10322 = vld [vmem:[#allocation3] sm:$0xff]
      %v10323 = vld [vmem:[#allocation3 + $0x8] sm:$0xff]
      %v10324 = vld [vmem:[#allocation3 + $0x10] sm:$0xff]
      %v10325 = vld [vmem:[#allocation3 + $0x18] sm:$0xff]
      %v10326 = vld [vmem:[#allocation3 + $0x20] sm:$0xff]
      %v10327 = vld [vmem:[#allocation3 + $0x28] sm:$0xff]
      %v10328 = vld [vmem:[#allocation3 + $0x30] sm:$0xff]
      %v10329 = vld [vmem:[#allocation3 + $0x38] sm:$0xff]
      %v10330 = vld [vmem:[#allocation3 + $0x40] sm:$0xff]
      %v10331 = vld [vmem:[#allocation3 + $0x48] sm:$0xff]
      %v10332 = vld [vmem:[#allocation3 + $0x50] sm:$0xff]
      %v10333 = vld [vmem:[#allocation3 + $0x58] sm:$0xff]
      %v10334 = vld [vmem:[#allocation3 + $0x60] sm:$0xff]
      %v10335 = vld [vmem:[#allocation3 + $0x68] sm:$0xff]
      %v10336 = vld [vmem:[#allocation3 + $0x70] sm:$0xff]
      %v10337 = vld [vmem:[#allocation3 + $0x78] sm:$0xff]
      %v10338 = vld [vmem:[#allocation3 + $0x80] sm:$0xff]
      %v10339 = vld [vmem:[#allocation3 + $0x88] sm:$0xff]
      %v10340 = vld [vmem:[#allocation3 + $0x90] sm:$0xff]
      %v10341 = vld [vmem:[#allocation3 + $0x98] sm:$0xff]
      %v10342 = vld [vmem:[#allocation3 + $0xa0] sm:$0xff]
      %v10343 = vld [vmem:[#allocation3 + $0xa8] sm:$0xff]
      %v10344 = vld [vmem:[#allocation3 + $0xb0] sm:$0xff]
      %v10345 = vld [vmem:[#allocation3 + $0xb8] sm:$0xff]
      %v10346 = vld [vmem:[#allocation3 + $0xc0] sm:$0xff]
      %v10347 = vld [vmem:[#allocation3 + $0xc8] sm:$0xff]
      %v10348 = vld [vmem:[#allocation3 + $0xd0] sm:$0xff]
      %v10349 = vld [vmem:[#allocation3 + $0xd8] sm:$0xff]
      %v10350 = vld [vmem:[#allocation3 + $0xe0] sm:$0xff]
      %v10351 = vld [vmem:[#allocation3 + $0xe8] sm:$0xff]
      %v10352 = vld [vmem:[#allocation3 + $0xf0] sm:$0xff]
      %v10353 = vld [vmem:[#allocation3 + $0xf8] sm:$0xff]
      %v10354 = vadd.f32 %v10322, %v10196
      %v10355 = vadd.f32 %v10323, %v10199
      %v10356 = vadd.f32 %v10324, %v10204
      %v10357 = vadd.f32 %v10325, %v10207
      %v10358 = vadd.f32 %v10326, %v10212
      %v10359 = vadd.f32 %v10327, %v10215
      %v10360 = vadd.f32 %v10328, %v10220
      %v10361 = vadd.f32 %v10329, %v10223
      %v10362 = vadd.f32 %v10330, %v10228
      %v10363 = vadd.f32 %v10331, %v10231
      %v10364 = vadd.f32 %v10332, %v10236
      %v10365 = vadd.f32 %v10333, %v10239
      %v10366 = vadd.f32 %v10334, %v10244
      %v10367 = vadd.f32 %v10335, %v10247
      %v10368 = vadd.f32 %v10336, %v10252
      %v10369 = vadd.f32 %v10337, %v10255
      %v10370 = vadd.f32 %v10338, %v10260
      %v10371 = vadd.f32 %v10339, %v10263
      %v10372 = vadd.f32 %v10340, %v10268
      %v10373 = vadd.f32 %v10341, %v10271
      %v10374 = vadd.f32 %v10342, %v10276
      %v10375 = vadd.f32 %v10343, %v10279
      %v10376 = vadd.f32 %v10344, %v10284
      %v10377 = vadd.f32 %v10345, %v10287
      %v10378 = vadd.f32 %v10346, %v10292
      %v10379 = vadd.f32 %v10347, %v10295
      %v10380 = vadd.f32 %v10348, %v10300
      %v10381 = vadd.f32 %v10349, %v10303
      %v10382 = vadd.f32 %v10350, %v10308
      %v10383 = vadd.f32 %v10351, %v10311
      %v10384 = vadd.f32 %v10352, %v10316
      %v10385 = vadd.f32 %v10353, %v10319
      %10386 = vst [vmem:[#allocation3] sm:$0xff] %v10354
      %10387 = vst [vmem:[#allocation3 + $0x8] sm:$0xff] %v10355
      %10388 = vst [vmem:[#allocation3 + $0x10] sm:$0xff] %v10356
      %10389 = vst [vmem:[#allocation3 + $0x18] sm:$0xff] %v10357
      %10390 = vst [vmem:[#allocation3 + $0x20] sm:$0xff] %v10358
      %10391 = vst [vmem:[#allocation3 + $0x28] sm:$0xff] %v10359
      %10392 = vst [vmem:[#allocation3 + $0x30] sm:$0xff] %v10360
      %10393 = vst [vmem:[#allocation3 + $0x38] sm:$0xff] %v10361
      %10394 = vst [vmem:[#allocation3 + $0x40] sm:$0xff] %v10362
      %10395 = vst [vmem:[#allocation3 + $0x48] sm:$0xff] %v10363
      %10396 = vst [vmem:[#allocation3 + $0x50] sm:$0xff] %v10364
      %10397 = vst [vmem:[#allocation3 + $0x58] sm:$0xff] %v10365
      %10398 = vst [vmem:[#allocation3 + $0x60] sm:$0xff] %v10366
      %10399 = vst [vmem:[#allocation3 + $0x68] sm:$0xff] %v10367
      %10400 = vst [vmem:[#allocation3 + $0x70] sm:$0xff] %v10368
      %10401 = vst [vmem:[#allocation3 + $0x78] sm:$0xff] %v10369
      %10402 = vst [vmem:[#allocation3 + $0x80] sm:$0xff] %v10370
      %10403 = vst [vmem:[#allocation3 + $0x88] sm:$0xff] %v10371
      %10404 = vst [vmem:[#allocation3 + $0x90] sm:$0xff] %v10372
      %10405 = vst [vmem:[#allocation3 + $0x98] sm:$0xff] %v10373
      %10406 = vst [vmem:[#allocation3 + $0xa0] sm:$0xff] %v10374
      %10407 = vst [vmem:[#allocation3 + $0xa8] sm:$0xff] %v10375
      %10408 = vst [vmem:[#allocation3 + $0xb0] sm:$0xff] %v10376
      %10409 = vst [vmem:[#allocation3 + $0xb8] sm:$0xff] %v10377
      %10410 = vst [vmem:[#allocation3 + $0xc0] sm:$0xff] %v10378
      %10411 = vst [vmem:[#allocation3 + $0xc8] sm:$0xff] %v10379
      %10412 = vst [vmem:[#allocation3 + $0xd0] sm:$0xff] %v10380
      %10413 = vst [vmem:[#allocation3 + $0xd8] sm:$0xff] %v10381
      %10414 = vst [vmem:[#allocation3 + $0xe0] sm:$0xff] %v10382
      %10415 = vst [vmem:[#allocation3 + $0xe8] sm:$0xff] %v10383
      %10416 = vst [vmem:[#allocation3 + $0xf0] sm:$0xff] %v10384
      %10417 = vst [vmem:[#allocation3 + $0xf8] sm:$0xff] %v10385
      %v10418 = vld [vmem:[#allocation3] sm:$0xff]
      %v10419 = vld [vmem:[#allocation3 + $0x8] sm:$0xff]
      %v10420 = vld [vmem:[#allocation3 + $0x10] sm:$0xff]
      %v10421 = vld [vmem:[#allocation3 + $0x18] sm:$0xff]
      %v10422 = vld [vmem:[#allocation3 + $0x20] sm:$0xff]
      %v10423 = vld [vmem:[#allocation3 + $0x28] sm:$0xff]
      %v10424 = vld [vmem:[#allocation3 + $0x30] sm:$0xff]
      %v10425 = vld [vmem:[#allocation3 + $0x38] sm:$0xff]
      %v10426 = vld [vmem:[#allocation3 + $0x40] sm:$0xff]
      %v10427 = vld [vmem:[#allocation3 + $0x48] sm:$0xff]
      %v10428 = vld [vmem:[#allocation3 + $0x50] sm:$0xff]
      %v10429 = vld [vmem:[#allocation3 + $0x58] sm:$0xff]
      %v10430 = vld [vmem:[#allocation3 + $0x60] sm:$0xff]
      %v10431 = vld [vmem:[#allocation3 + $0x68] sm:$0xff]
      %v10432 = vld [vmem:[#allocation3 + $0x70] sm:$0xff]
      %v10433 = vld [vmem:[#allocation3 + $0x78] sm:$0xff]
      %v10434 = vld [vmem:[#allocation3 + $0x80] sm:$0xff]
      %v10435 = vld [vmem:[#allocation3 + $0x88] sm:$0xff]
      %v10436 = vld [vmem:[#allocation3 + $0x90] sm:$0xff]
      %v10437 = vld [vmem:[#allocation3 + $0x98] sm:$0xff]
      %v10438 = vld [vmem:[#allocation3 + $0xa0] sm:$0xff]
      %v10439 = vld [vmem:[#allocation3 + $0xa8] sm:$0xff]
      %v10440 = vld [vmem:[#allocation3 + $0xb0] sm:$0xff]
      %v10441 = vld [vmem:[#allocation3 + $0xb8] sm:$0xff]
      %v10442 = vld [vmem:[#allocation3 + $0xc0] sm:$0xff]
      %v10443 = vld [vmem:[#allocation3 + $0xc8] sm:$0xff]
      %v10444 = vld [vmem:[#allocation3 + $0xd0] sm:$0xff]
      %v10445 = vld [vmem:[#allocation3 + $0xd8] sm:$0xff]
      %v10446 = vld [vmem:[#allocation3 + $0xe0] sm:$0xff]
      %v10447 = vld [vmem:[#allocation3 + $0xe8] sm:$0xff]
      %v10448 = vld [vmem:[#allocation3 + $0xf0] sm:$0xff]
      %v10449 = vld [vmem:[#allocation3 + $0xf8] sm:$0xff]
      %v10450 = vld [vmem:[%s5] sm:$0x1]
      %v10452 = vlaneseq
      %v10453 = vshrl.u32 %v10452, 7
      %v10454 = vsub.s32 0, %v10453
      %v10455 = vrot.slane %v10450, %v10454
      %v10457 = vadd.f32 %v10418, %v10455
      %v10458 = vadd.f32 %v10419, %v10455
      %v10459 = vadd.f32 %v10420, %v10455
      %v10460 = vadd.f32 %v10421, %v10455
      %v10461 = vadd.f32 %v10422, %v10455
      %v10462 = vadd.f32 %v10423, %v10455
      %v10463 = vadd.f32 %v10424, %v10455
      %v10464 = vadd.f32 %v10425, %v10455
      %v10465 = vadd.f32 %v10426, %v10455
      %v10466 = vadd.f32 %v10427, %v10455
      %v10467 = vadd.f32 %v10428, %v10455
      %v10468 = vadd.f32 %v10429, %v10455
      %v10469 = vadd.f32 %v10430, %v10455
      %v10470 = vadd.f32 %v10431, %v10455
      %v10471 = vadd.f32 %v10432, %v10455
      %v10472 = vadd.f32 %v10433, %v10455
      %v10473 = vadd.f32 %v10434, %v10455
      %v10474 = vadd.f32 %v10435, %v10455
      %v10475 = vadd.f32 %v10436, %v10455
      %v10476 = vadd.f32 %v10437, %v10455
      %v10477 = vadd.f32 %v10438, %v10455
      %v10478 = vadd.f32 %v10439, %v10455
      %v10479 = vadd.f32 %v10440, %v10455
      %v10480 = vadd.f32 %v10441, %v10455
      %v10481 = vadd.f32 %v10442, %v10455
      %v10482 = vadd.f32 %v10443, %v10455
      %v10483 = vadd.f32 %v10444, %v10455
      %v10484 = vadd.f32 %v10445, %v10455
      %v10485 = vadd.f32 %v10446, %v10455
      %v10486 = vadd.f32 %v10447, %v10455
      %v10487 = vadd.f32 %v10448, %v10455
      %v10488 = vadd.f32 %v10449, %v10455
      %v10489 = vmax.f32 %v10457, 0.0
      %v10490 = vmax.f32 %v10458, 0.0
      %v10491 = vmax.f32 %v10459, 0.0
      %v10492 = vmax.f32 %v10460, 0.0
      %v10493 = vmax.f32 %v10461, 0.0
      %v10494 = vmax.f32 %v10462, 0.0
      %v10495 = vmax.f32 %v10463, 0.0
      %v10496 = vmax.f32 %v10464, 0.0
      %v10497 = vmax.f32 %v10465, 0.0
      %v10498 = vmax.f32 %v10466, 0.0
      %v10499 = vmax.f32 %v10467, 0.0
      %v10500 = vmax.f32 %v10468, 0.0
      %v10501 = vmax.f32 %v10469, 0.0
      %v10502 = vmax.f32 %v10470, 0.0
      %v10503 = vmax.f32 %v10471, 0.0
      %v10504 = vmax.f32 %v10472, 0.0
      %v10505 = vmax.f32 %v10473, 0.0
      %v10506 = vmax.f32 %v10474, 0.0
      %v10507 = vmax.f32 %v10475, 0.0
      %v10508 = vmax.f32 %v10476, 0.0
      %v10509 = vmax.f32 %v10477, 0.0
      %v10510 = vmax.f32 %v10478, 0.0
      %v10511 = vmax.f32 %v10479, 0.0
      %v10512 = vmax.f32 %v10480, 0.0
      %v10513 = vmax.f32 %v10481, 0.0
      %v10514 = vmax.f32 %v10482, 0.0
      %v10515 = vmax.f32 %v10483, 0.0
      %v10516 = vmax.f32 %v10484, 0.0
      %v10517 = vmax.f32 %v10485, 0.0
      %v10518 = vmax.f32 %v10486, 0.0
      %v10519 = vmax.f32 %v10487, 0.0
      %v10520 = vmax.f32 %v10488, 0.0
      %v10521 = vsel %vm5333, %v10489, 0.0
      %v10522 = vsel %vm5334, %v10490, 0.0
      %v10523 = vsel %vm5335, %v10491, 0.0
      %v10524 = vsel %vm5336, %v10492, 0.0
      %v10525 = vsel %vm5337, %v10493, 0.0
      %v10526 = vsel %vm5338, %v10494, 0.0
      %v10527 = vsel %vm5339, %v10495, 0.0
      %v10528 = vsel %vm5340, %v10496, 0.0
      %v10529 = vsel %vm5341, %v10497, 0.0
      %v10530 = vsel %vm5342, %v10498, 0.0
      %v10531 = vsel %vm5343, %v10499, 0.0
      %v10532 = vsel %vm5344, %v10500, 0.0
      %v10533 = vsel %vm5345, %v10501, 0.0
      %v10534 = vsel %vm5346, %v10502, 0.0
      %v10535 = vsel %vm5347, %v10503, 0.0
      %v10536 = vsel %vm5348, %v10504, 0.0
      %v10537 = vsel %vm5349, %v10505, 0.0
      %v10538 = vsel %vm5350, %v10506, 0.0
      %v10539 = vsel %vm5351, %v10507, 0.0
      %v10540 = vsel %vm5352, %v10508, 0.0
      %v10541 = vsel %vm5353, %v10509, 0.0
      %v10542 = vsel %vm5354, %v10510, 0.0
      %v10543 = vsel %vm5355, %v10511, 0.0
      %v10544 = vsel %vm5356, %v10512, 0.0
      %v10545 = vsel %vm5357, %v10513, 0.0
      %v10546 = vsel %vm5358, %v10514, 0.0
      %v10547 = vsel %vm5359, %v10515, 0.0
      %v10548 = vsel %vm5360, %v10516, 0.0
      %v10549 = vsel %vm5361, %v10517, 0.0
      %v10550 = vsel %vm5362, %v10518, 0.0
      %v10551 = vsel %vm5363, %v10519, 0.0
      %v10552 = vsel %vm5364, %v10520, 0.0
      %v10553 = vpack.c.bf16 %v10522, %v10521
      %v10554 = vpack.c.bf16 %v10524, %v10523
      %v10555 = vpack.c.bf16 %v10526, %v10525
      %v10556 = vpack.c.bf16 %v10528, %v10527
      %v10557 = vpack.c.bf16 %v10530, %v10529
      %v10558 = vpack.c.bf16 %v10532, %v10531
      %v10559 = vpack.c.bf16 %v10534, %v10533
      %v10560 = vpack.c.bf16 %v10536, %v10535
      %v10561 = vpack.c.bf16 %v10538, %v10537
      %v10562 = vpack.c.bf16 %v10540, %v10539
      %v10563 = vpack.c.bf16 %v10542, %v10541
      %v10564 = vpack.c.bf16 %v10544, %v10543
      %v10565 = vpack.c.bf16 %v10546, %v10545
      %v10566 = vpack.c.bf16 %v10548, %v10547
      %v10567 = vpack.c.bf16 %v10550, %v10549
      %v10568 = vpack.c.bf16 %v10552, %v10551
      %v10585 = vunpack.c.l.b16 %v10553
      %v10586 = vunpack.c.h.b16 %v10553
      %v10587 = vunpack.c.l.b16 %v10554
      %v10588 = vunpack.c.h.b16 %v10554
      %v10589 = vunpack.c.l.b16 %v10555
      %v10590 = vunpack.c.h.b16 %v10555
      %v10591 = vunpack.c.l.b16 %v10556
      %v10592 = vunpack.c.h.b16 %v10556
      %v10593 = vunpack.c.l.b16 %v10557
      %v10594 = vunpack.c.h.b16 %v10557
      %v10595 = vunpack.c.l.b16 %v10558
      %v10596 = vunpack.c.h.b16 %v10558
      %v10597 = vunpack.c.l.b16 %v10559
      %v10598 = vunpack.c.h.b16 %v10559
      %v10599 = vunpack.c.l.b16 %v10560
      %v10600 = vunpack.c.h.b16 %v10560
      %v10601 = vunpack.c.l.b16 %v10561
      %v10602 = vunpack.c.h.b16 %v10561
      %v10603 = vunpack.c.l.b16 %v10562
      %v10604 = vunpack.c.h.b16 %v10562
      %v10605 = vunpack.c.l.b16 %v10563
      %v10606 = vunpack.c.h.b16 %v10563
      %v10607 = vunpack.c.l.b16 %v10564
      %v10608 = vunpack.c.h.b16 %v10564
      %v10609 = vunpack.c.l.b16 %v10565
      %v10610 = vunpack.c.h.b16 %v10565
      %v10611 = vunpack.c.l.b16 %v10566
      %v10612 = vunpack.c.h.b16 %v10566
      %v10613 = vunpack.c.l.b16 %v10567
      %v10614 = vunpack.c.h.b16 %v10567
      %v10615 = vunpack.c.l.b16 %v10568
      %v10616 = vunpack.c.h.b16 %v10568
      %v10617 = vpack.c.b16 %v10585, %v10585
      %v10618 = vpack.c.b16 %v10586, %v10586
      %v10619 = vpack.c.b16 %v10587, %v10587
      %v10620 = vpack.c.b16 %v10588, %v10588
      %v10621 = vpack.c.b16 %v10589, %v10589
      %v10622 = vpack.c.b16 %v10590, %v10590
      %v10623 = vpack.c.b16 %v10591, %v10591
      %v10624 = vpack.c.b16 %v10592, %v10592
      %v10625 = vpack.c.b16 %v10593, %v10593
      %v10626 = vpack.c.b16 %v10594, %v10594
      %v10627 = vpack.c.b16 %v10595, %v10595
      %v10628 = vpack.c.b16 %v10596, %v10596
      %v10629 = vpack.c.b16 %v10597, %v10597
      %v10630 = vpack.c.b16 %v10598, %v10598
      %v10631 = vpack.c.b16 %v10599, %v10599
      %v10632 = vpack.c.b16 %v10600, %v10600
      %v10633 = vpack.c.b16 %v10601, %v10601
      %v10634 = vpack.c.b16 %v10602, %v10602
      %v10635 = vpack.c.b16 %v10603, %v10603
      %v10636 = vpack.c.b16 %v10604, %v10604
      %v10637 = vpack.c.b16 %v10605, %v10605
      %v10638 = vpack.c.b16 %v10606, %v10606
      %v10639 = vpack.c.b16 %v10607, %v10607
      %v10640 = vpack.c.b16 %v10608, %v10608
      %v10641 = vpack.c.b16 %v10609, %v10609
      %v10642 = vpack.c.b16 %v10610, %v10610
      %v10643 = vpack.c.b16 %v10611, %v10611
      %v10644 = vpack.c.b16 %v10612, %v10612
      %v10645 = vpack.c.b16 %v10613, %v10613
      %v10646 = vpack.c.b16 %v10614, %v10614
      %v10647 = vpack.c.b16 %v10615, %v10615
      %v10648 = vpack.c.b16 %v10616, %v10616
      %10681 = vst [vmem:[#allocation2 + $0x10] sm:$0xf] %v10617
      %10682 = vst [vmem:[#allocation2 + $0x14] sm:$0xf] %v10618
      %10683 = vst [vmem:[#allocation2 + $0x18] sm:$0xf] %v10619
      %10684 = vst [vmem:[#allocation2 + $0x1c] sm:$0xf] %v10620
      %10685 = vst [vmem:[#allocation2 + $0x20] sm:$0xf] %v10621
      %10686 = vst [vmem:[#allocation2 + $0x24] sm:$0xf] %v10622
      %10687 = vst [vmem:[#allocation2 + $0x28] sm:$0xf] %v10623
      %10688 = vst [vmem:[#allocation2 + $0x2c] sm:$0xf] %v10624
      %10689 = vst [vmem:[#allocation2 + $0x30] sm:$0xf] %v10625
      %10690 = vst [vmem:[#allocation2 + $0x34] sm:$0xf] %v10626
      %10691 = vst [vmem:[#allocation2 + $0x38] sm:$0xf] %v10627
      %10692 = vst [vmem:[#allocation2 + $0x3c] sm:$0xf] %v10628
      %10693 = vst [vmem:[#allocation2 + $0x40] sm:$0xf] %v10629
      %10694 = vst [vmem:[#allocation2 + $0x44] sm:$0xf] %v10630
      %10695 = vst [vmem:[#allocation2 + $0x48] sm:$0xf] %v10631
      %10696 = vst [vmem:[#allocation2 + $0x4c] sm:$0xf] %v10632
      %10697 = vst [vmem:[#allocation2 + $0x50] sm:$0xf] %v10633
      %10698 = vst [vmem:[#allocation2 + $0x54] sm:$0xf] %v10634
      %10699 = vst [vmem:[#allocation2 + $0x58] sm:$0xf] %v10635
      %10700 = vst [vmem:[#allocation2 + $0x5c] sm:$0xf] %v10636
      %10701 = vst [vmem:[#allocation2 + $0x60] sm:$0xf] %v10637
      %10702 = vst [vmem:[#allocation2 + $0x64] sm:$0xf] %v10638
      %10703 = vst [vmem:[#allocation2 + $0x68] sm:$0xf] %v10639
      %10704 = vst [vmem:[#allocation2 + $0x6c] sm:$0xf] %v10640
      %10705 = vst [vmem:[#allocation2 + $0x70] sm:$0xf] %v10641
      %10706 = vst [vmem:[#allocation2 + $0x74] sm:$0xf] %v10642
      %10707 = vst [vmem:[#allocation2 + $0x78] sm:$0xf] %v10643
      %10708 = vst [vmem:[#allocation2 + $0x7c] sm:$0xf] %v10644
      %10709 = vst [vmem:[#allocation2 + $0x80] sm:$0xf] %v10645
      %10710 = vst [vmem:[#allocation2 + $0x84] sm:$0xf] %v10646
      %10711 = vst [vmem:[#allocation2 + $0x88] sm:$0xf] %v10647
      %10712 = vst [vmem:[#allocation2 + $0x8c] sm:$0xf] %v10648
      %v10713 = vld [vmem:[#allocation2 + $0x10] sm:$0xf]
      %v10714 = vld [vmem:[#allocation2 + $0x14] sm:$0xf]
      %v10715 = vld [vmem:[#allocation2 + $0x18] sm:$0xf]
      %v10716 = vld [vmem:[#allocation2 + $0x1c] sm:$0xf]
      %v10717 = vld [vmem:[#allocation2 + $0x20] sm:$0xf]
      %v10718 = vld [vmem:[#allocation2 + $0x24] sm:$0xf]
      %v10719 = vld [vmem:[#allocation2 + $0x28] sm:$0xf]
      %v10720 = vld [vmem:[#allocation2 + $0x2c] sm:$0xf]
      %v10721 = vld [vmem:[#allocation2 + $0x30] sm:$0xf]
      %v10722 = vld [vmem:[#allocation2 + $0x34] sm:$0xf]
      %v10723 = vld [vmem:[#allocation2 + $0x38] sm:$0xf]
      %v10724 = vld [vmem:[#allocation2 + $0x3c] sm:$0xf]
      %v10725 = vld [vmem:[#allocation2 + $0x40] sm:$0xf]
      %v10726 = vld [vmem:[#allocation2 + $0x44] sm:$0xf]
      %v10727 = vld [vmem:[#allocation2 + $0x48] sm:$0xf]
      %v10728 = vld [vmem:[#allocation2 + $0x4c] sm:$0xf]
      %v10729 = vld [vmem:[#allocation2 + $0x50] sm:$0xf]
      %v10730 = vld [vmem:[#allocation2 + $0x54] sm:$0xf]
      %v10731 = vld [vmem:[#allocation2 + $0x58] sm:$0xf]
      %v10732 = vld [vmem:[#allocation2 + $0x5c] sm:$0xf]
      %v10733 = vld [vmem:[#allocation2 + $0x60] sm:$0xf]
      %v10734 = vld [vmem:[#allocation2 + $0x64] sm:$0xf]
      %v10735 = vld [vmem:[#allocation2 + $0x68] sm:$0xf]
      %v10736 = vld [vmem:[#allocation2 + $0x6c] sm:$0xf]
      %v10737 = vld [vmem:[#allocation2 + $0x70] sm:$0xf]
      %v10738 = vld [vmem:[#allocation2 + $0x74] sm:$0xf]
      %v10739 = vld [vmem:[#allocation2 + $0x78] sm:$0xf]
      %v10740 = vld [vmem:[#allocation2 + $0x7c] sm:$0xf]
      %v10741 = vld [vmem:[#allocation2 + $0x80] sm:$0xf]
      %v10742 = vld [vmem:[#allocation2 + $0x84] sm:$0xf]
      %v10743 = vld [vmem:[#allocation2 + $0x88] sm:$0xf]
      %v10744 = vld [vmem:[#allocation2 + $0x8c] sm:$0xf]
      %v10745 = vld [vmem:[%s6] sm:$0xf]
      %v10746 = vld [vmem:[%s6 + $0x4] sm:$0xf]
      %v10747 = vld [vmem:[%s6 + $0x8] sm:$0xf]
      %v10748 = vld [vmem:[%s6 + $0xc] sm:$0xf]
      %v10749 = vld [vmem:[%s6 + $0x10] sm:$0xf]
      %v10750 = vld [vmem:[%s6 + $0x14] sm:$0xf]
      %v10751 = vld [vmem:[%s6 + $0x18] sm:$0xf]
      %v10752 = vld [vmem:[%s6 + $0x1c] sm:$0xf]
      %v10753 = vld [vmem:[%s6 + $0x20] sm:$0xf]
      %v10754 = vld [vmem:[%s6 + $0x24] sm:$0xf]
      %v10755 = vld [vmem:[%s6 + $0x28] sm:$0xf]
      %v10756 = vld [vmem:[%s6 + $0x2c] sm:$0xf]
      %v10757 = vld [vmem:[%s6 + $0x30] sm:$0xf]
      %v10758 = vld [vmem:[%s6 + $0x34] sm:$0xf]
      %v10759 = vld [vmem:[%s6 + $0x38] sm:$0xf]
      %v10760 = vld [vmem:[%s6 + $0x3c] sm:$0xf]
      %v10761 = vld [vmem:[%s7] sm:$0x1]
      %v10763 = vlaneseq
      %v10764 = vshrl.u32 %v10763, 7
      %v10765 = vsub.s32 0, %v10764
      %v10766 = vrot.slane %v10761, %v10765
      %v10800 = vunpack.c.l.b16 %v10713
      %v10801 = vunpack.c.l.b16 %v10714
      %v10802 = vunpack.c.l.b16 %v10715
      %v10803 = vunpack.c.l.b16 %v10716
      %v10804 = vunpack.c.l.b16 %v10717
      %v10805 = vunpack.c.l.b16 %v10718
      %v10806 = vunpack.c.l.b16 %v10719
      %v10807 = vunpack.c.l.b16 %v10720
      %v10808 = vunpack.c.l.b16 %v10721
      %v10809 = vunpack.c.l.b16 %v10722
      %v10810 = vunpack.c.l.b16 %v10723
      %v10811 = vunpack.c.l.b16 %v10724
      %v10812 = vunpack.c.l.b16 %v10725
      %v10813 = vunpack.c.l.b16 %v10726
      %v10814 = vunpack.c.l.b16 %v10727
      %v10815 = vunpack.c.l.b16 %v10728
      %v10816 = vunpack.c.l.b16 %v10729
      %v10817 = vunpack.c.l.b16 %v10730
      %v10818 = vunpack.c.l.b16 %v10731
      %v10819 = vunpack.c.l.b16 %v10732
      %v10820 = vunpack.c.l.b16 %v10733
      %v10821 = vunpack.c.l.b16 %v10734
      %v10822 = vunpack.c.l.b16 %v10735
      %v10823 = vunpack.c.l.b16 %v10736
      %v10824 = vunpack.c.l.b16 %v10737
      %v10825 = vunpack.c.l.b16 %v10738
      %v10826 = vunpack.c.l.b16 %v10739
      %v10827 = vunpack.c.l.b16 %v10740
      %v10828 = vunpack.c.l.b16 %v10741
      %v10829 = vunpack.c.l.b16 %v10742
      %v10830 = vunpack.c.l.b16 %v10743
      %v10831 = vunpack.c.l.b16 %v10744
      %v10832 = vpack.c.b16 %v10801, %v10800
      %v10833 = vpack.c.b16 %v10803, %v10802
      %v10834 = vpack.c.b16 %v10805, %v10804
      %v10835 = vpack.c.b16 %v10807, %v10806
      %v10836 = vpack.c.b16 %v10809, %v10808
      %v10837 = vpack.c.b16 %v10811, %v10810
      %v10838 = vpack.c.b16 %v10813, %v10812
      %v10839 = vpack.c.b16 %v10815, %v10814
      %v10840 = vpack.c.b16 %v10817, %v10816
      %v10841 = vpack.c.b16 %v10819, %v10818
      %v10842 = vpack.c.b16 %v10821, %v10820
      %v10843 = vpack.c.b16 %v10823, %v10822
      %v10844 = vpack.c.b16 %v10825, %v10824
      %v10845 = vpack.c.b16 %v10827, %v10826
      %v10846 = vpack.c.b16 %v10829, %v10828
      %v10847 = vpack.c.b16 %v10831, %v10830
      %v10880 = vunpack.c.l.b16 %v10745
      %v10881 = vunpack.c.l.b16 %v10746
      %v10882 = vunpack.c.l.b16 %v10747
      %v10883 = vunpack.c.l.b16 %v10748
      %v10884 = vunpack.c.l.b16 %v10749
      %v10885 = vunpack.c.l.b16 %v10750
      %v10886 = vunpack.c.l.b16 %v10751
      %v10887 = vunpack.c.l.b16 %v10752
      %v10888 = vunpack.c.l.b16 %v10753
      %v10889 = vunpack.c.l.b16 %v10754
      %v10890 = vunpack.c.l.b16 %v10755
      %v10891 = vunpack.c.l.b16 %v10756
      %v10892 = vunpack.c.l.b16 %v10757
      %v10893 = vunpack.c.l.b16 %v10758
      %v10894 = vunpack.c.l.b16 %v10759
      %v10895 = vunpack.c.l.b16 %v10760
      %v10896 = vpack.c.b16 %v10881, %v10880
      %v10897 = vpack.c.b16 %v10883, %v10882
      %v10898 = vpack.c.b16 %v10885, %v10884
      %v10899 = vpack.c.b16 %v10887, %v10886
      %v10900 = vpack.c.b16 %v10889, %v10888
      %v10901 = vpack.c.b16 %v10891, %v10890
      %v10902 = vpack.c.b16 %v10893, %v10892
      %v10903 = vpack.c.b16 %v10895, %v10894
      %10912 = vmatprep.subr.bf16.mxu0 0
      %10913 = vmatpush1.bf16.msra.mxu0 %v10903
      %10914 = vmatprep.subr.bf16.mxu0 0
      %10915 = vmatpush1.bf16.msra.mxu0 %v10902
      %10916 = vmatprep.subr.bf16.mxu0 0
      %10917 = vmatpush1.bf16.msra.mxu0 %v10901
      %10918 = vmatprep.subr.bf16.mxu0 0
      %10919 = vmatpush1.bf16.msra.mxu0 %v10900
      %10920 = vmatprep.subr.bf16.mxu0 0
      %10921 = vmatpush1.bf16.msra.mxu0 %v10899
      %10922 = vmatprep.subr.bf16.mxu0 0
      %10923 = vmatpush1.bf16.msra.mxu0 %v10898
      %10924 = vmatprep.subr.bf16.mxu0 0
      %10925 = vmatpush1.bf16.msra.mxu0 %v10897
      %10926 = vmatprep.subr.bf16.mxu0 0
      %10927 = vmatpush1.bf16.msra.mxu0 %v10896
      %10928 = vmatprep.subr.bf16.mxu0 0
      %10929 = vmatpush2.bf16.msra.mxu0 0
      %10930 = vmatprep.subr.bf16.mxu0 0
      %10931 = vmatpush2.bf16.msra.mxu0 0
      %10932 = vmatprep.subr.bf16.mxu0 0
      %10933 = vmatpush2.bf16.msra.mxu0 0
      %10934 = vmatprep.subr.bf16.mxu0 0
      %10935 = vmatpush2.bf16.msra.mxu0 0
      %10936 = vmatprep.subr.bf16.mxu0 0
      %10937 = vmatpush2.bf16.msra.mxu0 0
      %10938 = vmatprep.subr.bf16.mxu0 0
      %10939 = vmatpush2.bf16.msra.mxu0 0
      %10940 = vmatprep.subr.bf16.mxu0 0
      %10941 = vmatpush2.bf16.msra.mxu0 0
      %10942 = vmatprep.subr.bf16.mxu0 0
      %10943 = vmatpush2.bf16.msra.mxu0 0
      %10944 = vmatprep.mubr.bf16.mxu0 0
      %10945 = vmatmul.mubr.bf16.gmra.mxu0 %v10832
      %v10946 = vpop.f32.mrf.mxu0
      %v10947 = vadd.f32 %v10766, %v10946
      %v10948 = vpop.f32.mrf.mxu0
      %v10949 = vpop.f32.mrf.mxu0
      %v10950 = vadd.f32 %v10766, %v10949
      %v10951 = vpop.f32.mrf.mxu0
      %10952 = vmatprep.mubr.bf16.mxu0 0
      %10953 = vmatmul.mubr.bf16.gmra.mxu0 %v10833
      %v10954 = vpop.f32.mrf.mxu0
      %v10955 = vadd.f32 %v10766, %v10954
      %v10956 = vpop.f32.mrf.mxu0
      %v10957 = vpop.f32.mrf.mxu0
      %v10958 = vadd.f32 %v10766, %v10957
      %v10959 = vpop.f32.mrf.mxu0
      %10960 = vmatprep.mubr.bf16.mxu0 0
      %10961 = vmatmul.mubr.bf16.gmra.mxu0 %v10834
      %v10962 = vpop.f32.mrf.mxu0
      %v10963 = vadd.f32 %v10766, %v10962
      %v10964 = vpop.f32.mrf.mxu0
      %v10965 = vpop.f32.mrf.mxu0
      %v10966 = vadd.f32 %v10766, %v10965
      %v10967 = vpop.f32.mrf.mxu0
      %10968 = vmatprep.mubr.bf16.mxu0 0
      %10969 = vmatmul.mubr.bf16.gmra.mxu0 %v10835
      %v10970 = vpop.f32.mrf.mxu0
      %v10971 = vadd.f32 %v10766, %v10970
      %v10972 = vpop.f32.mrf.mxu0
      %v10973 = vpop.f32.mrf.mxu0
      %v10974 = vadd.f32 %v10766, %v10973
      %v10975 = vpop.f32.mrf.mxu0
      %10976 = vmatprep.mubr.bf16.mxu0 0
      %10977 = vmatmul.mubr.bf16.gmra.mxu0 %v10836
      %v10978 = vpop.f32.mrf.mxu0
      %v10979 = vadd.f32 %v10766, %v10978
      %v10980 = vpop.f32.mrf.mxu0
      %v10981 = vpop.f32.mrf.mxu0
      %v10982 = vadd.f32 %v10766, %v10981
      %v10983 = vpop.f32.mrf.mxu0
      %10984 = vmatprep.mubr.bf16.mxu0 0
      %10985 = vmatmul.mubr.bf16.gmra.mxu0 %v10837
      %v10986 = vpop.f32.mrf.mxu0
      %v10987 = vadd.f32 %v10766, %v10986
      %v10988 = vpop.f32.mrf.mxu0
      %v10989 = vpop.f32.mrf.mxu0
      %v10990 = vadd.f32 %v10766, %v10989
      %v10991 = vpop.f32.mrf.mxu0
      %10992 = vmatprep.mubr.bf16.mxu0 0
      %10993 = vmatmul.mubr.bf16.gmra.mxu0 %v10838
      %v10994 = vpop.f32.mrf.mxu0
      %v10995 = vadd.f32 %v10766, %v10994
      %v10996 = vpop.f32.mrf.mxu0
      %v10997 = vpop.f32.mrf.mxu0
      %v10998 = vadd.f32 %v10766, %v10997
      %v10999 = vpop.f32.mrf.mxu0
      %11000 = vmatprep.mubr.bf16.mxu0 0
      %11001 = vmatmul.mubr.bf16.gmra.mxu0 %v10839
      %v11002 = vpop.f32.mrf.mxu0
      %v11003 = vadd.f32 %v10766, %v11002
      %v11004 = vpop.f32.mrf.mxu0
      %v11005 = vpop.f32.mrf.mxu0
      %v11006 = vadd.f32 %v10766, %v11005
      %v11007 = vpop.f32.mrf.mxu0
      %11008 = vmatprep.mubr.bf16.mxu0 0
      %11009 = vmatmul.mubr.bf16.gmra.mxu0 %v10840
      %v11010 = vpop.f32.mrf.mxu0
      %v11011 = vadd.f32 %v10766, %v11010
      %v11012 = vpop.f32.mrf.mxu0
      %v11013 = vpop.f32.mrf.mxu0
      %v11014 = vadd.f32 %v10766, %v11013
      %v11015 = vpop.f32.mrf.mxu0
      %11016 = vmatprep.mubr.bf16.mxu0 0
      %11017 = vmatmul.mubr.bf16.gmra.mxu0 %v10841
      %v11018 = vpop.f32.mrf.mxu0
      %v11019 = vadd.f32 %v10766, %v11018
      %v11020 = vpop.f32.mrf.mxu0
      %v11021 = vpop.f32.mrf.mxu0
      %v11022 = vadd.f32 %v10766, %v11021
      %v11023 = vpop.f32.mrf.mxu0
      %11024 = vmatprep.mubr.bf16.mxu0 0
      %11025 = vmatmul.mubr.bf16.gmra.mxu0 %v10842
      %v11026 = vpop.f32.mrf.mxu0
      %v11027 = vadd.f32 %v10766, %v11026
      %v11028 = vpop.f32.mrf.mxu0
      %v11029 = vpop.f32.mrf.mxu0
      %v11030 = vadd.f32 %v10766, %v11029
      %v11031 = vpop.f32.mrf.mxu0
      %11032 = vmatprep.mubr.bf16.mxu0 0
      %11033 = vmatmul.mubr.bf16.gmra.mxu0 %v10843
      %v11034 = vpop.f32.mrf.mxu0
      %v11035 = vadd.f32 %v10766, %v11034
      %v11036 = vpop.f32.mrf.mxu0
      %v11037 = vpop.f32.mrf.mxu0
      %v11038 = vadd.f32 %v10766, %v11037
      %v11039 = vpop.f32.mrf.mxu0
      %11040 = vmatprep.mubr.bf16.mxu0 0
      %11041 = vmatmul.mubr.bf16.gmra.mxu0 %v10844
      %v11042 = vpop.f32.mrf.mxu0
      %v11043 = vadd.f32 %v10766, %v11042
      %v11044 = vpop.f32.mrf.mxu0
      %v11045 = vpop.f32.mrf.mxu0
      %v11046 = vadd.f32 %v10766, %v11045
      %v11047 = vpop.f32.mrf.mxu0
      %11048 = vmatprep.mubr.bf16.mxu0 0
      %11049 = vmatmul.mubr.bf16.gmra.mxu0 %v10845
      %v11050 = vpop.f32.mrf.mxu0
      %v11051 = vadd.f32 %v10766, %v11050
      %v11052 = vpop.f32.mrf.mxu0
      %v11053 = vpop.f32.mrf.mxu0
      %v11054 = vadd.f32 %v10766, %v11053
      %v11055 = vpop.f32.mrf.mxu0
      %11056 = vmatprep.mubr.bf16.mxu0 0
      %11057 = vmatmul.mubr.bf16.gmra.mxu0 %v10846
      %v11058 = vpop.f32.mrf.mxu0
      %v11059 = vadd.f32 %v10766, %v11058
      %v11060 = vpop.f32.mrf.mxu0
      %v11061 = vpop.f32.mrf.mxu0
      %v11062 = vadd.f32 %v10766, %v11061
      %v11063 = vpop.f32.mrf.mxu0
      %11064 = vmatprep.mubr.bf16.mxu0 0
      %11065 = vmatmul.mubr.bf16.gmra.mxu0 %v10847
      %v11066 = vpop.f32.mrf.mxu0
      %v11067 = vadd.f32 %v10766, %v11066
      %v11068 = vpop.f32.mrf.mxu0
      %v11069 = vpop.f32.mrf.mxu0
      %v11070 = vadd.f32 %v10766, %v11069
      %v11071 = vpop.f32.mrf.mxu0
      %11072 = vdwg.mxu0
      %v11073 = vpack.c.bf16 %v10950, %v10947
      %v11074 = vpack.c.bf16 %v10958, %v10955
      %v11075 = vpack.c.bf16 %v10966, %v10963
      %v11076 = vpack.c.bf16 %v10974, %v10971
      %v11077 = vpack.c.bf16 %v10982, %v10979
      %v11078 = vpack.c.bf16 %v10990, %v10987
      %v11079 = vpack.c.bf16 %v10998, %v10995
      %v11080 = vpack.c.bf16 %v11006, %v11003
      %v11081 = vpack.c.bf16 %v11014, %v11011
      %v11082 = vpack.c.bf16 %v11022, %v11019
      %v11083 = vpack.c.bf16 %v11030, %v11027
      %v11084 = vpack.c.bf16 %v11038, %v11035
      %v11085 = vpack.c.bf16 %v11046, %v11043
      %v11086 = vpack.c.bf16 %v11054, %v11051
      %v11087 = vpack.c.bf16 %v11062, %v11059
      %v11088 = vpack.c.bf16 %v11070, %v11067
      %v11105 = vunpack.c.l.b16 %v11073
      %v11106 = vunpack.c.h.b16 %v11073
      %v11107 = vunpack.c.l.b16 %v11074
      %v11108 = vunpack.c.h.b16 %v11074
      %v11109 = vunpack.c.l.b16 %v11075
      %v11110 = vunpack.c.h.b16 %v11075
      %v11111 = vunpack.c.l.b16 %v11076
      %v11112 = vunpack.c.h.b16 %v11076
      %v11113 = vunpack.c.l.b16 %v11077
      %v11114 = vunpack.c.h.b16 %v11077
      %v11115 = vunpack.c.l.b16 %v11078
      %v11116 = vunpack.c.h.b16 %v11078
      %v11117 = vunpack.c.l.b16 %v11079
      %v11118 = vunpack.c.h.b16 %v11079
      %v11119 = vunpack.c.l.b16 %v11080
      %v11120 = vunpack.c.h.b16 %v11080
      %v11121 = vunpack.c.l.b16 %v11081
      %v11122 = vunpack.c.h.b16 %v11081
      %v11123 = vunpack.c.l.b16 %v11082
      %v11124 = vunpack.c.h.b16 %v11082
      %v11125 = vunpack.c.l.b16 %v11083
      %v11126 = vunpack.c.h.b16 %v11083
      %v11127 = vunpack.c.l.b16 %v11084
      %v11128 = vunpack.c.h.b16 %v11084
      %v11129 = vunpack.c.l.b16 %v11085
      %v11130 = vunpack.c.h.b16 %v11085
      %v11131 = vunpack.c.l.b16 %v11086
      %v11132 = vunpack.c.h.b16 %v11086
      %v11133 = vunpack.c.l.b16 %v11087
      %v11134 = vunpack.c.h.b16 %v11087
      %v11135 = vunpack.c.l.b16 %v11088
      %v11136 = vunpack.c.h.b16 %v11088
      %v11137 = vpack.c.b16 %v11105, %v11105
      %v11138 = vpack.c.b16 %v11106, %v11106
      %v11139 = vpack.c.b16 %v11107, %v11107
      %v11140 = vpack.c.b16 %v11108, %v11108
      %v11141 = vpack.c.b16 %v11109, %v11109
      %v11142 = vpack.c.b16 %v11110, %v11110
      %v11143 = vpack.c.b16 %v11111, %v11111
      %v11144 = vpack.c.b16 %v11112, %v11112
      %v11145 = vpack.c.b16 %v11113, %v11113
      %v11146 = vpack.c.b16 %v11114, %v11114
      %v11147 = vpack.c.b16 %v11115, %v11115
      %v11148 = vpack.c.b16 %v11116, %v11116
      %v11149 = vpack.c.b16 %v11117, %v11117
      %v11150 = vpack.c.b16 %v11118, %v11118
      %v11151 = vpack.c.b16 %v11119, %v11119
      %v11152 = vpack.c.b16 %v11120, %v11120
      %v11153 = vpack.c.b16 %v11121, %v11121
      %v11154 = vpack.c.b16 %v11122, %v11122
      %v11155 = vpack.c.b16 %v11123, %v11123
      %v11156 = vpack.c.b16 %v11124, %v11124
      %v11157 = vpack.c.b16 %v11125, %v11125
      %v11158 = vpack.c.b16 %v11126, %v11126
      %v11159 = vpack.c.b16 %v11127, %v11127
      %v11160 = vpack.c.b16 %v11128, %v11128
      %v11161 = vpack.c.b16 %v11129, %v11129
      %v11162 = vpack.c.b16 %v11130, %v11130
      %v11163 = vpack.c.b16 %v11131, %v11131
      %v11164 = vpack.c.b16 %v11132, %v11132
      %v11165 = vpack.c.b16 %v11133, %v11133
      %v11166 = vpack.c.b16 %v11134, %v11134
      %v11167 = vpack.c.b16 %v11135, %v11135
      %v11168 = vpack.c.b16 %v11136, %v11136
      %11201 = vst [vmem:[%s307] sm:$0xf] %v11137
      %11202 = vst [vmem:[%s307 + $0x4] sm:$0xf] %v11138
      %11203 = vst [vmem:[%s307 + $0x8] sm:$0xf] %v11139
      %11204 = vst [vmem:[%s307 + $0xc] sm:$0xf] %v11140
      %11205 = vst [vmem:[%s307 + $0x10] sm:$0xf] %v11141
      %11206 = vst [vmem:[%s307 + $0x14] sm:$0xf] %v11142
      %11207 = vst [vmem:[%s307 + $0x18] sm:$0xf] %v11143
      %11208 = vst [vmem:[%s307 + $0x1c] sm:$0xf] %v11144
      %11209 = vst [vmem:[%s307 + $0x20] sm:$0xf] %v11145
      %11210 = vst [vmem:[%s307 + $0x24] sm:$0xf] %v11146
      %11211 = vst [vmem:[%s307 + $0x28] sm:$0xf] %v11147
      %11212 = vst [vmem:[%s307 + $0x2c] sm:$0xf] %v11148
      %11213 = vst [vmem:[%s307 + $0x30] sm:$0xf] %v11149
      %11214 = vst [vmem:[%s307 + $0x34] sm:$0xf] %v11150
      %11215 = vst [vmem:[%s307 + $0x38] sm:$0xf] %v11151
      %11216 = vst [vmem:[%s307 + $0x3c] sm:$0xf] %v11152
      %11217 = vst [vmem:[%s307 + $0x40] sm:$0xf] %v11153
      %11218 = vst [vmem:[%s307 + $0x44] sm:$0xf] %v11154
      %11219 = vst [vmem:[%s307 + $0x48] sm:$0xf] %v11155
      %11220 = vst [vmem:[%s307 + $0x4c] sm:$0xf] %v11156
      %11221 = vst [vmem:[%s307 + $0x50] sm:$0xf] %v11157
      %11222 = vst [vmem:[%s307 + $0x54] sm:$0xf] %v11158
      %11223 = vst [vmem:[%s307 + $0x58] sm:$0xf] %v11159
      %11224 = vst [vmem:[%s307 + $0x5c] sm:$0xf] %v11160
      %11225 = vst [vmem:[%s307 + $0x60] sm:$0xf] %v11161
      %11226 = vst [vmem:[%s307 + $0x64] sm:$0xf] %v11162
      %11227 = vst [vmem:[%s307 + $0x68] sm:$0xf] %v11163
      %11228 = vst [vmem:[%s307 + $0x6c] sm:$0xf] %v11164
      %11229 = vst [vmem:[%s307 + $0x70] sm:$0xf] %v11165
      %11230 = vst [vmem:[%s307 + $0x74] sm:$0xf] %v11166
      %11231 = vst [vmem:[%s307 + $0x78] sm:$0xf] %v11167
      %11232 = vst [vmem:[%s307 + $0x7c] sm:$0xf] %v11168
      %s11233 = smul.u32 32, %s19
      %p11234 = scmp.lt.s32.totalorder %s11233, 63
      %s11235 = scalar_select %p11234, %s11233, 63
      %s11236 = smul.addr %s11235, 4
      %s11237 = scalar_lea.vmem %s8, %s11236
      // Predicated region
      $region53: #{grasp_head_forward.1} parent=51 // pred_check
        %p11238 = pneg %p210
      $region54: #{grasp_head_forward.1} parent=51 // pred_check_branch
        %11240 = sbr.rel (%p11238) target = $region56
      $region55: #{grasp_head_forward.1} parent=51 // pred_region
        %s11241 = smul.u32 32, %s19
      $region56: #{grasp_head_forward.1} parent=51 // pred_fallthru
        _
    $region52: #{grasp_head_forward.1} parent=5 // pred_fallthru
      _
    %p11242 = scmp.le.s32.totalorder 2, %s14
    // Predicated region
    $region57: #{grasp_head_forward.1} parent=5 // pred_check
      %p11243 = pneg %p11242
    $region58: #{grasp_head_forward.1} parent=5 // pred_check_branch
      %11245 = sbr.rel (%p11243) target = $region60
    $region59: #{grasp_head_forward.1} parent=5 // pred_region
      %s11246 = ssub.s32 %s14, 2
      // Predicated region
      $region61: #{grasp_head_forward.1} parent=59 // pred_check
        %p11247 = pneg %p216
      $region62: #{grasp_head_forward.1} parent=59 // pred_check_branch
        %11249 = sbr.rel (%p11247) target = $region64
      $region63: #{grasp_head_forward.1} parent=59 // pred_region
        %s11250 = smul.u32 32, %s20
        %p11251 = scmp.lt.s32.totalorder %s11250, 63
        %s11252 = scalar_select %p11251, %s11250, 63
        %s11253 = smul.addr %s11252, 4
        %s11254 = scalar_lea.vmem %s8, %s11253
      $region64: #{grasp_head_forward.1} parent=59 // pred_fallthru
        _
    $region60: #{grasp_head_forward.1} parent=5 // pred_fallthru
      _
  $region6: #{grasp_head_forward.1} parent=0 // loop_footer
    %s18 = sadd.s32 1, %s14
  $region7: #{grasp_head_forward.1} parent=0 // loop_footer_branch
    %13 = sbr.rel target = $region3
  $region8: #{grasp_head_forward.1} parent=0 // loop_exit
    _

</llo_original>
